<compile_context>
chip_gen: v6e
topology: v6e:2x2x1
jax: 0.10.0
libtpu: 0.0.40
codegen_flags: <defaults>
</compile_context>

<pallas_src>
import functools

import numpy as np
import jax
import jax.numpy as jnp
from jax import lax
from jax.experimental import pallas as pl
from jax.experimental.pallas import tpu as pltpu


# ----------------------------------------------------------------------------
# helpers
# ----------------------------------------------------------------------------
_LANE = 128                      # pad channel dims to multiples of this
_TM = 512                        # row tile for the 1x1-conv matmul kernel
_TH = 8                          # output-row tile for the fused 3x3 kernel
_VMEM_LIMIT_BYTES = 48 * 1024 * 1024


def _round_up(x, m):
    return (x + m - 1) // m * m


def _pad_axis(a, axis, size):
    if a.shape[axis] == size:
        return a
    widths = [(0, 0)] * a.ndim
    widths[axis] = (0, size - a.shape[axis])
    return jnp.pad(a, widths)


def fold_bn(gamma, beta, mean, var, eps=1e-5):
    scale = gamma / jnp.sqrt(var + eps)
    bias = beta - mean * scale
    return scale.astype(jnp.float32), bias.astype(jnp.float32)


# ----------------------------------------------------------------------------
# Kernel 1:  (M, K) @ (K, N) * scale + bias + relu        (conv1 1x1 + bn1)
# ----------------------------------------------------------------------------
def _mm_bn_relu_kernel(x_ref, w_ref, s_ref, b_ref, o_ref):
    acc = jnp.dot(x_ref[...], w_ref[...], preferred_element_type=jnp.float32)
    acc = jnp.maximum(acc * s_ref[...] + b_ref[...], 0.0)
    o_ref[...] = acc.astype(o_ref.dtype)


def conv1x1_bn_relu(x2d, w, scale, bias, *, out_dtype, tm=_TM):
    M, K = x2d.shape
    N = w.shape[1]
    tm = min(tm, _round_up(M, 8))
    Mp = _round_up(M, tm)
    xp = _pad_axis(x2d, 0, Mp)
    out = pl.pallas_call(
        _mm_bn_relu_kernel,
        out_shape=jax.ShapeDtypeStruct((Mp, N), out_dtype),
        grid_spec=pltpu.PrefetchScalarGridSpec(
            num_scalar_prefetch=0,
            grid=(Mp // tm,),
            in_specs=[
                pl.BlockSpec((tm, K), lambda i: (i, 0)),
                pl.BlockSpec((K, N), lambda i: (0, 0)),
                pl.BlockSpec((1, N), lambda i: (0, 0)),
                pl.BlockSpec((1, N), lambda i: (0, 0)),
            ],
            out_specs=pl.BlockSpec((tm, N), lambda i: (i, 0)),
        ),
        compiler_params=pltpu.CompilerParams(
            dimension_semantics=("parallel",),
            vmem_limit_bytes=_VMEM_LIMIT_BYTES),
    )(xp, w, scale, bias)
    return out[:M]


# ----------------------------------------------------------------------------
# Kernel 2:  fused  conv3x3(dilation d) + bn2 + relu
#                 + conv3(1x1) + bn3 + residual (+ downsample) + relu
# ----------------------------------------------------------------------------
def _conv2_bn_relu(cur_ref, prev_ref, next_ref, scratch_ref,
                   w2_ref, s2_ref, b2_ref, *, TH, W, d, n_tiles):
    """Dilated 3x3 conv + folded-BN affine + relu for one (TH, W) row tile.

    A (TH + 2d)-row halo strip is assembled into a flat VMEM scratch laid out
    as  flat[d + hr*W + c] = (halo row hr, column c).  Each tap (ky, kx) is
    then a CONTIGUOUS window of TH*W scratch rows starting at the static
    offset d + ky*d*W + (kx-1)*d; entries whose column wraps across a row
    boundary (== hits the zero image border) are select-masked to zero before
    the MXU matmul, so no per-tap re-layout copies are needed.
    Returns the (TH*W, C1) float32 activation after bn2 + relu.
    """
    i = pl.program_id(1)
    C1 = scratch_ref.shape[-1]

    # ---- halo assembly: 3 contiguous stores + pl.when boundary zero-fill ----
    scratch_ref[pl.ds(d + d * W, TH * W), :] = cur_ref[0].reshape(TH * W, C1)

    @pl.when(i > 0)
    def _():
        top = prev_ref[0, pl.ds(TH - d, d), :, :].reshape(d * W, C1)
        scratch_ref[pl.ds(d, d * W), :] = top

    @pl.when(i == 0)
    def _():
        scratch_ref[pl.ds(d, d * W), :] = jnp.zeros((d * W, C1),
                                                    scratch_ref.dtype)

    @pl.when(i < n_tiles - 1)
    def _():
        bot = next_ref[0, pl.ds(0, d), :, :].reshape(d * W, C1)
        scratch_ref[pl.ds(d + (TH + d) * W, d * W), :] = bot

    @pl.when(i == n_tiles - 1)
    def _():
        scratch_ref[pl.ds(d + (TH + d) * W, d * W), :] = jnp.zeros(
            (d * W, C1), scratch_ref.dtype)

    # ---- column-border masks (input col = output col + (kx-1)*d) -----------
    col = lax.broadcasted_iota(jnp.int32, (TH, W, 1), 1).reshape(TH * W, 1)
    left_ok = col >= d           # tap kx == 0
    right_ok = col < W - d       # tap kx == 2

    # ---- 9 taps, register accumulation --------------------------------------
    acc = None
    for ky in range(3):
        for kx in range(3):
            start = d + ky * d * W + (kx - 1) * d        # static offset
            win = scratch_ref[pl.ds(start, TH * W), :]
            if kx == 0:
                win = jnp.where(left_ok, win, jnp.zeros_like(win))
            elif kx == 2:
                win = jnp.where(right_ok, win, jnp.zeros_like(win))
            contrib = jnp.dot(win, w2_ref[ky, kx, :, :],
                              preferred_element_type=jnp.float32)
            acc = contrib if acc is None else acc + contrib
    return jnp.maximum(acc * s2_ref[...] + b2_ref[...], 0.0)


def _bottleneck_tail_proj_kernel(cur_ref, prev_ref, next_ref, res_ref,
                                 w2_ref, s2_ref, b2_ref,
                                 w3_ref, s3_ref, b3_ref,
                                 wd_ref, sd_ref, bd_ref,
                                 o_ref, scratch_ref, *, TH, W, d, n_tiles):
    h = _conv2_bn_relu(cur_ref, prev_ref, next_ref, scratch_ref,
                       w2_ref, s2_ref, b2_ref,
                       TH=TH, W=W, d=d, n_tiles=n_tiles)
    acc = jnp.dot(h.astype(w3_ref.dtype), w3_ref[...],
                  preferred_element_type=jnp.float32)
    acc = acc * s3_ref[...] + b3_ref[...]
    res = res_ref[0].reshape(TH * W, res_ref.shape[3])
    rproj = jnp.dot(res, wd_ref[...], preferred_element_type=jnp.float32)
    acc = acc + rproj * sd_ref[...] + bd_ref[...]
    out = jnp.maximum(acc, 0.0)
    o_ref[0] = out.reshape(TH, W, o_ref.shape[3]).astype(o_ref.dtype)


def _bottleneck_tail_ident_kernel(cur_ref, prev_ref, next_ref, res_ref,
                                  w2_ref, s2_ref, b2_ref,
                                  w3_ref, s3_ref, b3_ref,
                                  o_ref, scratch_ref, *, TH, W, d, n_tiles):
    h = _conv2_bn_relu(cur_ref, prev_ref, next_ref, scratch_ref,
                       w2_ref, s2_ref, b2_ref,
                       TH=TH, W=W, d=d, n_tiles=n_tiles)
    acc = jnp.dot(h.astype(w3_ref.dtype), w3_ref[...],
                  preferred_element_type=jnp.float32)
    acc = acc * s3_ref[...] + b3_ref[...]
    acc = acc + res_ref[0].reshape(TH * W, res_ref.shape[3]).astype(jnp.float32)
    out = jnp.maximum(acc, 0.0)
    o_ref[0] = out.reshape(TH, W, o_ref.shape[3]).astype(o_ref.dtype)


def fused_conv2_tail(y1, resid, w2, s2, b2, w3, s3, b3,
                     wd=None, sd=None, bd=None, *,
                     dilation=1, out_dtype=jnp.bfloat16, th=_TH):
    """Fused conv2(3x3) + bn2 + relu + conv3 + bn3 + residual + relu."""
    N, H, W, C1 = y1.shape
    C3 = w3.shape[1]
    Cr = resid.shape[-1]
    d = int(dilation)

    TH = max(th, _round_up(d, 8))        # halo (d rows) must fit in one block
    H_pad = _round_up(H, TH)
    if H_pad != H:
        # TODO(synk): handle the ragged last tile in-kernel (row masking)
        # instead of this HBM pad pass for the common odd DeepLab heights.
        pad = ((0, 0), (0, H_pad - H), (0, 0), (0, 0))
        y1 = jnp.pad(y1, pad)
        resid = jnp.pad(resid, pad)
    n_tiles = H_pad // TH

    Lh = (TH + 2 * d) * W + 2 * d        # flat halo rows actually addressed
    Lh_pad = _round_up(Lh, 8)

    in_specs = [
        # cur / prev / next row tiles of the conv1 activation (clamped halo)
        pl.BlockSpec((1, TH, W, C1), lambda n, i: (n, i, 0, 0)),
        pl.BlockSpec((1, TH, W, C1),
                     lambda n, i: (n, jnp.maximum(i - 1, 0), 0, 0)),
        pl.BlockSpec((1, TH, W, C1),
                     lambda n, i: (n, jnp.minimum(i + 1, n_tiles - 1), 0, 0)),
        # residual row tile (block input x, lane-padded)
        pl.BlockSpec((1, TH, W, Cr), lambda n, i: (n, i, 0, 0)),
        # grid-invariant weights / folded-BN affines
        pl.BlockSpec((3, 3, C1, C1), lambda n, i: (0, 0, 0, 0)),
        pl.BlockSpec((1, C1), lambda n, i: (0, 0)),
        pl.BlockSpec((1, C1), lambda n, i: (0, 0)),
        pl.BlockSpec((C1, C3), lambda n, i: (0, 0)),
        pl.BlockSpec((1, C3), lambda n, i: (0, 0)),
        pl.BlockSpec((1, C3), lambda n, i: (0, 0)),
    ]
    args = [y1, y1, y1, resid, w2, s2, b2, w3, s3, b3]

    if wd is not None:
        kernel = functools.partial(_bottleneck_tail_proj_kernel,
                                   TH=TH, W=W, d=d, n_tiles=n_tiles)
        in_specs += [
            pl.BlockSpec((Cr, C3), lambda n, i: (0, 0)),
            pl.BlockSpec((1, C3), lambda n, i: (0, 0)),
            pl.BlockSpec((1, C3), lambda n, i: (0, 0)),
        ]
        args += [wd, sd, bd]
    else:
        kernel = functools.partial(_bottleneck_tail_ident_kernel,
                                   TH=TH, W=W, d=d, n_tiles=n_tiles)

    out = pl.pallas_call(
        kernel,
        out_shape=jax.ShapeDtypeStruct((N, H_pad, W, C3), out_dtype),
        grid_spec=pltpu.PrefetchScalarGridSpec(
            num_scalar_prefetch=0,
            grid=(N, n_tiles),
            in_specs=in_specs,
            out_specs=pl.BlockSpec((1, TH, W, C3), lambda n, i: (n, i, 0, 0)),
            scratch_shapes=[pltpu.VMEM((Lh_pad, C1), y1.dtype)],
        ),
        compiler_params=pltpu.CompilerParams(
            dimension_semantics=("parallel", "parallel"),
            vmem_limit_bytes=_VMEM_LIMIT_BYTES),
    )(*args)
    if H_pad != H:
        out = out[:, :H]
    return out


# ----------------------------------------------------------------------------
# Parameter preparation (fold BN, transpose + lane-pad weights, cast bf16).
# ----------------------------------------------------------------------------
def prepare_bottleneck_params(params, compute_dtype=jnp.bfloat16):
    inplanes = params["conv1_w"].shape[1]
    planes = params["conv1_w"].shape[0]
    cout = params["conv3_w"].shape[0]
    cin_p = _round_up(inplanes, _LANE)
    c1_p = _round_up(planes, _LANE)
    c3_p = _round_up(cout, _LANE)

    def pad2(w, r, c):
        return _pad_axis(_pad_axis(w, 0, r), 1, c)

    s1, b1 = fold_bn(*params["bn1"])
    s2, b2 = fold_bn(*params["bn2"])
    s3, b3 = fold_bn(*params["bn3"])

    prep = {
        "cin": inplanes, "cout": cout,
        "cin_p": cin_p, "c1_p": c1_p, "c3_p": c3_p,
        "w1": pad2(params["conv1_w"][:, :, 0, 0].T, cin_p, c1_p)
              .astype(compute_dtype),
        "s1": _pad_axis(s1, 0, c1_p).reshape(1, c1_p),
        "b1": _pad_axis(b1, 0, c1_p).reshape(1, c1_p),
        "w2": _pad_axis(_pad_axis(
                  jnp.transpose(params["conv2_w"], (2, 3, 1, 0)), 2, c1_p),
                  3, c1_p).astype(compute_dtype),
        "s2": _pad_axis(s2, 0, c1_p).reshape(1, c1_p),
        "b2": _pad_axis(b2, 0, c1_p).reshape(1, c1_p),
        "w3": pad2(params["conv3_w"][:, :, 0, 0].T, c1_p, c3_p)
              .astype(compute_dtype),
        "s3": _pad_axis(s3, 0, c3_p).reshape(1, c3_p),
        "b3": _pad_axis(b3, 0, c3_p).reshape(1, c3_p),
    }
    if "down_w" in params:
        sd, bd = fold_bn(*params["down_bn"])
        prep["wd"] = pad2(params["down_w"][:, :, 0, 0].T, cin_p, c3_p) \
            .astype(compute_dtype)
        prep["sd"] = _pad_axis(sd, 0, c3_p).reshape(1, c3_p)
        prep["bd"] = _pad_axis(bd, 0, c3_p).reshape(1, c3_p)
    return prep


# ----------------------------------------------------------------------------
# Bottleneck forward passes.
# ----------------------------------------------------------------------------
def bottleneck_forward_nhwc(x, prep, *, stride=1, dilation=1, out_dtype=None):
    """x: (N, H, W, cin_p) in compute dtype, zeros in the padded channels.
    Returns (N, H, W, c3_p) with zeros in the padded channels."""
    assert stride == 1  # TODO(synk): stride > 1 not implemented
    N, H, W, cin_p = x.shape
    assert cin_p == prep["cin_p"]
    out_dtype = out_dtype or x.dtype
    c1_p, c3_p = prep["c1_p"], prep["c3_p"]

    # conv1 (1x1) + bn1 + relu as a flat matmul
    y1 = conv1x1_bn_relu(x.reshape(N * H * W, cin_p),
                         prep["w1"], prep["s1"], prep["b1"], out_dtype=x.dtype)
    y1 = y1.reshape(N, H, W, c1_p)

    # fused conv2 (3x3, dilated) + bn2 + relu + conv3 + bn3 + residual + relu
    if "wd" in prep:
        return fused_conv2_tail(y1, x, prep["w2"], prep["s2"], prep["b2"],
                                prep["w3"], prep["s3"], prep["b3"],
                                prep["wd"], prep["sd"], prep["bd"],
                                dilation=dilation, out_dtype=out_dtype)
    assert prep["cin"] == prep["cout"] and cin_p == c3_p, \
        "identity shortcut requires inplanes == planes*4"
    return fused_conv2_tail(y1, x, prep["w2"], prep["s2"], prep["b2"],
                            prep["w3"], prep["s3"], prep["b3"],
                            dilation=dilation, out_dtype=out_dtype)


def bottleneck_forward(x_nchw, params, *, stride=1, dilation=1,
                       compute_dtype=jnp.bfloat16):
    """Drop-in NCHW interface for a single Bottleneck block (eval mode)."""
    prep = prepare_bottleneck_params(params, compute_dtype)
    x = jnp.transpose(x_nchw, (0, 2, 3, 1))
    x = _pad_axis(x, 3, prep["cin_p"]).astype(compute_dtype)
    out = bottleneck_forward_nhwc(x, prep, stride=stride, dilation=dilation)
    out = out[..., :prep["cout"]].astype(jnp.float32)
    return jnp.transpose(out, (0, 3, 1, 2))


# ----------------------------------------------------------------------------
# Parameter init and pure-JAX f32 reference (semantics oracle).
# ----------------------------------------------------------------------------
def _bn_params(key, c):
    kg, kb, km, kv = jax.random.split(key, 4)
    gamma = 1.0 + 0.2 * jax.random.normal(kg, (c,), jnp.float32)
    beta = 0.1 * jax.random.normal(kb, (c,), jnp.float32)
    mean = 0.1 * jax.random.normal(km, (c,), jnp.float32)
    var = 1.0 + 0.2 * jax.random.uniform(kv, (c,), jnp.float32)
    return (gamma, beta, mean, var)


def init_bottleneck_params(key, inplanes, planes, with_downsample):
    expansion = 4
    ks = jax.random.split(key, 8)

    def kaiming(k, shape, fan_in):
        return jax.random.normal(k, shape, jnp.float32) * np.sqrt(2.0 / fan_in)

    p = {
        "conv1_w": kaiming(ks[0], (planes, inplanes, 1, 1), inplanes),
        "bn1": _bn_params(ks[1], planes),
        "conv2_w": kaiming(ks[2], (planes, planes, 3, 3), planes * 9),
        "bn2": _bn_params(ks[3], planes),
        "conv3_w": kaiming(ks[4], (planes * expansion, planes, 1, 1), planes),
        "bn3": _bn_params(ks[5], planes * expansion),
    }
    if with_downsample:
        p["down_w"] = kaiming(ks[6], (planes * expansion, inplanes, 1, 1),
                              inplanes)
        p["down_bn"] = _bn_params(ks[7], planes * expansion)
    return p


def bottleneck_reference(x, params, *, stride=1, dilation=1):
    def bn(y, bnp, eps=1e-5):
        g, b, m, v = bnp
        s = g / jnp.sqrt(v + eps)
        return y * s[None, :, None, None] + (b - m * s)[None, :, None, None]

    def conv1x1(y, w):
        return lax.conv_general_dilated(
            y, w, (1, 1), "VALID", dimension_numbers=("NCHW", "OIHW", "NCHW"))

    d = dilation
    out = jax.nn.relu(bn(conv1x1(x, params["conv1_w"]), params["bn1"]))
    out = lax.conv_general_dilated(
        out, params["conv2_w"], (stride, stride), [(d, d), (d, d)],
        rhs_dilation=(d, d), dimension_numbers=("NCHW", "OIHW", "NCHW"))
    out = jax.nn.relu(bn(out, params["bn2"]))
    out = bn(conv1x1(out, params["conv3_w"]), params["bn3"])
    if "down_w" in params:
        resid = bn(conv1x1(x, params["down_w"]), params["down_bn"])
    else:
        resid = x
    return jax.nn.relu(out + resid)


# ----------------------------------------------------------------------------
if __name__ == "__main__":
    key = jax.random.PRNGKey(0)
    k_x, k_p1, k_p2 = jax.random.split(key, 3)

    N, inplanes, H, W = 2, 64, 16, 16
    planes = 32                                  # expansion 4 -> 128 channels

    x = jax.random.normal(k_x, (N, inplanes, H, W), jnp.float32)

    # block 1: projection shortcut (inplanes != planes*4)
    p1 = init_bottleneck_params(k_p1, inplanes, planes, with_downsample=True)
    # block 2: identity shortcut (inplanes == planes*4)
    p2 = init_bottleneck_params(k_p2, planes * 4, planes, with_downsample=False)
    prep1 = prepare_bottleneck_params(p1)
    prep2 = prepare_bottleneck_params(p2)

    def two_block_forward(x_nchw):
        # NCHW -> lane-padded NHWC bf16 once; the block chain stays NHWC/bf16
        # (no per-block transpose / re-pad round trips).
        xin = jnp.transpose(x_nchw, (0, 2, 3, 1))
        xin = _pad_axis(xin, 3, prep1["cin_p"]).astype(jnp.bfloat16)
        y = bottleneck_forward_nhwc(xin, prep1, dilation=1)
        y = bottleneck_forward_nhwc(y, prep2, dilation=1)
        y = y[..., :prep2["cout"]].astype(jnp.float32)
        return jnp.transpose(y, (0, 3, 1, 2))

    fwd = jax.jit(two_block_forward)
    out = jax.block_until_ready(fwd(x))

    assert out.shape == (N, planes * 4, H, W), out.shape
    assert bool(jnp.all(jnp.isfinite(out)))

    ref = bottleneck_reference(bottleneck_reference(x, p1), p2)
    rel_err = float(jnp.max(jnp.abs(out - ref)) / (jnp.max(jnp.abs(ref)) + 1e-6))
    # bf16 MXU operands / bf16 inter-block activations vs f32 reference.
    assert rel_err < 0.08, rel_err

    print("KERNEL_OK")
</pallas_src>

<mosaic_0001>
module attributes {stable_mosaic.version = 11 : i64} {
  func.func @_mm_bn_relu_kernel(%arg0: i32, %arg1: memref<512x128xbf16, #tpu.memory_space<vmem>>, %arg2: memref<128x128xbf16, #tpu.memory_space<vmem>>, %arg3: memref<1x128xf32, #tpu.memory_space<vmem>>, %arg4: memref<1x128xf32, #tpu.memory_space<vmem>>, %arg5: memref<512x128xbf16, #tpu.memory_space<vmem>>) attributes {dimension_semantics = [#tpu.dimension_semantics<parallel>], iteration_bounds = array<i64: 1>, scalar_prefetch = 0 : i64, scratch_operands = 0 : i64, tpu.core_type = #tpu.core_type<tc>, window_params = [{transform_indices = @transform_0, window_bounds = array<i64: 512, 128>}, {pipeline_mode = #tpu.pipeline_mode<synchronous>, transform_indices = @transform_1, window_bounds = array<i64: 128, 128>}, {pipeline_mode = #tpu.pipeline_mode<synchronous>, transform_indices = @transform_2, window_bounds = array<i64: 1, 128>}, {pipeline_mode = #tpu.pipeline_mode<synchronous>, transform_indices = @transform_3, window_bounds = array<i64: 1, 128>}, {transform_indices = @transform_4, window_bounds = array<i64: 512, 128>}]} {
    %c0 = arith.constant 0 : index
    %c0_0 = arith.constant 0 : index
    %0 = vector.load %arg1[%c0, %c0_0] : memref<512x128xbf16, #tpu.memory_space<vmem>>, vector<512x128xbf16>
    %c0_1 = arith.constant 0 : index
    %c0_2 = arith.constant 0 : index
    %1 = vector.load %arg2[%c0_1, %c0_2] : memref<128x128xbf16, #tpu.memory_space<vmem>>, vector<128x128xbf16>
    %cst = arith.constant dense<0.000000e+00> : vector<512x128xf32>
    %2 = tpu.matmul %0, %1, %cst {dimension_numbers = #tpu.dot_dimension_numbers<[1], [0], [0], [1], [0, 0, 1, 1], [], []>} : vector<512x128xbf16>, vector<128x128xbf16>, vector<512x128xf32> -> vector<512x128xf32>
    %c0_3 = arith.constant 0 : index
    %c0_4 = arith.constant 0 : index
    %3 = vector.load %arg3[%c0_3, %c0_4] : memref<1x128xf32, #tpu.memory_space<vmem>>, vector<1x128xf32>
    %4 = vector.broadcast %3 : vector<1x128xf32> to vector<512x128xf32>
    %5 = arith.mulf %2, %4 : vector<512x128xf32>
    %c0_5 = arith.constant 0 : index
    %c0_6 = arith.constant 0 : index
    %6 = vector.load %arg4[%c0_5, %c0_6] : memref<1x128xf32, #tpu.memory_space<vmem>>, vector<1x128xf32>
    %7 = vector.broadcast %6 : vector<1x128xf32> to vector<512x128xf32>
    %8 = arith.addf %5, %7 : vector<512x128xf32>
    %cst_7 = arith.constant 0.000000e+00 : f32
    %9 = vector.broadcast %cst_7 : f32 to vector<512x128xf32>
    %10 = arith.maximumf %8, %9 : vector<512x128xf32>
    %11 = arith.truncf %10 : vector<512x128xf32> to vector<512x128xbf16>
    %c0_8 = arith.constant 0 : index
    %c0_9 = arith.constant 0 : index
    %12 = vector.load %arg5[%c0_8, %c0_9] : memref<512x128xbf16, #tpu.memory_space<vmem>>, vector<512x128xbf16>
    tpu.vector_store %arg5[%c0_8, %c0_9], %11 {strides = array<i32>} : memref<512x128xbf16, #tpu.memory_space<vmem>>, vector<512x128xbf16>,
    return
  }
  func.func @transform_0(%arg0: i32) -> (i32, i32) {
    %c0_i32 = arith.constant 0 : i32
    %c0_i32_0 = arith.constant 0 : i32
    return %arg0, %c0_i32 : i32, i32
  }
  func.func @transform_1(%arg0: i32) -> (i32, i32) {
    %c0_i32 = arith.constant 0 : i32
    %c0_i32_0 = arith.constant 0 : i32
    %c0_i32_1 = arith.constant 0 : i32
    return %c0_i32, %c0_i32_0 : i32, i32
  }
  func.func @transform_2(%arg0: i32) -> (i32, i32) {
    %c0_i32 = arith.constant 0 : i32
    %c0_i32_0 = arith.constant 0 : i32
    %c0_i32_1 = arith.constant 0 : i32
    return %c0_i32, %c0_i32_0 : i32, i32
  }
  func.func @transform_3(%arg0: i32) -> (i32, i32) {
    %c0_i32 = arith.constant 0 : i32
    %c0_i32_0 = arith.constant 0 : i32
    %c0_i32_1 = arith.constant 0 : i32
    return %c0_i32, %c0_i32_0 : i32, i32
  }
  func.func @transform_4(%arg0: i32) -> (i32, i32) {
    %c0_i32 = arith.constant 0 : i32
    %c0_i32_0 = arith.constant 0 : i32
    return %arg0, %c0_i32 : i32, i32
  }
}

module attributes {stable_mosaic.version = 11 : i64} {
  func.func @_bottleneck_tail_proj_kernel(%arg0: i32, %arg1: i32, %arg2: memref<1x8x16x128xbf16, #tpu.memory_space<vmem>>, %arg3: memref<1x8x16x128xbf16, #tpu.memory_space<vmem>>, %arg4: memref<1x8x16x128xbf16, #tpu.memory_space<vmem>>, %arg5: memref<1x8x16x128xbf16, #tpu.memory_space<vmem>>, %arg6: memref<3x3x128x128xbf16, #tpu.memory_space<vmem>>, %arg7: memref<1x128xf32, #tpu.memory_space<vmem>>, %arg8: memref<1x128xf32, #tpu.memory_space<vmem>>, %arg9: memref<128x128xbf16, #tpu.memory_space<vmem>>, %arg10: memref<1x128xf32, #tpu.memory_space<vmem>>, %arg11: memref<1x128xf32, #tpu.memory_space<vmem>>, %arg12: memref<128x128xbf16, #tpu.memory_space<vmem>>, %arg13: memref<1x128xf32, #tpu.memory_space<vmem>>, %arg14: memref<1x128xf32, #tpu.memory_space<vmem>>, %arg15: memref<1x8x16x128xbf16, #tpu.memory_space<vmem>>, %arg16: memref<168x128xbf16, #tpu.memory_space<vmem>>) attributes {dimension_semantics = [#tpu.dimension_semantics<parallel>, #tpu.dimension_semantics<parallel>], iteration_bounds = array<i64: 2, 2>, scalar_prefetch = 0 : i64, scratch_operands = 1 : i64, tpu.core_type = #tpu.core_type<tc>, window_params = [{transform_indices = @transform_0, window_bounds = array<i64: 1, 8, 16, 128>}, {transform_indices = @transform_1, window_bounds = array<i64: 1, 8, 16, 128>}, {transform_indices = @transform_2, window_bounds = array<i64: 1, 8, 16, 128>}, {transform_indices = @transform_3, window_bounds = array<i64: 1, 8, 16, 128>}, {pipeline_mode = #tpu.pipeline_mode<synchronous>, transform_indices = @transform_4, window_bounds = array<i64: 3, 3, 128, 128>}, {pipeline_mode = #tpu.pipeline_mode<synchronous>, transform_indices = @transform_5, window_bounds = array<i64: 1, 128>}, {pipeline_mode = #tpu.pipeline_mode<synchronous>, transform_indices = @transform_6, window_bounds = array<i64: 1, 128>}, {pipeline_mode = #tpu.pipeline_mode<synchronous>, transform_indices = @transform_7, window_bounds = array<i64: 128, 128>}, {pipeline_mode = #tpu.pipeline_mode<synchronous>, transform_indices = @transform_8, window_bounds = array<i64: 1, 128>}, {pipeline_mode = #tpu.pipeline_mode<synchronous>, transform_indices = @transform_9, window_bounds = array<i64: 1, 128>}, {pipeline_mode = #tpu.pipeline_mode<synchronous>, transform_indices = @transform_10, window_bounds = array<i64: 128, 128>}, {pipeline_mode = #tpu.pipeline_mode<synchronous>, transform_indices = @transform_11, window_bounds = array<i64: 1, 128>}, {pipeline_mode = #tpu.pipeline_mode<synchronous>, transform_indices = @transform_12, window_bounds = array<i64: 1, 128>}, {transform_indices = @transform_13, window_bounds = array<i64: 1, 8, 16, 128>}]} {
    %c0 = arith.constant 0 : index
    %c0_0 = arith.constant 0 : index
    %c0_1 = arith.constant 0 : index
    %c0_2 = arith.constant 0 : index
    %0 = vector.load %arg2[%c0, %c0_0, %c0_1, %c0_2] : memref<1x8x16x128xbf16, #tpu.memory_space<vmem>>, vector<1x8x16x128xbf16>
    %1 = vector.shape_cast %0 : vector<1x8x16x128xbf16> to vector<8x16x128xbf16>
    %2 = vector.shape_cast %1 : vector<8x16x128xbf16> to vector<128x128xbf16>
    %c17 = arith.constant 17 : index
    %c0_3 = arith.constant 0 : index
    %3 = vector.load %arg16[%c17, %c0_3] : memref<168x128xbf16, #tpu.memory_space<vmem>>, vector<128x128xbf16>
    tpu.vector_store %arg16[%c17, %c0_3], %2 {strides = array<i32>} : memref<168x128xbf16, #tpu.memory_space<vmem>>, vector<128x128xbf16>,
    %c0_i32 = arith.constant 0 : i32
    %4 = arith.cmpi sgt, %arg1, %c0_i32 : i32
    %5 = arith.extui %4 : i1 to i32
    %c0_i32_4 = arith.constant 0 : i32
    %6 = arith.cmpi ne, %5, %c0_i32_4 : i32
    scf.if %6 {
      %c0_100 = arith.constant 0 : index
      %c7 = arith.constant 7 : index
      %c0_101 = arith.constant 0 : index
      %c0_102 = arith.constant 0 : index
      %126 = vector.load %arg3[%c0_100, %c7, %c0_101, %c0_102] : memref<1x8x16x128xbf16, #tpu.memory_space<vmem>>, vector<1x1x16x128xbf16>
      %127 = vector.shape_cast %126 : vector<1x1x16x128xbf16> to vector<1x16x128xbf16>
      %128 = vector.shape_cast %127 : vector<1x16x128xbf16> to vector<16x128xbf16>
      %c1_103 = arith.constant 1 : index
      %c0_104 = arith.constant 0 : index
      %129 = vector.load %arg16[%c1_103, %c0_104] : memref<168x128xbf16, #tpu.memory_space<vmem>>, vector<16x128xbf16>
      tpu.vector_store %arg16[%c1_103, %c0_104], %128 {strides = array<i32>} : memref<168x128xbf16, #tpu.memory_space<vmem>>, vector<16x128xbf16>,
    } else {
    }
    %c0_i32_5 = arith.constant 0 : i32
    %7 = arith.cmpi eq, %arg1, %c0_i32_5 : i32
    %8 = arith.extui %7 : i1 to i32
    %c0_i32_6 = arith.constant 0 : i32
    %9 = arith.cmpi ne, %8, %c0_i32_6 : i32
    scf.if %9 {
      %cst_100 = arith.constant 0.000000e+00 : bf16
      %126 = vector.broadcast %cst_100 : bf16 to vector<16x128xbf16>
      %c1_101 = arith.constant 1 : index
      %c0_102 = arith.constant 0 : index
      %127 = vector.load %arg16[%c1_101, %c0_102] : memref<168x128xbf16, #tpu.memory_space<vmem>>, vector<16x128xbf16>
      tpu.vector_store %arg16[%c1_101, %c0_102], %126 {strides = array<i32>} : memref<168x128xbf16, #tpu.memory_space<vmem>>, vector<16x128xbf16>,
    } else {
    }
    %c1_i32 = arith.constant 1 : i32
    %10 = arith.cmpi slt, %arg1, %c1_i32 : i32
    %11 = arith.extui %10 : i1 to i32
    %c0_i32_7 = arith.constant 0 : i32
    %12 = arith.cmpi ne, %11, %c0_i32_7 : i32
    scf.if %12 {
      %c0_100 = arith.constant 0 : index
      %c0_101 = arith.constant 0 : index
      %c0_102 = arith.constant 0 : index
      %c0_103 = arith.constant 0 : index
      %126 = vector.load %arg4[%c0_100, %c0_101, %c0_102, %c0_103] : memref<1x8x16x128xbf16, #tpu.memory_space<vmem>>, vector<1x1x16x128xbf16>
      %127 = vector.shape_cast %126 : vector<1x1x16x128xbf16> to vector<1x16x128xbf16>
      %128 = vector.shape_cast %127 : vector<1x16x128xbf16> to vector<16x128xbf16>
      %c145 = arith.constant 145 : index
      %c0_104 = arith.constant 0 : index
      %129 = vector.load %arg16[%c145, %c0_104] : memref<168x128xbf16, #tpu.memory_space<vmem>>, vector<16x128xbf16>
      tpu.vector_store %arg16[%c145, %c0_104], %128 {strides = array<i32>} : memref<168x128xbf16, #tpu.memory_space<vmem>>, vector<16x128xbf16>,
    } else {
    }
    %c1_i32_8 = arith.constant 1 : i32
    %13 = arith.cmpi eq, %arg1, %c1_i32_8 : i32
    %14 = arith.extui %13 : i1 to i32
    %c0_i32_9 = arith.constant 0 : i32
    %15 = arith.cmpi ne, %14, %c0_i32_9 : i32
    scf.if %15 {
      %cst_100 = arith.constant 0.000000e+00 : bf16
      %126 = vector.broadcast %cst_100 : bf16 to vector<16x128xbf16>
      %c145 = arith.constant 145 : index
      %c0_101 = arith.constant 0 : index
      %127 = vector.load %arg16[%c145, %c0_101] : memref<168x128xbf16, #tpu.memory_space<vmem>>, vector<16x128xbf16>
      tpu.vector_store %arg16[%c145, %c0_101], %126 {strides = array<i32>} : memref<168x128xbf16, #tpu.memory_space<vmem>>, vector<16x128xbf16>,
    } else {
    }
    %16 = tpu.iota {dimensions = array<i32: 1>} : vector<8x16x1xi32>
    %17 = vector.shape_cast %16 : vector<8x16x1xi32> to vector<128x1xi32>
    %c1_i32_10 = arith.constant 1 : i32
    %18 = vector.broadcast %c1_i32_10 : i32 to vector<128x1xi32>
    %19 = arith.cmpi sge, %17, %18 : vector<128x1xi32>
    %c15_i32 = arith.constant 15 : i32
    %20 = vector.broadcast %c15_i32 : i32 to vector<128x1xi32>
    %21 = arith.cmpi slt, %17, %20 : vector<128x1xi32>
    %c0_11 = arith.constant 0 : index
    %c0_12 = arith.constant 0 : index
    %22 = vector.load %arg16[%c0_11, %c0_12] : memref<168x128xbf16, #tpu.memory_space<vmem>>, vector<128x128xbf16>
    %cst = arith.constant 0.000000e+00 : bf16
    %23 = vector.broadcast %cst : bf16 to vector<128x128xbf16>
    %24 = vector.shape_cast %19 : vector<128x1xi1> to vector<128x1xi1>
    %25 = vector.broadcast %24 : vector<128x1xi1> to vector<128x128xi1>
    %26 = arith.select %25, %22, %23 : vector<128x128xi1>, vector<128x128xbf16>
    %c0_13 = arith.constant 0 : index
    %c0_14 = arith.constant 0 : index
    %c0_15 = arith.constant 0 : index
    %c0_16 = arith.constant 0 : index
    %27 = vector.load %arg6[%c0_13, %c0_14, %c0_15, %c0_16] : memref<3x3x128x128xbf16, #tpu.memory_space<vmem>>, vector<1x1x128x128xbf16>
    %28 = vector.shape_cast %27 : vector<1x1x128x128xbf16> to vector<128x128xbf16>
    %cst_17 = arith.constant dense<0.000000e+00> : vector<128x128xf32>
    %29 = tpu.matmul %26, %28, %cst_17 {dimension_numbers = #tpu.dot_dimension_numbers<[1], [0], [0], [1], [0, 0, 1, 1], [], []>} : vector<128x128xbf16>, vector<128x128xbf16>, vector<128x128xf32> -> vector<128x128xf32>
    %c1 = arith.constant 1 : index
    %c0_18 = arith.constant 0 : index
    %30 = vector.load %arg16[%c1, %c0_18] : memref<168x128xbf16, #tpu.memory_space<vmem>>, vector<128x128xbf16>
    %c0_19 = arith.constant 0 : index
    %c1_20 = arith.constant 1 : index
    %c0_21 = arith.constant 0 : index
    %c0_22 = arith.constant 0 : index
    %31 = vector.load %arg6[%c0_19, %c1_20, %c0_21, %c0_22] : memref<3x3x128x128xbf16, #tpu.memory_space<vmem>>, vector<1x1x128x128xbf16>
    %32 = vector.shape_cast %31 : vector<1x1x128x128xbf16> to vector<128x128xbf16>
    %cst_23 = arith.constant dense<0.000000e+00> : vector<128x128xf32>
    %33 = tpu.matmul %30, %32, %cst_23 {dimension_numbers = #tpu.dot_dimension_numbers<[1], [0], [0], [1], [0, 0, 1, 1], [], []>} : vector<128x128xbf16>, vector<128x128xbf16>, vector<128x128xf32> -> vector<128x128xf32>
    %34 = arith.addf %29, %33 : vector<128x128xf32>
    %c2 = arith.constant 2 : index
    %c0_24 = arith.constant 0 : index
    %35 = vector.load %arg16[%c2, %c0_24] : memref<168x128xbf16, #tpu.memory_space<vmem>>, vector<128x128xbf16>
    %cst_25 = arith.constant 0.000000e+00 : bf16
    %36 = vector.broadcast %cst_25 : bf16 to vector<128x128xbf16>
    %37 = vector.shape_cast %21 : vector<128x1xi1> to vector<128x1xi1>
    %38 = vector.broadcast %37 : vector<128x1xi1> to vector<128x128xi1>
    %39 = arith.select %38, %35, %36 : vector<128x128xi1>, vector<128x128xbf16>
    %c0_26 = arith.constant 0 : index
    %c2_27 = arith.constant 2 : index
    %c0_28 = arith.constant 0 : index
    %c0_29 = arith.constant 0 : index
    %40 = vector.load %arg6[%c0_26, %c2_27, %c0_28, %c0_29] : memref<3x3x128x128xbf16, #tpu.memory_space<vmem>>, vector<1x1x128x128xbf16>
    %41 = vector.shape_cast %40 : vector<1x1x128x128xbf16> to vector<128x128xbf16>
    %cst_30 = arith.constant dense<0.000000e+00> : vector<128x128xf32>
    %42 = tpu.matmul %39, %41, %cst_30 {dimension_numbers = #tpu.dot_dimension_numbers<[1], [0], [0], [1], [0, 0, 1, 1], [], []>} : vector<128x128xbf16>, vector<128x128xbf16>, vector<128x128xf32> -> vector<128x128xf32>
    %43 = arith.addf %34, %42 : vector<128x128xf32>
    %c16 = arith.constant 16 : index
    %c0_31 = arith.constant 0 : index
    %44 = vector.load %arg16[%c16, %c0_31] : memref<168x128xbf16, #tpu.memory_space<vmem>>, vector<128x128xbf16>
    %cst_32 = arith.constant 0.000000e+00 : bf16
    %45 = vector.broadcast %cst_32 : bf16 to vector<128x128xbf16>
    %46 = vector.shape_cast %19 : vector<128x1xi1> to vector<128x1xi1>
    %47 = vector.broadcast %46 : vector<128x1xi1> to vector<128x128xi1>
    %48 = arith.select %47, %44, %45 : vector<128x128xi1>, vector<128x128xbf16>
    %c1_33 = arith.constant 1 : index
    %c0_34 = arith.constant 0 : index
    %c0_35 = arith.constant 0 : index
    %c0_36 = arith.constant 0 : index
    %49 = vector.load %arg6[%c1_33, %c0_34, %c0_35, %c0_36] : memref<3x3x128x128xbf16, #tpu.memory_space<vmem>>, vector<1x1x128x128xbf16>
    %50 = vector.shape_cast %49 : vector<1x1x128x128xbf16> to vector<128x128xbf16>
    %cst_37 = arith.constant dense<0.000000e+00> : vector<128x128xf32>
    %51 = tpu.matmul %48, %50, %cst_37 {dimension_numbers = #tpu.dot_dimension_numbers<[1], [0], [0], [1], [0, 0, 1, 1], [], []>} : vector<128x128xbf16>, vector<128x128xbf16>, vector<128x128xf32> -> vector<128x128xf32>
    %52 = arith.addf %43, %51 : vector<128x128xf32>
    %c17_38 = arith.constant 17 : index
    %c0_39 = arith.constant 0 : index
    %53 = vector.load %arg16[%c17_38, %c0_39] : memref<168x128xbf16, #tpu.memory_space<vmem>>, vector<128x128xbf16>
    %c1_40 = arith.constant 1 : index
    %c1_41 = arith.constant 1 : index
    %c0_42 = arith.constant 0 : index
    %c0_43 = arith.constant 0 : index
    %54 = vector.load %arg6[%c1_40, %c1_41, %c0_42, %c0_43] : memref<3x3x128x128xbf16, #tpu.memory_space<vmem>>, vector<1x1x128x128xbf16>
    %55 = vector.shape_cast %54 : vector<1x1x128x128xbf16> to vector<128x128xbf16>
    %cst_44 = arith.constant dense<0.000000e+00> : vector<128x128xf32>
    %56 = tpu.matmul %53, %55, %cst_44 {dimension_numbers = #tpu.dot_dimension_numbers<[1], [0], [0], [1], [0, 0, 1, 1], [], []>} : vector<128x128xbf16>, vector<128x128xbf16>, vector<128x128xf32> -> vector<128x128xf32>
    %57 = arith.addf %52, %56 : vector<128x128xf32>
    %c18 = arith.constant 18 : index
    %c0_45 = arith.constant 0 : index
    %58 = vector.load %arg16[%c18, %c0_45] : memref<168x128xbf16, #tpu.memory_space<vmem>>, vector<128x128xbf16>
    %cst_46 = arith.constant 0.000000e+00 : bf16
    %59 = vector.broadcast %cst_46 : bf16 to vector<128x128xbf16>
    %60 = vector.shape_cast %21 : vector<128x1xi1> to vector<128x1xi1>
    %61 = vector.broadcast %60 : vector<128x1xi1> to vector<128x128xi1>
    %62 = arith.select %61, %58, %59 : vector<128x128xi1>, vector<128x128xbf16>
    %c1_47 = arith.constant 1 : index
    %c2_48 = arith.constant 2 : index
    %c0_49 = arith.constant 0 : index
    %c0_50 = arith.constant 0 : index
    %63 = vector.load %arg6[%c1_47, %c2_48, %c0_49, %c0_50] : memref<3x3x128x128xbf16, #tpu.memory_space<vmem>>, vector<1x1x128x128xbf16>
    %64 = vector.shape_cast %63 : vector<1x1x128x128xbf16> to vector<128x128xbf16>
    %cst_51 = arith.constant dense<0.000000e+00> : vector<128x128xf32>
    %65 = tpu.matmul %62, %64, %cst_51 {dimension_numbers = #tpu.dot_dimension_numbers<[1], [0], [0], [1], [0, 0, 1, 1], [], []>} : vector<128x128xbf16>, vector<128x128xbf16>, vector<128x128xf32> -> vector<128x128xf32>
    %66 = arith.addf %57, %65 : vector<128x128xf32>
    %c32 = arith.constant 32 : index
    %c0_52 = arith.constant 0 : index
    %67 = vector.load %arg16[%c32, %c0_52] : memref<168x128xbf16, #tpu.memory_space<vmem>>, vector<128x128xbf16>
    %cst_53 = arith.constant 0.000000e+00 : bf16
    %68 = vector.broadcast %cst_53 : bf16 to vector<128x128xbf16>
    %69 = vector.shape_cast %19 : vector<128x1xi1> to vector<128x1xi1>
    %70 = vector.broadcast %69 : vector<128x1xi1> to vector<128x128xi1>
    %71 = arith.select %70, %67, %68 : vector<128x128xi1>, vector<128x128xbf16>
    %c2_54 = arith.constant 2 : index
    %c0_55 = arith.constant 0 : index
    %c0_56 = arith.constant 0 : index
    %c0_57 = arith.constant 0 : index
    %72 = vector.load %arg6[%c2_54, %c0_55, %c0_56, %c0_57] : memref<3x3x128x128xbf16, #tpu.memory_space<vmem>>, vector<1x1x128x128xbf16>
    %73 = vector.shape_cast %72 : vector<1x1x128x128xbf16> to vector<128x128xbf16>
    %cst_58 = arith.constant dense<0.000000e+00> : vector<128x128xf32>
    %74 = tpu.matmul %71, %73, %cst_58 {dimension_numbers = #tpu.dot_dimension_numbers<[1], [0], [0], [1], [0, 0, 1, 1], [], []>} : vector<128x128xbf16>, vector<128x128xbf16>, vector<128x128xf32> -> vector<128x128xf32>
    %75 = arith.addf %66, %74 : vector<128x128xf32>
    %c33 = arith.constant 33 : index
    %c0_59 = arith.constant 0 : index
    %76 = vector.load %arg16[%c33, %c0_59] : memref<168x128xbf16, #tpu.memory_space<vmem>>, vector<128x128xbf16>
    %c2_60 = arith.constant 2 : index
    %c1_61 = arith.constant 1 : index
    %c0_62 = arith.constant 0 : index
    %c0_63 = arith.constant 0 : index
    %77 = vector.load %arg6[%c2_60, %c1_61, %c0_62, %c0_63] : memref<3x3x128x128xbf16, #tpu.memory_space<vmem>>, vector<1x1x128x128xbf16>
    %78 = vector.shape_cast %77 : vector<1x1x128x128xbf16> to vector<128x128xbf16>
    %cst_64 = arith.constant dense<0.000000e+00> : vector<128x128xf32>
    %79 = tpu.matmul %76, %78, %cst_64 {dimension_numbers = #tpu.dot_dimension_numbers<[1], [0], [0], [1], [0, 0, 1, 1], [], []>} : vector<128x128xbf16>, vector<128x128xbf16>, vector<128x128xf32> -> vector<128x128xf32>
    %80 = arith.addf %75, %79 : vector<128x128xf32>
    %c34 = arith.constant 34 : index
    %c0_65 = arith.constant 0 : index
    %81 = vector.load %arg16[%c34, %c0_65] : memref<168x128xbf16, #tpu.memory_space<vmem>>, vector<128x128xbf16>
    %cst_66 = arith.constant 0.000000e+00 : bf16
    %82 = vector.broadcast %cst_66 : bf16 to vector<128x128xbf16>
    %83 = vector.shape_cast %21 : vector<128x1xi1> to vector<128x1xi1>
    %84 = vector.broadcast %83 : vector<128x1xi1> to vector<128x128xi1>
    %85 = arith.select %84, %81, %82 : vector<128x128xi1>, vector<128x128xbf16>
    %c2_67 = arith.constant 2 : index
    %c2_68 = arith.constant 2 : index
    %c0_69 = arith.constant 0 : index
    %c0_70 = arith.constant 0 : index
    %86 = vector.load %arg6[%c2_67, %c2_68, %c0_69, %c0_70] : memref<3x3x128x128xbf16, #tpu.memory_space<vmem>>, vector<1x1x128x128xbf16>
    %87 = vector.shape_cast %86 : vector<1x1x128x128xbf16> to vector<128x128xbf16>
    %cst_71 = arith.constant dense<0.000000e+00> : vector<128x128xf32>
    %88 = tpu.matmul %85, %87, %cst_71 {dimension_numbers = #tpu.dot_dimension_numbers<[1], [0], [0], [1], [0, 0, 1, 1], [], []>} : vector<128x128xbf16>, vector<128x128xbf16>, vector<128x128xf32> -> vector<128x128xf32>
    %89 = arith.addf %80, %88 : vector<128x128xf32>
    %c0_72 = arith.constant 0 : index
    %c0_73 = arith.constant 0 : index
    %90 = vector.load %arg7[%c0_72, %c0_73] : memref<1x128xf32, #tpu.memory_space<vmem>>, vector<1x128xf32>
    %91 = vector.broadcast %90 : vector<1x128xf32> to vector<128x128xf32>
    %92 = arith.mulf %89, %91 : vector<128x128xf32>
    %c0_74 = arith.constant 0 : index
    %c0_75 = arith.constant 0 : index
    %93 = vector.load %arg8[%c0_74, %c0_75] : memref<1x128xf32, #tpu.memory_space<vmem>>, vector<1x128xf32>
    %94 = vector.broadcast %93 : vector<1x128xf32> to vector<128x128xf32>
    %95 = arith.addf %92, %94 : vector<128x128xf32>
    %cst_76 = arith.constant 0.000000e+00 : f32
    %96 = vector.broadcast %cst_76 : f32 to vector<128x128xf32>
    %97 = arith.maximumf %95, %96 : vector<128x128xf32>
    %98 = arith.truncf %97 : vector<128x128xf32> to vector<128x128xbf16>
    %c0_77 = arith.constant 0 : index
    %c0_78 = arith.constant 0 : index
    %99 = vector.load %arg9[%c0_77, %c0_78] : memref<128x128xbf16, #tpu.memory_space<vmem>>, vector<128x128xbf16>
    %cst_79 = arith.constant dense<0.000000e+00> : vector<128x128xf32>
    %100 = tpu.matmul %98, %99, %cst_79 {dimension_numbers = #tpu.dot_dimension_numbers<[1], [0], [0], [1], [0, 0, 1, 1], [], []>} : vector<128x128xbf16>, vector<128x128xbf16>, vector<128x128xf32> -> vector<128x128xf32>
    %c0_80 = arith.constant 0 : index
    %c0_81 = arith.constant 0 : index
    %101 = vector.load %arg10[%c0_80, %c0_81] : memref<1x128xf32, #tpu.memory_space<vmem>>, vector<1x128xf32>
    %102 = vector.broadcast %101 : vector<1x128xf32> to vector<128x128xf32>
    %103 = arith.mulf %100, %102 : vector<128x128xf32>
    %c0_82 = arith.constant 0 : index
    %c0_83 = arith.constant 0 : index
    %104 = vector.load %arg11[%c0_82, %c0_83] : memref<1x128xf32, #tpu.memory_space<vmem>>, vector<1x128xf32>
    %105 = vector.broadcast %104 : vector<1x128xf32> to vector<128x128xf32>
    %106 = arith.addf %103, %105 : vector<128x128xf32>
    %c0_84 = arith.constant 0 : index
    %c0_85 = arith.constant 0 : index
    %c0_86 = arith.constant 0 : index
    %c0_87 = arith.constant 0 : index
    %107 = vector.load %arg5[%c0_84, %c0_85, %c0_86, %c0_87] : memref<1x8x16x128xbf16, #tpu.memory_space<vmem>>, vector<1x8x16x128xbf16>
    %108 = vector.shape_cast %107 : vector<1x8x16x128xbf16> to vector<8x16x128xbf16>
    %109 = vector.shape_cast %108 : vector<8x16x128xbf16> to vector<128x128xbf16>
    %c0_88 = arith.constant 0 : index
    %c0_89 = arith.constant 0 : index
    %110 = vector.load %arg12[%c0_88, %c0_89] : memref<128x128xbf16, #tpu.memory_space<vmem>>, vector<128x128xbf16>
    %cst_90 = arith.constant dense<0.000000e+00> : vector<128x128xf32>
    %111 = tpu.matmul %109, %110, %cst_90 {dimension_numbers = #tpu.dot_dimension_numbers<[1], [0], [0], [1], [0, 0, 1, 1], [], []>} : vector<128x128xbf16>, vector<128x128xbf16>, vector<128x128xf32> -> vector<128x128xf32>
    %c0_91 = arith.constant 0 : index
    %c0_92 = arith.constant 0 : index
    %112 = vector.load %arg13[%c0_91, %c0_92] : memref<1x128xf32, #tpu.memory_space<vmem>>, vector<1x128xf32>
    %113 = vector.broadcast %112 : vector<1x128xf32> to vector<128x128xf32>
    %114 = arith.mulf %111, %113 : vector<128x128xf32>
    %115 = arith.addf %106, %114 : vector<128x128xf32>
    %c0_93 = arith.constant 0 : index
    %c0_94 = arith.constant 0 : index
    %116 = vector.load %arg14[%c0_93, %c0_94] : memref<1x128xf32, #tpu.memory_space<vmem>>, vector<1x128xf32>
    %117 = vector.broadcast %116 : vector<1x128xf32> to vector<128x128xf32>
    %118 = arith.addf %115, %117 : vector<128x128xf32>
    %cst_95 = arith.constant 0.000000e+00 : f32
    %119 = vector.broadcast %cst_95 : f32 to vector<128x128xf32>
    %120 = arith.maximumf %118, %119 : vector<128x128xf32>
    %121 = vector.shape_cast %120 : vector<128x128xf32> to vector<8x16x128xf32>
    %122 = arith.truncf %121 : vector<8x16x128xf32> to vector<8x16x128xbf16>
    %c0_96 = arith.constant 0 : index
    %c0_97 = arith.constant 0 : index
    %c0_98 = arith.constant 0 : index
    %c0_99 = arith.constant 0 : index
    %123 = vector.load %arg15[%c0_96, %c0_97, %c0_98, %c0_99] : memref<1x8x16x128xbf16, #tpu.memory_space<vmem>>, vector<1x8x16x128xbf16>
    %124 = vector.shape_cast %123 : vector<1x8x16x128xbf16> to vector<8x16x128xbf16>
    %125 = vector.shape_cast %122 : vector<8x16x128xbf16> to vector<1x8x16x128xbf16>
    tpu.vector_store %arg15[%c0_96, %c0_97, %c0_98, %c0_99], %125 {strides = array<i32>} : memref<1x8x16x128xbf16, #tpu.memory_space<vmem>>, vector<1x8x16x128xbf16>,
    return
  }
  func.func @transform_0(%arg0: i32, %arg1: i32) -> (i32, i32, i32, i32) {
    %c0_i32 = arith.constant 0 : i32
    %c0_i32_0 = arith.constant 0 : i32
    %c0_i32_1 = arith.constant 0 : i32
    return %arg0, %arg1, %c0_i32, %c0_i32_0 : i32, i32, i32, i32
  }
  func.func @transform_1(%arg0: i32, %arg1: i32) -> (i32, i32, i32, i32) {
    %c1_i32 = arith.constant 1 : i32
    %0 = arith.subi %arg1, %c1_i32 : i32
    %c0_i32 = arith.constant 0 : i32
    %1 = arith.maxsi %0, %c0_i32 : i32
    %c0_i32_0 = arith.constant 0 : i32
    %c0_i32_1 = arith.constant 0 : i32
    %c0_i32_2 = arith.constant 0 : i32
    return %arg0, %1, %c0_i32_0, %c0_i32_1 : i32, i32, i32, i32
  }
  func.func @transform_2(%arg0: i32, %arg1: i32) -> (i32, i32, i32, i32) {
    %c1_i32 = arith.constant 1 : i32
    %0 = arith.addi %arg1, %c1_i32 : i32
    %c1_i32_0 = arith.constant 1 : i32
    %1 = arith.minsi %0, %c1_i32_0 : i32
    %c0_i32 = arith.constant 0 : i32
    %c0_i32_1 = arith.constant 0 : i32
    %c0_i32_2 = arith.constant 0 : i32
    return %arg0, %1, %c0_i32, %c0_i32_1 : i32, i32, i32, i32
  }
  func.func @transform_3(%arg0: i32, %arg1: i32) -> (i32, i32, i32, i32) {
    %c0_i32 = arith.constant 0 : i32
    %c0_i32_0 = arith.constant 0 : i32
    %c0_i32_1 = arith.constant 0 : i32
    return %arg0, %arg1, %c0_i32, %c0_i32_0 : i32, i32, i32, i32
  }
  func.func @transform_4(%arg0: i32, %arg1: i32) -> (i32, i32, i32, i32) {
    %c0_i32 = arith.constant 0 : i32
    %c0_i32_0 = arith.constant 0 : i32
    %c0_i32_1 = arith.constant 0 : i32
    %c0_i32_2 = arith.constant 0 : i32
    %c0_i32_3 = arith.constant 0 : i32
    return %c0_i32, %c0_i32_0, %c0_i32_1, %c0_i32_2 : i32, i32, i32, i32
  }
  func.func @transform_5(%arg0: i32, %arg1: i32) -> (i32, i32) {
    %c0_i32 = arith.constant 0 : i32
    %c0_i32_0 = arith.constant 0 : i32
    %c0_i32_1 = arith.constant 0 : i32
    return %c0_i32, %c0_i32_0 : i32, i32
  }
  func.func @transform_6(%arg0: i32, %arg1: i32) -> (i32, i32) {
    %c0_i32 = arith.constant 0 : i32
    %c0_i32_0 = arith.constant 0 : i32
    %c0_i32_1 = arith.constant 0 : i32
    return %c0_i32, %c0_i32_0 : i32, i32
  }
  func.func @transform_7(%arg0: i32, %arg1: i32) -> (i32, i32) {
    %c0_i32 = arith.constant 0 : i32
    %c0_i32_0 = arith.constant 0 : i32
    %c0_i32_1 = arith.constant 0 : i32
    return %c0_i32, %c0_i32_0 : i32, i32
  }
  func.func @transform_8(%arg0: i32, %arg1: i32) -> (i32, i32) {
    %c0_i32 = arith.constant 0 : i32
    %c0_i32_0 = arith.constant 0 : i32
    %c0_i32_1 = arith.constant 0 : i32
    return %c0_i32, %c0_i32_0 : i32, i32
  }
  func.func @transform_9(%arg0: i32, %arg1: i32) -> (i32, i32) {
    %c0_i32 = arith.constant 0 : i32
    %c0_i32_0 = arith.constant 0 : i32
    %c0_i32_1 = arith.constant 0 : i32
    return %c0_i32, %c0_i32_0 : i32, i32
  }
  func.func @transform_10(%arg0: i32, %arg1: i32) -> (i32, i32) {
    %c0_i32 = arith.constant 0 : i32
    %c0_i32_0 = arith.constant 0 : i32
    %c0_i32_1 = arith.constant 0 : i32
    return %c0_i32, %c0_i32_0 : i32, i32
  }
  func.func @transform_11(%arg0: i32, %arg1: i32) -> (i32, i32) {
    %c0_i32 = arith.constant 0 : i32
    %c0_i32_0 = arith.constant 0 : i32
    %c0_i32_1 = arith.constant 0 : i32
    return %c0_i32, %c0_i32_0 : i32, i32
  }
  func.func @transform_12(%arg0: i32, %arg1: i32) -> (i32, i32) {
    %c0_i32 = arith.constant 0 : i32
    %c0_i32_0 = arith.constant 0 : i32
    %c0_i32_1 = arith.constant 0 : i32
    return %c0_i32, %c0_i32_0 : i32, i32
  }
  func.func @transform_13(%arg0: i32, %arg1: i32) -> (i32, i32, i32, i32) {
    %c0_i32 = arith.constant 0 : i32
    %c0_i32_0 = arith.constant 0 : i32
    %c0_i32_1 = arith.constant 0 : i32
    return %arg0, %arg1, %c0_i32, %c0_i32_0 : i32, i32, i32, i32
  }
}

module attributes {stable_mosaic.version = 11 : i64} {
  func.func @_bottleneck_tail_ident_kernel(%arg0: i32, %arg1: i32, %arg2: memref<1x8x16x128xbf16, #tpu.memory_space<vmem>>, %arg3: memref<1x8x16x128xbf16, #tpu.memory_space<vmem>>, %arg4: memref<1x8x16x128xbf16, #tpu.memory_space<vmem>>, %arg5: memref<1x8x16x128xbf16, #tpu.memory_space<vmem>>, %arg6: memref<3x3x128x128xbf16, #tpu.memory_space<vmem>>, %arg7: memref<1x128xf32, #tpu.memory_space<vmem>>, %arg8: memref<1x128xf32, #tpu.memory_space<vmem>>, %arg9: memref<128x128xbf16, #tpu.memory_space<vmem>>, %arg10: memref<1x128xf32, #tpu.memory_space<vmem>>, %arg11: memref<1x128xf32, #tpu.memory_space<vmem>>, %arg12: memref<1x8x16x128xbf16, #tpu.memory_space<vmem>>, %arg13: memref<168x128xbf16, #tpu.memory_space<vmem>>) attributes {dimension_semantics = [#tpu.dimension_semantics<parallel>, #tpu.dimension_semantics<parallel>], iteration_bounds = array<i64: 2, 2>, scalar_prefetch = 0 : i64, scratch_operands = 1 : i64, tpu.core_type = #tpu.core_type<tc>, window_params = [{transform_indices = @transform_0, window_bounds = array<i64: 1, 8, 16, 128>}, {transform_indices = @transform_1, window_bounds = array<i64: 1, 8, 16, 128>}, {transform_indices = @transform_2, window_bounds = array<i64: 1, 8, 16, 128>}, {transform_indices = @transform_3, window_bounds = array<i64: 1, 8, 16, 128>}, {pipeline_mode = #tpu.pipeline_mode<synchronous>, transform_indices = @transform_4, window_bounds = array<i64: 3, 3, 128, 128>}, {pipeline_mode = #tpu.pipeline_mode<synchronous>, transform_indices = @transform_5, window_bounds = array<i64: 1, 128>}, {pipeline_mode = #tpu.pipeline_mode<synchronous>, transform_indices = @transform_6, window_bounds = array<i64: 1, 128>}, {pipeline_mode = #tpu.pipeline_mode<synchronous>, transform_indices = @transform_7, window_bounds = array<i64: 128, 128>}, {pipeline_mode = #tpu.pipeline_mode<synchronous>, transform_indices = @transform_8, window_bounds = array<i64: 1, 128>}, {pipeline_mode = #tpu.pipeline_mode<synchronous>, transform_indices = @transform_9, window_bounds = array<i64: 1, 128>}, {transform_indices = @transform_10, window_bounds = array<i64: 1, 8, 16, 128>}]} {
    %c0 = arith.constant 0 : index
    %c0_0 = arith.constant 0 : index
    %c0_1 = arith.constant 0 : index
    %c0_2 = arith.constant 0 : index
    %0 = vector.load %arg2[%c0, %c0_0, %c0_1, %c0_2] : memref<1x8x16x128xbf16, #tpu.memory_space<vmem>>, vector<1x8x16x128xbf16>
    %1 = vector.shape_cast %0 : vector<1x8x16x128xbf16> to vector<8x16x128xbf16>
    %2 = vector.shape_cast %1 : vector<8x16x128xbf16> to vector<128x128xbf16>
    %c17 = arith.constant 17 : index
    %c0_3 = arith.constant 0 : index
    %3 = vector.load %arg13[%c17, %c0_3] : memref<168x128xbf16, #tpu.memory_space<vmem>>, vector<128x128xbf16>
    tpu.vector_store %arg13[%c17, %c0_3], %2 {strides = array<i32>} : memref<168x128xbf16, #tpu.memory_space<vmem>>, vector<128x128xbf16>,
    %c0_i32 = arith.constant 0 : i32
    %4 = arith.cmpi sgt, %arg1, %c0_i32 : i32
    %5 = arith.extui %4 : i1 to i32
    %c0_i32_4 = arith.constant 0 : i32
    %6 = arith.cmpi ne, %5, %c0_i32_4 : i32
    scf.if %6 {
      %c0_93 = arith.constant 0 : index
      %c7 = arith.constant 7 : index
      %c0_94 = arith.constant 0 : index
      %c0_95 = arith.constant 0 : index
      %119 = vector.load %arg3[%c0_93, %c7, %c0_94, %c0_95] : memref<1x8x16x128xbf16, #tpu.memory_space<vmem>>, vector<1x1x16x128xbf16>
      %120 = vector.shape_cast %119 : vector<1x1x16x128xbf16> to vector<1x16x128xbf16>
      %121 = vector.shape_cast %120 : vector<1x16x128xbf16> to vector<16x128xbf16>
      %c1_96 = arith.constant 1 : index
      %c0_97 = arith.constant 0 : index
      %122 = vector.load %arg13[%c1_96, %c0_97] : memref<168x128xbf16, #tpu.memory_space<vmem>>, vector<16x128xbf16>
      tpu.vector_store %arg13[%c1_96, %c0_97], %121 {strides = array<i32>} : memref<168x128xbf16, #tpu.memory_space<vmem>>, vector<16x128xbf16>,
    } else {
    }
    %c0_i32_5 = arith.constant 0 : i32
    %7 = arith.cmpi eq, %arg1, %c0_i32_5 : i32
    %8 = arith.extui %7 : i1 to i32
    %c0_i32_6 = arith.constant 0 : i32
    %9 = arith.cmpi ne, %8, %c0_i32_6 : i32
    scf.if %9 {
      %cst_93 = arith.constant 0.000000e+00 : bf16
      %119 = vector.broadcast %cst_93 : bf16 to vector<16x128xbf16>
      %c1_94 = arith.constant 1 : index
      %c0_95 = arith.constant 0 : index
      %120 = vector.load %arg13[%c1_94, %c0_95] : memref<168x128xbf16, #tpu.memory_space<vmem>>, vector<16x128xbf16>
      tpu.vector_store %arg13[%c1_94, %c0_95], %119 {strides = array<i32>} : memref<168x128xbf16, #tpu.memory_space<vmem>>, vector<16x128xbf16>,
    } else {
    }
    %c1_i32 = arith.constant 1 : i32
    %10 = arith.cmpi slt, %arg1, %c1_i32 : i32
    %11 = arith.extui %10 : i1 to i32
    %c0_i32_7 = arith.constant 0 : i32
    %12 = arith.cmpi ne, %11, %c0_i32_7 : i32
    scf.if %12 {
      %c0_93 = arith.constant 0 : index
      %c0_94 = arith.constant 0 : index
      %c0_95 = arith.constant 0 : index
      %c0_96 = arith.constant 0 : index
      %119 = vector.load %arg4[%c0_93, %c0_94, %c0_95, %c0_96] : memref<1x8x16x128xbf16, #tpu.memory_space<vmem>>, vector<1x1x16x128xbf16>
      %120 = vector.shape_cast %119 : vector<1x1x16x128xbf16> to vector<1x16x128xbf16>
      %121 = vector.shape_cast %120 : vector<1x16x128xbf16> to vector<16x128xbf16>
      %c145 = arith.constant 145 : index
      %c0_97 = arith.constant 0 : index
      %122 = vector.load %arg13[%c145, %c0_97] : memref<168x128xbf16, #tpu.memory_space<vmem>>, vector<16x128xbf16>
      tpu.vector_store %arg13[%c145, %c0_97], %121 {strides = array<i32>} : memref<168x128xbf16, #tpu.memory_space<vmem>>, vector<16x128xbf16>,
    } else {
    }
    %c1_i32_8 = arith.constant 1 : i32
    %13 = arith.cmpi eq, %arg1, %c1_i32_8 : i32
    %14 = arith.extui %13 : i1 to i32
    %c0_i32_9 = arith.constant 0 : i32
    %15 = arith.cmpi ne, %14, %c0_i32_9 : i32
    scf.if %15 {
      %cst_93 = arith.constant 0.000000e+00 : bf16
      %119 = vector.broadcast %cst_93 : bf16 to vector<16x128xbf16>
      %c145 = arith.constant 145 : index
      %c0_94 = arith.constant 0 : index
      %120 = vector.load %arg13[%c145, %c0_94] : memref<168x128xbf16, #tpu.memory_space<vmem>>, vector<16x128xbf16>
      tpu.vector_store %arg13[%c145, %c0_94], %119 {strides = array<i32>} : memref<168x128xbf16, #tpu.memory_space<vmem>>, vector<16x128xbf16>,
    } else {
    }
    %16 = tpu.iota {dimensions = array<i32: 1>} : vector<8x16x1xi32>
    %17 = vector.shape_cast %16 : vector<8x16x1xi32> to vector<128x1xi32>
    %c1_i32_10 = arith.constant 1 : i32
    %18 = vector.broadcast %c1_i32_10 : i32 to vector<128x1xi32>
    %19 = arith.cmpi sge, %17, %18 : vector<128x1xi32>
    %c15_i32 = arith.constant 15 : i32
    %20 = vector.broadcast %c15_i32 : i32 to vector<128x1xi32>
    %21 = arith.cmpi slt, %17, %20 : vector<128x1xi32>
    %c0_11 = arith.constant 0 : index
    %c0_12 = arith.constant 0 : index
    %22 = vector.load %arg13[%c0_11, %c0_12] : memref<168x128xbf16, #tpu.memory_space<vmem>>, vector<128x128xbf16>
    %cst = arith.constant 0.000000e+00 : bf16
    %23 = vector.broadcast %cst : bf16 to vector<128x128xbf16>
    %24 = vector.shape_cast %19 : vector<128x1xi1> to vector<128x1xi1>
    %25 = vector.broadcast %24 : vector<128x1xi1> to vector<128x128xi1>
    %26 = arith.select %25, %22, %23 : vector<128x128xi1>, vector<128x128xbf16>
    %c0_13 = arith.constant 0 : index
    %c0_14 = arith.constant 0 : index
    %c0_15 = arith.constant 0 : index
    %c0_16 = arith.constant 0 : index
    %27 = vector.load %arg6[%c0_13, %c0_14, %c0_15, %c0_16] : memref<3x3x128x128xbf16, #tpu.memory_space<vmem>>, vector<1x1x128x128xbf16>
    %28 = vector.shape_cast %27 : vector<1x1x128x128xbf16> to vector<128x128xbf16>
    %cst_17 = arith.constant dense<0.000000e+00> : vector<128x128xf32>
    %29 = tpu.matmul %26, %28, %cst_17 {dimension_numbers = #tpu.dot_dimension_numbers<[1], [0], [0], [1], [0, 0, 1, 1], [], []>} : vector<128x128xbf16>, vector<128x128xbf16>, vector<128x128xf32> -> vector<128x128xf32>
    %c1 = arith.constant 1 : index
    %c0_18 = arith.constant 0 : index
    %30 = vector.load %arg13[%c1, %c0_18] : memref<168x128xbf16, #tpu.memory_space<vmem>>, vector<128x128xbf16>
    %c0_19 = arith.constant 0 : index
    %c1_20 = arith.constant 1 : index
    %c0_21 = arith.constant 0 : index
    %c0_22 = arith.constant 0 : index
    %31 = vector.load %arg6[%c0_19, %c1_20, %c0_21, %c0_22] : memref<3x3x128x128xbf16, #tpu.memory_space<vmem>>, vector<1x1x128x128xbf16>
    %32 = vector.shape_cast %31 : vector<1x1x128x128xbf16> to vector<128x128xbf16>
    %cst_23 = arith.constant dense<0.000000e+00> : vector<128x128xf32>
    %33 = tpu.matmul %30, %32, %cst_23 {dimension_numbers = #tpu.dot_dimension_numbers<[1], [0], [0], [1], [0, 0, 1, 1], [], []>} : vector<128x128xbf16>, vector<128x128xbf16>, vector<128x128xf32> -> vector<128x128xf32>
    %34 = arith.addf %29, %33 : vector<128x128xf32>
    %c2 = arith.constant 2 : index
    %c0_24 = arith.constant 0 : index
    %35 = vector.load %arg13[%c2, %c0_24] : memref<168x128xbf16, #tpu.memory_space<vmem>>, vector<128x128xbf16>
    %cst_25 = arith.constant 0.000000e+00 : bf16
    %36 = vector.broadcast %cst_25 : bf16 to vector<128x128xbf16>
    %37 = vector.shape_cast %21 : vector<128x1xi1> to vector<128x1xi1>
    %38 = vector.broadcast %37 : vector<128x1xi1> to vector<128x128xi1>
    %39 = arith.select %38, %35, %36 : vector<128x128xi1>, vector<128x128xbf16>
    %c0_26 = arith.constant 0 : index
    %c2_27 = arith.constant 2 : index
    %c0_28 = arith.constant 0 : index
    %c0_29 = arith.constant 0 : index
    %40 = vector.load %arg6[%c0_26, %c2_27, %c0_28, %c0_29] : memref<3x3x128x128xbf16, #tpu.memory_space<vmem>>, vector<1x1x128x128xbf16>
    %41 = vector.shape_cast %40 : vector<1x1x128x128xbf16> to vector<128x128xbf16>
    %cst_30 = arith.constant dense<0.000000e+00> : vector<128x128xf32>
    %42 = tpu.matmul %39, %41, %cst_30 {dimension_numbers = #tpu.dot_dimension_numbers<[1], [0], [0], [1], [0, 0, 1, 1], [], []>} : vector<128x128xbf16>, vector<128x128xbf16>, vector<128x128xf32> -> vector<128x128xf32>
    %43 = arith.addf %34, %42 : vector<128x128xf32>
    %c16 = arith.constant 16 : index
    %c0_31 = arith.constant 0 : index
    %44 = vector.load %arg13[%c16, %c0_31] : memref<168x128xbf16, #tpu.memory_space<vmem>>, vector<128x128xbf16>
    %cst_32 = arith.constant 0.000000e+00 : bf16
    %45 = vector.broadcast %cst_32 : bf16 to vector<128x128xbf16>
    %46 = vector.shape_cast %19 : vector<128x1xi1> to vector<128x1xi1>
    %47 = vector.broadcast %46 : vector<128x1xi1> to vector<128x128xi1>
    %48 = arith.select %47, %44, %45 : vector<128x128xi1>, vector<128x128xbf16>
    %c1_33 = arith.constant 1 : index
    %c0_34 = arith.constant 0 : index
    %c0_35 = arith.constant 0 : index
    %c0_36 = arith.constant 0 : index
    %49 = vector.load %arg6[%c1_33, %c0_34, %c0_35, %c0_36] : memref<3x3x128x128xbf16, #tpu.memory_space<vmem>>, vector<1x1x128x128xbf16>
    %50 = vector.shape_cast %49 : vector<1x1x128x128xbf16> to vector<128x128xbf16>
    %cst_37 = arith.constant dense<0.000000e+00> : vector<128x128xf32>
    %51 = tpu.matmul %48, %50, %cst_37 {dimension_numbers = #tpu.dot_dimension_numbers<[1], [0], [0], [1], [0, 0, 1, 1], [], []>} : vector<128x128xbf16>, vector<128x128xbf16>, vector<128x128xf32> -> vector<128x128xf32>
    %52 = arith.addf %43, %51 : vector<128x128xf32>
    %c17_38 = arith.constant 17 : index
    %c0_39 = arith.constant 0 : index
    %53 = vector.load %arg13[%c17_38, %c0_39] : memref<168x128xbf16, #tpu.memory_space<vmem>>, vector<128x128xbf16>
    %c1_40 = arith.constant 1 : index
    %c1_41 = arith.constant 1 : index
    %c0_42 = arith.constant 0 : index
    %c0_43 = arith.constant 0 : index
    %54 = vector.load %arg6[%c1_40, %c1_41, %c0_42, %c0_43] : memref<3x3x128x128xbf16, #tpu.memory_space<vmem>>, vector<1x1x128x128xbf16>
    %55 = vector.shape_cast %54 : vector<1x1x128x128xbf16> to vector<128x128xbf16>
    %cst_44 = arith.constant dense<0.000000e+00> : vector<128x128xf32>
    %56 = tpu.matmul %53, %55, %cst_44 {dimension_numbers = #tpu.dot_dimension_numbers<[1], [0], [0], [1], [0, 0, 1, 1], [], []>} : vector<128x128xbf16>, vector<128x128xbf16>, vector<128x128xf32> -> vector<128x128xf32>
    %57 = arith.addf %52, %56 : vector<128x128xf32>
    %c18 = arith.constant 18 : index
    %c0_45 = arith.constant 0 : index
    %58 = vector.load %arg13[%c18, %c0_45] : memref<168x128xbf16, #tpu.memory_space<vmem>>, vector<128x128xbf16>
    %cst_46 = arith.constant 0.000000e+00 : bf16
    %59 = vector.broadcast %cst_46 : bf16 to vector<128x128xbf16>
    %60 = vector.shape_cast %21 : vector<128x1xi1> to vector<128x1xi1>
    %61 = vector.broadcast %60 : vector<128x1xi1> to vector<128x128xi1>
    %62 = arith.select %61, %58, %59 : vector<128x128xi1>, vector<128x128xbf16>
    %c1_47 = arith.constant 1 : index
    %c2_48 = arith.constant 2 : index
    %c0_49 = arith.constant 0 : index
    %c0_50 = arith.constant 0 : index
    %63 = vector.load %arg6[%c1_47, %c2_48, %c0_49, %c0_50] : memref<3x3x128x128xbf16, #tpu.memory_space<vmem>>, vector<1x1x128x128xbf16>
    %64 = vector.shape_cast %63 : vector<1x1x128x128xbf16> to vector<128x128xbf16>
    %cst_51 = arith.constant dense<0.000000e+00> : vector<128x128xf32>
    %65 = tpu.matmul %62, %64, %cst_51 {dimension_numbers = #tpu.dot_dimension_numbers<[1], [0], [0], [1], [0, 0, 1, 1], [], []>} : vector<128x128xbf16>, vector<128x128xbf16>, vector<128x128xf32> -> vector<128x128xf32>
    %66 = arith.addf %57, %65 : vector<128x128xf32>
    %c32 = arith.constant 32 : index
    %c0_52 = arith.constant 0 : index
    %67 = vector.load %arg13[%c32, %c0_52] : memref<168x128xbf16, #tpu.memory_space<vmem>>, vector<128x128xbf16>
    %cst_53 = arith.constant 0.000000e+00 : bf16
    %68 = vector.broadcast %cst_53 : bf16 to vector<128x128xbf16>
    %69 = vector.shape_cast %19 : vector<128x1xi1> to vector<128x1xi1>
    %70 = vector.broadcast %69 : vector<128x1xi1> to vector<128x128xi1>
    %71 = arith.select %70, %67, %68 : vector<128x128xi1>, vector<128x128xbf16>
    %c2_54 = arith.constant 2 : index
    %c0_55 = arith.constant 0 : index
    %c0_56 = arith.constant 0 : index
    %c0_57 = arith.constant 0 : index
    %72 = vector.load %arg6[%c2_54, %c0_55, %c0_56, %c0_57] : memref<3x3x128x128xbf16, #tpu.memory_space<vmem>>, vector<1x1x128x128xbf16>
    %73 = vector.shape_cast %72 : vector<1x1x128x128xbf16> to vector<128x128xbf16>
    %cst_58 = arith.constant dense<0.000000e+00> : vector<128x128xf32>
    %74 = tpu.matmul %71, %73, %cst_58 {dimension_numbers = #tpu.dot_dimension_numbers<[1], [0], [0], [1], [0, 0, 1, 1], [], []>} : vector<128x128xbf16>, vector<128x128xbf16>, vector<128x128xf32> -> vector<128x128xf32>
    %75 = arith.addf %66, %74 : vector<128x128xf32>
    %c33 = arith.constant 33 : index
    %c0_59 = arith.constant 0 : index
    %76 = vector.load %arg13[%c33, %c0_59] : memref<168x128xbf16, #tpu.memory_space<vmem>>, vector<128x128xbf16>
    %c2_60 = arith.constant 2 : index
    %c1_61 = arith.constant 1 : index
    %c0_62 = arith.constant 0 : index
    %c0_63 = arith.constant 0 : index
    %77 = vector.load %arg6[%c2_60, %c1_61, %c0_62, %c0_63] : memref<3x3x128x128xbf16, #tpu.memory_space<vmem>>, vector<1x1x128x128xbf16>
    %78 = vector.shape_cast %77 : vector<1x1x128x128xbf16> to vector<128x128xbf16>
    %cst_64 = arith.constant dense<0.000000e+00> : vector<128x128xf32>
    %79 = tpu.matmul %76, %78, %cst_64 {dimension_numbers = #tpu.dot_dimension_numbers<[1], [0], [0], [1], [0, 0, 1, 1], [], []>} : vector<128x128xbf16>, vector<128x128xbf16>, vector<128x128xf32> -> vector<128x128xf32>
    %80 = arith.addf %75, %79 : vector<128x128xf32>
    %c34 = arith.constant 34 : index
    %c0_65 = arith.constant 0 : index
    %81 = vector.load %arg13[%c34, %c0_65] : memref<168x128xbf16, #tpu.memory_space<vmem>>, vector<128x128xbf16>
    %cst_66 = arith.constant 0.000000e+00 : bf16
    %82 = vector.broadcast %cst_66 : bf16 to vector<128x128xbf16>
    %83 = vector.shape_cast %21 : vector<128x1xi1> to vector<128x1xi1>
    %84 = vector.broadcast %83 : vector<128x1xi1> to vector<128x128xi1>
    %85 = arith.select %84, %81, %82 : vector<128x128xi1>, vector<128x128xbf16>
    %c2_67 = arith.constant 2 : index
    %c2_68 = arith.constant 2 : index
    %c0_69 = arith.constant 0 : index
    %c0_70 = arith.constant 0 : index
    %86 = vector.load %arg6[%c2_67, %c2_68, %c0_69, %c0_70] : memref<3x3x128x128xbf16, #tpu.memory_space<vmem>>, vector<1x1x128x128xbf16>
    %87 = vector.shape_cast %86 : vector<1x1x128x128xbf16> to vector<128x128xbf16>
    %cst_71 = arith.constant dense<0.000000e+00> : vector<128x128xf32>
    %88 = tpu.matmul %85, %87, %cst_71 {dimension_numbers = #tpu.dot_dimension_numbers<[1], [0], [0], [1], [0, 0, 1, 1], [], []>} : vector<128x128xbf16>, vector<128x128xbf16>, vector<128x128xf32> -> vector<128x128xf32>
    %89 = arith.addf %80, %88 : vector<128x128xf32>
    %c0_72 = arith.constant 0 : index
    %c0_73 = arith.constant 0 : index
    %90 = vector.load %arg7[%c0_72, %c0_73] : memref<1x128xf32, #tpu.memory_space<vmem>>, vector<1x128xf32>
    %91 = vector.broadcast %90 : vector<1x128xf32> to vector<128x128xf32>
    %92 = arith.mulf %89, %91 : vector<128x128xf32>
    %c0_74 = arith.constant 0 : index
    %c0_75 = arith.constant 0 : index
    %93 = vector.load %arg8[%c0_74, %c0_75] : memref<1x128xf32, #tpu.memory_space<vmem>>, vector<1x128xf32>
    %94 = vector.broadcast %93 : vector<1x128xf32> to vector<128x128xf32>
    %95 = arith.addf %92, %94 : vector<128x128xf32>
    %cst_76 = arith.constant 0.000000e+00 : f32
    %96 = vector.broadcast %cst_76 : f32 to vector<128x128xf32>
    %97 = arith.maximumf %95, %96 : vector<128x128xf32>
    %98 = arith.truncf %97 : vector<128x128xf32> to vector<128x128xbf16>
    %c0_77 = arith.constant 0 : index
    %c0_78 = arith.constant 0 : index
    %99 = vector.load %arg9[%c0_77, %c0_78] : memref<128x128xbf16, #tpu.memory_space<vmem>>, vector<128x128xbf16>
    %cst_79 = arith.constant dense<0.000000e+00> : vector<128x128xf32>
    %100 = tpu.matmul %98, %99, %cst_79 {dimension_numbers = #tpu.dot_dimension_numbers<[1], [0], [0], [1], [0, 0, 1, 1], [], []>} : vector<128x128xbf16>, vector<128x128xbf16>, vector<128x128xf32> -> vector<128x128xf32>
    %c0_80 = arith.constant 0 : index
    %c0_81 = arith.constant 0 : index
    %101 = vector.load %arg10[%c0_80, %c0_81] : memref<1x128xf32, #tpu.memory_space<vmem>>, vector<1x128xf32>
    %102 = vector.broadcast %101 : vector<1x128xf32> to vector<128x128xf32>
    %103 = arith.mulf %100, %102 : vector<128x128xf32>
    %c0_82 = arith.constant 0 : index
    %c0_83 = arith.constant 0 : index
    %104 = vector.load %arg11[%c0_82, %c0_83] : memref<1x128xf32, #tpu.memory_space<vmem>>, vector<1x128xf32>
    %105 = vector.broadcast %104 : vector<1x128xf32> to vector<128x128xf32>
    %106 = arith.addf %103, %105 : vector<128x128xf32>
    %c0_84 = arith.constant 0 : index
    %c0_85 = arith.constant 0 : index
    %c0_86 = arith.constant 0 : index
    %c0_87 = arith.constant 0 : index
    %107 = vector.load %arg5[%c0_84, %c0_85, %c0_86, %c0_87] : memref<1x8x16x128xbf16, #tpu.memory_space<vmem>>, vector<1x8x16x128xbf16>
    %108 = vector.shape_cast %107 : vector<1x8x16x128xbf16> to vector<8x16x128xbf16>
    %109 = vector.shape_cast %108 : vector<8x16x128xbf16> to vector<128x128xbf16>
    %110 = arith.extf %109 : vector<128x128xbf16> to vector<128x128xf32>
    %111 = arith.addf %106, %110 : vector<128x128xf32>
    %cst_88 = arith.constant 0.000000e+00 : f32
    %112 = vector.broadcast %cst_88 : f32 to vector<128x128xf32>
    %113 = arith.maximumf %111, %112 : vector<128x128xf32>
    %114 = vector.shape_cast %113 : vector<128x128xf32> to vector<8x16x128xf32>
    %115 = arith.truncf %114 : vector<8x16x128xf32> to vector<8x16x128xbf16>
    %c0_89 = arith.constant 0 : index
    %c0_90 = arith.constant 0 : index
    %c0_91 = arith.constant 0 : index
    %c0_92 = arith.constant 0 : index
    %116 = vector.load %arg12[%c0_89, %c0_90, %c0_91, %c0_92] : memref<1x8x16x128xbf16, #tpu.memory_space<vmem>>, vector<1x8x16x128xbf16>
    %117 = vector.shape_cast %116 : vector<1x8x16x128xbf16> to vector<8x16x128xbf16>
    %118 = vector.shape_cast %115 : vector<8x16x128xbf16> to vector<1x8x16x128xbf16>
    tpu.vector_store %arg12[%c0_89, %c0_90, %c0_91, %c0_92], %118 {strides = array<i32>} : memref<1x8x16x128xbf16, #tpu.memory_space<vmem>>, vector<1x8x16x128xbf16>,
    return
  }
  func.func @transform_0(%arg0: i32, %arg1: i32) -> (i32, i32, i32, i32) {
    %c0_i32 = arith.constant 0 : i32
    %c0_i32_0 = arith.constant 0 : i32
    %c0_i32_1 = arith.constant 0 : i32
    return %arg0, %arg1, %c0_i32, %c0_i32_0 : i32, i32, i32, i32
  }
  func.func @transform_1(%arg0: i32, %arg1: i32) -> (i32, i32, i32, i32) {
    %c1_i32 = arith.constant 1 : i32
    %0 = arith.subi %arg1, %c1_i32 : i32
    %c0_i32 = arith.constant 0 : i32
    %1 = arith.maxsi %0, %c0_i32 : i32
    %c0_i32_0 = arith.constant 0 : i32
    %c0_i32_1 = arith.constant 0 : i32
    %c0_i32_2 = arith.constant 0 : i32
    return %arg0, %1, %c0_i32_0, %c0_i32_1 : i32, i32, i32, i32
  }
  func.func @transform_2(%arg0: i32, %arg1: i32) -> (i32, i32, i32, i32) {
    %c1_i32 = arith.constant 1 : i32
    %0 = arith.addi %arg1, %c1_i32 : i32
    %c1_i32_0 = arith.constant 1 : i32
    %1 = arith.minsi %0, %c1_i32_0 : i32
    %c0_i32 = arith.constant 0 : i32
    %c0_i32_1 = arith.constant 0 : i32
    %c0_i32_2 = arith.constant 0 : i32
    return %arg0, %1, %c0_i32, %c0_i32_1 : i32, i32, i32, i32
  }
  func.func @transform_3(%arg0: i32, %arg1: i32) -> (i32, i32, i32, i32) {
    %c0_i32 = arith.constant 0 : i32
    %c0_i32_0 = arith.constant 0 : i32
    %c0_i32_1 = arith.constant 0 : i32
    return %arg0, %arg1, %c0_i32, %c0_i32_0 : i32, i32, i32, i32
  }
  func.func @transform_4(%arg0: i32, %arg1: i32) -> (i32, i32, i32, i32) {
    %c0_i32 = arith.constant 0 : i32
    %c0_i32_0 = arith.constant 0 : i32
    %c0_i32_1 = arith.constant 0 : i32
    %c0_i32_2 = arith.constant 0 : i32
    %c0_i32_3 = arith.constant 0 : i32
    return %c0_i32, %c0_i32_0, %c0_i32_1, %c0_i32_2 : i32, i32, i32, i32
  }
  func.func @transform_5(%arg0: i32, %arg1: i32) -> (i32, i32) {
    %c0_i32 = arith.constant 0 : i32
    %c0_i32_0 = arith.constant 0 : i32
    %c0_i32_1 = arith.constant 0 : i32
    return %c0_i32, %c0_i32_0 : i32, i32
  }
  func.func @transform_6(%arg0: i32, %arg1: i32) -> (i32, i32) {
    %c0_i32 = arith.constant 0 : i32
    %c0_i32_0 = arith.constant 0 : i32
    %c0_i32_1 = arith.constant 0 : i32
    return %c0_i32, %c0_i32_0 : i32, i32
  }
  func.func @transform_7(%arg0: i32, %arg1: i32) -> (i32, i32) {
    %c0_i32 = arith.constant 0 : i32
    %c0_i32_0 = arith.constant 0 : i32
    %c0_i32_1 = arith.constant 0 : i32
    return %c0_i32, %c0_i32_0 : i32, i32
  }
  func.func @transform_8(%arg0: i32, %arg1: i32) -> (i32, i32) {
    %c0_i32 = arith.constant 0 : i32
    %c0_i32_0 = arith.constant 0 : i32
    %c0_i32_1 = arith.constant 0 : i32
    return %c0_i32, %c0_i32_0 : i32, i32
  }
  func.func @transform_9(%arg0: i32, %arg1: i32) -> (i32, i32) {
    %c0_i32 = arith.constant 0 : i32
    %c0_i32_0 = arith.constant 0 : i32
    %c0_i32_1 = arith.constant 0 : i32
    return %c0_i32, %c0_i32_0 : i32, i32
  }
  func.func @transform_10(%arg0: i32, %arg1: i32) -> (i32, i32, i32, i32) {
    %c0_i32 = arith.constant 0 : i32
    %c0_i32_0 = arith.constant 0 : i32
    %c0_i32_1 = arith.constant 0 : i32
    return %arg0, %arg1, %c0_i32, %c0_i32_0 : i32, i32, i32, i32
  }
}

</mosaic_0001>

<llo_original>
// kernel: two_block_forward.4
$region0: #{two_block_forward.4}
  #allocation0 [shape = 'u32[]', space=smem, size = 0x4, offset = 0x4, fixed_abs, tag = 'smem constant byte address 0x4 - core index']
  #allocation1 [shape = 'u32[144,128]{1,0:T(1,128)}', space=vmem, size = 0x12000, scoped, tag = 'internal scratch']
  %s0 = inlined_call_operand.vmem [shape: bf16[512,128], index: 0, kind: input, shape index: {}]
  %s1 = inlined_call_operand.vmem [shape: bf16[128,128], index: 1, kind: input, shape index: {}]
  %s2 = inlined_call_operand.vmem [shape: f32[1,128], index: 2, kind: input, shape index: {}]
  %s3 = inlined_call_operand.vmem [shape: f32[1,128], index: 3, kind: input, shape index: {}]
  %s4 = inlined_call_operand.vmem [shape: bf16[512,128], index: 4, kind: output, shape index: {}]
  %s5 = sld [smem:[#allocation0]]
  $region26: #{two_block_forward.4} parent=0
    _
  %s7 = ssub.s32 1, %s5
  %s8 = scalar_select 0, %s7, %s5
  // Predicated region
  $region2: #{two_block_forward.4} parent=0 // pred_check
    _
  $region3: #{two_block_forward.4} parent=0 // pred_check_branch
    %10 = sbr.rel (0) target = $region5
  $region4: #{two_block_forward.4} parent=0 // pred_region
    _
  $region5: #{two_block_forward.4} parent=0 // pred_fallthru
    _
  // Predicated region
  $region6: #{two_block_forward.4} parent=0 // pred_check
    _
  $region7: #{two_block_forward.4} parent=0 // pred_check_branch
    %12 = sbr.rel (0) target = $region9
  $region8: #{two_block_forward.4} parent=0 // pred_region
    _
  $region9: #{two_block_forward.4} parent=0 // pred_fallthru
    _
  // Predicated region
  $region10: #{two_block_forward.4} parent=0 // pred_check
    _
  $region11: #{two_block_forward.4} parent=0 // pred_check_branch
    %14 = sbr.rel (0) target = $region13
  $region12: #{two_block_forward.4} parent=0 // pred_region
    _
  $region13: #{two_block_forward.4} parent=0 // pred_fallthru
    _
  // Predicated region
  $region14: #{two_block_forward.4} parent=0 // pred_check
    _
  $region15: #{two_block_forward.4} parent=0 // pred_check_branch
    %16 = sbr.rel (0) target = $region17
  $region16: #{two_block_forward.4} parent=0 // pred_region
    _
  $region17: #{two_block_forward.4} parent=0 // pred_fallthru
    _
  %v18 = vld [vmem:[%s0] sm:$0xf]
  %v19 = vld [vmem:[%s0 + $0x4] sm:$0xf]
  %v20 = vld [vmem:[%s0 + $0x8] sm:$0xf]
  %v21 = vld [vmem:[%s0 + $0xc] sm:$0xf]
  %v22 = vld [vmem:[%s0 + $0x10] sm:$0xf]
  %v23 = vld [vmem:[%s0 + $0x14] sm:$0xf]
  %v24 = vld [vmem:[%s0 + $0x18] sm:$0xf]
  %v25 = vld [vmem:[%s0 + $0x1c] sm:$0xf]
  %v26 = vld [vmem:[%s0 + $0x20] sm:$0xf]
  %v27 = vld [vmem:[%s0 + $0x24] sm:$0xf]
  %v28 = vld [vmem:[%s0 + $0x28] sm:$0xf]
  %v29 = vld [vmem:[%s0 + $0x2c] sm:$0xf]
  %v30 = vld [vmem:[%s0 + $0x30] sm:$0xf]
  %v31 = vld [vmem:[%s0 + $0x34] sm:$0xf]
  %v32 = vld [vmem:[%s0 + $0x38] sm:$0xf]
  %v33 = vld [vmem:[%s0 + $0x3c] sm:$0xf]
  %v34 = vld [vmem:[%s0 + $0x40] sm:$0xf]
  %v35 = vld [vmem:[%s0 + $0x44] sm:$0xf]
  %v36 = vld [vmem:[%s0 + $0x48] sm:$0xf]
  %v37 = vld [vmem:[%s0 + $0x4c] sm:$0xf]
  %v38 = vld [vmem:[%s0 + $0x50] sm:$0xf]
  %v39 = vld [vmem:[%s0 + $0x54] sm:$0xf]
  %v40 = vld [vmem:[%s0 + $0x58] sm:$0xf]
  %v41 = vld [vmem:[%s0 + $0x5c] sm:$0xf]
  %v42 = vld [vmem:[%s0 + $0x60] sm:$0xf]
  %v43 = vld [vmem:[%s0 + $0x64] sm:$0xf]
  %v44 = vld [vmem:[%s0 + $0x68] sm:$0xf]
  %v45 = vld [vmem:[%s0 + $0x6c] sm:$0xf]
  %v46 = vld [vmem:[%s0 + $0x70] sm:$0xf]
  %v47 = vld [vmem:[%s0 + $0x74] sm:$0xf]
  %v48 = vld [vmem:[%s0 + $0x78] sm:$0xf]
  %v49 = vld [vmem:[%s0 + $0x7c] sm:$0xf]
  %v50 = vld [vmem:[%s0 + $0x80] sm:$0xf]
  %v51 = vld [vmem:[%s0 + $0x84] sm:$0xf]
  %v52 = vld [vmem:[%s0 + $0x88] sm:$0xf]
  %v53 = vld [vmem:[%s0 + $0x8c] sm:$0xf]
  %v54 = vld [vmem:[%s0 + $0x90] sm:$0xf]
  %v55 = vld [vmem:[%s0 + $0x94] sm:$0xf]
  %v56 = vld [vmem:[%s0 + $0x98] sm:$0xf]
  %v57 = vld [vmem:[%s0 + $0x9c] sm:$0xf]
  %v58 = vld [vmem:[%s0 + $0xa0] sm:$0xf]
  %v59 = vld [vmem:[%s0 + $0xa4] sm:$0xf]
  %v60 = vld [vmem:[%s0 + $0xa8] sm:$0xf]
  %v61 = vld [vmem:[%s0 + $0xac] sm:$0xf]
  %v62 = vld [vmem:[%s0 + $0xb0] sm:$0xf]
  %v63 = vld [vmem:[%s0 + $0xb4] sm:$0xf]
  %v64 = vld [vmem:[%s0 + $0xb8] sm:$0xf]
  %v65 = vld [vmem:[%s0 + $0xbc] sm:$0xf]
  %v66 = vld [vmem:[%s0 + $0xc0] sm:$0xf]
  %v67 = vld [vmem:[%s0 + $0xc4] sm:$0xf]
  %v68 = vld [vmem:[%s0 + $0xc8] sm:$0xf]
  %v69 = vld [vmem:[%s0 + $0xcc] sm:$0xf]
  %v70 = vld [vmem:[%s0 + $0xd0] sm:$0xf]
  %v71 = vld [vmem:[%s0 + $0xd4] sm:$0xf]
  %v72 = vld [vmem:[%s0 + $0xd8] sm:$0xf]
  %v73 = vld [vmem:[%s0 + $0xdc] sm:$0xf]
  %v74 = vld [vmem:[%s0 + $0xe0] sm:$0xf]
  %v75 = vld [vmem:[%s0 + $0xe4] sm:$0xf]
  %v76 = vld [vmem:[%s0 + $0xe8] sm:$0xf]
  %v77 = vld [vmem:[%s0 + $0xec] sm:$0xf]
  %v78 = vld [vmem:[%s0 + $0xf0] sm:$0xf]
  %v79 = vld [vmem:[%s0 + $0xf4] sm:$0xf]
  %v80 = vld [vmem:[%s0 + $0xf8] sm:$0xf]
  %v81 = vld [vmem:[%s0 + $0xfc] sm:$0xf]
  %v82 = vld [vmem:[%s1] sm:$0xf]
  %v83 = vld [vmem:[%s1 + $0x4] sm:$0xf]
  %v84 = vld [vmem:[%s1 + $0x8] sm:$0xf]
  %v85 = vld [vmem:[%s1 + $0xc] sm:$0xf]
  %v86 = vld [vmem:[%s1 + $0x10] sm:$0xf]
  %v87 = vld [vmem:[%s1 + $0x14] sm:$0xf]
  %v88 = vld [vmem:[%s1 + $0x18] sm:$0xf]
  %v89 = vld [vmem:[%s1 + $0x1c] sm:$0xf]
  %v90 = vld [vmem:[%s1 + $0x20] sm:$0xf]
  %v91 = vld [vmem:[%s1 + $0x24] sm:$0xf]
  %v92 = vld [vmem:[%s1 + $0x28] sm:$0xf]
  %v93 = vld [vmem:[%s1 + $0x2c] sm:$0xf]
  %v94 = vld [vmem:[%s1 + $0x30] sm:$0xf]
  %v95 = vld [vmem:[%s1 + $0x34] sm:$0xf]
  %v96 = vld [vmem:[%s1 + $0x38] sm:$0xf]
  %v97 = vld [vmem:[%s1 + $0x3c] sm:$0xf]
  %v162 = vunpack.c.l.b16 %v18
  %v163 = vunpack.c.l.b16 %v19
  %v164 = vunpack.c.l.b16 %v20
  %v165 = vunpack.c.l.b16 %v21
  %v166 = vunpack.c.l.b16 %v22
  %v167 = vunpack.c.l.b16 %v23
  %v168 = vunpack.c.l.b16 %v24
  %v169 = vunpack.c.l.b16 %v25
  %v170 = vunpack.c.l.b16 %v26
  %v171 = vunpack.c.l.b16 %v27
  %v172 = vunpack.c.l.b16 %v28
  %v173 = vunpack.c.l.b16 %v29
  %v174 = vunpack.c.l.b16 %v30
  %v175 = vunpack.c.l.b16 %v31
  %v176 = vunpack.c.l.b16 %v32
  %v177 = vunpack.c.l.b16 %v33
  %v178 = vunpack.c.l.b16 %v34
  %v179 = vunpack.c.l.b16 %v35
  %v180 = vunpack.c.l.b16 %v36
  %v181 = vunpack.c.l.b16 %v37
  %v182 = vunpack.c.l.b16 %v38
  %v183 = vunpack.c.l.b16 %v39
  %v184 = vunpack.c.l.b16 %v40
  %v185 = vunpack.c.l.b16 %v41
  %v186 = vunpack.c.l.b16 %v42
  %v187 = vunpack.c.l.b16 %v43
  %v188 = vunpack.c.l.b16 %v44
  %v189 = vunpack.c.l.b16 %v45
  %v190 = vunpack.c.l.b16 %v46
  %v191 = vunpack.c.l.b16 %v47
  %v192 = vunpack.c.l.b16 %v48
  %v193 = vunpack.c.l.b16 %v49
  %v194 = vunpack.c.l.b16 %v50
  %v195 = vunpack.c.l.b16 %v51
  %v196 = vunpack.c.l.b16 %v52
  %v197 = vunpack.c.l.b16 %v53
  %v198 = vunpack.c.l.b16 %v54
  %v199 = vunpack.c.l.b16 %v55
  %v200 = vunpack.c.l.b16 %v56
  %v201 = vunpack.c.l.b16 %v57
  %v202 = vunpack.c.l.b16 %v58
  %v203 = vunpack.c.l.b16 %v59
  %v204 = vunpack.c.l.b16 %v60
  %v205 = vunpack.c.l.b16 %v61
  %v206 = vunpack.c.l.b16 %v62
  %v207 = vunpack.c.l.b16 %v63
  %v208 = vunpack.c.l.b16 %v64
  %v209 = vunpack.c.l.b16 %v65
  %v210 = vunpack.c.l.b16 %v66
  %v211 = vunpack.c.l.b16 %v67
  %v212 = vunpack.c.l.b16 %v68
  %v213 = vunpack.c.l.b16 %v69
  %v214 = vunpack.c.l.b16 %v70
  %v215 = vunpack.c.l.b16 %v71
  %v216 = vunpack.c.l.b16 %v72
  %v217 = vunpack.c.l.b16 %v73
  %v218 = vunpack.c.l.b16 %v74
  %v219 = vunpack.c.l.b16 %v75
  %v220 = vunpack.c.l.b16 %v76
  %v221 = vunpack.c.l.b16 %v77
  %v222 = vunpack.c.l.b16 %v78
  %v223 = vunpack.c.l.b16 %v79
  %v224 = vunpack.c.l.b16 %v80
  %v225 = vunpack.c.l.b16 %v81
  %v226 = vpack.c.b16 %v163, %v162
  %v227 = vpack.c.b16 %v165, %v164
  %v228 = vpack.c.b16 %v167, %v166
  %v229 = vpack.c.b16 %v169, %v168
  %v230 = vpack.c.b16 %v171, %v170
  %v231 = vpack.c.b16 %v173, %v172
  %v232 = vpack.c.b16 %v175, %v174
  %v233 = vpack.c.b16 %v177, %v176
  %v234 = vpack.c.b16 %v179, %v178
  %v235 = vpack.c.b16 %v181, %v180
  %v236 = vpack.c.b16 %v183, %v182
  %v237 = vpack.c.b16 %v185, %v184
  %v238 = vpack.c.b16 %v187, %v186
  %v239 = vpack.c.b16 %v189, %v188
  %v240 = vpack.c.b16 %v191, %v190
  %v241 = vpack.c.b16 %v193, %v192
  %v242 = vpack.c.b16 %v195, %v194
  %v243 = vpack.c.b16 %v197, %v196
  %v244 = vpack.c.b16 %v199, %v198
  %v245 = vpack.c.b16 %v201, %v200
  %v246 = vpack.c.b16 %v203, %v202
  %v247 = vpack.c.b16 %v205, %v204
  %v248 = vpack.c.b16 %v207, %v206
  %v249 = vpack.c.b16 %v209, %v208
  %v250 = vpack.c.b16 %v211, %v210
  %v251 = vpack.c.b16 %v213, %v212
  %v252 = vpack.c.b16 %v215, %v214
  %v253 = vpack.c.b16 %v217, %v216
  %v254 = vpack.c.b16 %v219, %v218
  %v255 = vpack.c.b16 %v221, %v220
  %v256 = vpack.c.b16 %v223, %v222
  %v257 = vpack.c.b16 %v225, %v224
  %v306 = vunpack.c.l.b16 %v82
  %v307 = vunpack.c.l.b16 %v83
  %v308 = vunpack.c.l.b16 %v84
  %v309 = vunpack.c.l.b16 %v85
  %v310 = vunpack.c.l.b16 %v86
  %v311 = vunpack.c.l.b16 %v87
  %v312 = vunpack.c.l.b16 %v88
  %v313 = vunpack.c.l.b16 %v89
  %v314 = vunpack.c.l.b16 %v90
  %v315 = vunpack.c.l.b16 %v91
  %v316 = vunpack.c.l.b16 %v92
  %v317 = vunpack.c.l.b16 %v93
  %v318 = vunpack.c.l.b16 %v94
  %v319 = vunpack.c.l.b16 %v95
  %v320 = vunpack.c.l.b16 %v96
  %v321 = vunpack.c.l.b16 %v97
  %v322 = vpack.c.b16 %v307, %v306
  %v323 = vpack.c.b16 %v309, %v308
  %v324 = vpack.c.b16 %v311, %v310
  %v325 = vpack.c.b16 %v313, %v312
  %v326 = vpack.c.b16 %v315, %v314
  %v327 = vpack.c.b16 %v317, %v316
  %v328 = vpack.c.b16 %v319, %v318
  %v329 = vpack.c.b16 %v321, %v320
  %338 = vmatprep.subr.bf16.mxu0 0
  %339 = vmatpush1.bf16.msra.mxu0 %v329
  %340 = vmatprep.subr.bf16.mxu0 0
  %341 = vmatpush1.bf16.msra.mxu0 %v328
  %342 = vmatprep.subr.bf16.mxu0 0
  %343 = vmatpush1.bf16.msra.mxu0 %v327
  %344 = vmatprep.subr.bf16.mxu0 0
  %345 = vmatpush1.bf16.msra.mxu0 %v326
  %346 = vmatprep.subr.bf16.mxu0 0
  %347 = vmatpush1.bf16.msra.mxu0 %v325
  %348 = vmatprep.subr.bf16.mxu0 0
  %349 = vmatpush1.bf16.msra.mxu0 %v324
  %350 = vmatprep.subr.bf16.mxu0 0
  %351 = vmatpush1.bf16.msra.mxu0 %v323
  %352 = vmatprep.subr.bf16.mxu0 0
  %353 = vmatpush1.bf16.msra.mxu0 %v322
  %354 = vmatprep.subr.bf16.mxu0 0
  %355 = vmatpush2.bf16.msra.mxu0 0
  %356 = vmatprep.subr.bf16.mxu0 0
  %357 = vmatpush2.bf16.msra.mxu0 0
  %358 = vmatprep.subr.bf16.mxu0 0
  %359 = vmatpush2.bf16.msra.mxu0 0
  %360 = vmatprep.subr.bf16.mxu0 0
  %361 = vmatpush2.bf16.msra.mxu0 0
  %362 = vmatprep.subr.bf16.mxu0 0
  %363 = vmatpush2.bf16.msra.mxu0 0
  %364 = vmatprep.subr.bf16.mxu0 0
  %365 = vmatpush2.bf16.msra.mxu0 0
  %366 = vmatprep.subr.bf16.mxu0 0
  %367 = vmatpush2.bf16.msra.mxu0 0
  %368 = vmatprep.subr.bf16.mxu0 0
  %369 = vmatpush2.bf16.msra.mxu0 0
  %370 = vmatprep.mubr.bf16.mxu0 0
  %371 = vmatmul.mubr.bf16.gmra.mxu0 %v226
  %v372 = vpop.f32.mrf.mxu0
  %v373 = vadd.f32 0.0, %v372
  %v374 = vpop.f32.mrf.mxu0
  %v375 = vpop.f32.mrf.mxu0
  %v376 = vadd.f32 0.0, %v375
  %v377 = vpop.f32.mrf.mxu0
  %378 = vmatprep.mubr.bf16.mxu0 0
  %379 = vmatmul.mubr.bf16.gmra.mxu0 %v227
  %v380 = vpop.f32.mrf.mxu0
  %v381 = vadd.f32 0.0, %v380
  %v382 = vpop.f32.mrf.mxu0
  %v383 = vpop.f32.mrf.mxu0
  %v384 = vadd.f32 0.0, %v383
  %v385 = vpop.f32.mrf.mxu0
  %386 = vmatprep.mubr.bf16.mxu0 0
  %387 = vmatmul.mubr.bf16.gmra.mxu0 %v228
  %v388 = vpop.f32.mrf.mxu0
  %v389 = vadd.f32 0.0, %v388
  %v390 = vpop.f32.mrf.mxu0
  %v391 = vpop.f32.mrf.mxu0
  %v392 = vadd.f32 0.0, %v391
  %v393 = vpop.f32.mrf.mxu0
  %394 = vmatprep.mubr.bf16.mxu0 0
  %395 = vmatmul.mubr.bf16.gmra.mxu0 %v229
  %v396 = vpop.f32.mrf.mxu0
  %v397 = vadd.f32 0.0, %v396
  %v398 = vpop.f32.mrf.mxu0
  %v399 = vpop.f32.mrf.mxu0
  %v400 = vadd.f32 0.0, %v399
  %v401 = vpop.f32.mrf.mxu0
  %402 = vmatprep.mubr.bf16.mxu0 0
  %403 = vmatmul.mubr.bf16.gmra.mxu0 %v230
  %v404 = vpop.f32.mrf.mxu0
  %v405 = vadd.f32 0.0, %v404
  %v406 = vpop.f32.mrf.mxu0
  %v407 = vpop.f32.mrf.mxu0
  %v408 = vadd.f32 0.0, %v407
  %v409 = vpop.f32.mrf.mxu0
  %410 = vmatprep.mubr.bf16.mxu0 0
  %411 = vmatmul.mubr.bf16.gmra.mxu0 %v231
  %v412 = vpop.f32.mrf.mxu0
  %v413 = vadd.f32 0.0, %v412
  %v414 = vpop.f32.mrf.mxu0
  %v415 = vpop.f32.mrf.mxu0
  %v416 = vadd.f32 0.0, %v415
  %v417 = vpop.f32.mrf.mxu0
  %418 = vmatprep.mubr.bf16.mxu0 0
  %419 = vmatmul.mubr.bf16.gmra.mxu0 %v232
  %v420 = vpop.f32.mrf.mxu0
  %v421 = vadd.f32 0.0, %v420
  %v422 = vpop.f32.mrf.mxu0
  %v423 = vpop.f32.mrf.mxu0
  %v424 = vadd.f32 0.0, %v423
  %v425 = vpop.f32.mrf.mxu0
  %426 = vmatprep.mubr.bf16.mxu0 0
  %427 = vmatmul.mubr.bf16.gmra.mxu0 %v233
  %v428 = vpop.f32.mrf.mxu0
  %v429 = vadd.f32 0.0, %v428
  %v430 = vpop.f32.mrf.mxu0
  %v431 = vpop.f32.mrf.mxu0
  %v432 = vadd.f32 0.0, %v431
  %v433 = vpop.f32.mrf.mxu0
  %434 = vmatprep.mubr.bf16.mxu0 0
  %435 = vmatmul.mubr.bf16.gmra.mxu0 %v234
  %v436 = vpop.f32.mrf.mxu0
  %v437 = vadd.f32 0.0, %v436
  %v438 = vpop.f32.mrf.mxu0
  %v439 = vpop.f32.mrf.mxu0
  %v440 = vadd.f32 0.0, %v439
  %v441 = vpop.f32.mrf.mxu0
  %442 = vmatprep.mubr.bf16.mxu0 0
  %443 = vmatmul.mubr.bf16.gmra.mxu0 %v235
  %v444 = vpop.f32.mrf.mxu0
  %v445 = vadd.f32 0.0, %v444
  %v446 = vpop.f32.mrf.mxu0
  %v447 = vpop.f32.mrf.mxu0
  %v448 = vadd.f32 0.0, %v447
  %v449 = vpop.f32.mrf.mxu0
  %450 = vmatprep.mubr.bf16.mxu0 0
  %451 = vmatmul.mubr.bf16.gmra.mxu0 %v236
  %v452 = vpop.f32.mrf.mxu0
  %v453 = vadd.f32 0.0, %v452
  %v454 = vpop.f32.mrf.mxu0
  %v455 = vpop.f32.mrf.mxu0
  %v456 = vadd.f32 0.0, %v455
  %v457 = vpop.f32.mrf.mxu0
  %458 = vmatprep.mubr.bf16.mxu0 0
  %459 = vmatmul.mubr.bf16.gmra.mxu0 %v237
  %v460 = vpop.f32.mrf.mxu0
  %v461 = vadd.f32 0.0, %v460
  %v462 = vpop.f32.mrf.mxu0
  %v463 = vpop.f32.mrf.mxu0
  %v464 = vadd.f32 0.0, %v463
  %v465 = vpop.f32.mrf.mxu0
  %466 = vmatprep.mubr.bf16.mxu0 0
  %467 = vmatmul.mubr.bf16.gmra.mxu0 %v238
  %v468 = vpop.f32.mrf.mxu0
  %v469 = vadd.f32 0.0, %v468
  %v470 = vpop.f32.mrf.mxu0
  %v471 = vpop.f32.mrf.mxu0
  %v472 = vadd.f32 0.0, %v471
  %v473 = vpop.f32.mrf.mxu0
  %474 = vmatprep.mubr.bf16.mxu0 0
  %475 = vmatmul.mubr.bf16.gmra.mxu0 %v239
  %v476 = vpop.f32.mrf.mxu0
  %v477 = vadd.f32 0.0, %v476
  %v478 = vpop.f32.mrf.mxu0
  %v479 = vpop.f32.mrf.mxu0
  %v480 = vadd.f32 0.0, %v479
  %v481 = vpop.f32.mrf.mxu0
  %482 = vmatprep.mubr.bf16.mxu0 0
  %483 = vmatmul.mubr.bf16.gmra.mxu0 %v240
  %v484 = vpop.f32.mrf.mxu0
  %v485 = vadd.f32 0.0, %v484
  %v486 = vpop.f32.mrf.mxu0
  %v487 = vpop.f32.mrf.mxu0
  %v488 = vadd.f32 0.0, %v487
  %v489 = vpop.f32.mrf.mxu0
  %490 = vmatprep.mubr.bf16.mxu0 0
  %491 = vmatmul.mubr.bf16.gmra.mxu0 %v241
  %v492 = vpop.f32.mrf.mxu0
  %v493 = vadd.f32 0.0, %v492
  %v494 = vpop.f32.mrf.mxu0
  %v495 = vpop.f32.mrf.mxu0
  %v496 = vadd.f32 0.0, %v495
  %v497 = vpop.f32.mrf.mxu0
  %498 = vmatprep.mubr.bf16.mxu0 0
  %499 = vmatmul.mubr.bf16.gmra.mxu0 %v242
  %v500 = vpop.f32.mrf.mxu0
  %v501 = vadd.f32 0.0, %v500
  %v502 = vpop.f32.mrf.mxu0
  %v503 = vpop.f32.mrf.mxu0
  %v504 = vadd.f32 0.0, %v503
  %v505 = vpop.f32.mrf.mxu0
  %506 = vmatprep.mubr.bf16.mxu0 0
  %507 = vmatmul.mubr.bf16.gmra.mxu0 %v243
  %v508 = vpop.f32.mrf.mxu0
  %v509 = vadd.f32 0.0, %v508
  %v510 = vpop.f32.mrf.mxu0
  %v511 = vpop.f32.mrf.mxu0
  %v512 = vadd.f32 0.0, %v511
  %v513 = vpop.f32.mrf.mxu0
  %514 = vmatprep.mubr.bf16.mxu0 0
  %515 = vmatmul.mubr.bf16.gmra.mxu0 %v244
  %v516 = vpop.f32.mrf.mxu0
  %v517 = vadd.f32 0.0, %v516
  %v518 = vpop.f32.mrf.mxu0
  %v519 = vpop.f32.mrf.mxu0
  %v520 = vadd.f32 0.0, %v519
  %v521 = vpop.f32.mrf.mxu0
  %522 = vmatprep.mubr.bf16.mxu0 0
  %523 = vmatmul.mubr.bf16.gmra.mxu0 %v245
  %v524 = vpop.f32.mrf.mxu0
  %v525 = vadd.f32 0.0, %v524
  %v526 = vpop.f32.mrf.mxu0
  %v527 = vpop.f32.mrf.mxu0
  %v528 = vadd.f32 0.0, %v527
  %v529 = vpop.f32.mrf.mxu0
  %530 = vmatprep.mubr.bf16.mxu0 0
  %531 = vmatmul.mubr.bf16.gmra.mxu0 %v246
  %v532 = vpop.f32.mrf.mxu0
  %v533 = vadd.f32 0.0, %v532
  %v534 = vpop.f32.mrf.mxu0
  %v535 = vpop.f32.mrf.mxu0
  %v536 = vadd.f32 0.0, %v535
  %v537 = vpop.f32.mrf.mxu0
  %538 = vmatprep.mubr.bf16.mxu0 0
  %539 = vmatmul.mubr.bf16.gmra.mxu0 %v247
  %v540 = vpop.f32.mrf.mxu0
  %v541 = vadd.f32 0.0, %v540
  %v542 = vpop.f32.mrf.mxu0
  %v543 = vpop.f32.mrf.mxu0
  %v544 = vadd.f32 0.0, %v543
  %v545 = vpop.f32.mrf.mxu0
  %546 = vmatprep.mubr.bf16.mxu0 0
  %547 = vmatmul.mubr.bf16.gmra.mxu0 %v248
  %v548 = vpop.f32.mrf.mxu0
  %v549 = vadd.f32 0.0, %v548
  %v550 = vpop.f32.mrf.mxu0
  %v551 = vpop.f32.mrf.mxu0
  %v552 = vadd.f32 0.0, %v551
  %v553 = vpop.f32.mrf.mxu0
  %554 = vmatprep.mubr.bf16.mxu0 0
  %555 = vmatmul.mubr.bf16.gmra.mxu0 %v249
  %v556 = vpop.f32.mrf.mxu0
  %v557 = vadd.f32 0.0, %v556
  %v558 = vpop.f32.mrf.mxu0
  %v559 = vpop.f32.mrf.mxu0
  %v560 = vadd.f32 0.0, %v559
  %v561 = vpop.f32.mrf.mxu0
  %562 = vmatprep.mubr.bf16.mxu0 0
  %563 = vmatmul.mubr.bf16.gmra.mxu0 %v250
  %v564 = vpop.f32.mrf.mxu0
  %v565 = vadd.f32 0.0, %v564
  %v566 = vpop.f32.mrf.mxu0
  %v567 = vpop.f32.mrf.mxu0
  %v568 = vadd.f32 0.0, %v567
  %v569 = vpop.f32.mrf.mxu0
  %570 = vmatprep.mubr.bf16.mxu0 0
  %571 = vmatmul.mubr.bf16.gmra.mxu0 %v251
  %v572 = vpop.f32.mrf.mxu0
  %v573 = vadd.f32 0.0, %v572
  %v574 = vpop.f32.mrf.mxu0
  %v575 = vpop.f32.mrf.mxu0
  %v576 = vadd.f32 0.0, %v575
  %v577 = vpop.f32.mrf.mxu0
  %578 = vmatprep.mubr.bf16.mxu0 0
  %579 = vmatmul.mubr.bf16.gmra.mxu0 %v252
  %v580 = vpop.f32.mrf.mxu0
  %v581 = vadd.f32 0.0, %v580
  %v582 = vpop.f32.mrf.mxu0
  %v583 = vpop.f32.mrf.mxu0
  %v584 = vadd.f32 0.0, %v583
  %v585 = vpop.f32.mrf.mxu0
  %586 = vmatprep.mubr.bf16.mxu0 0
  %587 = vmatmul.mubr.bf16.gmra.mxu0 %v253
  %v588 = vpop.f32.mrf.mxu0
  %v589 = vadd.f32 0.0, %v588
  %v590 = vpop.f32.mrf.mxu0
  %v591 = vpop.f32.mrf.mxu0
  %v592 = vadd.f32 0.0, %v591
  %v593 = vpop.f32.mrf.mxu0
  %594 = vmatprep.mubr.bf16.mxu0 0
  %595 = vmatmul.mubr.bf16.gmra.mxu0 %v254
  %v596 = vpop.f32.mrf.mxu0
  %v597 = vadd.f32 0.0, %v596
  %v598 = vpop.f32.mrf.mxu0
  %v599 = vpop.f32.mrf.mxu0
  %v600 = vadd.f32 0.0, %v599
  %v601 = vpop.f32.mrf.mxu0
  %602 = vmatprep.mubr.bf16.mxu0 0
  %603 = vmatmul.mubr.bf16.gmra.mxu0 %v255
  %v604 = vpop.f32.mrf.mxu0
  %v605 = vadd.f32 0.0, %v604
  %v606 = vpop.f32.mrf.mxu0
  %v607 = vpop.f32.mrf.mxu0
  %v608 = vadd.f32 0.0, %v607
  %v609 = vpop.f32.mrf.mxu0
  %610 = vmatprep.mubr.bf16.mxu0 0
  %611 = vmatmul.mubr.bf16.gmra.mxu0 %v256
  %v612 = vpop.f32.mrf.mxu0
  %v613 = vadd.f32 0.0, %v612
  %v614 = vpop.f32.mrf.mxu0
  %v615 = vpop.f32.mrf.mxu0
  %v616 = vadd.f32 0.0, %v615
  %v617 = vpop.f32.mrf.mxu0
  %618 = vmatprep.mubr.bf16.mxu0 0
  %619 = vmatmul.mubr.bf16.gmra.mxu0 %v257
  %v620 = vpop.f32.mrf.mxu0
  %v621 = vadd.f32 0.0, %v620
  %v622 = vpop.f32.mrf.mxu0
  %v623 = vpop.f32.mrf.mxu0
  %v624 = vadd.f32 0.0, %v623
  %v625 = vpop.f32.mrf.mxu0
  %626 = vdwg.mxu0
  %v627 = vld [vmem:[%s2] sm:$0x1]
  %v629 = vlaneseq
  %v630 = vshrl.u32 %v629, 7
  %v631 = vsub.s32 0, %v630
  %v632 = vrot.slane %v627, %v631
  %v634 = vmul.f32 %v373, %v632
  %v635 = vmul.f32 %v376, %v632
  %v636 = vmul.f32 %v381, %v632
  %v637 = vmul.f32 %v384, %v632
  %v638 = vmul.f32 %v389, %v632
  %v639 = vmul.f32 %v392, %v632
  %v640 = vmul.f32 %v397, %v632
  %v641 = vmul.f32 %v400, %v632
  %v642 = vmul.f32 %v405, %v632
  %v643 = vmul.f32 %v408, %v632
  %v644 = vmul.f32 %v413, %v632
  %v645 = vmul.f32 %v416, %v632
  %v646 = vmul.f32 %v421, %v632
  %v647 = vmul.f32 %v424, %v632
  %v648 = vmul.f32 %v429, %v632
  %v649 = vmul.f32 %v432, %v632
  %v650 = vmul.f32 %v437, %v632
  %v651 = vmul.f32 %v440, %v632
  %v652 = vmul.f32 %v445, %v632
  %v653 = vmul.f32 %v448, %v632
  %v654 = vmul.f32 %v453, %v632
  %v655 = vmul.f32 %v456, %v632
  %v656 = vmul.f32 %v461, %v632
  %v657 = vmul.f32 %v464, %v632
  %v658 = vmul.f32 %v469, %v632
  %v659 = vmul.f32 %v472, %v632
  %v660 = vmul.f32 %v477, %v632
  %v661 = vmul.f32 %v480, %v632
  %v662 = vmul.f32 %v485, %v632
  %v663 = vmul.f32 %v488, %v632
  %v664 = vmul.f32 %v493, %v632
  %v665 = vmul.f32 %v496, %v632
  %v666 = vmul.f32 %v501, %v632
  %v667 = vmul.f32 %v504, %v632
  %v668 = vmul.f32 %v509, %v632
  %v669 = vmul.f32 %v512, %v632
  %v670 = vmul.f32 %v517, %v632
  %v671 = vmul.f32 %v520, %v632
  %v672 = vmul.f32 %v525, %v632
  %v673 = vmul.f32 %v528, %v632
  %v674 = vmul.f32 %v533, %v632
  %v675 = vmul.f32 %v536, %v632
  %v676 = vmul.f32 %v541, %v632
  %v677 = vmul.f32 %v544, %v632
  %v678 = vmul.f32 %v549, %v632
  %v679 = vmul.f32 %v552, %v632
  %v680 = vmul.f32 %v557, %v632
  %v681 = vmul.f32 %v560, %v632
  %v682 = vmul.f32 %v565, %v632
  %v683 = vmul.f32 %v568, %v632
  %v684 = vmul.f32 %v573, %v632
  %v685 = vmul.f32 %v576, %v632
  %v686 = vmul.f32 %v581, %v632
  %v687 = vmul.f32 %v584, %v632
  %v688 = vmul.f32 %v589, %v632
  %v689 = vmul.f32 %v592, %v632
  %v690 = vmul.f32 %v597, %v632
  %v691 = vmul.f32 %v600, %v632
  %v692 = vmul.f32 %v605, %v632
  %v693 = vmul.f32 %v608, %v632
  %v694 = vmul.f32 %v613, %v632
  %v695 = vmul.f32 %v616, %v632
  %v696 = vmul.f32 %v621, %v632
  %v697 = vmul.f32 %v624, %v632
  %v698 = vld [vmem:[%s3] sm:$0x1]
  %v700 = vlaneseq
  %v701 = vshrl.u32 %v700, 7
  %v702 = vsub.s32 0, %v701
  %v703 = vrot.slane %v698, %v702
  %v705 = vadd.f32 %v634, %v703
  %v706 = vadd.f32 %v635, %v703
  %v707 = vadd.f32 %v636, %v703
  %v708 = vadd.f32 %v637, %v703
  %v709 = vadd.f32 %v638, %v703
  %v710 = vadd.f32 %v639, %v703
  %v711 = vadd.f32 %v640, %v703
  %v712 = vadd.f32 %v641, %v703
  %v713 = vadd.f32 %v642, %v703
  %v714 = vadd.f32 %v643, %v703
  %v715 = vadd.f32 %v644, %v703
  %v716 = vadd.f32 %v645, %v703
  %v717 = vadd.f32 %v646, %v703
  %v718 = vadd.f32 %v647, %v703
  %v719 = vadd.f32 %v648, %v703
  %v720 = vadd.f32 %v649, %v703
  %v721 = vadd.f32 %v650, %v703
  %v722 = vadd.f32 %v651, %v703
  %v723 = vadd.f32 %v652, %v703
  %v724 = vadd.f32 %v653, %v703
  %v725 = vadd.f32 %v654, %v703
  %v726 = vadd.f32 %v655, %v703
  %v727 = vadd.f32 %v656, %v703
  %v728 = vadd.f32 %v657, %v703
  %v729 = vadd.f32 %v658, %v703
  %v730 = vadd.f32 %v659, %v703
  %v731 = vadd.f32 %v660, %v703
  %v732 = vadd.f32 %v661, %v703
  %v733 = vadd.f32 %v662, %v703
  %v734 = vadd.f32 %v663, %v703
  %v735 = vadd.f32 %v664, %v703
  %v736 = vadd.f32 %v665, %v703
  %v737 = vadd.f32 %v666, %v703
  %v738 = vadd.f32 %v667, %v703
  %v739 = vadd.f32 %v668, %v703
  %v740 = vadd.f32 %v669, %v703
  %v741 = vadd.f32 %v670, %v703
  %v742 = vadd.f32 %v671, %v703
  %v743 = vadd.f32 %v672, %v703
  %v744 = vadd.f32 %v673, %v703
  %v745 = vadd.f32 %v674, %v703
  %v746 = vadd.f32 %v675, %v703
  %v747 = vadd.f32 %v676, %v703
  %v748 = vadd.f32 %v677, %v703
  %v749 = vadd.f32 %v678, %v703
  %v750 = vadd.f32 %v679, %v703
  %v751 = vadd.f32 %v680, %v703
  %v752 = vadd.f32 %v681, %v703
  %v753 = vadd.f32 %v682, %v703
  %v754 = vadd.f32 %v683, %v703
  %v755 = vadd.f32 %v684, %v703
  %v756 = vadd.f32 %v685, %v703
  %v757 = vadd.f32 %v686, %v703
  %v758 = vadd.f32 %v687, %v703
  %v759 = vadd.f32 %v688, %v703
  %v760 = vadd.f32 %v689, %v703
  %v761 = vadd.f32 %v690, %v703
  %v762 = vadd.f32 %v691, %v703
  %v763 = vadd.f32 %v692, %v703
  %v764 = vadd.f32 %v693, %v703
  %v765 = vadd.f32 %v694, %v703
  %v766 = vadd.f32 %v695, %v703
  %v767 = vadd.f32 %v696, %v703
  %v768 = vadd.f32 %v697, %v703
  %v769 = vmax.f32 %v705, 0.0
  %v770 = vmax.f32 %v706, 0.0
  %v771 = vmax.f32 %v707, 0.0
  %v772 = vmax.f32 %v708, 0.0
  %v773 = vmax.f32 %v709, 0.0
  %v774 = vmax.f32 %v710, 0.0
  %v775 = vmax.f32 %v711, 0.0
  %v776 = vmax.f32 %v712, 0.0
  %v777 = vmax.f32 %v713, 0.0
  %v778 = vmax.f32 %v714, 0.0
  %v779 = vmax.f32 %v715, 0.0
  %v780 = vmax.f32 %v716, 0.0
  %v781 = vmax.f32 %v717, 0.0
  %v782 = vmax.f32 %v718, 0.0
  %v783 = vmax.f32 %v719, 0.0
  %v784 = vmax.f32 %v720, 0.0
  %v785 = vmax.f32 %v721, 0.0
  %v786 = vmax.f32 %v722, 0.0
  %v787 = vmax.f32 %v723, 0.0
  %v788 = vmax.f32 %v724, 0.0
  %v789 = vmax.f32 %v725, 0.0
  %v790 = vmax.f32 %v726, 0.0
  %v791 = vmax.f32 %v727, 0.0
  %v792 = vmax.f32 %v728, 0.0
  %v793 = vmax.f32 %v729, 0.0
  %v794 = vmax.f32 %v730, 0.0
  %v795 = vmax.f32 %v731, 0.0
  %v796 = vmax.f32 %v732, 0.0
  %v797 = vmax.f32 %v733, 0.0
  %v798 = vmax.f32 %v734, 0.0
  %v799 = vmax.f32 %v735, 0.0
  %v800 = vmax.f32 %v736, 0.0
  %v801 = vmax.f32 %v737, 0.0
  %v802 = vmax.f32 %v738, 0.0
  %v803 = vmax.f32 %v739, 0.0
  %v804 = vmax.f32 %v740, 0.0
  %v805 = vmax.f32 %v741, 0.0
  %v806 = vmax.f32 %v742, 0.0
  %v807 = vmax.f32 %v743, 0.0
  %v808 = vmax.f32 %v744, 0.0
  %v809 = vmax.f32 %v745, 0.0
  %v810 = vmax.f32 %v746, 0.0
  %v811 = vmax.f32 %v747, 0.0
  %v812 = vmax.f32 %v748, 0.0
  %v813 = vmax.f32 %v749, 0.0
  %v814 = vmax.f32 %v750, 0.0
  %v815 = vmax.f32 %v751, 0.0
  %v816 = vmax.f32 %v752, 0.0
  %v817 = vmax.f32 %v753, 0.0
  %v818 = vmax.f32 %v754, 0.0
  %v819 = vmax.f32 %v755, 0.0
  %v820 = vmax.f32 %v756, 0.0
  %v821 = vmax.f32 %v757, 0.0
  %v822 = vmax.f32 %v758, 0.0
  %v823 = vmax.f32 %v759, 0.0
  %v824 = vmax.f32 %v760, 0.0
  %v825 = vmax.f32 %v761, 0.0
  %v826 = vmax.f32 %v762, 0.0
  %v827 = vmax.f32 %v763, 0.0
  %v828 = vmax.f32 %v764, 0.0
  %v829 = vmax.f32 %v765, 0.0
  %v830 = vmax.f32 %v766, 0.0
  %v831 = vmax.f32 %v767, 0.0
  %v832 = vmax.f32 %v768, 0.0
  %v833 = vpack.c.bf16 %v770, %v769
  %v834 = vpack.c.bf16 %v772, %v771
  %v835 = vpack.c.bf16 %v774, %v773
  %v836 = vpack.c.bf16 %v776, %v775
  %v837 = vpack.c.bf16 %v778, %v777
  %v838 = vpack.c.bf16 %v780, %v779
  %v839 = vpack.c.bf16 %v782, %v781
  %v840 = vpack.c.bf16 %v784, %v783
  %v841 = vpack.c.bf16 %v786, %v785
  %v842 = vpack.c.bf16 %v788, %v787
  %v843 = vpack.c.bf16 %v790, %v789
  %v844 = vpack.c.bf16 %v792, %v791
  %v845 = vpack.c.bf16 %v794, %v793
  %v846 = vpack.c.bf16 %v796, %v795
  %v847 = vpack.c.bf16 %v798, %v797
  %v848 = vpack.c.bf16 %v800, %v799
  %v849 = vpack.c.bf16 %v802, %v801
  %v850 = vpack.c.bf16 %v804, %v803
  %v851 = vpack.c.bf16 %v806, %v805
  %v852 = vpack.c.bf16 %v808, %v807
  %v853 = vpack.c.bf16 %v810, %v809
  %v854 = vpack.c.bf16 %v812, %v811
  %v855 = vpack.c.bf16 %v814, %v813
  %v856 = vpack.c.bf16 %v816, %v815
  %v857 = vpack.c.bf16 %v818, %v817
  %v858 = vpack.c.bf16 %v820, %v819
  %v859 = vpack.c.bf16 %v822, %v821
  %v860 = vpack.c.bf16 %v824, %v823
  %v861 = vpack.c.bf16 %v826, %v825
  %v862 = vpack.c.bf16 %v828, %v827
  %v863 = vpack.c.bf16 %v830, %v829
  %v864 = vpack.c.bf16 %v832, %v831
  %v897 = vunpack.c.l.b16 %v833
  %v898 = vunpack.c.h.b16 %v833
  %v899 = vunpack.c.l.b16 %v834
  %v900 = vunpack.c.h.b16 %v834
  %v901 = vunpack.c.l.b16 %v835
  %v902 = vunpack.c.h.b16 %v835
  %v903 = vunpack.c.l.b16 %v836
  %v904 = vunpack.c.h.b16 %v836
  %v905 = vunpack.c.l.b16 %v837
  %v906 = vunpack.c.h.b16 %v837
  %v907 = vunpack.c.l.b16 %v838
  %v908 = vunpack.c.h.b16 %v838
  %v909 = vunpack.c.l.b16 %v839
  %v910 = vunpack.c.h.b16 %v839
  %v911 = vunpack.c.l.b16 %v840
  %v912 = vunpack.c.h.b16 %v840
  %v913 = vunpack.c.l.b16 %v841
  %v914 = vunpack.c.h.b16 %v841
  %v915 = vunpack.c.l.b16 %v842
  %v916 = vunpack.c.h.b16 %v842
  %v917 = vunpack.c.l.b16 %v843
  %v918 = vunpack.c.h.b16 %v843
  %v919 = vunpack.c.l.b16 %v844
  %v920 = vunpack.c.h.b16 %v844
  %v921 = vunpack.c.l.b16 %v845
  %v922 = vunpack.c.h.b16 %v845
  %v923 = vunpack.c.l.b16 %v846
  %v924 = vunpack.c.h.b16 %v846
  %v925 = vunpack.c.l.b16 %v847
  %v926 = vunpack.c.h.b16 %v847
  %v927 = vunpack.c.l.b16 %v848
  %v928 = vunpack.c.h.b16 %v848
  %v929 = vunpack.c.l.b16 %v849
  %v930 = vunpack.c.h.b16 %v849
  %v931 = vunpack.c.l.b16 %v850
  %v932 = vunpack.c.h.b16 %v850
  %v933 = vunpack.c.l.b16 %v851
  %v934 = vunpack.c.h.b16 %v851
  %v935 = vunpack.c.l.b16 %v852
  %v936 = vunpack.c.h.b16 %v852
  %v937 = vunpack.c.l.b16 %v853
  %v938 = vunpack.c.h.b16 %v853
  %v939 = vunpack.c.l.b16 %v854
  %v940 = vunpack.c.h.b16 %v854
  %v941 = vunpack.c.l.b16 %v855
  %v942 = vunpack.c.h.b16 %v855
  %v943 = vunpack.c.l.b16 %v856
  %v944 = vunpack.c.h.b16 %v856
  %v945 = vunpack.c.l.b16 %v857
  %v946 = vunpack.c.h.b16 %v857
  %v947 = vunpack.c.l.b16 %v858
  %v948 = vunpack.c.h.b16 %v858
  %v949 = vunpack.c.l.b16 %v859
  %v950 = vunpack.c.h.b16 %v859
  %v951 = vunpack.c.l.b16 %v860
  %v952 = vunpack.c.h.b16 %v860
  %v953 = vunpack.c.l.b16 %v861
  %v954 = vunpack.c.h.b16 %v861
  %v955 = vunpack.c.l.b16 %v862
  %v956 = vunpack.c.h.b16 %v862
  %v957 = vunpack.c.l.b16 %v863
  %v958 = vunpack.c.h.b16 %v863
  %v959 = vunpack.c.l.b16 %v864
  %v960 = vunpack.c.h.b16 %v864
  %v961 = vpack.c.b16 %v897, %v897
  %v962 = vpack.c.b16 %v898, %v898
  %v963 = vpack.c.b16 %v899, %v899
  %v964 = vpack.c.b16 %v900, %v900
  %v965 = vpack.c.b16 %v901, %v901
  %v966 = vpack.c.b16 %v902, %v902
  %v967 = vpack.c.b16 %v903, %v903
  %v968 = vpack.c.b16 %v904, %v904
  %v969 = vpack.c.b16 %v905, %v905
  %v970 = vpack.c.b16 %v906, %v906
  %v971 = vpack.c.b16 %v907, %v907
  %v972 = vpack.c.b16 %v908, %v908
  %v973 = vpack.c.b16 %v909, %v909
  %v974 = vpack.c.b16 %v910, %v910
  %v975 = vpack.c.b16 %v911, %v911
  %v976 = vpack.c.b16 %v912, %v912
  %v977 = vpack.c.b16 %v913, %v913
  %v978 = vpack.c.b16 %v914, %v914
  %v979 = vpack.c.b16 %v915, %v915
  %v980 = vpack.c.b16 %v916, %v916
  %v981 = vpack.c.b16 %v917, %v917
  %v982 = vpack.c.b16 %v918, %v918
  %v983 = vpack.c.b16 %v919, %v919
  %v984 = vpack.c.b16 %v920, %v920
  %v985 = vpack.c.b16 %v921, %v921
  %v986 = vpack.c.b16 %v922, %v922
  %v987 = vpack.c.b16 %v923, %v923
  %v988 = vpack.c.b16 %v924, %v924
  %v989 = vpack.c.b16 %v925, %v925
  %v990 = vpack.c.b16 %v926, %v926
  %v991 = vpack.c.b16 %v927, %v927
  %v992 = vpack.c.b16 %v928, %v928
  %v993 = vpack.c.b16 %v929, %v929
  %v994 = vpack.c.b16 %v930, %v930
  %v995 = vpack.c.b16 %v931, %v931
  %v996 = vpack.c.b16 %v932, %v932
  %v997 = vpack.c.b16 %v933, %v933
  %v998 = vpack.c.b16 %v934, %v934
  %v999 = vpack.c.b16 %v935, %v935
  %v1000 = vpack.c.b16 %v936, %v936
  %v1001 = vpack.c.b16 %v937, %v937
  %v1002 = vpack.c.b16 %v938, %v938
  %v1003 = vpack.c.b16 %v939, %v939
  %v1004 = vpack.c.b16 %v940, %v940
  %v1005 = vpack.c.b16 %v941, %v941
  %v1006 = vpack.c.b16 %v942, %v942
  %v1007 = vpack.c.b16 %v943, %v943
  %v1008 = vpack.c.b16 %v944, %v944
  %v1009 = vpack.c.b16 %v945, %v945
  %v1010 = vpack.c.b16 %v946, %v946
  %v1011 = vpack.c.b16 %v947, %v947
  %v1012 = vpack.c.b16 %v948, %v948
  %v1013 = vpack.c.b16 %v949, %v949
  %v1014 = vpack.c.b16 %v950, %v950
  %v1015 = vpack.c.b16 %v951, %v951
  %v1016 = vpack.c.b16 %v952, %v952
  %v1017 = vpack.c.b16 %v953, %v953
  %v1018 = vpack.c.b16 %v954, %v954
  %v1019 = vpack.c.b16 %v955, %v955
  %v1020 = vpack.c.b16 %v956, %v956
  %v1021 = vpack.c.b16 %v957, %v957
  %v1022 = vpack.c.b16 %v958, %v958
  %v1023 = vpack.c.b16 %v959, %v959
  %v1024 = vpack.c.b16 %v960, %v960
  %1089 = vst [vmem:[%s4] sm:$0xf] %v961
  %1090 = vst [vmem:[%s4 + $0x4] sm:$0xf] %v962
  %1091 = vst [vmem:[%s4 + $0x8] sm:$0xf] %v963
  %1092 = vst [vmem:[%s4 + $0xc] sm:$0xf] %v964
  %1093 = vst [vmem:[%s4 + $0x10] sm:$0xf] %v965
  %1094 = vst [vmem:[%s4 + $0x14] sm:$0xf] %v966
  %1095 = vst [vmem:[%s4 + $0x18] sm:$0xf] %v967
  %1096 = vst [vmem:[%s4 + $0x1c] sm:$0xf] %v968
  %1097 = vst [vmem:[%s4 + $0x20] sm:$0xf] %v969
  %1098 = vst [vmem:[%s4 + $0x24] sm:$0xf] %v970
  %1099 = vst [vmem:[%s4 + $0x28] sm:$0xf] %v971
  %1100 = vst [vmem:[%s4 + $0x2c] sm:$0xf] %v972
  %1101 = vst [vmem:[%s4 + $0x30] sm:$0xf] %v973
  %1102 = vst [vmem:[%s4 + $0x34] sm:$0xf] %v974
  %1103 = vst [vmem:[%s4 + $0x38] sm:$0xf] %v975
  %1104 = vst [vmem:[%s4 + $0x3c] sm:$0xf] %v976
  %1105 = vst [vmem:[%s4 + $0x40] sm:$0xf] %v977
  %1106 = vst [vmem:[%s4 + $0x44] sm:$0xf] %v978
  %1107 = vst [vmem:[%s4 + $0x48] sm:$0xf] %v979
  %1108 = vst [vmem:[%s4 + $0x4c] sm:$0xf] %v980
  %1109 = vst [vmem:[%s4 + $0x50] sm:$0xf] %v981
  %1110 = vst [vmem:[%s4 + $0x54] sm:$0xf] %v982
  %1111 = vst [vmem:[%s4 + $0x58] sm:$0xf] %v983
  %1112 = vst [vmem:[%s4 + $0x5c] sm:$0xf] %v984
  %1113 = vst [vmem:[%s4 + $0x60] sm:$0xf] %v985
  %1114 = vst [vmem:[%s4 + $0x64] sm:$0xf] %v986
  %1115 = vst [vmem:[%s4 + $0x68] sm:$0xf] %v987
  %1116 = vst [vmem:[%s4 + $0x6c] sm:$0xf] %v988
  %1117 = vst [vmem:[%s4 + $0x70] sm:$0xf] %v989
  %1118 = vst [vmem:[%s4 + $0x74] sm:$0xf] %v990
  %1119 = vst [vmem:[%s4 + $0x78] sm:$0xf] %v991
  %1120 = vst [vmem:[%s4 + $0x7c] sm:$0xf] %v992
  %1121 = vst [vmem:[%s4 + $0x80] sm:$0xf] %v993
  %1122 = vst [vmem:[%s4 + $0x84] sm:$0xf] %v994
  %1123 = vst [vmem:[%s4 + $0x88] sm:$0xf] %v995
  %1124 = vst [vmem:[%s4 + $0x8c] sm:$0xf] %v996
  %1125 = vst [vmem:[%s4 + $0x90] sm:$0xf] %v997
  %1126 = vst [vmem:[%s4 + $0x94] sm:$0xf] %v998
  %1127 = vst [vmem:[%s4 + $0x98] sm:$0xf] %v999
  %1128 = vst [vmem:[%s4 + $0x9c] sm:$0xf] %v1000
  %1129 = vst [vmem:[%s4 + $0xa0] sm:$0xf] %v1001
  %1130 = vst [vmem:[%s4 + $0xa4] sm:$0xf] %v1002
  %1131 = vst [vmem:[%s4 + $0xa8] sm:$0xf] %v1003
  %1132 = vst [vmem:[%s4 + $0xac] sm:$0xf] %v1004
  %1133 = vst [vmem:[%s4 + $0xb0] sm:$0xf] %v1005
  %1134 = vst [vmem:[%s4 + $0xb4] sm:$0xf] %v1006
  %1135 = vst [vmem:[%s4 + $0xb8] sm:$0xf] %v1007
  %1136 = vst [vmem:[%s4 + $0xbc] sm:$0xf] %v1008
  %1137 = vst [vmem:[%s4 + $0xc0] sm:$0xf] %v1009
  %1138 = vst [vmem:[%s4 + $0xc4] sm:$0xf] %v1010
  %1139 = vst [vmem:[%s4 + $0xc8] sm:$0xf] %v1011
  %1140 = vst [vmem:[%s4 + $0xcc] sm:$0xf] %v1012
  %1141 = vst [vmem:[%s4 + $0xd0] sm:$0xf] %v1013
  %1142 = vst [vmem:[%s4 + $0xd4] sm:$0xf] %v1014
  %1143 = vst [vmem:[%s4 + $0xd8] sm:$0xf] %v1015
  %1144 = vst [vmem:[%s4 + $0xdc] sm:$0xf] %v1016
  %1145 = vst [vmem:[%s4 + $0xe0] sm:$0xf] %v1017
  %1146 = vst [vmem:[%s4 + $0xe4] sm:$0xf] %v1018
  %1147 = vst [vmem:[%s4 + $0xe8] sm:$0xf] %v1019
  %1148 = vst [vmem:[%s4 + $0xec] sm:$0xf] %v1020
  %1149 = vst [vmem:[%s4 + $0xf0] sm:$0xf] %v1021
  %1150 = vst [vmem:[%s4 + $0xf4] sm:$0xf] %v1022
  %1151 = vst [vmem:[%s4 + $0xf8] sm:$0xf] %v1023
  %1152 = vst [vmem:[%s4 + $0xfc] sm:$0xf] %v1024
  // Predicated region
  $region18: #{two_block_forward.4} parent=0 // pred_check
    _
  $region19: #{two_block_forward.4} parent=0 // pred_check_branch
    %1154 = sbr.rel (0) target = $region21
  $region20: #{two_block_forward.4} parent=0 // pred_region
    _
  $region21: #{two_block_forward.4} parent=0 // pred_fallthru
    _
  // Predicated region
  $region22: #{two_block_forward.4} parent=0 // pred_check
    _
  $region23: #{two_block_forward.4} parent=0 // pred_check_branch
    %1156 = sbr.rel (0) target = $region25
  $region24: #{two_block_forward.4} parent=0 // pred_region
    _
  $region25: #{two_block_forward.4} parent=0 // pred_fallthru
    _

// kernel: two_block_forward.5
$region0: #{two_block_forward.5}
  #allocation0 [shape = 'u32[]', space=smem, size = 0x4, offset = 0x4, fixed_abs, tag = 'smem constant byte address 0x4 - core index']
  #allocation1 [shape = 'u32[144,128]{1,0:T(1,128)}', space=vmem, size = 0x12000, scoped, tag = 'internal scratch']
  #allocation2 [shape = 'bf16[168,128]{1,0:T(8,128)(2,1)}', space=vmem, size = 0xa800, scoped, tag = 'scratch operand']
  %s0 = inlined_call_operand.vmem [shape: bf16[2,16,16,128], index: 0, kind: input, shape index: {}, may-alias: {0,1,2}]
  %s1 = inlined_call_operand.vmem [shape: bf16[2,16,16,128], index: 1, kind: input, shape index: {}, may-alias: {0,1,2}]
  %s2 = inlined_call_operand.vmem [shape: bf16[2,16,16,128], index: 2, kind: input, shape index: {}, may-alias: {0,1,2}]
  %s3 = inlined_call_operand.vmem [shape: bf16[2,16,16,128], index: 3, kind: input, shape index: {}]
  %s4 = inlined_call_operand.vmem [shape: bf16[3,3,128,128], index: 4, kind: input, shape index: {}]
  %s5 = inlined_call_operand.vmem [shape: f32[1,128], index: 5, kind: input, shape index: {}]
  %s6 = inlined_call_operand.vmem [shape: f32[1,128], index: 6, kind: input, shape index: {}]
  %s7 = inlined_call_operand.vmem [shape: bf16[128,128], index: 7, kind: input, shape index: {}]
  %s8 = inlined_call_operand.vmem [shape: f32[1,128], index: 8, kind: input, shape index: {}]
  %s9 = inlined_call_operand.vmem [shape: f32[1,128], index: 9, kind: input, shape index: {}]
  %s10 = inlined_call_operand.vmem [shape: bf16[128,128], index: 10, kind: input, shape index: {}]
  %s11 = inlined_call_operand.vmem [shape: f32[1,128], index: 11, kind: input, shape index: {}]
  %s12 = inlined_call_operand.vmem [shape: f32[1,128], index: 12, kind: input, shape index: {}]
  %s13 = inlined_call_operand.vmem [shape: bf16[2,16,16,128], index: 13, kind: output, shape index: {}]
  %s14 = sld [smem:[#allocation0]]
  $region101: #{two_block_forward.5} parent=0
    _
  %s16 = ssub.s32 1, %s14
  %s17 = scalar_select 0, %s16, %s14
  loop: start=0, step=1, limit=6
  $region2: #{two_block_forward.5} parent=0 // loop_pre_header
    _
  $region3: #{two_block_forward.5} parent=0 // loop_header
    %s19 = sphi 0, %s23
    %p20 = scmp.ge.s32.totalorder %s19, 6
    %s26 = sphi 0, %s38
    %s27 = sphi 0, %s34
    %s28 = sphi 0, %s26
    %s29 = sphi 0, %s27
    %s30 = sphi 0, %s28
    %s31 = sphi 0, %s29
    %s43 = sphi 0, %s45
    %s46 = sphi 0, %s43
    %s47 = sphi 0, %s46
    %s63 = sphi 0, %s47
    %s77 = sphi 0, %s79
    %s80 = sphi 0, %s77
    %s81 = sphi 0, %s80
    %s97 = sphi 0, %s81
    %s111 = sphi 0, %s113
    %s114 = sphi 0, %s111
    %s115 = sphi 0, %s114
    %s131 = sphi 0, %s115
    %s139 = sphi 0, %s141
    %s142 = sphi 0, %s139
    %s143 = sphi 0, %s142
    %s159 = sphi 0, %s143
    %s163 = sphi 0, %s163
    %s165 = sphi 0, %s163
    %s166 = sphi 0, %s165
    %s180 = sphi 0, %s166
    %s184 = sphi 0, %s184
    %s186 = sphi 0, %s184
    %s187 = sphi 0, %s186
    %s201 = sphi 0, %s187
    %s205 = sphi 0, %s205
    %s207 = sphi 0, %s205
    %s208 = sphi 0, %s207
    %s222 = sphi 0, %s208
    %s226 = sphi 0, %s226
    %s228 = sphi 0, %s226
    %s229 = sphi 0, %s228
    %s243 = sphi 0, %s229
    %s247 = sphi 0, %s247
    %s249 = sphi 0, %s247
    %s250 = sphi 0, %s249
    %s264 = sphi 0, %s250
    %s268 = sphi 0, %s268
    %s270 = sphi 0, %s268
    %s271 = sphi 0, %s270
    %s285 = sphi 0, %s271
    %s289 = sphi 0, %s289
    %s291 = sphi 0, %s289
    %s292 = sphi 0, %s291
    %s306 = sphi 0, %s292
    %s310 = sphi 0, %s310
    %s312 = sphi 0, %s310
    %s313 = sphi 0, %s312
    %s327 = sphi 0, %s313
    %s331 = sphi 0, %s331
    %s333 = sphi 0, %s331
    %s334 = sphi 0, %s333
    %s348 = sphi 0, %s334
    %s356 = sphi 0, %s358
    %s359 = sphi 0, %s356
    %s360 = sphi 0, %s359
    %s376 = sphi 0, %s360
  $region4: #{two_block_forward.5} parent=0 // loop_header_branch
    %22 = sbr.rel (%p20) target = $region8
  $region5: #{two_block_forward.5} parent=0 // loop_body
    %s24 = ssub.s32 %s19, 1
    %s25 = ssub.s32 %s19, 2
    %s32 = sadd.s32 1, %s27
    %p33 = scmp.ge.s32.totalorder %s32, 2
    %s34 = scalar_select %p33, 0, %s32
    %s35 = sadd.s32 1, %s26
    %s36 = scalar_select %p33, %s35, %s26
    %p37 = scmp.ge.s32.totalorder %s36, 2
    %s38 = scalar_select %p37, 0, %s36
    %s39 = ssub.s32 %s26, %s38
    %s40 = ssub.s32 %s27, %s34
    %s41 = sor.u32 %s39, %s40
    %p42 = scmp.eq.s32.totalorder %s41, 0
    %s44 = sadd.s32 %s43, 1
    %s45 = scalar_select %p42, %s43, %s44
    %p48 = pneg %p42
    %p49 = scmp.eq.s32.totalorder %s19, 3
    %p50 = por %p48, %p49
    %p51 = scmp.ne.s32.totalorder %s43, %s46
    %p52 = scmp.eq.s32.totalorder %s19, 0
    %p53 = por %p51, %p52
    %p54 = scmp.ne.s32.totalorder %s43, %s46
    %p55 = scmp.eq.s32.totalorder %s24, 3
    %p56 = por %p54, %p55
    %p57 = scmp.ne.s32.totalorder %s46, %s47
    %p58 = scmp.eq.s32.totalorder %s24, 0
    %p59 = por %p57, %p58
    %p60 = scmp.ne.s32.totalorder %s46, %s47
    %p61 = scmp.eq.s32.totalorder %s25, 3
    %p62 = por %p60, %p61
    %p64 = scmp.ne.s32.totalorder %s47, %s63
    %p65 = scmp.eq.s32.totalorder %s25, 0
    %p66 = por %p64, %p65
    %s67 = ssub.s32 %s27, 1
    %p68 = scmp.gt.s32.totalorder %s67, 0
    %s69 = scalar_select %p68, %s67, 0
    %s70 = ssub.s32 %s34, 1
    %p71 = scmp.gt.s32.totalorder %s70, 0
    %s72 = scalar_select %p71, %s70, 0
    %s73 = ssub.s32 %s26, %s38
    %s74 = ssub.s32 %s69, %s72
    %s75 = sor.u32 %s73, %s74
    %p76 = scmp.eq.s32.totalorder %s75, 0
    %s78 = sadd.s32 %s77, 1
    %s79 = scalar_select %p76, %s77, %s78
    %p82 = pneg %p76
    %p83 = scmp.eq.s32.totalorder %s19, 3
    %p84 = por %p82, %p83
    %p85 = scmp.ne.s32.totalorder %s77, %s80
    %p86 = scmp.eq.s32.totalorder %s19, 0
    %p87 = por %p85, %p86
    %p88 = scmp.ne.s32.totalorder %s77, %s80
    %p89 = scmp.eq.s32.totalorder %s24, 3
    %p90 = por %p88, %p89
    %p91 = scmp.ne.s32.totalorder %s80, %s81
    %p92 = scmp.eq.s32.totalorder %s24, 0
    %p93 = por %p91, %p92
    %p94 = scmp.ne.s32.totalorder %s80, %s81
    %p95 = scmp.eq.s32.totalorder %s25, 3
    %p96 = por %p94, %p95
    %p98 = scmp.ne.s32.totalorder %s81, %s97
    %p99 = scmp.eq.s32.totalorder %s25, 0
    %p100 = por %p98, %p99
    %s101 = sadd.s32 %s27, 1
    %p102 = scmp.lt.s32.totalorder %s101, 1
    %s103 = scalar_select %p102, %s101, 1
    %s104 = sadd.s32 %s34, 1
    %p105 = scmp.lt.s32.totalorder %s104, 1
    %s106 = scalar_select %p105, %s104, 1
    %s107 = ssub.s32 %s26, %s38
    %s108 = ssub.s32 %s103, %s106
    %s109 = sor.u32 %s107, %s108
    %p110 = scmp.eq.s32.totalorder %s109, 0
    %s112 = sadd.s32 %s111, 1
    %s113 = scalar_select %p110, %s111, %s112
    %p116 = pneg %p110
    %p117 = scmp.eq.s32.totalorder %s19, 3
    %p118 = por %p116, %p117
    %p119 = scmp.ne.s32.totalorder %s111, %s114
    %p120 = scmp.eq.s32.totalorder %s19, 0
    %p121 = por %p119, %p120
    %p122 = scmp.ne.s32.totalorder %s111, %s114
    %p123 = scmp.eq.s32.totalorder %s24, 3
    %p124 = por %p122, %p123
    %p125 = scmp.ne.s32.totalorder %s114, %s115
    %p126 = scmp.eq.s32.totalorder %s24, 0
    %p127 = por %p125, %p126
    %p128 = scmp.ne.s32.totalorder %s114, %s115
    %p129 = scmp.eq.s32.totalorder %s25, 3
    %p130 = por %p128, %p129
    %p132 = scmp.ne.s32.totalorder %s115, %s131
    %p133 = scmp.eq.s32.totalorder %s25, 0
    %p134 = por %p132, %p133
    %s135 = ssub.s32 %s26, %s38
    %s136 = ssub.s32 %s27, %s34
    %s137 = sor.u32 %s135, %s136
    %p138 = scmp.eq.s32.totalorder %s137, 0
    %s140 = sadd.s32 %s139, 1
    %s141 = scalar_select %p138, %s139, %s140
    %p144 = pneg %p138
    %p145 = scmp.eq.s32.totalorder %s19, 3
    %p146 = por %p144, %p145
    %p147 = scmp.ne.s32.totalorder %s139, %s142
    %p148 = scmp.eq.s32.totalorder %s19, 0
    %p149 = por %p147, %p148
    %p150 = scmp.ne.s32.totalorder %s139, %s142
    %p151 = scmp.eq.s32.totalorder %s24, 3
    %p152 = por %p150, %p151
    %p153 = scmp.ne.s32.totalorder %s142, %s143
    %p154 = scmp.eq.s32.totalorder %s24, 0
    %p155 = por %p153, %p154
    %p156 = scmp.ne.s32.totalorder %s142, %s143
    %p157 = scmp.eq.s32.totalorder %s25, 3
    %p158 = por %p156, %p157
    %p160 = scmp.ne.s32.totalorder %s143, %s159
    %p161 = scmp.eq.s32.totalorder %s25, 0
    %p162 = por %p160, %p161
    %s164 = sadd.s32 %s163, 1
    %p167 = scmp.eq.s32.totalorder %s19, 3
    %p168 = scmp.ne.s32.totalorder %s163, %s165
    %p169 = scmp.eq.s32.totalorder %s19, 0
    %p170 = por %p168, %p169
    %p171 = scmp.ne.s32.totalorder %s163, %s165
    %p172 = scmp.eq.s32.totalorder %s24, 3
    %p173 = por %p171, %p172
    %p174 = scmp.ne.s32.totalorder %s165, %s166
    %p175 = scmp.eq.s32.totalorder %s24, 0
    %p176 = por %p174, %p175
    %p177 = scmp.ne.s32.totalorder %s165, %s166
    %p178 = scmp.eq.s32.totalorder %s25, 3
    %p179 = por %p177, %p178
    %p181 = scmp.ne.s32.totalorder %s166, %s180
    %p182 = scmp.eq.s32.totalorder %s25, 0
    %p183 = por %p181, %p182
    %s185 = sadd.s32 %s184, 1
    %p188 = scmp.eq.s32.totalorder %s19, 3
    %p189 = scmp.ne.s32.totalorder %s184, %s186
    %p190 = scmp.eq.s32.totalorder %s19, 0
    %p191 = por %p189, %p190
    %p192 = scmp.ne.s32.totalorder %s184, %s186
    %p193 = scmp.eq.s32.totalorder %s24, 3
    %p194 = por %p192, %p193
    %p195 = scmp.ne.s32.totalorder %s186, %s187
    %p196 = scmp.eq.s32.totalorder %s24, 0
    %p197 = por %p195, %p196
    %p198 = scmp.ne.s32.totalorder %s186, %s187
    %p199 = scmp.eq.s32.totalorder %s25, 3
    %p200 = por %p198, %p199
    %p202 = scmp.ne.s32.totalorder %s187, %s201
    %p203 = scmp.eq.s32.totalorder %s25, 0
    %p204 = por %p202, %p203
    %s206 = sadd.s32 %s205, 1
    %p209 = scmp.eq.s32.totalorder %s19, 3
    %p210 = scmp.ne.s32.totalorder %s205, %s207
    %p211 = scmp.eq.s32.totalorder %s19, 0
    %p212 = por %p210, %p211
    %p213 = scmp.ne.s32.totalorder %s205, %s207
    %p214 = scmp.eq.s32.totalorder %s24, 3
    %p215 = por %p213, %p214
    %p216 = scmp.ne.s32.totalorder %s207, %s208
    %p217 = scmp.eq.s32.totalorder %s24, 0
    %p218 = por %p216, %p217
    %p219 = scmp.ne.s32.totalorder %s207, %s208
    %p220 = scmp.eq.s32.totalorder %s25, 3
    %p221 = por %p219, %p220
    %p223 = scmp.ne.s32.totalorder %s208, %s222
    %p224 = scmp.eq.s32.totalorder %s25, 0
    %p225 = por %p223, %p224
    %s227 = sadd.s32 %s226, 1
    %p230 = scmp.eq.s32.totalorder %s19, 3
    %p231 = scmp.ne.s32.totalorder %s226, %s228
    %p232 = scmp.eq.s32.totalorder %s19, 0
    %p233 = por %p231, %p232
    %p234 = scmp.ne.s32.totalorder %s226, %s228
    %p235 = scmp.eq.s32.totalorder %s24, 3
    %p236 = por %p234, %p235
    %p237 = scmp.ne.s32.totalorder %s228, %s229
    %p238 = scmp.eq.s32.totalorder %s24, 0
    %p239 = por %p237, %p238
    %p240 = scmp.ne.s32.totalorder %s228, %s229
    %p241 = scmp.eq.s32.totalorder %s25, 3
    %p242 = por %p240, %p241
    %p244 = scmp.ne.s32.totalorder %s229, %s243
    %p245 = scmp.eq.s32.totalorder %s25, 0
    %p246 = por %p244, %p245
    %s248 = sadd.s32 %s247, 1
    %p251 = scmp.eq.s32.totalorder %s19, 3
    %p252 = scmp.ne.s32.totalorder %s247, %s249
    %p253 = scmp.eq.s32.totalorder %s19, 0
    %p254 = por %p252, %p253
    %p255 = scmp.ne.s32.totalorder %s247, %s249
    %p256 = scmp.eq.s32.totalorder %s24, 3
    %p257 = por %p255, %p256
    %p258 = scmp.ne.s32.totalorder %s249, %s250
    %p259 = scmp.eq.s32.totalorder %s24, 0
    %p260 = por %p258, %p259
    %p261 = scmp.ne.s32.totalorder %s249, %s250
    %p262 = scmp.eq.s32.totalorder %s25, 3
    %p263 = por %p261, %p262
    %p265 = scmp.ne.s32.totalorder %s250, %s264
    %p266 = scmp.eq.s32.totalorder %s25, 0
    %p267 = por %p265, %p266
    %s269 = sadd.s32 %s268, 1
    %p272 = scmp.eq.s32.totalorder %s19, 3
    %p273 = scmp.ne.s32.totalorder %s268, %s270
    %p274 = scmp.eq.s32.totalorder %s19, 0
    %p275 = por %p273, %p274
    %p276 = scmp.ne.s32.totalorder %s268, %s270
    %p277 = scmp.eq.s32.totalorder %s24, 3
    %p278 = por %p276, %p277
    %p279 = scmp.ne.s32.totalorder %s270, %s271
    %p280 = scmp.eq.s32.totalorder %s24, 0
    %p281 = por %p279, %p280
    %p282 = scmp.ne.s32.totalorder %s270, %s271
    %p283 = scmp.eq.s32.totalorder %s25, 3
    %p284 = por %p282, %p283
    %p286 = scmp.ne.s32.totalorder %s271, %s285
    %p287 = scmp.eq.s32.totalorder %s25, 0
    %p288 = por %p286, %p287
    %s290 = sadd.s32 %s289, 1
    %p293 = scmp.eq.s32.totalorder %s19, 3
    %p294 = scmp.ne.s32.totalorder %s289, %s291
    %p295 = scmp.eq.s32.totalorder %s19, 0
    %p296 = por %p294, %p295
    %p297 = scmp.ne.s32.totalorder %s289, %s291
    %p298 = scmp.eq.s32.totalorder %s24, 3
    %p299 = por %p297, %p298
    %p300 = scmp.ne.s32.totalorder %s291, %s292
    %p301 = scmp.eq.s32.totalorder %s24, 0
    %p302 = por %p300, %p301
    %p303 = scmp.ne.s32.totalorder %s291, %s292
    %p304 = scmp.eq.s32.totalorder %s25, 3
    %p305 = por %p303, %p304
    %p307 = scmp.ne.s32.totalorder %s292, %s306
    %p308 = scmp.eq.s32.totalorder %s25, 0
    %p309 = por %p307, %p308
    %s311 = sadd.s32 %s310, 1
    %p314 = scmp.eq.s32.totalorder %s19, 3
    %p315 = scmp.ne.s32.totalorder %s310, %s312
    %p316 = scmp.eq.s32.totalorder %s19, 0
    %p317 = por %p315, %p316
    %p318 = scmp.ne.s32.totalorder %s310, %s312
    %p319 = scmp.eq.s32.totalorder %s24, 3
    %p320 = por %p318, %p319
    %p321 = scmp.ne.s32.totalorder %s312, %s313
    %p322 = scmp.eq.s32.totalorder %s24, 0
    %p323 = por %p321, %p322
    %p324 = scmp.ne.s32.totalorder %s312, %s313
    %p325 = scmp.eq.s32.totalorder %s25, 3
    %p326 = por %p324, %p325
    %p328 = scmp.ne.s32.totalorder %s313, %s327
    %p329 = scmp.eq.s32.totalorder %s25, 0
    %p330 = por %p328, %p329
    %s332 = sadd.s32 %s331, 1
    %p335 = scmp.eq.s32.totalorder %s19, 3
    %p336 = scmp.ne.s32.totalorder %s331, %s333
    %p337 = scmp.eq.s32.totalorder %s19, 0
    %p338 = por %p336, %p337
    %p339 = scmp.ne.s32.totalorder %s331, %s333
    %p340 = scmp.eq.s32.totalorder %s24, 3
    %p341 = por %p339, %p340
    %p342 = scmp.ne.s32.totalorder %s333, %s334
    %p343 = scmp.eq.s32.totalorder %s24, 0
    %p344 = por %p342, %p343
    %p345 = scmp.ne.s32.totalorder %s333, %s334
    %p346 = scmp.eq.s32.totalorder %s25, 3
    %p347 = por %p345, %p346
    %p349 = scmp.ne.s32.totalorder %s334, %s348
    %p350 = scmp.eq.s32.totalorder %s25, 0
    %p351 = por %p349, %p350
    %s352 = ssub.s32 %s26, %s38
    %s353 = ssub.s32 %s27, %s34
    %s354 = sor.u32 %s352, %s353
    %p355 = scmp.eq.s32.totalorder %s354, 0
    %s357 = sadd.s32 %s356, 1
    %s358 = scalar_select %p355, %s356, %s357
    %p361 = pneg %p355
    %p362 = scmp.eq.s32.totalorder %s19, 3
    %p363 = por %p361, %p362
    %p364 = scmp.ne.s32.totalorder %s356, %s359
    %p365 = scmp.eq.s32.totalorder %s19, 0
    %p366 = por %p364, %p365
    %p367 = scmp.ne.s32.totalorder %s356, %s359
    %p368 = scmp.eq.s32.totalorder %s24, 3
    %p369 = por %p367, %p368
    %p370 = scmp.ne.s32.totalorder %s359, %s360
    %p371 = scmp.eq.s32.totalorder %s24, 0
    %p372 = por %p370, %p371
    %p373 = scmp.ne.s32.totalorder %s359, %s360
    %p374 = scmp.eq.s32.totalorder %s25, 3
    %p375 = por %p373, %p374
    %p377 = scmp.ne.s32.totalorder %s360, %s376
    %p378 = scmp.eq.s32.totalorder %s25, 0
    %p379 = por %p377, %p378
    %p380 = scmp.le.s32.totalorder 1, %s19
    %p381 = scmp.lt.s32.totalorder %s19, 5
    %p382 = pnand %p380, %p381
    %p383 = pneg %p382
    // Predicated region
    $region9: #{two_block_forward.5} parent=5 // pred_check
      _
    $region10: #{two_block_forward.5} parent=5 // pred_check_branch
      %385 = sbr.rel (%p382) target = $region12
    $region11: #{two_block_forward.5} parent=5 // pred_region
      %s386 = ssub.s32 %s19, 1
      // Predicated region
      $region13: #{two_block_forward.5} parent=11 // pred_check
        %p387 = pneg %p176
      $region14: #{two_block_forward.5} parent=11 // pred_check_branch
        %389 = sbr.rel (%p387) target = $region16
      $region15: #{two_block_forward.5} parent=11 // pred_region
        _
      $region16: #{two_block_forward.5} parent=11 // pred_fallthru
        _
      // Predicated region
      $region17: #{two_block_forward.5} parent=11 // pred_check
        %p390 = pneg %p197
      $region18: #{two_block_forward.5} parent=11 // pred_check_branch
        %392 = sbr.rel (%p390) target = $region20
      $region19: #{two_block_forward.5} parent=11 // pred_region
        _
      $region20: #{two_block_forward.5} parent=11 // pred_fallthru
        _
      // Predicated region
      $region21: #{two_block_forward.5} parent=11 // pred_check
        %p393 = pneg %p218
      $region22: #{two_block_forward.5} parent=11 // pred_check_branch
        %395 = sbr.rel (%p393) target = $region24
      $region23: #{two_block_forward.5} parent=11 // pred_region
        _
      $region24: #{two_block_forward.5} parent=11 // pred_fallthru
        _
      // Predicated region
      $region25: #{two_block_forward.5} parent=11 // pred_check
        %p396 = pneg %p239
      $region26: #{two_block_forward.5} parent=11 // pred_check_branch
        %398 = sbr.rel (%p396) target = $region28
      $region27: #{two_block_forward.5} parent=11 // pred_region
        _
      $region28: #{two_block_forward.5} parent=11 // pred_fallthru
        _
      // Predicated region
      $region29: #{two_block_forward.5} parent=11 // pred_check
        %p399 = pneg %p260
      $region30: #{two_block_forward.5} parent=11 // pred_check_branch
        %401 = sbr.rel (%p399) target = $region32
      $region31: #{two_block_forward.5} parent=11 // pred_region
        _
      $region32: #{two_block_forward.5} parent=11 // pred_fallthru
        _
      // Predicated region
      $region33: #{two_block_forward.5} parent=11 // pred_check
        %p402 = pneg %p281
      $region34: #{two_block_forward.5} parent=11 // pred_check_branch
        %404 = sbr.rel (%p402) target = $region36
      $region35: #{two_block_forward.5} parent=11 // pred_region
        _
      $region36: #{two_block_forward.5} parent=11 // pred_fallthru
        _
      // Predicated region
      $region37: #{two_block_forward.5} parent=11 // pred_check
        %p405 = pneg %p302
      $region38: #{two_block_forward.5} parent=11 // pred_check_branch
        %407 = sbr.rel (%p405) target = $region40
      $region39: #{two_block_forward.5} parent=11 // pred_region
        _
      $region40: #{two_block_forward.5} parent=11 // pred_fallthru
        _
      // Predicated region
      $region41: #{two_block_forward.5} parent=11 // pred_check
        %p408 = pneg %p323
      $region42: #{two_block_forward.5} parent=11 // pred_check_branch
        %410 = sbr.rel (%p408) target = $region44
      $region43: #{two_block_forward.5} parent=11 // pred_region
        _
      $region44: #{two_block_forward.5} parent=11 // pred_fallthru
        _
      // Predicated region
      $region45: #{two_block_forward.5} parent=11 // pred_check
        %p411 = pneg %p344
      $region46: #{two_block_forward.5} parent=11 // pred_check_branch
        %413 = sbr.rel (%p411) target = $region48
      $region47: #{two_block_forward.5} parent=11 // pred_region
        _
      $region48: #{two_block_forward.5} parent=11 // pred_fallthru
        _
    $region12: #{two_block_forward.5} parent=5 // pred_fallthru
      _
    %p414 = scmp.lt.s32.totalorder %s19, 4
    // Predicated region
    $region49: #{two_block_forward.5} parent=5 // pred_check
      %p415 = pneg %p414
    $region50: #{two_block_forward.5} parent=5 // pred_check_branch
      %417 = sbr.rel (%p415) target = $region52
    $region51: #{two_block_forward.5} parent=5 // pred_region
      // Predicated region
      $region53: #{two_block_forward.5} parent=51 // pred_check
        %p418 = pneg %p53
      $region54: #{two_block_forward.5} parent=51 // pred_check_branch
        %420 = sbr.rel (%p418) target = $region56
      $region55: #{two_block_forward.5} parent=51 // pred_region
        %s421 = smul.u32 8, %s27
        %p422 = scmp.lt.s32.totalorder %s26, 1
        %s423 = scalar_select %p422, %s26, 1
        %p424 = scmp.lt.s32.totalorder %s421, 15
        %s425 = scalar_select %p424, %s421, 15
        %s426 = smul.addr %s425, 2
        %s427 = smul.addr %s423, 32
        %s428 = sadd.s32 %s426, %s427
        %s429 = smul.addr %s428, 4
        %s430 = scalar_lea.vmem %s0, %s429
        %s431 = smul.u32 8, %s27
      $region56: #{two_block_forward.5} parent=51 // pred_fallthru
        _
      // Predicated region
      $region57: #{two_block_forward.5} parent=51 // pred_check
        %p432 = pneg %p87
      $region58: #{two_block_forward.5} parent=51 // pred_check_branch
        %434 = sbr.rel (%p432) target = $region60
      $region59: #{two_block_forward.5} parent=51 // pred_region
        %s435 = ssub.s32 %s27, 1
        %p436 = scmp.gt.s32.totalorder %s435, 0
        %s437 = scalar_select %p436, %s435, 0
        %s438 = smul.u32 8, %s437
        %p439 = scmp.lt.s32.totalorder %s26, 1
        %s440 = scalar_select %p439, %s26, 1
        %p441 = scmp.lt.s32.totalorder %s438, 15
        %s442 = scalar_select %p441, %s438, 15
        %s443 = smul.addr %s442, 2
        %s444 = smul.addr %s440, 32
        %s445 = sadd.s32 %s443, %s444
        %s446 = smul.addr %s445, 4
        %s447 = scalar_lea.vmem %s1, %s446
        %s448 = ssub.s32 %s27, 1
        %p449 = scmp.gt.s32.totalorder %s448, 0
        %s450 = scalar_select %p449, %s448, 0
        %s451 = smul.u32 8, %s450
      $region60: #{two_block_forward.5} parent=51 // pred_fallthru
        _
      // Predicated region
      $region61: #{two_block_forward.5} parent=51 // pred_check
        %p452 = pneg %p121
      $region62: #{two_block_forward.5} parent=51 // pred_check_branch
        %454 = sbr.rel (%p452) target = $region64
      $region63: #{two_block_forward.5} parent=51 // pred_region
        %s455 = sadd.s32 %s27, 1
        %p456 = scmp.lt.s32.totalorder %s455, 1
        %s457 = scalar_select %p456, %s455, 1
        %s458 = smul.u32 8, %s457
        %p459 = scmp.lt.s32.totalorder %s26, 1
        %s460 = scalar_select %p459, %s26, 1
        %p461 = scmp.lt.s32.totalorder %s458, 15
        %s462 = scalar_select %p461, %s458, 15
        %s463 = smul.addr %s462, 2
        %s464 = smul.addr %s460, 32
        %s465 = sadd.s32 %s463, %s464
        %s466 = smul.addr %s465, 4
        %s467 = scalar_lea.vmem %s2, %s466
        %s468 = sadd.s32 %s27, 1
        %p469 = scmp.lt.s32.totalorder %s468, 1
        %s470 = scalar_select %p469, %s468, 1
        %s471 = smul.u32 8, %s470
      $region64: #{two_block_forward.5} parent=51 // pred_fallthru
        _
      // Predicated region
      $region65: #{two_block_forward.5} parent=51 // pred_check
        %p472 = pneg %p149
      $region66: #{two_block_forward.5} parent=51 // pred_check_branch
        %474 = sbr.rel (%p472) target = $region68
      $region67: #{two_block_forward.5} parent=51 // pred_region
        %s475 = smul.u32 8, %s27
        %p476 = scmp.lt.s32.totalorder %s26, 1
        %s477 = scalar_select %p476, %s26, 1
        %p478 = scmp.lt.s32.totalorder %s475, 15
        %s479 = scalar_select %p478, %s475, 15
        %s480 = smul.addr %s479, 2
        %s481 = smul.addr %s477, 32
        %s482 = sadd.s32 %s480, %s481
        %s483 = smul.addr %s482, 4
        %s484 = scalar_lea.vmem %s3, %s483
        %s485 = smul.u32 8, %s27
      $region68: #{two_block_forward.5} parent=51 // pred_fallthru
        _
    $region52: #{two_block_forward.5} parent=5 // pred_fallthru
      _
    %p486 = scmp.le.s32.totalorder 1, %s19
    %p487 = scmp.lt.s32.totalorder %s19, 5
    %p488 = pnand %p486, %p487
    %p489 = pneg %p488
    // Predicated region
    $region69: #{two_block_forward.5} parent=5 // pred_check
      _
    $region70: #{two_block_forward.5} parent=5 // pred_check_branch
      %491 = sbr.rel (%p488) target = $region72
    $region71: #{two_block_forward.5} parent=5 // pred_region
      %s492 = ssub.s32 %s19, 1
      %s493 = smul.u32 8, %s29
      %p494 = scmp.lt.s32.totalorder %s28, 1
      %s495 = scalar_select %p494, %s28, 1
      %p496 = scmp.lt.s32.totalorder %s493, 15
      %s497 = scalar_select %p496, %s493, 15
      %s498 = smul.addr %s497, 2
      %s499 = smul.addr %s495, 32
      %s500 = sadd.s32 %s498, %s499
      %s501 = smul.addr %s500, 4
      %s502 = scalar_lea.vmem %s0, %s501
      %p503 = pneg %p59
      %p504 = pneg %p56
      %s505 = ssub.s32 %s29, 1
      %p506 = scmp.gt.s32.totalorder %s505, 0
      %s507 = scalar_select %p506, %s505, 0
      %s508 = smul.u32 8, %s507
      %p509 = scmp.lt.s32.totalorder %s28, 1
      %s510 = scalar_select %p509, %s28, 1
      %p511 = scmp.lt.s32.totalorder %s508, 15
      %s512 = scalar_select %p511, %s508, 15
      %s513 = smul.addr %s512, 2
      %s514 = smul.addr %s510, 32
      %s515 = sadd.s32 %s513, %s514
      %s516 = smul.addr %s515, 4
      %s517 = scalar_lea.vmem %s1, %s516
      %p518 = pneg %p93
      %p519 = pneg %p90
      %s520 = sadd.s32 %s29, 1
      %p521 = scmp.lt.s32.totalorder %s520, 1
      %s522 = scalar_select %p521, %s520, 1
      %s523 = smul.u32 8, %s522
      %p524 = scmp.lt.s32.totalorder %s28, 1
      %s525 = scalar_select %p524, %s28, 1
      %p526 = scmp.lt.s32.totalorder %s523, 15
      %s527 = scalar_select %p526, %s523, 15
      %s528 = smul.addr %s527, 2
      %s529 = smul.addr %s525, 32
      %s530 = sadd.s32 %s528, %s529
      %s531 = smul.addr %s530, 4
      %s532 = scalar_lea.vmem %s2, %s531
      %p533 = pneg %p127
      %p534 = pneg %p124
      %s535 = smul.u32 8, %s29
      %p536 = scmp.lt.s32.totalorder %s28, 1
      %s537 = scalar_select %p536, %s28, 1
      %p538 = scmp.lt.s32.totalorder %s535, 15
      %s539 = scalar_select %p538, %s535, 15
      %s540 = smul.addr %s539, 2
      %s541 = smul.addr %s537, 32
      %s542 = sadd.s32 %s540, %s541
      %s543 = smul.addr %s542, 4
      %s544 = scalar_lea.vmem %s3, %s543
      %p545 = pneg %p155
      %p546 = pneg %p152
      %p547 = pneg %p176
      %p548 = pneg %p173
      %p549 = pneg %p197
      %p550 = pneg %p194
      %p551 = pneg %p218
      %p552 = pneg %p215
      %p553 = pneg %p239
      %p554 = pneg %p236
      %p555 = pneg %p260
      %p556 = pneg %p257
      %p557 = pneg %p281
      %p558 = pneg %p278
      %p559 = pneg %p302
      %p560 = pneg %p299
      %p561 = pneg %p323
      %p562 = pneg %p320
      %p563 = pneg %p344
      %p564 = pneg %p341
      %p565 = pneg %p372
      %p566 = pneg %p369
      %s567 = smul.u32 8, %s29
      %p568 = scmp.lt.s32.totalorder %s28, 1
      %s569 = scalar_select %p568, %s28, 1
      %p570 = scmp.lt.s32.totalorder %s567, 15
      %s571 = scalar_select %p570, %s567, 15
      %s572 = smul.addr %s571, 2
      %s573 = smul.addr %s569, 32
      %s574 = sadd.s32 %s572, %s573
      %s575 = smul.addr %s574, 4
      %s576 = scalar_lea.vmem %s13, %s575
      %s577 = smul.u32 8, %s29
      %p578 = scmp.lt.s32.totalorder %s28, 1
      %s579 = scalar_select %p578, %s28, 1
      %p580 = scmp.lt.s32.totalorder %s577, 15
      %s581 = scalar_select %p580, %s577, 15
      %s582 = smul.addr %s581, 2
      %s583 = smul.addr %s579, 32
      %s584 = sadd.s32 %s582, %s583
      %s585 = smul.addr %s584, 4
      %s586 = scalar_lea.vmem %s0, %s585
      %s587 = smul.u32 8, %s29
      %s588 = ssub.s32 %s29, 1
      %p589 = scmp.gt.s32.totalorder %s588, 0
      %s590 = scalar_select %p589, %s588, 0
      %s591 = smul.u32 8, %s590
      %p592 = scmp.lt.s32.totalorder %s28, 1
      %s593 = scalar_select %p592, %s28, 1
      %p594 = scmp.lt.s32.totalorder %s591, 15
      %s595 = scalar_select %p594, %s591, 15
      %s596 = smul.addr %s595, 2
      %s597 = smul.addr %s593, 32
      %s598 = sadd.s32 %s596, %s597
      %s599 = smul.addr %s598, 4
      %s600 = scalar_lea.vmem %s1, %s599
      %s601 = ssub.s32 %s29, 1
      %p602 = scmp.gt.s32.totalorder %s601, 0
      %s603 = scalar_select %p602, %s601, 0
      %s604 = smul.u32 8, %s603
      %s605 = sadd.s32 %s29, 1
      %p606 = scmp.lt.s32.totalorder %s605, 1
      %s607 = scalar_select %p606, %s605, 1
      %s608 = smul.u32 8, %s607
      %p609 = scmp.lt.s32.totalorder %s28, 1
      %s610 = scalar_select %p609, %s28, 1
      %p611 = scmp.lt.s32.totalorder %s608, 15
      %s612 = scalar_select %p611, %s608, 15
      %s613 = smul.addr %s612, 2
      %s614 = smul.addr %s610, 32
      %s615 = sadd.s32 %s613, %s614
      %s616 = smul.addr %s615, 4
      %s617 = scalar_lea.vmem %s2, %s616
      %s618 = sadd.s32 %s29, 1
      %p619 = scmp.lt.s32.totalorder %s618, 1
      %s620 = scalar_select %p619, %s618, 1
      %s621 = smul.u32 8, %s620
      %s622 = smul.u32 8, %s29
      %p623 = scmp.lt.s32.totalorder %s28, 1
      %s624 = scalar_select %p623, %s28, 1
      %p625 = scmp.lt.s32.totalorder %s622, 15
      %s626 = scalar_select %p625, %s622, 15
      %s627 = smul.addr %s626, 2
      %s628 = smul.addr %s624, 32
      %s629 = sadd.s32 %s627, %s628
      %s630 = smul.addr %s629, 4
      %s631 = scalar_lea.vmem %s3, %s630
      %s632 = smul.u32 8, %s29
      %s633 = smul.u32 8, %s29
      %p634 = scmp.lt.s32.totalorder %s28, 1
      %s635 = scalar_select %p634, %s28, 1
      %p636 = scmp.lt.s32.totalorder %s633, 15
      %s637 = scalar_select %p636, %s633, 15
      %s638 = smul.addr %s637, 2
      %s639 = smul.addr %s635, 32
      %s640 = sadd.s32 %s638, %s639
      %s641 = smul.addr %s640, 4
      %s642 = scalar_lea.vmem %s13, %s641
      %s643 = smul.u32 8, %s29
      %v647 = vld [vmem:[%s586] sm:$0xf]
      %v648 = vld [vmem:[%s586 + $0x4] sm:$0xf]
      %v649 = vld [vmem:[%s586 + $0x8] sm:$0xf]
      %v650 = vld [vmem:[%s586 + $0xc] sm:$0xf]
      %v651 = vld [vmem:[%s586 + $0x10] sm:$0xf]
      %v652 = vld [vmem:[%s586 + $0x14] sm:$0xf]
      %v653 = vld [vmem:[%s586 + $0x18] sm:$0xf]
      %v654 = vld [vmem:[%s586 + $0x1c] sm:$0xf]
      %v655 = vld [vmem:[%s586 + $0x20] sm:$0xf]
      %v656 = vld [vmem:[%s586 + $0x24] sm:$0xf]
      %v657 = vld [vmem:[%s586 + $0x28] sm:$0xf]
      %v658 = vld [vmem:[%s586 + $0x2c] sm:$0xf]
      %v659 = vld [vmem:[%s586 + $0x30] sm:$0xf]
      %v660 = vld [vmem:[%s586 + $0x34] sm:$0xf]
      %v661 = vld [vmem:[%s586 + $0x38] sm:$0xf]
      %v662 = vld [vmem:[%s586 + $0x3c] sm:$0xf]
      %vm663 = vsmask.f32 256
      %vm664 = vsmask.f32 4368
      %vm665 = vmor %vm663, %vm664
      %v667 = vshrl.u32 %v647, 16
      %v669 = vrot.slane %v667, 7
      %v670 = vshll.u32 %v647, 16
      %v672 = vor.u32 %v669, %v670
      %v673 = vrot.slane %v669, 4
      %v675 = vshrl.u32 %v648, 16
      %v677 = vrot.slane %v675, 7
      %v678 = vshll.u32 %v648, 16
      %v680 = vor.u32 %v677, %v678
      %v681 = vsel %vm665, %v673, %v680
      %v682 = vrot.slane %v677, 4
      %v684 = vshrl.u32 %v649, 16
      %v686 = vrot.slane %v684, 7
      %v687 = vshll.u32 %v649, 16
      %v689 = vor.u32 %v686, %v687
      %v690 = vsel %vm665, %v682, %v689
      %v691 = vrot.slane %v686, 4
      %v693 = vshrl.u32 %v650, 16
      %v695 = vrot.slane %v693, 7
      %v696 = vshll.u32 %v650, 16
      %v698 = vor.u32 %v695, %v696
      %v699 = vsel %vm665, %v691, %v698
      %v700 = vrot.slane %v695, 4
      %v702 = vshrl.u32 %v651, 16
      %v704 = vrot.slane %v702, 7
      %v705 = vshll.u32 %v651, 16
      %v707 = vor.u32 %v704, %v705
      %v708 = vsel %vm665, %v700, %v707
      %v709 = vrot.slane %v704, 4
      %v711 = vshrl.u32 %v652, 16
      %v713 = vrot.slane %v711, 7
      %v714 = vshll.u32 %v652, 16
      %v716 = vor.u32 %v713, %v714
      %v717 = vsel %vm665, %v709, %v716
      %v718 = vrot.slane %v713, 4
      %v720 = vshrl.u32 %v653, 16
      %v722 = vrot.slane %v720, 7
      %v723 = vshll.u32 %v653, 16
      %v725 = vor.u32 %v722, %v723
      %v726 = vsel %vm665, %v718, %v725
      %v727 = vrot.slane %v722, 4
      %v729 = vshrl.u32 %v654, 16
      %v731 = vrot.slane %v729, 7
      %v732 = vshll.u32 %v654, 16
      %v734 = vor.u32 %v731, %v732
      %v735 = vsel %vm665, %v727, %v734
      %v736 = vrot.slane %v731, 4
      %v738 = vshrl.u32 %v655, 16
      %v740 = vrot.slane %v738, 7
      %v741 = vshll.u32 %v655, 16
      %v743 = vor.u32 %v740, %v741
      %v744 = vsel %vm665, %v736, %v743
      %v745 = vrot.slane %v740, 4
      %v747 = vshrl.u32 %v656, 16
      %v749 = vrot.slane %v747, 7
      %v750 = vshll.u32 %v656, 16
      %v752 = vor.u32 %v749, %v750
      %v753 = vsel %vm665, %v745, %v752
      %v754 = vrot.slane %v749, 4
      %v756 = vshrl.u32 %v657, 16
      %v758 = vrot.slane %v756, 7
      %v759 = vshll.u32 %v657, 16
      %v761 = vor.u32 %v758, %v759
      %v762 = vsel %vm665, %v754, %v761
      %v763 = vrot.slane %v758, 4
      %v765 = vshrl.u32 %v658, 16
      %v767 = vrot.slane %v765, 7
      %v768 = vshll.u32 %v658, 16
      %v770 = vor.u32 %v767, %v768
      %v771 = vsel %vm665, %v763, %v770
      %v772 = vrot.slane %v767, 4
      %v774 = vshrl.u32 %v659, 16
      %v776 = vrot.slane %v774, 7
      %v777 = vshll.u32 %v659, 16
      %v779 = vor.u32 %v776, %v777
      %v780 = vsel %vm665, %v772, %v779
      %v781 = vrot.slane %v776, 4
      %v783 = vshrl.u32 %v660, 16
      %v785 = vrot.slane %v783, 7
      %v786 = vshll.u32 %v660, 16
      %v788 = vor.u32 %v785, %v786
      %v789 = vsel %vm665, %v781, %v788
      %v790 = vrot.slane %v785, 4
      %v792 = vshrl.u32 %v661, 16
      %v794 = vrot.slane %v792, 7
      %v795 = vshll.u32 %v661, 16
      %v797 = vor.u32 %v794, %v795
      %v798 = vsel %vm665, %v790, %v797
      %v799 = vrot.slane %v794, 4
      %v801 = vshrl.u32 %v662, 16
      %v803 = vrot.slane %v801, 7
      %v804 = vshll.u32 %v662, 16
      %v806 = vor.u32 %v803, %v804
      %v807 = vsel %vm665, %v799, %v806
      %v808 = vrot.slane %v803, 4
      %vm826 = vcmask 1043456
      %vm827 = vsmask.f32 7938
      %vm828 = vmand %vm826, %vm827
      %v829 = vld [vmem:[#allocation2 + $0x8] sm:$0xf]
      %v830 = vsel %vm828, %v672, %v829
      %831 = vst [vmem:[#allocation2 + $0x8] sm:$0xf] %v830
      %832 = vst [vmem:[#allocation2 + $0xc] sm:$0xf] %v681
      %833 = vst [vmem:[#allocation2 + $0x10] sm:$0xf] %v690
      %834 = vst [vmem:[#allocation2 + $0x14] sm:$0xf] %v699
      %835 = vst [vmem:[#allocation2 + $0x18] sm:$0xf] %v708
      %836 = vst [vmem:[#allocation2 + $0x1c] sm:$0xf] %v717
      %837 = vst [vmem:[#allocation2 + $0x20] sm:$0xf] %v726
      %838 = vst [vmem:[#allocation2 + $0x24] sm:$0xf] %v735
      %839 = vst [vmem:[#allocation2 + $0x28] sm:$0xf] %v744
      %840 = vst [vmem:[#allocation2 + $0x2c] sm:$0xf] %v753
      %841 = vst [vmem:[#allocation2 + $0x30] sm:$0xf] %v762
      %842 = vst [vmem:[#allocation2 + $0x34] sm:$0xf] %v771
      %843 = vst [vmem:[#allocation2 + $0x38] sm:$0xf] %v780
      %844 = vst [vmem:[#allocation2 + $0x3c] sm:$0xf] %v789
      %845 = vst [vmem:[#allocation2 + $0x40] sm:$0xf] %v798
      %846 = vst [vmem:[#allocation2 + $0x44] sm:$0xf] %v807
      %vm847 = vcmask 1040384
      %vm848 = vmand %vm847, %vm663
      %v849 = vld [vmem:[#allocation2 + $0x48] sm:$0x1]
      %v850 = vsel %vm848, %v808, %v849
      %851 = vst [vmem:[#allocation2 + $0x48] sm:$0x1] %v850
      %p852 = scmp.gt.s32.totalorder %s29, 0
      // Predicated region
      $region73: #{two_block_forward.5} parent=71 // pred_check
        %p853 = pneg %p852
      $region74: #{two_block_forward.5} parent=71 // pred_check_branch
        %855 = sbr.rel (%p853) target = $region76
      $region75: #{two_block_forward.5} parent=71 // pred_region
        %s856 = scalar_lea.vmem %s600, 56
        %v857 = vld [vmem:[%s856] sm:$0xf]
        %v858 = vld [vmem:[%s856 + $0x4] sm:$0xf]
        %v860 = vshrl.u32 %v857, 16
        %v862 = vrot.slane %v860, 7
        %v863 = vshll.u32 %v857, 16
        %v865 = vor.u32 %v862, %v863
        %v866 = vrot.slane %v862, 4
        %v868 = vshrl.u32 %v858, 16
        %v870 = vrot.slane %v868, 7
        %v871 = vshll.u32 %v858, 16
        %v873 = vor.u32 %v870, %v871
        %v874 = vsel %vm665, %v866, %v873
        %v875 = vrot.slane %v870, 4
        %v879 = vld [vmem:[#allocation2] sm:$0xf]
        %v880 = vsel %vm828, %v865, %v879
        %881 = vst [vmem:[#allocation2] sm:$0xf] %v880
        %882 = vst [vmem:[#allocation2 + $0x4] sm:$0xf] %v874
        %v883 = vld [vmem:[#allocation2 + $0x8] sm:$0x1]
        %v884 = vsel %vm848, %v875, %v883
        %885 = vst [vmem:[#allocation2 + $0x8] sm:$0x1] %v884
      $region76: #{two_block_forward.5} parent=71 // pred_fallthru
        _
      %p886 = scmp.eq.s32.totalorder %s29, 0
      // Predicated region
      $region77: #{two_block_forward.5} parent=71 // pred_check
        %p887 = pneg %p886
      $region78: #{two_block_forward.5} parent=71 // pred_check_branch
        %889 = sbr.rel (%p887) target = $region80
      $region79: #{two_block_forward.5} parent=71 // pred_region
        %v890 = vld [vmem:[#allocation2] sm:$0xf]
        %v891 = vsel %vm828, 0, %v890
        %892 = vst [vmem:[#allocation2] sm:$0xf] %v891
        %893 = vst [vmem:[#allocation2 + $0x4] sm:$0xf] 0
        %v894 = vld [vmem:[#allocation2 + $0x8] sm:$0x1]
        %v895 = vsel %vm848, 0, %v894
        %896 = vst [vmem:[#allocation2 + $0x8] sm:$0x1] %v895
      $region80: #{two_block_forward.5} parent=71 // pred_fallthru
        _
      %p897 = scmp.lt.s32.totalorder %s29, 1
      // Predicated region
      $region81: #{two_block_forward.5} parent=71 // pred_check
        %p898 = pneg %p897
      $region82: #{two_block_forward.5} parent=71 // pred_check_branch
        %900 = sbr.rel (%p898) target = $region84
      $region83: #{two_block_forward.5} parent=71 // pred_region
        %v901 = vld [vmem:[%s617] sm:$0xf]
        %v902 = vld [vmem:[%s617 + $0x4] sm:$0xf]
        %v904 = vshrl.u32 %v901, 16
        %v906 = vrot.slane %v904, 7
        %v907 = vshll.u32 %v901, 16
        %v909 = vor.u32 %v906, %v907
        %v910 = vrot.slane %v906, 4
        %v912 = vshrl.u32 %v902, 16
        %v914 = vrot.slane %v912, 7
        %v915 = vshll.u32 %v902, 16
        %v917 = vor.u32 %v914, %v915
        %v918 = vsel %vm665, %v910, %v917
        %v919 = vrot.slane %v914, 4
        %v923 = vld [vmem:[#allocation2 + $0x48] sm:$0xf]
        %v924 = vsel %vm828, %v909, %v923
        %925 = vst [vmem:[#allocation2 + $0x48] sm:$0xf] %v924
        %926 = vst [vmem:[#allocation2 + $0x4c] sm:$0xf] %v918
        %v927 = vld [vmem:[#allocation2 + $0x50] sm:$0x1]
        %v928 = vsel %vm848, %v919, %v927
        %929 = vst [vmem:[#allocation2 + $0x50] sm:$0x1] %v928
      $region84: #{two_block_forward.5} parent=71 // pred_fallthru
        _
      %p930 = scmp.eq.s32.totalorder %s29, 1
      // Predicated region
      $region85: #{two_block_forward.5} parent=71 // pred_check
        %p931 = pneg %p930
      $region86: #{two_block_forward.5} parent=71 // pred_check_branch
        %933 = sbr.rel (%p931) target = $region88
      $region87: #{two_block_forward.5} parent=71 // pred_region
        %v934 = vld [vmem:[#allocation2 + $0x48] sm:$0xf]
        %v935 = vsel %vm828, 0, %v934
        %936 = vst [vmem:[#allocation2 + $0x48] sm:$0xf] %v935
        %937 = vst [vmem:[#allocation2 + $0x4c] sm:$0xf] 0
        %v938 = vld [vmem:[#allocation2 + $0x50] sm:$0x1]
        %v939 = vsel %vm848, 0, %v938
        %940 = vst [vmem:[#allocation2 + $0x50] sm:$0x1] %v939
      $region88: #{two_block_forward.5} parent=71 // pred_fallthru
        _
      %v941 = vlaneseq
      %v942 = vshrl.u32 %v941, 7
      %v943 = vadd.s32 %v942, 8
      %vm944 = vcmp.ge.s32.totalorder %v942, 1
      %vm945 = vcmp.ge.s32.totalorder %v943, 1
      %vm946 = vcmp.lt.s32.totalorder %v942, 15
      %vm947 = vcmp.lt.s32.totalorder %v943, 15
      %v948 = vld [vmem:[#allocation2] sm:$0xf]
      %v949 = vld [vmem:[#allocation2 + $0x4] sm:$0xf]
      %v950 = vld [vmem:[#allocation2 + $0x8] sm:$0xf]
      %v951 = vld [vmem:[#allocation2 + $0xc] sm:$0xf]
      %v952 = vld [vmem:[#allocation2 + $0x10] sm:$0xf]
      %v953 = vld [vmem:[#allocation2 + $0x14] sm:$0xf]
      %v954 = vld [vmem:[#allocation2 + $0x18] sm:$0xf]
      %v955 = vld [vmem:[#allocation2 + $0x1c] sm:$0xf]
      %v956 = vld [vmem:[#allocation2 + $0x20] sm:$0xf]
      %v957 = vld [vmem:[#allocation2 + $0x24] sm:$0xf]
      %v958 = vld [vmem:[#allocation2 + $0x28] sm:$0xf]
      %v959 = vld [vmem:[#allocation2 + $0x2c] sm:$0xf]
      %v960 = vld [vmem:[#allocation2 + $0x30] sm:$0xf]
      %v961 = vld [vmem:[#allocation2 + $0x34] sm:$0xf]
      %v962 = vld [vmem:[#allocation2 + $0x38] sm:$0xf]
      %v963 = vld [vmem:[#allocation2 + $0x3c] sm:$0xf]
      %v964 = vsel %vm944, 1, 0
      %v965 = vsel %vm945, 1, 0
      %vm966 = vcmp.eq.s32.totalorder %v964, 1
      %vm967 = vcmp.eq.s32.totalorder %v965, 1
      %vm968 = vmpackc.low %vm966, %vm966
      %vm969 = vmpackc.low %vm967, %vm967
      %v970 = vsel %vm968, %v948, 0
      %v971 = vsel %vm969, %v949, 0
      %v972 = vsel %vm968, %v950, 0
      %v973 = vsel %vm969, %v951, 0
      %v974 = vsel %vm968, %v952, 0
      %v975 = vsel %vm969, %v953, 0
      %v976 = vsel %vm968, %v954, 0
      %v977 = vsel %vm969, %v955, 0
      %v978 = vsel %vm968, %v956, 0
      %v979 = vsel %vm969, %v957, 0
      %v980 = vsel %vm968, %v958, 0
      %v981 = vsel %vm969, %v959, 0
      %v982 = vsel %vm968, %v960, 0
      %v983 = vsel %vm969, %v961, 0
      %v984 = vsel %vm968, %v962, 0
      %v985 = vsel %vm969, %v963, 0
      %v986 = vld [vmem:[%s4] sm:$0xf]
      %v987 = vld [vmem:[%s4 + $0x4] sm:$0xf]
      %v988 = vld [vmem:[%s4 + $0x8] sm:$0xf]
      %v989 = vld [vmem:[%s4 + $0xc] sm:$0xf]
      %v990 = vld [vmem:[%s4 + $0x10] sm:$0xf]
      %v991 = vld [vmem:[%s4 + $0x14] sm:$0xf]
      %v992 = vld [vmem:[%s4 + $0x18] sm:$0xf]
      %v993 = vld [vmem:[%s4 + $0x1c] sm:$0xf]
      %v994 = vld [vmem:[%s4 + $0x20] sm:$0xf]
      %v995 = vld [vmem:[%s4 + $0x24] sm:$0xf]
      %v996 = vld [vmem:[%s4 + $0x28] sm:$0xf]
      %v997 = vld [vmem:[%s4 + $0x2c] sm:$0xf]
      %v998 = vld [vmem:[%s4 + $0x30] sm:$0xf]
      %v999 = vld [vmem:[%s4 + $0x34] sm:$0xf]
      %v1000 = vld [vmem:[%s4 + $0x38] sm:$0xf]
      %v1001 = vld [vmem:[%s4 + $0x3c] sm:$0xf]
      %v1002 = vld [vmem:[#allocation2 + $0x40] sm:$0x1]
      %s1003 = scalar_lea.vmem %s4, 64
      %v1004 = vld [vmem:[%s1003] sm:$0xf]
      %v1005 = vld [vmem:[%s1003 + $0x4] sm:$0xf]
      %v1006 = vld [vmem:[%s1003 + $0x8] sm:$0xf]
      %v1007 = vld [vmem:[%s1003 + $0xc] sm:$0xf]
      %v1008 = vld [vmem:[%s1003 + $0x10] sm:$0xf]
      %v1009 = vld [vmem:[%s1003 + $0x14] sm:$0xf]
      %v1010 = vld [vmem:[%s1003 + $0x18] sm:$0xf]
      %v1011 = vld [vmem:[%s1003 + $0x1c] sm:$0xf]
      %v1012 = vld [vmem:[%s1003 + $0x20] sm:$0xf]
      %v1013 = vld [vmem:[%s1003 + $0x24] sm:$0xf]
      %v1014 = vld [vmem:[%s1003 + $0x28] sm:$0xf]
      %v1015 = vld [vmem:[%s1003 + $0x2c] sm:$0xf]
      %v1016 = vld [vmem:[%s1003 + $0x30] sm:$0xf]
      %v1017 = vld [vmem:[%s1003 + $0x34] sm:$0xf]
      %v1018 = vld [vmem:[%s1003 + $0x38] sm:$0xf]
      %v1019 = vld [vmem:[%s1003 + $0x3c] sm:$0xf]
      %v1037 = vunpack.c.l.b16 %v948
      %v1038 = vunpack.c.l.b16 %v949
      %v1039 = vunpack.c.l.b16 %v950
      %v1040 = vunpack.c.l.b16 %v951
      %v1041 = vunpack.c.l.b16 %v952
      %v1042 = vunpack.c.l.b16 %v953
      %v1043 = vunpack.c.l.b16 %v954
      %v1044 = vunpack.c.l.b16 %v955
      %v1045 = vunpack.c.l.b16 %v956
      %v1046 = vunpack.c.l.b16 %v957
      %v1047 = vunpack.c.l.b16 %v958
      %v1048 = vunpack.c.l.b16 %v959
      %v1049 = vunpack.c.l.b16 %v960
      %v1050 = vunpack.c.l.b16 %v961
      %v1051 = vunpack.c.l.b16 %v962
      %v1052 = vunpack.c.l.b16 %v963
      %v1053 = vunpack.c.l.b16 %v1002
      %v1054 = vpack.c.b16 %v1038, %v1037
      %v1055 = vpack.c.b16 %v1040, %v1039
      %v1056 = vpack.c.b16 %v1042, %v1041
      %v1057 = vpack.c.b16 %v1044, %v1043
      %v1058 = vpack.c.b16 %v1046, %v1045
      %v1059 = vpack.c.b16 %v1048, %v1047
      %v1060 = vpack.c.b16 %v1050, %v1049
      %v1061 = vpack.c.b16 %v1052, %v1051
      %v1062 = vpack.c.b16 %v1053, %v1053
      %vm1063 = vsmask.f32 7424
      %v1065 = vshrl.u32 %v1054, 16
      %v1067 = vshll.u32 %v1054, 16
      %v1069 = vrot.slane %v1067, 1
      %v1070 = vor.u32 %v1065, %v1069
      %v1072 = vshll.u32 %v1055, 16
      %v1074 = vrot.slane %v1072, 1
      %v1075 = vsel %vm1063, %v1070, %v1074
      %v1076 = vshrl.u32 %v1055, 16
      %v1078 = vor.u32 %v1076, %v1074
      %v1080 = vshll.u32 %v1056, 16
      %v1082 = vrot.slane %v1080, 1
      %v1083 = vsel %vm1063, %v1078, %v1082
      %v1084 = vshrl.u32 %v1056, 16
      %v1086 = vor.u32 %v1084, %v1082
      %v1088 = vshll.u32 %v1057, 16
      %v1090 = vrot.slane %v1088, 1
      %v1091 = vsel %vm1063, %v1086, %v1090
      %v1092 = vshrl.u32 %v1057, 16
      %v1094 = vor.u32 %v1092, %v1090
      %v1096 = vshll.u32 %v1058, 16
      %v1098 = vrot.slane %v1096, 1
      %v1099 = vsel %vm1063, %v1094, %v1098
      %v1100 = vshrl.u32 %v1058, 16
      %v1102 = vor.u32 %v1100, %v1098
      %v1104 = vshll.u32 %v1059, 16
      %v1106 = vrot.slane %v1104, 1
      %v1107 = vsel %vm1063, %v1102, %v1106
      %v1108 = vshrl.u32 %v1059, 16
      %v1110 = vor.u32 %v1108, %v1106
      %v1112 = vshll.u32 %v1060, 16
      %v1114 = vrot.slane %v1112, 1
      %v1115 = vsel %vm1063, %v1110, %v1114
      %v1116 = vshrl.u32 %v1060, 16
      %v1118 = vor.u32 %v1116, %v1114
      %v1120 = vshll.u32 %v1061, 16
      %v1122 = vrot.slane %v1120, 1
      %v1123 = vsel %vm1063, %v1118, %v1122
      %v1124 = vshrl.u32 %v1061, 16
      %v1126 = vor.u32 %v1124, %v1122
      %v1128 = vshll.u32 %v1062, 16
      %v1130 = vrot.slane %v1128, 1
      %v1131 = vsel %vm1063, %v1126, %v1130
      %v1156 = vunpack.c.l.b16 %v1004
      %v1157 = vunpack.c.l.b16 %v1005
      %v1158 = vunpack.c.l.b16 %v1006
      %v1159 = vunpack.c.l.b16 %v1007
      %v1160 = vunpack.c.l.b16 %v1008
      %v1161 = vunpack.c.l.b16 %v1009
      %v1162 = vunpack.c.l.b16 %v1010
      %v1163 = vunpack.c.l.b16 %v1011
      %v1164 = vunpack.c.l.b16 %v1012
      %v1165 = vunpack.c.l.b16 %v1013
      %v1166 = vunpack.c.l.b16 %v1014
      %v1167 = vunpack.c.l.b16 %v1015
      %v1168 = vunpack.c.l.b16 %v1016
      %v1169 = vunpack.c.l.b16 %v1017
      %v1170 = vunpack.c.l.b16 %v1018
      %v1171 = vunpack.c.l.b16 %v1019
      %v1172 = vpack.c.b16 %v1157, %v1156
      %v1173 = vpack.c.b16 %v1159, %v1158
      %v1174 = vpack.c.b16 %v1161, %v1160
      %v1175 = vpack.c.b16 %v1163, %v1162
      %v1176 = vpack.c.b16 %v1165, %v1164
      %v1177 = vpack.c.b16 %v1167, %v1166
      %v1178 = vpack.c.b16 %v1169, %v1168
      %v1179 = vpack.c.b16 %v1171, %v1170
      %1188 = vmatprep.subr.bf16.mxu0 0
      %1189 = vmatpush1.bf16.msra.mxu0 %v1179
      %1190 = vmatprep.subr.bf16.mxu0 0
      %1191 = vmatpush1.bf16.msra.mxu0 %v1178
      %1192 = vmatprep.subr.bf16.mxu0 0
      %1193 = vmatpush1.bf16.msra.mxu0 %v1177
      %1194 = vmatprep.subr.bf16.mxu0 0
      %1195 = vmatpush1.bf16.msra.mxu0 %v1176
      %1196 = vmatprep.subr.bf16.mxu0 0
      %1197 = vmatpush1.bf16.msra.mxu0 %v1175
      %1198 = vmatprep.subr.bf16.mxu0 0
      %1199 = vmatpush1.bf16.msra.mxu0 %v1174
      %1200 = vmatprep.subr.bf16.mxu0 0
      %1201 = vmatpush1.bf16.msra.mxu0 %v1173
      %1202 = vmatprep.subr.bf16.mxu0 0
      %1203 = vmatpush1.bf16.msra.mxu0 %v1172
      %1204 = vmatprep.subr.bf16.mxu0 0
      %1205 = vmatpush2.bf16.msra.mxu0 0
      %1206 = vmatprep.subr.bf16.mxu0 0
      %1207 = vmatpush2.bf16.msra.mxu0 0
      %1208 = vmatprep.subr.bf16.mxu0 0
      %1209 = vmatpush2.bf16.msra.mxu0 0
      %1210 = vmatprep.subr.bf16.mxu0 0
      %1211 = vmatpush2.bf16.msra.mxu0 0
      %1212 = vmatprep.subr.bf16.mxu0 0
      %1213 = vmatpush2.bf16.msra.mxu0 0
      %1214 = vmatprep.subr.bf16.mxu0 0
      %1215 = vmatpush2.bf16.msra.mxu0 0
      %1216 = vmatprep.subr.bf16.mxu0 0
      %1217 = vmatpush2.bf16.msra.mxu0 0
      %1218 = vmatprep.subr.bf16.mxu0 0
      %1219 = vmatpush2.bf16.msra.mxu0 0
      %1220 = vmatprep.mubr.bf16.mxu0 0
      %1221 = vmatmul.mubr.bf16.gmra.mxu0 %v1075
      %v1222 = vpop.f32.mrf.mxu0
      %v1223 = vadd.f32 0.0, %v1222
      %v1224 = vpop.f32.mrf.mxu0
      %v1225 = vpop.f32.mrf.mxu0
      %v1226 = vadd.f32 0.0, %v1225
      %v1227 = vpop.f32.mrf.mxu0
      %1228 = vmatprep.mubr.bf16.mxu0 0
      %1229 = vmatmul.mubr.bf16.gmra.mxu0 %v1083
      %v1230 = vpop.f32.mrf.mxu0
      %v1231 = vadd.f32 0.0, %v1230
      %v1232 = vpop.f32.mrf.mxu0
      %v1233 = vpop.f32.mrf.mxu0
      %v1234 = vadd.f32 0.0, %v1233
      %v1235 = vpop.f32.mrf.mxu0
      %1236 = vmatprep.mubr.bf16.mxu0 0
      %1237 = vmatmul.mubr.bf16.gmra.mxu0 %v1091
      %v1238 = vpop.f32.mrf.mxu0
      %v1239 = vadd.f32 0.0, %v1238
      %v1240 = vpop.f32.mrf.mxu0
      %v1241 = vpop.f32.mrf.mxu0
      %v1242 = vadd.f32 0.0, %v1241
      %v1243 = vpop.f32.mrf.mxu0
      %1244 = vmatprep.mubr.bf16.mxu0 0
      %1245 = vmatmul.mubr.bf16.gmra.mxu0 %v1099
      %v1246 = vpop.f32.mrf.mxu0
      %v1247 = vadd.f32 0.0, %v1246
      %v1248 = vpop.f32.mrf.mxu0
      %v1249 = vpop.f32.mrf.mxu0
      %v1250 = vadd.f32 0.0, %v1249
      %v1251 = vpop.f32.mrf.mxu0
      %1252 = vmatprep.mubr.bf16.mxu0 0
      %1253 = vmatmul.mubr.bf16.gmra.mxu0 %v1107
      %v1254 = vpop.f32.mrf.mxu0
      %v1255 = vadd.f32 0.0, %v1254
      %v1256 = vpop.f32.mrf.mxu0
      %v1257 = vpop.f32.mrf.mxu0
      %v1258 = vadd.f32 0.0, %v1257
      %v1259 = vpop.f32.mrf.mxu0
      %1260 = vmatprep.mubr.bf16.mxu0 0
      %1261 = vmatmul.mubr.bf16.gmra.mxu0 %v1115
      %v1262 = vpop.f32.mrf.mxu0
      %v1263 = vadd.f32 0.0, %v1262
      %v1264 = vpop.f32.mrf.mxu0
      %v1265 = vpop.f32.mrf.mxu0
      %v1266 = vadd.f32 0.0, %v1265
      %v1267 = vpop.f32.mrf.mxu0
      %1268 = vmatprep.mubr.bf16.mxu0 0
      %1269 = vmatmul.mubr.bf16.gmra.mxu0 %v1123
      %v1270 = vpop.f32.mrf.mxu0
      %v1271 = vadd.f32 0.0, %v1270
      %v1272 = vpop.f32.mrf.mxu0
      %v1273 = vpop.f32.mrf.mxu0
      %v1274 = vadd.f32 0.0, %v1273
      %v1275 = vpop.f32.mrf.mxu0
      %1276 = vmatprep.mubr.bf16.mxu0 0
      %1277 = vmatmul.mubr.bf16.gmra.mxu0 %v1131
      %v1278 = vpop.f32.mrf.mxu0
      %v1279 = vadd.f32 0.0, %v1278
      %v1280 = vpop.f32.mrf.mxu0
      %v1281 = vpop.f32.mrf.mxu0
      %v1282 = vadd.f32 0.0, %v1281
      %v1283 = vpop.f32.mrf.mxu0
      %1284 = vdwg.mxu0
      %v1301 = vunpack.c.l.b16 %v970
      %v1302 = vunpack.c.l.b16 %v971
      %v1303 = vunpack.c.l.b16 %v972
      %v1304 = vunpack.c.l.b16 %v973
      %v1305 = vunpack.c.l.b16 %v974
      %v1306 = vunpack.c.l.b16 %v975
      %v1307 = vunpack.c.l.b16 %v976
      %v1308 = vunpack.c.l.b16 %v977
      %v1309 = vunpack.c.l.b16 %v978
      %v1310 = vunpack.c.l.b16 %v979
      %v1311 = vunpack.c.l.b16 %v980
      %v1312 = vunpack.c.l.b16 %v981
      %v1313 = vunpack.c.l.b16 %v982
      %v1314 = vunpack.c.l.b16 %v983
      %v1315 = vunpack.c.l.b16 %v984
      %v1316 = vunpack.c.l.b16 %v985
      %v1317 = vpack.c.b16 %v1302, %v1301
      %v1318 = vpack.c.b16 %v1304, %v1303
      %v1319 = vpack.c.b16 %v1306, %v1305
      %v1320 = vpack.c.b16 %v1308, %v1307
      %v1321 = vpack.c.b16 %v1310, %v1309
      %v1322 = vpack.c.b16 %v1312, %v1311
      %v1323 = vpack.c.b16 %v1314, %v1313
      %v1324 = vpack.c.b16 %v1316, %v1315
      %v1349 = vunpack.c.l.b16 %v986
      %v1350 = vunpack.c.l.b16 %v987
      %v1351 = vunpack.c.l.b16 %v988
      %v1352 = vunpack.c.l.b16 %v989
      %v1353 = vunpack.c.l.b16 %v990
      %v1354 = vunpack.c.l.b16 %v991
      %v1355 = vunpack.c.l.b16 %v992
      %v1356 = vunpack.c.l.b16 %v993
      %v1357 = vunpack.c.l.b16 %v994
      %v1358 = vunpack.c.l.b16 %v995
      %v1359 = vunpack.c.l.b16 %v996
      %v1360 = vunpack.c.l.b16 %v997
      %v1361 = vunpack.c.l.b16 %v998
      %v1362 = vunpack.c.l.b16 %v999
      %v1363 = vunpack.c.l.b16 %v1000
      %v1364 = vunpack.c.l.b16 %v1001
      %v1365 = vpack.c.b16 %v1350, %v1349
      %v1366 = vpack.c.b16 %v1352, %v1351
      %v1367 = vpack.c.b16 %v1354, %v1353
      %v1368 = vpack.c.b16 %v1356, %v1355
      %v1369 = vpack.c.b16 %v1358, %v1357
      %v1370 = vpack.c.b16 %v1360, %v1359
      %v1371 = vpack.c.b16 %v1362, %v1361
      %v1372 = vpack.c.b16 %v1364, %v1363
      %1381 = vmatprep.subr.bf16.mxu0 0
      %1382 = vmatpush1.bf16.msra.mxu0 %v1372
      %1383 = vmatprep.subr.bf16.mxu0 0
      %1384 = vmatpush1.bf16.msra.mxu0 %v1371
      %1385 = vmatprep.subr.bf16.mxu0 0
      %1386 = vmatpush1.bf16.msra.mxu0 %v1370
      %1387 = vmatprep.subr.bf16.mxu0 0
      %1388 = vmatpush1.bf16.msra.mxu0 %v1369
      %1389 = vmatprep.subr.bf16.mxu0 0
      %1390 = vmatpush1.bf16.msra.mxu0 %v1368
      %1391 = vmatprep.subr.bf16.mxu0 0
      %1392 = vmatpush1.bf16.msra.mxu0 %v1367
      %1393 = vmatprep.subr.bf16.mxu0 0
      %1394 = vmatpush1.bf16.msra.mxu0 %v1366
      %1395 = vmatprep.subr.bf16.mxu0 0
      %1396 = vmatpush1.bf16.msra.mxu0 %v1365
      %1397 = vmatprep.subr.bf16.mxu0 0
      %1398 = vmatpush2.bf16.msra.mxu0 0
      %1399 = vmatprep.subr.bf16.mxu0 0
      %1400 = vmatpush2.bf16.msra.mxu0 0
      %1401 = vmatprep.subr.bf16.mxu0 0
      %1402 = vmatpush2.bf16.msra.mxu0 0
      %1403 = vmatprep.subr.bf16.mxu0 0
      %1404 = vmatpush2.bf16.msra.mxu0 0
      %1405 = vmatprep.subr.bf16.mxu0 0
      %1406 = vmatpush2.bf16.msra.mxu0 0
      %1407 = vmatprep.subr.bf16.mxu0 0
      %1408 = vmatpush2.bf16.msra.mxu0 0
      %1409 = vmatprep.subr.bf16.mxu0 0
      %1410 = vmatpush2.bf16.msra.mxu0 0
      %1411 = vmatprep.subr.bf16.mxu0 0
      %1412 = vmatpush2.bf16.msra.mxu0 0
      %1413 = vmatprep.mubr.bf16.mxu0 0
      %1414 = vmatmul.mubr.bf16.gmra.mxu0 %v1317
      %v1415 = vpop.f32.mrf.mxu0
      %v1416 = vadd.f32 %v1223, %v1415
      %v1417 = vpop.f32.mrf.mxu0
      %v1418 = vpop.f32.mrf.mxu0
      %v1419 = vadd.f32 %v1226, %v1418
      %v1420 = vpop.f32.mrf.mxu0
      %1421 = vmatprep.mubr.bf16.mxu0 0
      %1422 = vmatmul.mubr.bf16.gmra.mxu0 %v1318
      %v1423 = vpop.f32.mrf.mxu0
      %v1424 = vadd.f32 %v1231, %v1423
      %v1425 = vpop.f32.mrf.mxu0
      %v1426 = vpop.f32.mrf.mxu0
      %v1427 = vadd.f32 %v1234, %v1426
      %v1428 = vpop.f32.mrf.mxu0
      %1429 = vmatprep.mubr.bf16.mxu0 0
      %1430 = vmatmul.mubr.bf16.gmra.mxu0 %v1319
      %v1431 = vpop.f32.mrf.mxu0
      %v1432 = vadd.f32 %v1239, %v1431
      %v1433 = vpop.f32.mrf.mxu0
      %v1434 = vpop.f32.mrf.mxu0
      %v1435 = vadd.f32 %v1242, %v1434
      %v1436 = vpop.f32.mrf.mxu0
      %1437 = vmatprep.mubr.bf16.mxu0 0
      %1438 = vmatmul.mubr.bf16.gmra.mxu0 %v1320
      %v1439 = vpop.f32.mrf.mxu0
      %v1440 = vadd.f32 %v1247, %v1439
      %v1441 = vpop.f32.mrf.mxu0
      %v1442 = vpop.f32.mrf.mxu0
      %v1443 = vadd.f32 %v1250, %v1442
      %v1444 = vpop.f32.mrf.mxu0
      %1445 = vmatprep.mubr.bf16.mxu0 0
      %1446 = vmatmul.mubr.bf16.gmra.mxu0 %v1321
      %v1447 = vpop.f32.mrf.mxu0
      %v1448 = vadd.f32 %v1255, %v1447
      %v1449 = vpop.f32.mrf.mxu0
      %v1450 = vpop.f32.mrf.mxu0
      %v1451 = vadd.f32 %v1258, %v1450
      %v1452 = vpop.f32.mrf.mxu0
      %1453 = vmatprep.mubr.bf16.mxu0 0
      %1454 = vmatmul.mubr.bf16.gmra.mxu0 %v1322
      %v1455 = vpop.f32.mrf.mxu0
      %v1456 = vadd.f32 %v1263, %v1455
      %v1457 = vpop.f32.mrf.mxu0
      %v1458 = vpop.f32.mrf.mxu0
      %v1459 = vadd.f32 %v1266, %v1458
      %v1460 = vpop.f32.mrf.mxu0
      %1461 = vmatprep.mubr.bf16.mxu0 0
      %1462 = vmatmul.mubr.bf16.gmra.mxu0 %v1323
      %v1463 = vpop.f32.mrf.mxu0
      %v1464 = vadd.f32 %v1271, %v1463
      %v1465 = vpop.f32.mrf.mxu0
      %v1466 = vpop.f32.mrf.mxu0
      %v1467 = vadd.f32 %v1274, %v1466
      %v1468 = vpop.f32.mrf.mxu0
      %1469 = vmatprep.mubr.bf16.mxu0 0
      %1470 = vmatmul.mubr.bf16.gmra.mxu0 %v1324
      %v1471 = vpop.f32.mrf.mxu0
      %v1472 = vadd.f32 %v1279, %v1471
      %v1473 = vpop.f32.mrf.mxu0
      %v1474 = vpop.f32.mrf.mxu0
      %v1475 = vadd.f32 %v1282, %v1474
      %v1476 = vpop.f32.mrf.mxu0
      %1477 = vdwg.mxu0
      %v1478 = vld [vmem:[#allocation2] sm:$0xe]
      %v1479 = vsel %vm946, 1, 0
      %v1480 = vsel %vm947, 1, 0
      %vm1481 = vcmp.eq.s32.totalorder %v1479, 1
      %vm1482 = vcmp.eq.s32.totalorder %v1480, 1
      %vm1483 = vmpackc.low %vm1481, %vm1481
      %vm1484 = vmpackc.low %vm1482, %vm1482
      %v1485 = vsel %vm1483, 65537, 0
      %v1486 = vsel %vm1484, 65537, 0
      %vm1487 = vcmask 1044484
      %vm1488 = vmor %vm847, %vm1487
      %v1489 = vrot.slane %v1485, 7
      %v1490 = vrot.slane %v1489, 4
      %v1491 = vrot.slane %v1486, 7
      %v1492 = vsel %vm1488, %v1490, %v1491
      %v1493 = vrot.slane %v1491, 4
      %v1494 = vsel %vm1488, %v1493, %v1489
      %vm1495 = vcmp.ne.s16.totalorder %v1489, 0
      %vm1496 = vcmp.ne.s16.totalorder %v1492, 0
      %vm1497 = vcmp.ne.s16.totalorder %v1494, 0
      %vm1498 = vcmp.ne.s16.totalorder %v1493, 0
      %v1499 = vsel %vm1495, %v1478, 0
      %v1500 = vsel %vm1496, %v949, 0
      %v1501 = vsel %vm1497, %v950, 0
      %v1502 = vsel %vm1496, %v951, 0
      %v1503 = vsel %vm1497, %v952, 0
      %v1504 = vsel %vm1496, %v953, 0
      %v1505 = vsel %vm1497, %v954, 0
      %v1506 = vsel %vm1496, %v955, 0
      %v1507 = vsel %vm1497, %v956, 0
      %v1508 = vsel %vm1496, %v957, 0
      %v1509 = vsel %vm1497, %v958, 0
      %v1510 = vsel %vm1496, %v959, 0
      %v1511 = vsel %vm1497, %v960, 0
      %v1512 = vsel %vm1496, %v961, 0
      %v1513 = vsel %vm1497, %v962, 0
      %v1514 = vsel %vm1496, %v963, 0
      %v1515 = vsel %vm1498, %v1002, 0
      %s1516 = scalar_lea.vmem %s4, 128
      %v1517 = vld [vmem:[%s1516] sm:$0xf]
      %v1518 = vld [vmem:[%s1516 + $0x4] sm:$0xf]
      %v1519 = vld [vmem:[%s1516 + $0x8] sm:$0xf]
      %v1520 = vld [vmem:[%s1516 + $0xc] sm:$0xf]
      %v1521 = vld [vmem:[%s1516 + $0x10] sm:$0xf]
      %v1522 = vld [vmem:[%s1516 + $0x14] sm:$0xf]
      %v1523 = vld [vmem:[%s1516 + $0x18] sm:$0xf]
      %v1524 = vld [vmem:[%s1516 + $0x1c] sm:$0xf]
      %v1525 = vld [vmem:[%s1516 + $0x20] sm:$0xf]
      %v1526 = vld [vmem:[%s1516 + $0x24] sm:$0xf]
      %v1527 = vld [vmem:[%s1516 + $0x28] sm:$0xf]
      %v1528 = vld [vmem:[%s1516 + $0x2c] sm:$0xf]
      %v1529 = vld [vmem:[%s1516 + $0x30] sm:$0xf]
      %v1530 = vld [vmem:[%s1516 + $0x34] sm:$0xf]
      %v1531 = vld [vmem:[%s1516 + $0x38] sm:$0xf]
      %v1532 = vld [vmem:[%s1516 + $0x3c] sm:$0xf]
      %v1550 = vunpack.c.l.b16 %v1499
      %v1551 = vunpack.c.l.b16 %v1500
      %v1552 = vunpack.c.l.b16 %v1501
      %v1553 = vunpack.c.l.b16 %v1502
      %v1554 = vunpack.c.l.b16 %v1503
      %v1555 = vunpack.c.l.b16 %v1504
      %v1556 = vunpack.c.l.b16 %v1505
      %v1557 = vunpack.c.l.b16 %v1506
      %v1558 = vunpack.c.l.b16 %v1507
      %v1559 = vunpack.c.l.b16 %v1508
      %v1560 = vunpack.c.l.b16 %v1509
      %v1561 = vunpack.c.l.b16 %v1510
      %v1562 = vunpack.c.l.b16 %v1511
      %v1563 = vunpack.c.l.b16 %v1512
      %v1564 = vunpack.c.l.b16 %v1513
      %v1565 = vunpack.c.l.b16 %v1514
      %v1566 = vunpack.c.l.b16 %v1515
      %v1567 = vpack.c.b16 %v1551, %v1550
      %v1568 = vpack.c.b16 %v1553, %v1552
      %v1569 = vpack.c.b16 %v1555, %v1554
      %v1570 = vpack.c.b16 %v1557, %v1556
      %v1571 = vpack.c.b16 %v1559, %v1558
      %v1572 = vpack.c.b16 %v1561, %v1560
      %v1573 = vpack.c.b16 %v1563, %v1562
      %v1574 = vpack.c.b16 %v1565, %v1564
      %v1575 = vpack.c.b16 %v1566, %v1566
      %vm1576 = vcmask 1046528
      %v1577 = vrot.slane %v1567, 1
      %v1578 = vrot.slane %v1568, 1
      %v1579 = vsel %vm1576, %v1577, %v1578
      %v1580 = vrot.slane %v1569, 1
      %v1581 = vsel %vm1576, %v1578, %v1580
      %v1582 = vrot.slane %v1570, 1
      %v1583 = vsel %vm1576, %v1580, %v1582
      %v1584 = vrot.slane %v1571, 1
      %v1585 = vsel %vm1576, %v1582, %v1584
      %v1586 = vrot.slane %v1572, 1
      %v1587 = vsel %vm1576, %v1584, %v1586
      %v1588 = vrot.slane %v1573, 1
      %v1589 = vsel %vm1576, %v1586, %v1588
      %v1590 = vrot.slane %v1574, 1
      %v1591 = vsel %vm1576, %v1588, %v1590
      %v1592 = vrot.slane %v1575, 1
      %v1593 = vsel %vm1576, %v1590, %v1592
      %v1618 = vunpack.c.l.b16 %v1517
      %v1619 = vunpack.c.l.b16 %v1518
      %v1620 = vunpack.c.l.b16 %v1519
      %v1621 = vunpack.c.l.b16 %v1520
      %v1622 = vunpack.c.l.b16 %v1521
      %v1623 = vunpack.c.l.b16 %v1522
      %v1624 = vunpack.c.l.b16 %v1523
      %v1625 = vunpack.c.l.b16 %v1524
      %v1626 = vunpack.c.l.b16 %v1525
      %v1627 = vunpack.c.l.b16 %v1526
      %v1628 = vunpack.c.l.b16 %v1527
      %v1629 = vunpack.c.l.b16 %v1528
      %v1630 = vunpack.c.l.b16 %v1529
      %v1631 = vunpack.c.l.b16 %v1530
      %v1632 = vunpack.c.l.b16 %v1531
      %v1633 = vunpack.c.l.b16 %v1532
      %v1634 = vpack.c.b16 %v1619, %v1618
      %v1635 = vpack.c.b16 %v1621, %v1620
      %v1636 = vpack.c.b16 %v1623, %v1622
      %v1637 = vpack.c.b16 %v1625, %v1624
      %v1638 = vpack.c.b16 %v1627, %v1626
      %v1639 = vpack.c.b16 %v1629, %v1628
      %v1640 = vpack.c.b16 %v1631, %v1630
      %v1641 = vpack.c.b16 %v1633, %v1632
      %1650 = vmatprep.subr.bf16.mxu0 0
      %1651 = vmatpush1.bf16.msra.mxu0 %v1641
      %1652 = vmatprep.subr.bf16.mxu0 0
      %1653 = vmatpush1.bf16.msra.mxu0 %v1640
      %1654 = vmatprep.subr.bf16.mxu0 0
      %1655 = vmatpush1.bf16.msra.mxu0 %v1639
      %1656 = vmatprep.subr.bf16.mxu0 0
      %1657 = vmatpush1.bf16.msra.mxu0 %v1638
      %1658 = vmatprep.subr.bf16.mxu0 0
      %1659 = vmatpush1.bf16.msra.mxu0 %v1637
      %1660 = vmatprep.subr.bf16.mxu0 0
      %1661 = vmatpush1.bf16.msra.mxu0 %v1636
      %1662 = vmatprep.subr.bf16.mxu0 0
      %1663 = vmatpush1.bf16.msra.mxu0 %v1635
      %1664 = vmatprep.subr.bf16.mxu0 0
      %1665 = vmatpush1.bf16.msra.mxu0 %v1634
      %1666 = vmatprep.subr.bf16.mxu0 0
      %1667 = vmatpush2.bf16.msra.mxu0 0
      %1668 = vmatprep.subr.bf16.mxu0 0
      %1669 = vmatpush2.bf16.msra.mxu0 0
      %1670 = vmatprep.subr.bf16.mxu0 0
      %1671 = vmatpush2.bf16.msra.mxu0 0
      %1672 = vmatprep.subr.bf16.mxu0 0
      %1673 = vmatpush2.bf16.msra.mxu0 0
      %1674 = vmatprep.subr.bf16.mxu0 0
      %1675 = vmatpush2.bf16.msra.mxu0 0
      %1676 = vmatprep.subr.bf16.mxu0 0
      %1677 = vmatpush2.bf16.msra.mxu0 0
      %1678 = vmatprep.subr.bf16.mxu0 0
      %1679 = vmatpush2.bf16.msra.mxu0 0
      %1680 = vmatprep.subr.bf16.mxu0 0
      %1681 = vmatpush2.bf16.msra.mxu0 0
      %1682 = vmatprep.mubr.bf16.mxu0 0
      %1683 = vmatmul.mubr.bf16.gmra.mxu0 %v1579
      %v1684 = vpop.f32.mrf.mxu0
      %v1685 = vadd.f32 0.0, %v1684
      %v1686 = vpop.f32.mrf.mxu0
      %v1687 = vpop.f32.mrf.mxu0
      %v1688 = vadd.f32 0.0, %v1687
      %v1689 = vpop.f32.mrf.mxu0
      %1690 = vmatprep.mubr.bf16.mxu0 0
      %1691 = vmatmul.mubr.bf16.gmra.mxu0 %v1581
      %v1692 = vpop.f32.mrf.mxu0
      %v1693 = vadd.f32 0.0, %v1692
      %v1694 = vpop.f32.mrf.mxu0
      %v1695 = vpop.f32.mrf.mxu0
      %v1696 = vadd.f32 0.0, %v1695
      %v1697 = vpop.f32.mrf.mxu0
      %1698 = vmatprep.mubr.bf16.mxu0 0
      %1699 = vmatmul.mubr.bf16.gmra.mxu0 %v1583
      %v1700 = vpop.f32.mrf.mxu0
      %v1701 = vadd.f32 0.0, %v1700
      %v1702 = vpop.f32.mrf.mxu0
      %v1703 = vpop.f32.mrf.mxu0
      %v1704 = vadd.f32 0.0, %v1703
      %v1705 = vpop.f32.mrf.mxu0
      %1706 = vmatprep.mubr.bf16.mxu0 0
      %1707 = vmatmul.mubr.bf16.gmra.mxu0 %v1585
      %v1708 = vpop.f32.mrf.mxu0
      %v1709 = vadd.f32 0.0, %v1708
      %v1710 = vpop.f32.mrf.mxu0
      %v1711 = vpop.f32.mrf.mxu0
      %v1712 = vadd.f32 0.0, %v1711
      %v1713 = vpop.f32.mrf.mxu0
      %1714 = vmatprep.mubr.bf16.mxu0 0
      %1715 = vmatmul.mubr.bf16.gmra.mxu0 %v1587
      %v1716 = vpop.f32.mrf.mxu0
      %v1717 = vadd.f32 0.0, %v1716
      %v1718 = vpop.f32.mrf.mxu0
      %v1719 = vpop.f32.mrf.mxu0
      %v1720 = vadd.f32 0.0, %v1719
      %v1721 = vpop.f32.mrf.mxu0
      %1722 = vmatprep.mubr.bf16.mxu0 0
      %1723 = vmatmul.mubr.bf16.gmra.mxu0 %v1589
      %v1724 = vpop.f32.mrf.mxu0
      %v1725 = vadd.f32 0.0, %v1724
      %v1726 = vpop.f32.mrf.mxu0
      %v1727 = vpop.f32.mrf.mxu0
      %v1728 = vadd.f32 0.0, %v1727
      %v1729 = vpop.f32.mrf.mxu0
      %1730 = vmatprep.mubr.bf16.mxu0 0
      %1731 = vmatmul.mubr.bf16.gmra.mxu0 %v1591
      %v1732 = vpop.f32.mrf.mxu0
      %v1733 = vadd.f32 0.0, %v1732
      %v1734 = vpop.f32.mrf.mxu0
      %v1735 = vpop.f32.mrf.mxu0
      %v1736 = vadd.f32 0.0, %v1735
      %v1737 = vpop.f32.mrf.mxu0
      %1738 = vmatprep.mubr.bf16.mxu0 0
      %1739 = vmatmul.mubr.bf16.gmra.mxu0 %v1593
      %v1740 = vpop.f32.mrf.mxu0
      %v1741 = vadd.f32 0.0, %v1740
      %v1742 = vpop.f32.mrf.mxu0
      %v1743 = vpop.f32.mrf.mxu0
      %v1744 = vadd.f32 0.0, %v1743
      %v1745 = vpop.f32.mrf.mxu0
      %1746 = vdwg.mxu0
      %v1747 = vadd.f32 %v1416, %v1685
      %v1748 = vadd.f32 %v1419, %v1688
      %v1749 = vadd.f32 %v1424, %v1693
      %v1750 = vadd.f32 %v1427, %v1696
      %v1751 = vadd.f32 %v1432, %v1701
      %v1752 = vadd.f32 %v1435, %v1704
      %v1753 = vadd.f32 %v1440, %v1709
      %v1754 = vadd.f32 %v1443, %v1712
      %v1755 = vadd.f32 %v1448, %v1717
      %v1756 = vadd.f32 %v1451, %v1720
      %v1757 = vadd.f32 %v1456, %v1725
      %v1758 = vadd.f32 %v1459, %v1728
      %v1759 = vadd.f32 %v1464, %v1733
      %v1760 = vadd.f32 %v1467, %v1736
      %v1761 = vadd.f32 %v1472, %v1741
      %v1762 = vadd.f32 %v1475, %v1744
      %v1763 = vld [vmem:[#allocation2 + $0x8] sm:$0xf]
      %v1764 = vld [vmem:[#allocation2 + $0xc] sm:$0xf]
      %v1765 = vld [vmem:[#allocation2 + $0x10] sm:$0xf]
      %v1766 = vld [vmem:[#allocation2 + $0x14] sm:$0xf]
      %v1767 = vld [vmem:[#allocation2 + $0x18] sm:$0xf]
      %v1768 = vld [vmem:[#allocation2 + $0x1c] sm:$0xf]
      %v1769 = vld [vmem:[#allocation2 + $0x20] sm:$0xf]
      %v1770 = vld [vmem:[#allocation2 + $0x24] sm:$0xf]
      %v1771 = vld [vmem:[#allocation2 + $0x28] sm:$0xf]
      %v1772 = vld [vmem:[#allocation2 + $0x2c] sm:$0xf]
      %v1773 = vld [vmem:[#allocation2 + $0x30] sm:$0xf]
      %v1774 = vld [vmem:[#allocation2 + $0x34] sm:$0xf]
      %v1775 = vld [vmem:[#allocation2 + $0x38] sm:$0xf]
      %v1776 = vld [vmem:[#allocation2 + $0x3c] sm:$0xf]
      %v1777 = vld [vmem:[#allocation2 + $0x40] sm:$0xf]
      %v1778 = vld [vmem:[#allocation2 + $0x44] sm:$0xf]
      %v1779 = vsel %vm968, %v1763, 0
      %v1780 = vsel %vm969, %v1764, 0
      %v1781 = vsel %vm968, %v1765, 0
      %v1782 = vsel %vm969, %v1766, 0
      %v1783 = vsel %vm968, %v1767, 0
      %v1784 = vsel %vm969, %v1768, 0
      %v1785 = vsel %vm968, %v1769, 0
      %v1786 = vsel %vm969, %v1770, 0
      %v1787 = vsel %vm968, %v1771, 0
      %v1788 = vsel %vm969, %v1772, 0
      %v1789 = vsel %vm968, %v1773, 0
      %v1790 = vsel %vm969, %v1774, 0
      %v1791 = vsel %vm968, %v1775, 0
      %v1792 = vsel %vm969, %v1776, 0
      %v1793 = vsel %vm968, %v1777, 0
      %v1794 = vsel %vm969, %v1778, 0
      %s1795 = scalar_lea.vmem %s4, 192
      %v1796 = vld [vmem:[%s1795] sm:$0xf]
      %v1797 = vld [vmem:[%s1795 + $0x4] sm:$0xf]
      %v1798 = vld [vmem:[%s1795 + $0x8] sm:$0xf]
      %v1799 = vld [vmem:[%s1795 + $0xc] sm:$0xf]
      %v1800 = vld [vmem:[%s1795 + $0x10] sm:$0xf]
      %v1801 = vld [vmem:[%s1795 + $0x14] sm:$0xf]
      %v1802 = vld [vmem:[%s1795 + $0x18] sm:$0xf]
      %v1803 = vld [vmem:[%s1795 + $0x1c] sm:$0xf]
      %v1804 = vld [vmem:[%s1795 + $0x20] sm:$0xf]
      %v1805 = vld [vmem:[%s1795 + $0x24] sm:$0xf]
      %v1806 = vld [vmem:[%s1795 + $0x28] sm:$0xf]
      %v1807 = vld [vmem:[%s1795 + $0x2c] sm:$0xf]
      %v1808 = vld [vmem:[%s1795 + $0x30] sm:$0xf]
      %v1809 = vld [vmem:[%s1795 + $0x34] sm:$0xf]
      %v1810 = vld [vmem:[%s1795 + $0x38] sm:$0xf]
      %v1811 = vld [vmem:[%s1795 + $0x3c] sm:$0xf]
      %v1828 = vunpack.c.l.b16 %v1779
      %v1829 = vunpack.c.l.b16 %v1780
      %v1830 = vunpack.c.l.b16 %v1781
      %v1831 = vunpack.c.l.b16 %v1782
      %v1832 = vunpack.c.l.b16 %v1783
      %v1833 = vunpack.c.l.b16 %v1784
      %v1834 = vunpack.c.l.b16 %v1785
      %v1835 = vunpack.c.l.b16 %v1786
      %v1836 = vunpack.c.l.b16 %v1787
      %v1837 = vunpack.c.l.b16 %v1788
      %v1838 = vunpack.c.l.b16 %v1789
      %v1839 = vunpack.c.l.b16 %v1790
      %v1840 = vunpack.c.l.b16 %v1791
      %v1841 = vunpack.c.l.b16 %v1792
      %v1842 = vunpack.c.l.b16 %v1793
      %v1843 = vunpack.c.l.b16 %v1794
      %v1844 = vpack.c.b16 %v1829, %v1828
      %v1845 = vpack.c.b16 %v1831, %v1830
      %v1846 = vpack.c.b16 %v1833, %v1832
      %v1847 = vpack.c.b16 %v1835, %v1834
      %v1848 = vpack.c.b16 %v1837, %v1836
      %v1849 = vpack.c.b16 %v1839, %v1838
      %v1850 = vpack.c.b16 %v1841, %v1840
      %v1851 = vpack.c.b16 %v1843, %v1842
      %v1876 = vunpack.c.l.b16 %v1796
      %v1877 = vunpack.c.l.b16 %v1797
      %v1878 = vunpack.c.l.b16 %v1798
      %v1879 = vunpack.c.l.b16 %v1799
      %v1880 = vunpack.c.l.b16 %v1800
      %v1881 = vunpack.c.l.b16 %v1801
      %v1882 = vunpack.c.l.b16 %v1802
      %v1883 = vunpack.c.l.b16 %v1803
      %v1884 = vunpack.c.l.b16 %v1804
      %v1885 = vunpack.c.l.b16 %v1805
      %v1886 = vunpack.c.l.b16 %v1806
      %v1887 = vunpack.c.l.b16 %v1807
      %v1888 = vunpack.c.l.b16 %v1808
      %v1889 = vunpack.c.l.b16 %v1809
      %v1890 = vunpack.c.l.b16 %v1810
      %v1891 = vunpack.c.l.b16 %v1811
      %v1892 = vpack.c.b16 %v1877, %v1876
      %v1893 = vpack.c.b16 %v1879, %v1878
      %v1894 = vpack.c.b16 %v1881, %v1880
      %v1895 = vpack.c.b16 %v1883, %v1882
      %v1896 = vpack.c.b16 %v1885, %v1884
      %v1897 = vpack.c.b16 %v1887, %v1886
      %v1898 = vpack.c.b16 %v1889, %v1888
      %v1899 = vpack.c.b16 %v1891, %v1890
      %1908 = vmatprep.subr.bf16.mxu0 0
      %1909 = vmatpush1.bf16.msra.mxu0 %v1899
      %1910 = vmatprep.subr.bf16.mxu0 0
      %1911 = vmatpush1.bf16.msra.mxu0 %v1898
      %1912 = vmatprep.subr.bf16.mxu0 0
      %1913 = vmatpush1.bf16.msra.mxu0 %v1897
      %1914 = vmatprep.subr.bf16.mxu0 0
      %1915 = vmatpush1.bf16.msra.mxu0 %v1896
      %1916 = vmatprep.subr.bf16.mxu0 0
      %1917 = vmatpush1.bf16.msra.mxu0 %v1895
      %1918 = vmatprep.subr.bf16.mxu0 0
      %1919 = vmatpush1.bf16.msra.mxu0 %v1894
      %1920 = vmatprep.subr.bf16.mxu0 0
      %1921 = vmatpush1.bf16.msra.mxu0 %v1893
      %1922 = vmatprep.subr.bf16.mxu0 0
      %1923 = vmatpush1.bf16.msra.mxu0 %v1892
      %1924 = vmatprep.subr.bf16.mxu0 0
      %1925 = vmatpush2.bf16.msra.mxu0 0
      %1926 = vmatprep.subr.bf16.mxu0 0
      %1927 = vmatpush2.bf16.msra.mxu0 0
      %1928 = vmatprep.subr.bf16.mxu0 0
      %1929 = vmatpush2.bf16.msra.mxu0 0
      %1930 = vmatprep.subr.bf16.mxu0 0
      %1931 = vmatpush2.bf16.msra.mxu0 0
      %1932 = vmatprep.subr.bf16.mxu0 0
      %1933 = vmatpush2.bf16.msra.mxu0 0
      %1934 = vmatprep.subr.bf16.mxu0 0
      %1935 = vmatpush2.bf16.msra.mxu0 0
      %1936 = vmatprep.subr.bf16.mxu0 0
      %1937 = vmatpush2.bf16.msra.mxu0 0
      %1938 = vmatprep.subr.bf16.mxu0 0
      %1939 = vmatpush2.bf16.msra.mxu0 0
      %1940 = vmatprep.mubr.bf16.mxu0 0
      %1941 = vmatmul.mubr.bf16.gmra.mxu0 %v1844
      %v1942 = vpop.f32.mrf.mxu0
      %v1943 = vadd.f32 0.0, %v1942
      %v1944 = vpop.f32.mrf.mxu0
      %v1945 = vpop.f32.mrf.mxu0
      %v1946 = vadd.f32 0.0, %v1945
      %v1947 = vpop.f32.mrf.mxu0
      %1948 = vmatprep.mubr.bf16.mxu0 0
      %1949 = vmatmul.mubr.bf16.gmra.mxu0 %v1845
      %v1950 = vpop.f32.mrf.mxu0
      %v1951 = vadd.f32 0.0, %v1950
      %v1952 = vpop.f32.mrf.mxu0
      %v1953 = vpop.f32.mrf.mxu0
      %v1954 = vadd.f32 0.0, %v1953
      %v1955 = vpop.f32.mrf.mxu0
      %1956 = vmatprep.mubr.bf16.mxu0 0
      %1957 = vmatmul.mubr.bf16.gmra.mxu0 %v1846
      %v1958 = vpop.f32.mrf.mxu0
      %v1959 = vadd.f32 0.0, %v1958
      %v1960 = vpop.f32.mrf.mxu0
      %v1961 = vpop.f32.mrf.mxu0
      %v1962 = vadd.f32 0.0, %v1961
      %v1963 = vpop.f32.mrf.mxu0
      %1964 = vmatprep.mubr.bf16.mxu0 0
      %1965 = vmatmul.mubr.bf16.gmra.mxu0 %v1847
      %v1966 = vpop.f32.mrf.mxu0
      %v1967 = vadd.f32 0.0, %v1966
      %v1968 = vpop.f32.mrf.mxu0
      %v1969 = vpop.f32.mrf.mxu0
      %v1970 = vadd.f32 0.0, %v1969
      %v1971 = vpop.f32.mrf.mxu0
      %1972 = vmatprep.mubr.bf16.mxu0 0
      %1973 = vmatmul.mubr.bf16.gmra.mxu0 %v1848
      %v1974 = vpop.f32.mrf.mxu0
      %v1975 = vadd.f32 0.0, %v1974
      %v1976 = vpop.f32.mrf.mxu0
      %v1977 = vpop.f32.mrf.mxu0
      %v1978 = vadd.f32 0.0, %v1977
      %v1979 = vpop.f32.mrf.mxu0
      %1980 = vmatprep.mubr.bf16.mxu0 0
      %1981 = vmatmul.mubr.bf16.gmra.mxu0 %v1849
      %v1982 = vpop.f32.mrf.mxu0
      %v1983 = vadd.f32 0.0, %v1982
      %v1984 = vpop.f32.mrf.mxu0
      %v1985 = vpop.f32.mrf.mxu0
      %v1986 = vadd.f32 0.0, %v1985
      %v1987 = vpop.f32.mrf.mxu0
      %1988 = vmatprep.mubr.bf16.mxu0 0
      %1989 = vmatmul.mubr.bf16.gmra.mxu0 %v1850
      %v1990 = vpop.f32.mrf.mxu0
      %v1991 = vadd.f32 0.0, %v1990
      %v1992 = vpop.f32.mrf.mxu0
      %v1993 = vpop.f32.mrf.mxu0
      %v1994 = vadd.f32 0.0, %v1993
      %v1995 = vpop.f32.mrf.mxu0
      %1996 = vmatprep.mubr.bf16.mxu0 0
      %1997 = vmatmul.mubr.bf16.gmra.mxu0 %v1851
      %v1998 = vpop.f32.mrf.mxu0
      %v1999 = vadd.f32 0.0, %v1998
      %v2000 = vpop.f32.mrf.mxu0
      %v2001 = vpop.f32.mrf.mxu0
      %v2002 = vadd.f32 0.0, %v2001
      %v2003 = vpop.f32.mrf.mxu0
      %2004 = vdwg.mxu0
      %v2005 = vadd.f32 %v1747, %v1943
      %v2006 = vadd.f32 %v1748, %v1946
      %v2007 = vadd.f32 %v1749, %v1951
      %v2008 = vadd.f32 %v1750, %v1954
      %v2009 = vadd.f32 %v1751, %v1959
      %v2010 = vadd.f32 %v1752, %v1962
      %v2011 = vadd.f32 %v1753, %v1967
      %v2012 = vadd.f32 %v1754, %v1970
      %v2013 = vadd.f32 %v1755, %v1975
      %v2014 = vadd.f32 %v1756, %v1978
      %v2015 = vadd.f32 %v1757, %v1983
      %v2016 = vadd.f32 %v1758, %v1986
      %v2017 = vadd.f32 %v1759, %v1991
      %v2018 = vadd.f32 %v1760, %v1994
      %v2019 = vadd.f32 %v1761, %v1999
      %v2020 = vadd.f32 %v1762, %v2002
      %v2021 = vld [vmem:[#allocation2 + $0x8] sm:$0xf]
      %v2022 = vld [vmem:[#allocation2 + $0xc] sm:$0xf]
      %v2023 = vld [vmem:[#allocation2 + $0x10] sm:$0xf]
      %v2024 = vld [vmem:[#allocation2 + $0x14] sm:$0xf]
      %v2025 = vld [vmem:[#allocation2 + $0x18] sm:$0xf]
      %v2026 = vld [vmem:[#allocation2 + $0x1c] sm:$0xf]
      %v2027 = vld [vmem:[#allocation2 + $0x20] sm:$0xf]
      %v2028 = vld [vmem:[#allocation2 + $0x24] sm:$0xf]
      %v2029 = vld [vmem:[#allocation2 + $0x28] sm:$0xf]
      %v2030 = vld [vmem:[#allocation2 + $0x2c] sm:$0xf]
      %v2031 = vld [vmem:[#allocation2 + $0x30] sm:$0xf]
      %v2032 = vld [vmem:[#allocation2 + $0x34] sm:$0xf]
      %v2033 = vld [vmem:[#allocation2 + $0x38] sm:$0xf]
      %v2034 = vld [vmem:[#allocation2 + $0x3c] sm:$0xf]
      %v2035 = vld [vmem:[#allocation2 + $0x40] sm:$0xf]
      %v2036 = vld [vmem:[#allocation2 + $0x44] sm:$0xf]
      %v2037 = vld [vmem:[#allocation2 + $0x48] sm:$0x1]
      %s2038 = scalar_lea.vmem %s4, 256
      %v2039 = vld [vmem:[%s2038] sm:$0xf]
      %v2040 = vld [vmem:[%s2038 + $0x4] sm:$0xf]
      %v2041 = vld [vmem:[%s2038 + $0x8] sm:$0xf]
      %v2042 = vld [vmem:[%s2038 + $0xc] sm:$0xf]
      %v2043 = vld [vmem:[%s2038 + $0x10] sm:$0xf]
      %v2044 = vld [vmem:[%s2038 + $0x14] sm:$0xf]
      %v2045 = vld [vmem:[%s2038 + $0x18] sm:$0xf]
      %v2046 = vld [vmem:[%s2038 + $0x1c] sm:$0xf]
      %v2047 = vld [vmem:[%s2038 + $0x20] sm:$0xf]
      %v2048 = vld [vmem:[%s2038 + $0x24] sm:$0xf]
      %v2049 = vld [vmem:[%s2038 + $0x28] sm:$0xf]
      %v2050 = vld [vmem:[%s2038 + $0x2c] sm:$0xf]
      %v2051 = vld [vmem:[%s2038 + $0x30] sm:$0xf]
      %v2052 = vld [vmem:[%s2038 + $0x34] sm:$0xf]
      %v2053 = vld [vmem:[%s2038 + $0x38] sm:$0xf]
      %v2054 = vld [vmem:[%s2038 + $0x3c] sm:$0xf]
      %v2072 = vunpack.c.l.b16 %v2021
      %v2073 = vunpack.c.l.b16 %v2022
      %v2074 = vunpack.c.l.b16 %v2023
      %v2075 = vunpack.c.l.b16 %v2024
      %v2076 = vunpack.c.l.b16 %v2025
      %v2077 = vunpack.c.l.b16 %v2026
      %v2078 = vunpack.c.l.b16 %v2027
      %v2079 = vunpack.c.l.b16 %v2028
      %v2080 = vunpack.c.l.b16 %v2029
      %v2081 = vunpack.c.l.b16 %v2030
      %v2082 = vunpack.c.l.b16 %v2031
      %v2083 = vunpack.c.l.b16 %v2032
      %v2084 = vunpack.c.l.b16 %v2033
      %v2085 = vunpack.c.l.b16 %v2034
      %v2086 = vunpack.c.l.b16 %v2035
      %v2087 = vunpack.c.l.b16 %v2036
      %v2088 = vunpack.c.l.b16 %v2037
      %v2089 = vpack.c.b16 %v2073, %v2072
      %v2090 = vpack.c.b16 %v2075, %v2074
      %v2091 = vpack.c.b16 %v2077, %v2076
      %v2092 = vpack.c.b16 %v2079, %v2078
      %v2093 = vpack.c.b16 %v2081, %v2080
      %v2094 = vpack.c.b16 %v2083, %v2082
      %v2095 = vpack.c.b16 %v2085, %v2084
      %v2096 = vpack.c.b16 %v2087, %v2086
      %v2097 = vpack.c.b16 %v2088, %v2088
      %v2099 = vshrl.u32 %v2089, 16
      %v2101 = vshll.u32 %v2089, 16
      %v2103 = vrot.slane %v2101, 1
      %v2104 = vor.u32 %v2099, %v2103
      %v2106 = vshll.u32 %v2090, 16
      %v2108 = vrot.slane %v2106, 1
      %v2109 = vsel %vm1063, %v2104, %v2108
      %v2110 = vshrl.u32 %v2090, 16
      %v2112 = vor.u32 %v2110, %v2108
      %v2114 = vshll.u32 %v2091, 16
      %v2116 = vrot.slane %v2114, 1
      %v2117 = vsel %vm1063, %v2112, %v2116
      %v2118 = vshrl.u32 %v2091, 16
      %v2120 = vor.u32 %v2118, %v2116
      %v2122 = vshll.u32 %v2092, 16
      %v2124 = vrot.slane %v2122, 1
      %v2125 = vsel %vm1063, %v2120, %v2124
      %v2126 = vshrl.u32 %v2092, 16
      %v2128 = vor.u32 %v2126, %v2124
      %v2130 = vshll.u32 %v2093, 16
      %v2132 = vrot.slane %v2130, 1
      %v2133 = vsel %vm1063, %v2128, %v2132
      %v2134 = vshrl.u32 %v2093, 16
      %v2136 = vor.u32 %v2134, %v2132
      %v2138 = vshll.u32 %v2094, 16
      %v2140 = vrot.slane %v2138, 1
      %v2141 = vsel %vm1063, %v2136, %v2140
      %v2142 = vshrl.u32 %v2094, 16
      %v2144 = vor.u32 %v2142, %v2140
      %v2146 = vshll.u32 %v2095, 16
      %v2148 = vrot.slane %v2146, 1
      %v2149 = vsel %vm1063, %v2144, %v2148
      %v2150 = vshrl.u32 %v2095, 16
      %v2152 = vor.u32 %v2150, %v2148
      %v2154 = vshll.u32 %v2096, 16
      %v2156 = vrot.slane %v2154, 1
      %v2157 = vsel %vm1063, %v2152, %v2156
      %v2158 = vshrl.u32 %v2096, 16
      %v2160 = vor.u32 %v2158, %v2156
      %v2162 = vshll.u32 %v2097, 16
      %v2164 = vrot.slane %v2162, 1
      %v2165 = vsel %vm1063, %v2160, %v2164
      %v2190 = vunpack.c.l.b16 %v2039
      %v2191 = vunpack.c.l.b16 %v2040
      %v2192 = vunpack.c.l.b16 %v2041
      %v2193 = vunpack.c.l.b16 %v2042
      %v2194 = vunpack.c.l.b16 %v2043
      %v2195 = vunpack.c.l.b16 %v2044
      %v2196 = vunpack.c.l.b16 %v2045
      %v2197 = vunpack.c.l.b16 %v2046
      %v2198 = vunpack.c.l.b16 %v2047
      %v2199 = vunpack.c.l.b16 %v2048
      %v2200 = vunpack.c.l.b16 %v2049
      %v2201 = vunpack.c.l.b16 %v2050
      %v2202 = vunpack.c.l.b16 %v2051
      %v2203 = vunpack.c.l.b16 %v2052
      %v2204 = vunpack.c.l.b16 %v2053
      %v2205 = vunpack.c.l.b16 %v2054
      %v2206 = vpack.c.b16 %v2191, %v2190
      %v2207 = vpack.c.b16 %v2193, %v2192
      %v2208 = vpack.c.b16 %v2195, %v2194
      %v2209 = vpack.c.b16 %v2197, %v2196
      %v2210 = vpack.c.b16 %v2199, %v2198
      %v2211 = vpack.c.b16 %v2201, %v2200
      %v2212 = vpack.c.b16 %v2203, %v2202
      %v2213 = vpack.c.b16 %v2205, %v2204
      %2222 = vmatprep.subr.bf16.mxu0 0
      %2223 = vmatpush1.bf16.msra.mxu0 %v2213
      %2224 = vmatprep.subr.bf16.mxu0 0
      %2225 = vmatpush1.bf16.msra.mxu0 %v2212
      %2226 = vmatprep.subr.bf16.mxu0 0
      %2227 = vmatpush1.bf16.msra.mxu0 %v2211
      %2228 = vmatprep.subr.bf16.mxu0 0
      %2229 = vmatpush1.bf16.msra.mxu0 %v2210
      %2230 = vmatprep.subr.bf16.mxu0 0
      %2231 = vmatpush1.bf16.msra.mxu0 %v2209
      %2232 = vmatprep.subr.bf16.mxu0 0
      %2233 = vmatpush1.bf16.msra.mxu0 %v2208
      %2234 = vmatprep.subr.bf16.mxu0 0
      %2235 = vmatpush1.bf16.msra.mxu0 %v2207
      %2236 = vmatprep.subr.bf16.mxu0 0
      %2237 = vmatpush1.bf16.msra.mxu0 %v2206
      %2238 = vmatprep.subr.bf16.mxu0 0
      %2239 = vmatpush2.bf16.msra.mxu0 0
      %2240 = vmatprep.subr.bf16.mxu0 0
      %2241 = vmatpush2.bf16.msra.mxu0 0
      %2242 = vmatprep.subr.bf16.mxu0 0
      %2243 = vmatpush2.bf16.msra.mxu0 0
      %2244 = vmatprep.subr.bf16.mxu0 0
      %2245 = vmatpush2.bf16.msra.mxu0 0
      %2246 = vmatprep.subr.bf16.mxu0 0
      %2247 = vmatpush2.bf16.msra.mxu0 0
      %2248 = vmatprep.subr.bf16.mxu0 0
      %2249 = vmatpush2.bf16.msra.mxu0 0
      %2250 = vmatprep.subr.bf16.mxu0 0
      %2251 = vmatpush2.bf16.msra.mxu0 0
      %2252 = vmatprep.subr.bf16.mxu0 0
      %2253 = vmatpush2.bf16.msra.mxu0 0
      %2254 = vmatprep.mubr.bf16.mxu0 0
      %2255 = vmatmul.mubr.bf16.gmra.mxu0 %v2109
      %v2256 = vpop.f32.mrf.mxu0
      %v2257 = vadd.f32 0.0, %v2256
      %v2258 = vpop.f32.mrf.mxu0
      %v2259 = vpop.f32.mrf.mxu0
      %v2260 = vadd.f32 0.0, %v2259
      %v2261 = vpop.f32.mrf.mxu0
      %2262 = vmatprep.mubr.bf16.mxu0 0
      %2263 = vmatmul.mubr.bf16.gmra.mxu0 %v2117
      %v2264 = vpop.f32.mrf.mxu0
      %v2265 = vadd.f32 0.0, %v2264
      %v2266 = vpop.f32.mrf.mxu0
      %v2267 = vpop.f32.mrf.mxu0
      %v2268 = vadd.f32 0.0, %v2267
      %v2269 = vpop.f32.mrf.mxu0
      %2270 = vmatprep.mubr.bf16.mxu0 0
      %2271 = vmatmul.mubr.bf16.gmra.mxu0 %v2125
      %v2272 = vpop.f32.mrf.mxu0
      %v2273 = vadd.f32 0.0, %v2272
      %v2274 = vpop.f32.mrf.mxu0
      %v2275 = vpop.f32.mrf.mxu0
      %v2276 = vadd.f32 0.0, %v2275
      %v2277 = vpop.f32.mrf.mxu0
      %2278 = vmatprep.mubr.bf16.mxu0 0
      %2279 = vmatmul.mubr.bf16.gmra.mxu0 %v2133
      %v2280 = vpop.f32.mrf.mxu0
      %v2281 = vadd.f32 0.0, %v2280
      %v2282 = vpop.f32.mrf.mxu0
      %v2283 = vpop.f32.mrf.mxu0
      %v2284 = vadd.f32 0.0, %v2283
      %v2285 = vpop.f32.mrf.mxu0
      %2286 = vmatprep.mubr.bf16.mxu0 0
      %2287 = vmatmul.mubr.bf16.gmra.mxu0 %v2141
      %v2288 = vpop.f32.mrf.mxu0
      %v2289 = vadd.f32 0.0, %v2288
      %v2290 = vpop.f32.mrf.mxu0
      %v2291 = vpop.f32.mrf.mxu0
      %v2292 = vadd.f32 0.0, %v2291
      %v2293 = vpop.f32.mrf.mxu0
      %2294 = vmatprep.mubr.bf16.mxu0 0
      %2295 = vmatmul.mubr.bf16.gmra.mxu0 %v2149
      %v2296 = vpop.f32.mrf.mxu0
      %v2297 = vadd.f32 0.0, %v2296
      %v2298 = vpop.f32.mrf.mxu0
      %v2299 = vpop.f32.mrf.mxu0
      %v2300 = vadd.f32 0.0, %v2299
      %v2301 = vpop.f32.mrf.mxu0
      %2302 = vmatprep.mubr.bf16.mxu0 0
      %2303 = vmatmul.mubr.bf16.gmra.mxu0 %v2157
      %v2304 = vpop.f32.mrf.mxu0
      %v2305 = vadd.f32 0.0, %v2304
      %v2306 = vpop.f32.mrf.mxu0
      %v2307 = vpop.f32.mrf.mxu0
      %v2308 = vadd.f32 0.0, %v2307
      %v2309 = vpop.f32.mrf.mxu0
      %2310 = vmatprep.mubr.bf16.mxu0 0
      %2311 = vmatmul.mubr.bf16.gmra.mxu0 %v2165
      %v2312 = vpop.f32.mrf.mxu0
      %v2313 = vadd.f32 0.0, %v2312
      %v2314 = vpop.f32.mrf.mxu0
      %v2315 = vpop.f32.mrf.mxu0
      %v2316 = vadd.f32 0.0, %v2315
      %v2317 = vpop.f32.mrf.mxu0
      %2318 = vdwg.mxu0
      %v2319 = vadd.f32 %v2005, %v2257
      %v2320 = vadd.f32 %v2006, %v2260
      %v2321 = vadd.f32 %v2007, %v2265
      %v2322 = vadd.f32 %v2008, %v2268
      %v2323 = vadd.f32 %v2009, %v2273
      %v2324 = vadd.f32 %v2010, %v2276
      %v2325 = vadd.f32 %v2011, %v2281
      %v2326 = vadd.f32 %v2012, %v2284
      %v2327 = vadd.f32 %v2013, %v2289
      %v2328 = vadd.f32 %v2014, %v2292
      %v2329 = vadd.f32 %v2015, %v2297
      %v2330 = vadd.f32 %v2016, %v2300
      %v2331 = vadd.f32 %v2017, %v2305
      %v2332 = vadd.f32 %v2018, %v2308
      %v2333 = vadd.f32 %v2019, %v2313
      %v2334 = vadd.f32 %v2020, %v2316
      %v2335 = vld [vmem:[#allocation2 + $0x8] sm:$0xe]
      %v2336 = vsel %vm1495, %v2335, 0
      %v2337 = vsel %vm1496, %v2022, 0
      %v2338 = vsel %vm1497, %v2023, 0
      %v2339 = vsel %vm1496, %v2024, 0
      %v2340 = vsel %vm1497, %v2025, 0
      %v2341 = vsel %vm1496, %v2026, 0
      %v2342 = vsel %vm1497, %v2027, 0
      %v2343 = vsel %vm1496, %v2028, 0
      %v2344 = vsel %vm1497, %v2029, 0
      %v2345 = vsel %vm1496, %v2030, 0
      %v2346 = vsel %vm1497, %v2031, 0
      %v2347 = vsel %vm1496, %v2032, 0
      %v2348 = vsel %vm1497, %v2033, 0
      %v2349 = vsel %vm1496, %v2034, 0
      %v2350 = vsel %vm1497, %v2035, 0
      %v2351 = vsel %vm1496, %v2036, 0
      %v2352 = vsel %vm1498, %v2037, 0
      %s2353 = scalar_lea.vmem %s4, 320
      %v2354 = vld [vmem:[%s2353] sm:$0xf]
      %v2355 = vld [vmem:[%s2353 + $0x4] sm:$0xf]
      %v2356 = vld [vmem:[%s2353 + $0x8] sm:$0xf]
      %v2357 = vld [vmem:[%s2353 + $0xc] sm:$0xf]
      %v2358 = vld [vmem:[%s2353 + $0x10] sm:$0xf]
      %v2359 = vld [vmem:[%s2353 + $0x14] sm:$0xf]
      %v2360 = vld [vmem:[%s2353 + $0x18] sm:$0xf]
      %v2361 = vld [vmem:[%s2353 + $0x1c] sm:$0xf]
      %v2362 = vld [vmem:[%s2353 + $0x20] sm:$0xf]
      %v2363 = vld [vmem:[%s2353 + $0x24] sm:$0xf]
      %v2364 = vld [vmem:[%s2353 + $0x28] sm:$0xf]
      %v2365 = vld [vmem:[%s2353 + $0x2c] sm:$0xf]
      %v2366 = vld [vmem:[%s2353 + $0x30] sm:$0xf]
      %v2367 = vld [vmem:[%s2353 + $0x34] sm:$0xf]
      %v2368 = vld [vmem:[%s2353 + $0x38] sm:$0xf]
      %v2369 = vld [vmem:[%s2353 + $0x3c] sm:$0xf]
      %v2387 = vunpack.c.l.b16 %v2336
      %v2388 = vunpack.c.l.b16 %v2337
      %v2389 = vunpack.c.l.b16 %v2338
      %v2390 = vunpack.c.l.b16 %v2339
      %v2391 = vunpack.c.l.b16 %v2340
      %v2392 = vunpack.c.l.b16 %v2341
      %v2393 = vunpack.c.l.b16 %v2342
      %v2394 = vunpack.c.l.b16 %v2343
      %v2395 = vunpack.c.l.b16 %v2344
      %v2396 = vunpack.c.l.b16 %v2345
      %v2397 = vunpack.c.l.b16 %v2346
      %v2398 = vunpack.c.l.b16 %v2347
      %v2399 = vunpack.c.l.b16 %v2348
      %v2400 = vunpack.c.l.b16 %v2349
      %v2401 = vunpack.c.l.b16 %v2350
      %v2402 = vunpack.c.l.b16 %v2351
      %v2403 = vunpack.c.l.b16 %v2352
      %v2404 = vpack.c.b16 %v2388, %v2387
      %v2405 = vpack.c.b16 %v2390, %v2389
      %v2406 = vpack.c.b16 %v2392, %v2391
      %v2407 = vpack.c.b16 %v2394, %v2393
      %v2408 = vpack.c.b16 %v2396, %v2395
      %v2409 = vpack.c.b16 %v2398, %v2397
      %v2410 = vpack.c.b16 %v2400, %v2399
      %v2411 = vpack.c.b16 %v2402, %v2401
      %v2412 = vpack.c.b16 %v2403, %v2403
      %v2413 = vrot.slane %v2404, 1
      %v2414 = vrot.slane %v2405, 1
      %v2415 = vsel %vm1576, %v2413, %v2414
      %v2416 = vrot.slane %v2406, 1
      %v2417 = vsel %vm1576, %v2414, %v2416
      %v2418 = vrot.slane %v2407, 1
      %v2419 = vsel %vm1576, %v2416, %v2418
      %v2420 = vrot.slane %v2408, 1
      %v2421 = vsel %vm1576, %v2418, %v2420
      %v2422 = vrot.slane %v2409, 1
      %v2423 = vsel %vm1576, %v2420, %v2422
      %v2424 = vrot.slane %v2410, 1
      %v2425 = vsel %vm1576, %v2422, %v2424
      %v2426 = vrot.slane %v2411, 1
      %v2427 = vsel %vm1576, %v2424, %v2426
      %v2428 = vrot.slane %v2412, 1
      %v2429 = vsel %vm1576, %v2426, %v2428
      %v2454 = vunpack.c.l.b16 %v2354
      %v2455 = vunpack.c.l.b16 %v2355
      %v2456 = vunpack.c.l.b16 %v2356
      %v2457 = vunpack.c.l.b16 %v2357
      %v2458 = vunpack.c.l.b16 %v2358
      %v2459 = vunpack.c.l.b16 %v2359
      %v2460 = vunpack.c.l.b16 %v2360
      %v2461 = vunpack.c.l.b16 %v2361
      %v2462 = vunpack.c.l.b16 %v2362
      %v2463 = vunpack.c.l.b16 %v2363
      %v2464 = vunpack.c.l.b16 %v2364
      %v2465 = vunpack.c.l.b16 %v2365
      %v2466 = vunpack.c.l.b16 %v2366
      %v2467 = vunpack.c.l.b16 %v2367
      %v2468 = vunpack.c.l.b16 %v2368
      %v2469 = vunpack.c.l.b16 %v2369
      %v2470 = vpack.c.b16 %v2455, %v2454
      %v2471 = vpack.c.b16 %v2457, %v2456
      %v2472 = vpack.c.b16 %v2459, %v2458
      %v2473 = vpack.c.b16 %v2461, %v2460
      %v2474 = vpack.c.b16 %v2463, %v2462
      %v2475 = vpack.c.b16 %v2465, %v2464
      %v2476 = vpack.c.b16 %v2467, %v2466
      %v2477 = vpack.c.b16 %v2469, %v2468
      %2486 = vmatprep.subr.bf16.mxu0 0
      %2487 = vmatpush1.bf16.msra.mxu0 %v2477
      %2488 = vmatprep.subr.bf16.mxu0 0
      %2489 = vmatpush1.bf16.msra.mxu0 %v2476
      %2490 = vmatprep.subr.bf16.mxu0 0
      %2491 = vmatpush1.bf16.msra.mxu0 %v2475
      %2492 = vmatprep.subr.bf16.mxu0 0
      %2493 = vmatpush1.bf16.msra.mxu0 %v2474
      %2494 = vmatprep.subr.bf16.mxu0 0
      %2495 = vmatpush1.bf16.msra.mxu0 %v2473
      %2496 = vmatprep.subr.bf16.mxu0 0
      %2497 = vmatpush1.bf16.msra.mxu0 %v2472
      %2498 = vmatprep.subr.bf16.mxu0 0
      %2499 = vmatpush1.bf16.msra.mxu0 %v2471
      %2500 = vmatprep.subr.bf16.mxu0 0
      %2501 = vmatpush1.bf16.msra.mxu0 %v2470
      %2502 = vmatprep.subr.bf16.mxu0 0
      %2503 = vmatpush2.bf16.msra.mxu0 0
      %2504 = vmatprep.subr.bf16.mxu0 0
      %2505 = vmatpush2.bf16.msra.mxu0 0
      %2506 = vmatprep.subr.bf16.mxu0 0
      %2507 = vmatpush2.bf16.msra.mxu0 0
      %2508 = vmatprep.subr.bf16.mxu0 0
      %2509 = vmatpush2.bf16.msra.mxu0 0
      %2510 = vmatprep.subr.bf16.mxu0 0
      %2511 = vmatpush2.bf16.msra.mxu0 0
      %2512 = vmatprep.subr.bf16.mxu0 0
      %2513 = vmatpush2.bf16.msra.mxu0 0
      %2514 = vmatprep.subr.bf16.mxu0 0
      %2515 = vmatpush2.bf16.msra.mxu0 0
      %2516 = vmatprep.subr.bf16.mxu0 0
      %2517 = vmatpush2.bf16.msra.mxu0 0
      %2518 = vmatprep.mubr.bf16.mxu0 0
      %2519 = vmatmul.mubr.bf16.gmra.mxu0 %v2415
      %v2520 = vpop.f32.mrf.mxu0
      %v2521 = vadd.f32 0.0, %v2520
      %v2522 = vpop.f32.mrf.mxu0
      %v2523 = vpop.f32.mrf.mxu0
      %v2524 = vadd.f32 0.0, %v2523
      %v2525 = vpop.f32.mrf.mxu0
      %2526 = vmatprep.mubr.bf16.mxu0 0
      %2527 = vmatmul.mubr.bf16.gmra.mxu0 %v2417
      %v2528 = vpop.f32.mrf.mxu0
      %v2529 = vadd.f32 0.0, %v2528
      %v2530 = vpop.f32.mrf.mxu0
      %v2531 = vpop.f32.mrf.mxu0
      %v2532 = vadd.f32 0.0, %v2531
      %v2533 = vpop.f32.mrf.mxu0
      %2534 = vmatprep.mubr.bf16.mxu0 0
      %2535 = vmatmul.mubr.bf16.gmra.mxu0 %v2419
      %v2536 = vpop.f32.mrf.mxu0
      %v2537 = vadd.f32 0.0, %v2536
      %v2538 = vpop.f32.mrf.mxu0
      %v2539 = vpop.f32.mrf.mxu0
      %v2540 = vadd.f32 0.0, %v2539
      %v2541 = vpop.f32.mrf.mxu0
      %2542 = vmatprep.mubr.bf16.mxu0 0
      %2543 = vmatmul.mubr.bf16.gmra.mxu0 %v2421
      %v2544 = vpop.f32.mrf.mxu0
      %v2545 = vadd.f32 0.0, %v2544
      %v2546 = vpop.f32.mrf.mxu0
      %v2547 = vpop.f32.mrf.mxu0
      %v2548 = vadd.f32 0.0, %v2547
      %v2549 = vpop.f32.mrf.mxu0
      %2550 = vmatprep.mubr.bf16.mxu0 0
      %2551 = vmatmul.mubr.bf16.gmra.mxu0 %v2423
      %v2552 = vpop.f32.mrf.mxu0
      %v2553 = vadd.f32 0.0, %v2552
      %v2554 = vpop.f32.mrf.mxu0
      %v2555 = vpop.f32.mrf.mxu0
      %v2556 = vadd.f32 0.0, %v2555
      %v2557 = vpop.f32.mrf.mxu0
      %2558 = vmatprep.mubr.bf16.mxu0 0
      %2559 = vmatmul.mubr.bf16.gmra.mxu0 %v2425
      %v2560 = vpop.f32.mrf.mxu0
      %v2561 = vadd.f32 0.0, %v2560
      %v2562 = vpop.f32.mrf.mxu0
      %v2563 = vpop.f32.mrf.mxu0
      %v2564 = vadd.f32 0.0, %v2563
      %v2565 = vpop.f32.mrf.mxu0
      %2566 = vmatprep.mubr.bf16.mxu0 0
      %2567 = vmatmul.mubr.bf16.gmra.mxu0 %v2427
      %v2568 = vpop.f32.mrf.mxu0
      %v2569 = vadd.f32 0.0, %v2568
      %v2570 = vpop.f32.mrf.mxu0
      %v2571 = vpop.f32.mrf.mxu0
      %v2572 = vadd.f32 0.0, %v2571
      %v2573 = vpop.f32.mrf.mxu0
      %2574 = vmatprep.mubr.bf16.mxu0 0
      %2575 = vmatmul.mubr.bf16.gmra.mxu0 %v2429
      %v2576 = vpop.f32.mrf.mxu0
      %v2577 = vadd.f32 0.0, %v2576
      %v2578 = vpop.f32.mrf.mxu0
      %v2579 = vpop.f32.mrf.mxu0
      %v2580 = vadd.f32 0.0, %v2579
      %v2581 = vpop.f32.mrf.mxu0
      %2582 = vdwg.mxu0
      %v2583 = vadd.f32 %v2319, %v2521
      %v2584 = vadd.f32 %v2320, %v2524
      %v2585 = vadd.f32 %v2321, %v2529
      %v2586 = vadd.f32 %v2322, %v2532
      %v2587 = vadd.f32 %v2323, %v2537
      %v2588 = vadd.f32 %v2324, %v2540
      %v2589 = vadd.f32 %v2325, %v2545
      %v2590 = vadd.f32 %v2326, %v2548
      %v2591 = vadd.f32 %v2327, %v2553
      %v2592 = vadd.f32 %v2328, %v2556
      %v2593 = vadd.f32 %v2329, %v2561
      %v2594 = vadd.f32 %v2330, %v2564
      %v2595 = vadd.f32 %v2331, %v2569
      %v2596 = vadd.f32 %v2332, %v2572
      %v2597 = vadd.f32 %v2333, %v2577
      %v2598 = vadd.f32 %v2334, %v2580
      %v2599 = vld [vmem:[#allocation2 + $0x10] sm:$0xf]
      %v2600 = vld [vmem:[#allocation2 + $0x14] sm:$0xf]
      %v2601 = vld [vmem:[#allocation2 + $0x18] sm:$0xf]
      %v2602 = vld [vmem:[#allocation2 + $0x1c] sm:$0xf]
      %v2603 = vld [vmem:[#allocation2 + $0x20] sm:$0xf]
      %v2604 = vld [vmem:[#allocation2 + $0x24] sm:$0xf]
      %v2605 = vld [vmem:[#allocation2 + $0x28] sm:$0xf]
      %v2606 = vld [vmem:[#allocation2 + $0x2c] sm:$0xf]
      %v2607 = vld [vmem:[#allocation2 + $0x30] sm:$0xf]
      %v2608 = vld [vmem:[#allocation2 + $0x34] sm:$0xf]
      %v2609 = vld [vmem:[#allocation2 + $0x38] sm:$0xf]
      %v2610 = vld [vmem:[#allocation2 + $0x3c] sm:$0xf]
      %v2611 = vld [vmem:[#allocation2 + $0x40] sm:$0xf]
      %v2612 = vld [vmem:[#allocation2 + $0x44] sm:$0xf]
      %v2613 = vld [vmem:[#allocation2 + $0x48] sm:$0xf]
      %v2614 = vld [vmem:[#allocation2 + $0x4c] sm:$0xf]
      %v2615 = vsel %vm968, %v2599, 0
      %v2616 = vsel %vm969, %v2600, 0
      %v2617 = vsel %vm968, %v2601, 0
      %v2618 = vsel %vm969, %v2602, 0
      %v2619 = vsel %vm968, %v2603, 0
      %v2620 = vsel %vm969, %v2604, 0
      %v2621 = vsel %vm968, %v2605, 0
      %v2622 = vsel %vm969, %v2606, 0
      %v2623 = vsel %vm968, %v2607, 0
      %v2624 = vsel %vm969, %v2608, 0
      %v2625 = vsel %vm968, %v2609, 0
      %v2626 = vsel %vm969, %v2610, 0
      %v2627 = vsel %vm968, %v2611, 0
      %v2628 = vsel %vm969, %v2612, 0
      %v2629 = vsel %vm968, %v2613, 0
      %v2630 = vsel %vm969, %v2614, 0
      %s2631 = scalar_lea.vmem %s4, 384
      %v2632 = vld [vmem:[%s2631] sm:$0xf]
      %v2633 = vld [vmem:[%s2631 + $0x4] sm:$0xf]
      %v2634 = vld [vmem:[%s2631 + $0x8] sm:$0xf]
      %v2635 = vld [vmem:[%s2631 + $0xc] sm:$0xf]
      %v2636 = vld [vmem:[%s2631 + $0x10] sm:$0xf]
      %v2637 = vld [vmem:[%s2631 + $0x14] sm:$0xf]
      %v2638 = vld [vmem:[%s2631 + $0x18] sm:$0xf]
      %v2639 = vld [vmem:[%s2631 + $0x1c] sm:$0xf]
      %v2640 = vld [vmem:[%s2631 + $0x20] sm:$0xf]
      %v2641 = vld [vmem:[%s2631 + $0x24] sm:$0xf]
      %v2642 = vld [vmem:[%s2631 + $0x28] sm:$0xf]
      %v2643 = vld [vmem:[%s2631 + $0x2c] sm:$0xf]
      %v2644 = vld [vmem:[%s2631 + $0x30] sm:$0xf]
      %v2645 = vld [vmem:[%s2631 + $0x34] sm:$0xf]
      %v2646 = vld [vmem:[%s2631 + $0x38] sm:$0xf]
      %v2647 = vld [vmem:[%s2631 + $0x3c] sm:$0xf]
      %v2664 = vunpack.c.l.b16 %v2615
      %v2665 = vunpack.c.l.b16 %v2616
      %v2666 = vunpack.c.l.b16 %v2617
      %v2667 = vunpack.c.l.b16 %v2618
      %v2668 = vunpack.c.l.b16 %v2619
      %v2669 = vunpack.c.l.b16 %v2620
      %v2670 = vunpack.c.l.b16 %v2621
      %v2671 = vunpack.c.l.b16 %v2622
      %v2672 = vunpack.c.l.b16 %v2623
      %v2673 = vunpack.c.l.b16 %v2624
      %v2674 = vunpack.c.l.b16 %v2625
      %v2675 = vunpack.c.l.b16 %v2626
      %v2676 = vunpack.c.l.b16 %v2627
      %v2677 = vunpack.c.l.b16 %v2628
      %v2678 = vunpack.c.l.b16 %v2629
      %v2679 = vunpack.c.l.b16 %v2630
      %v2680 = vpack.c.b16 %v2665, %v2664
      %v2681 = vpack.c.b16 %v2667, %v2666
      %v2682 = vpack.c.b16 %v2669, %v2668
      %v2683 = vpack.c.b16 %v2671, %v2670
      %v2684 = vpack.c.b16 %v2673, %v2672
      %v2685 = vpack.c.b16 %v2675, %v2674
      %v2686 = vpack.c.b16 %v2677, %v2676
      %v2687 = vpack.c.b16 %v2679, %v2678
      %v2712 = vunpack.c.l.b16 %v2632
      %v2713 = vunpack.c.l.b16 %v2633
      %v2714 = vunpack.c.l.b16 %v2634
      %v2715 = vunpack.c.l.b16 %v2635
      %v2716 = vunpack.c.l.b16 %v2636
      %v2717 = vunpack.c.l.b16 %v2637
      %v2718 = vunpack.c.l.b16 %v2638
      %v2719 = vunpack.c.l.b16 %v2639
      %v2720 = vunpack.c.l.b16 %v2640
      %v2721 = vunpack.c.l.b16 %v2641
      %v2722 = vunpack.c.l.b16 %v2642
      %v2723 = vunpack.c.l.b16 %v2643
      %v2724 = vunpack.c.l.b16 %v2644
      %v2725 = vunpack.c.l.b16 %v2645
      %v2726 = vunpack.c.l.b16 %v2646
      %v2727 = vunpack.c.l.b16 %v2647
      %v2728 = vpack.c.b16 %v2713, %v2712
      %v2729 = vpack.c.b16 %v2715, %v2714
      %v2730 = vpack.c.b16 %v2717, %v2716
      %v2731 = vpack.c.b16 %v2719, %v2718
      %v2732 = vpack.c.b16 %v2721, %v2720
      %v2733 = vpack.c.b16 %v2723, %v2722
      %v2734 = vpack.c.b16 %v2725, %v2724
      %v2735 = vpack.c.b16 %v2727, %v2726
      %2744 = vmatprep.subr.bf16.mxu0 0
      %2745 = vmatpush1.bf16.msra.mxu0 %v2735
      %2746 = vmatprep.subr.bf16.mxu0 0
      %2747 = vmatpush1.bf16.msra.mxu0 %v2734
      %2748 = vmatprep.subr.bf16.mxu0 0
      %2749 = vmatpush1.bf16.msra.mxu0 %v2733
      %2750 = vmatprep.subr.bf16.mxu0 0
      %2751 = vmatpush1.bf16.msra.mxu0 %v2732
      %2752 = vmatprep.subr.bf16.mxu0 0
      %2753 = vmatpush1.bf16.msra.mxu0 %v2731
      %2754 = vmatprep.subr.bf16.mxu0 0
      %2755 = vmatpush1.bf16.msra.mxu0 %v2730
      %2756 = vmatprep.subr.bf16.mxu0 0
      %2757 = vmatpush1.bf16.msra.mxu0 %v2729
      %2758 = vmatprep.subr.bf16.mxu0 0
      %2759 = vmatpush1.bf16.msra.mxu0 %v2728
      %2760 = vmatprep.subr.bf16.mxu0 0
      %2761 = vmatpush2.bf16.msra.mxu0 0
      %2762 = vmatprep.subr.bf16.mxu0 0
      %2763 = vmatpush2.bf16.msra.mxu0 0
      %2764 = vmatprep.subr.bf16.mxu0 0
      %2765 = vmatpush2.bf16.msra.mxu0 0
      %2766 = vmatprep.subr.bf16.mxu0 0
      %2767 = vmatpush2.bf16.msra.mxu0 0
      %2768 = vmatprep.subr.bf16.mxu0 0
      %2769 = vmatpush2.bf16.msra.mxu0 0
      %2770 = vmatprep.subr.bf16.mxu0 0
      %2771 = vmatpush2.bf16.msra.mxu0 0
      %2772 = vmatprep.subr.bf16.mxu0 0
      %2773 = vmatpush2.bf16.msra.mxu0 0
      %2774 = vmatprep.subr.bf16.mxu0 0
      %2775 = vmatpush2.bf16.msra.mxu0 0
      %2776 = vmatprep.mubr.bf16.mxu0 0
      %2777 = vmatmul.mubr.bf16.gmra.mxu0 %v2680
      %v2778 = vpop.f32.mrf.mxu0
      %v2779 = vadd.f32 0.0, %v2778
      %v2780 = vpop.f32.mrf.mxu0
      %v2781 = vpop.f32.mrf.mxu0
      %v2782 = vadd.f32 0.0, %v2781
      %v2783 = vpop.f32.mrf.mxu0
      %2784 = vmatprep.mubr.bf16.mxu0 0
      %2785 = vmatmul.mubr.bf16.gmra.mxu0 %v2681
      %v2786 = vpop.f32.mrf.mxu0
      %v2787 = vadd.f32 0.0, %v2786
      %v2788 = vpop.f32.mrf.mxu0
      %v2789 = vpop.f32.mrf.mxu0
      %v2790 = vadd.f32 0.0, %v2789
      %v2791 = vpop.f32.mrf.mxu0
      %2792 = vmatprep.mubr.bf16.mxu0 0
      %2793 = vmatmul.mubr.bf16.gmra.mxu0 %v2682
      %v2794 = vpop.f32.mrf.mxu0
      %v2795 = vadd.f32 0.0, %v2794
      %v2796 = vpop.f32.mrf.mxu0
      %v2797 = vpop.f32.mrf.mxu0
      %v2798 = vadd.f32 0.0, %v2797
      %v2799 = vpop.f32.mrf.mxu0
      %2800 = vmatprep.mubr.bf16.mxu0 0
      %2801 = vmatmul.mubr.bf16.gmra.mxu0 %v2683
      %v2802 = vpop.f32.mrf.mxu0
      %v2803 = vadd.f32 0.0, %v2802
      %v2804 = vpop.f32.mrf.mxu0
      %v2805 = vpop.f32.mrf.mxu0
      %v2806 = vadd.f32 0.0, %v2805
      %v2807 = vpop.f32.mrf.mxu0
      %2808 = vmatprep.mubr.bf16.mxu0 0
      %2809 = vmatmul.mubr.bf16.gmra.mxu0 %v2684
      %v2810 = vpop.f32.mrf.mxu0
      %v2811 = vadd.f32 0.0, %v2810
      %v2812 = vpop.f32.mrf.mxu0
      %v2813 = vpop.f32.mrf.mxu0
      %v2814 = vadd.f32 0.0, %v2813
      %v2815 = vpop.f32.mrf.mxu0
      %2816 = vmatprep.mubr.bf16.mxu0 0
      %2817 = vmatmul.mubr.bf16.gmra.mxu0 %v2685
      %v2818 = vpop.f32.mrf.mxu0
      %v2819 = vadd.f32 0.0, %v2818
      %v2820 = vpop.f32.mrf.mxu0
      %v2821 = vpop.f32.mrf.mxu0
      %v2822 = vadd.f32 0.0, %v2821
      %v2823 = vpop.f32.mrf.mxu0
      %2824 = vmatprep.mubr.bf16.mxu0 0
      %2825 = vmatmul.mubr.bf16.gmra.mxu0 %v2686
      %v2826 = vpop.f32.mrf.mxu0
      %v2827 = vadd.f32 0.0, %v2826
      %v2828 = vpop.f32.mrf.mxu0
      %v2829 = vpop.f32.mrf.mxu0
      %v2830 = vadd.f32 0.0, %v2829
      %v2831 = vpop.f32.mrf.mxu0
      %2832 = vmatprep.mubr.bf16.mxu0 0
      %2833 = vmatmul.mubr.bf16.gmra.mxu0 %v2687
      %v2834 = vpop.f32.mrf.mxu0
      %v2835 = vadd.f32 0.0, %v2834
      %v2836 = vpop.f32.mrf.mxu0
      %v2837 = vpop.f32.mrf.mxu0
      %v2838 = vadd.f32 0.0, %v2837
      %v2839 = vpop.f32.mrf.mxu0
      %2840 = vdwg.mxu0
      %v2841 = vadd.f32 %v2583, %v2779
      %v2842 = vadd.f32 %v2584, %v2782
      %v2843 = vadd.f32 %v2585, %v2787
      %v2844 = vadd.f32 %v2586, %v2790
      %v2845 = vadd.f32 %v2587, %v2795
      %v2846 = vadd.f32 %v2588, %v2798
      %v2847 = vadd.f32 %v2589, %v2803
      %v2848 = vadd.f32 %v2590, %v2806
      %v2849 = vadd.f32 %v2591, %v2811
      %v2850 = vadd.f32 %v2592, %v2814
      %v2851 = vadd.f32 %v2593, %v2819
      %v2852 = vadd.f32 %v2594, %v2822
      %v2853 = vadd.f32 %v2595, %v2827
      %v2854 = vadd.f32 %v2596, %v2830
      %v2855 = vadd.f32 %v2597, %v2835
      %v2856 = vadd.f32 %v2598, %v2838
      %v2857 = vld [vmem:[#allocation2 + $0x10] sm:$0xf]
      %v2858 = vld [vmem:[#allocation2 + $0x14] sm:$0xf]
      %v2859 = vld [vmem:[#allocation2 + $0x18] sm:$0xf]
      %v2860 = vld [vmem:[#allocation2 + $0x1c] sm:$0xf]
      %v2861 = vld [vmem:[#allocation2 + $0x20] sm:$0xf]
      %v2862 = vld [vmem:[#allocation2 + $0x24] sm:$0xf]
      %v2863 = vld [vmem:[#allocation2 + $0x28] sm:$0xf]
      %v2864 = vld [vmem:[#allocation2 + $0x2c] sm:$0xf]
      %v2865 = vld [vmem:[#allocation2 + $0x30] sm:$0xf]
      %v2866 = vld [vmem:[#allocation2 + $0x34] sm:$0xf]
      %v2867 = vld [vmem:[#allocation2 + $0x38] sm:$0xf]
      %v2868 = vld [vmem:[#allocation2 + $0x3c] sm:$0xf]
      %v2869 = vld [vmem:[#allocation2 + $0x40] sm:$0xf]
      %v2870 = vld [vmem:[#allocation2 + $0x44] sm:$0xf]
      %v2871 = vld [vmem:[#allocation2 + $0x48] sm:$0xf]
      %v2872 = vld [vmem:[#allocation2 + $0x4c] sm:$0xf]
      %v2873 = vld [vmem:[#allocation2 + $0x50] sm:$0x1]
      %s2874 = scalar_lea.vmem %s4, 448
      %v2875 = vld [vmem:[%s2874] sm:$0xf]
      %v2876 = vld [vmem:[%s2874 + $0x4] sm:$0xf]
      %v2877 = vld [vmem:[%s2874 + $0x8] sm:$0xf]
      %v2878 = vld [vmem:[%s2874 + $0xc] sm:$0xf]
      %v2879 = vld [vmem:[%s2874 + $0x10] sm:$0xf]
      %v2880 = vld [vmem:[%s2874 + $0x14] sm:$0xf]
      %v2881 = vld [vmem:[%s2874 + $0x18] sm:$0xf]
      %v2882 = vld [vmem:[%s2874 + $0x1c] sm:$0xf]
      %v2883 = vld [vmem:[%s2874 + $0x20] sm:$0xf]
      %v2884 = vld [vmem:[%s2874 + $0x24] sm:$0xf]
      %v2885 = vld [vmem:[%s2874 + $0x28] sm:$0xf]
      %v2886 = vld [vmem:[%s2874 + $0x2c] sm:$0xf]
      %v2887 = vld [vmem:[%s2874 + $0x30] sm:$0xf]
      %v2888 = vld [vmem:[%s2874 + $0x34] sm:$0xf]
      %v2889 = vld [vmem:[%s2874 + $0x38] sm:$0xf]
      %v2890 = vld [vmem:[%s2874 + $0x3c] sm:$0xf]
      %v2908 = vunpack.c.l.b16 %v2857
      %v2909 = vunpack.c.l.b16 %v2858
      %v2910 = vunpack.c.l.b16 %v2859
      %v2911 = vunpack.c.l.b16 %v2860
      %v2912 = vunpack.c.l.b16 %v2861
      %v2913 = vunpack.c.l.b16 %v2862
      %v2914 = vunpack.c.l.b16 %v2863
      %v2915 = vunpack.c.l.b16 %v2864
      %v2916 = vunpack.c.l.b16 %v2865
      %v2917 = vunpack.c.l.b16 %v2866
      %v2918 = vunpack.c.l.b16 %v2867
      %v2919 = vunpack.c.l.b16 %v2868
      %v2920 = vunpack.c.l.b16 %v2869
      %v2921 = vunpack.c.l.b16 %v2870
      %v2922 = vunpack.c.l.b16 %v2871
      %v2923 = vunpack.c.l.b16 %v2872
      %v2924 = vunpack.c.l.b16 %v2873
      %v2925 = vpack.c.b16 %v2909, %v2908
      %v2926 = vpack.c.b16 %v2911, %v2910
      %v2927 = vpack.c.b16 %v2913, %v2912
      %v2928 = vpack.c.b16 %v2915, %v2914
      %v2929 = vpack.c.b16 %v2917, %v2916
      %v2930 = vpack.c.b16 %v2919, %v2918
      %v2931 = vpack.c.b16 %v2921, %v2920
      %v2932 = vpack.c.b16 %v2923, %v2922
      %v2933 = vpack.c.b16 %v2924, %v2924
      %v2935 = vshrl.u32 %v2925, 16
      %v2937 = vshll.u32 %v2925, 16
      %v2939 = vrot.slane %v2937, 1
      %v2940 = vor.u32 %v2935, %v2939
      %v2942 = vshll.u32 %v2926, 16
      %v2944 = vrot.slane %v2942, 1
      %v2945 = vsel %vm1063, %v2940, %v2944
      %v2946 = vshrl.u32 %v2926, 16
      %v2948 = vor.u32 %v2946, %v2944
      %v2950 = vshll.u32 %v2927, 16
      %v2952 = vrot.slane %v2950, 1
      %v2953 = vsel %vm1063, %v2948, %v2952
      %v2954 = vshrl.u32 %v2927, 16
      %v2956 = vor.u32 %v2954, %v2952
      %v2958 = vshll.u32 %v2928, 16
      %v2960 = vrot.slane %v2958, 1
      %v2961 = vsel %vm1063, %v2956, %v2960
      %v2962 = vshrl.u32 %v2928, 16
      %v2964 = vor.u32 %v2962, %v2960
      %v2966 = vshll.u32 %v2929, 16
      %v2968 = vrot.slane %v2966, 1
      %v2969 = vsel %vm1063, %v2964, %v2968
      %v2970 = vshrl.u32 %v2929, 16
      %v2972 = vor.u32 %v2970, %v2968
      %v2974 = vshll.u32 %v2930, 16
      %v2976 = vrot.slane %v2974, 1
      %v2977 = vsel %vm1063, %v2972, %v2976
      %v2978 = vshrl.u32 %v2930, 16
      %v2980 = vor.u32 %v2978, %v2976
      %v2982 = vshll.u32 %v2931, 16
      %v2984 = vrot.slane %v2982, 1
      %v2985 = vsel %vm1063, %v2980, %v2984
      %v2986 = vshrl.u32 %v2931, 16
      %v2988 = vor.u32 %v2986, %v2984
      %v2990 = vshll.u32 %v2932, 16
      %v2992 = vrot.slane %v2990, 1
      %v2993 = vsel %vm1063, %v2988, %v2992
      %v2994 = vshrl.u32 %v2932, 16
      %v2996 = vor.u32 %v2994, %v2992
      %v2998 = vshll.u32 %v2933, 16
      %v3000 = vrot.slane %v2998, 1
      %v3001 = vsel %vm1063, %v2996, %v3000
      %v3026 = vunpack.c.l.b16 %v2875
      %v3027 = vunpack.c.l.b16 %v2876
      %v3028 = vunpack.c.l.b16 %v2877
      %v3029 = vunpack.c.l.b16 %v2878
      %v3030 = vunpack.c.l.b16 %v2879
      %v3031 = vunpack.c.l.b16 %v2880
      %v3032 = vunpack.c.l.b16 %v2881
      %v3033 = vunpack.c.l.b16 %v2882
      %v3034 = vunpack.c.l.b16 %v2883
      %v3035 = vunpack.c.l.b16 %v2884
      %v3036 = vunpack.c.l.b16 %v2885
      %v3037 = vunpack.c.l.b16 %v2886
      %v3038 = vunpack.c.l.b16 %v2887
      %v3039 = vunpack.c.l.b16 %v2888
      %v3040 = vunpack.c.l.b16 %v2889
      %v3041 = vunpack.c.l.b16 %v2890
      %v3042 = vpack.c.b16 %v3027, %v3026
      %v3043 = vpack.c.b16 %v3029, %v3028
      %v3044 = vpack.c.b16 %v3031, %v3030
      %v3045 = vpack.c.b16 %v3033, %v3032
      %v3046 = vpack.c.b16 %v3035, %v3034
      %v3047 = vpack.c.b16 %v3037, %v3036
      %v3048 = vpack.c.b16 %v3039, %v3038
      %v3049 = vpack.c.b16 %v3041, %v3040
      %3058 = vmatprep.subr.bf16.mxu0 0
      %3059 = vmatpush1.bf16.msra.mxu0 %v3049
      %3060 = vmatprep.subr.bf16.mxu0 0
      %3061 = vmatpush1.bf16.msra.mxu0 %v3048
      %3062 = vmatprep.subr.bf16.mxu0 0
      %3063 = vmatpush1.bf16.msra.mxu0 %v3047
      %3064 = vmatprep.subr.bf16.mxu0 0
      %3065 = vmatpush1.bf16.msra.mxu0 %v3046
      %3066 = vmatprep.subr.bf16.mxu0 0
      %3067 = vmatpush1.bf16.msra.mxu0 %v3045
      %3068 = vmatprep.subr.bf16.mxu0 0
      %3069 = vmatpush1.bf16.msra.mxu0 %v3044
      %3070 = vmatprep.subr.bf16.mxu0 0
      %3071 = vmatpush1.bf16.msra.mxu0 %v3043
      %3072 = vmatprep.subr.bf16.mxu0 0
      %3073 = vmatpush1.bf16.msra.mxu0 %v3042
      %3074 = vmatprep.subr.bf16.mxu0 0
      %3075 = vmatpush2.bf16.msra.mxu0 0
      %3076 = vmatprep.subr.bf16.mxu0 0
      %3077 = vmatpush2.bf16.msra.mxu0 0
      %3078 = vmatprep.subr.bf16.mxu0 0
      %3079 = vmatpush2.bf16.msra.mxu0 0
      %3080 = vmatprep.subr.bf16.mxu0 0
      %3081 = vmatpush2.bf16.msra.mxu0 0
      %3082 = vmatprep.subr.bf16.mxu0 0
      %3083 = vmatpush2.bf16.msra.mxu0 0
      %3084 = vmatprep.subr.bf16.mxu0 0
      %3085 = vmatpush2.bf16.msra.mxu0 0
      %3086 = vmatprep.subr.bf16.mxu0 0
      %3087 = vmatpush2.bf16.msra.mxu0 0
      %3088 = vmatprep.subr.bf16.mxu0 0
      %3089 = vmatpush2.bf16.msra.mxu0 0
      %3090 = vmatprep.mubr.bf16.mxu0 0
      %3091 = vmatmul.mubr.bf16.gmra.mxu0 %v2945
      %v3092 = vpop.f32.mrf.mxu0
      %v3093 = vadd.f32 0.0, %v3092
      %v3094 = vpop.f32.mrf.mxu0
      %v3095 = vpop.f32.mrf.mxu0
      %v3096 = vadd.f32 0.0, %v3095
      %v3097 = vpop.f32.mrf.mxu0
      %3098 = vmatprep.mubr.bf16.mxu0 0
      %3099 = vmatmul.mubr.bf16.gmra.mxu0 %v2953
      %v3100 = vpop.f32.mrf.mxu0
      %v3101 = vadd.f32 0.0, %v3100
      %v3102 = vpop.f32.mrf.mxu0
      %v3103 = vpop.f32.mrf.mxu0
      %v3104 = vadd.f32 0.0, %v3103
      %v3105 = vpop.f32.mrf.mxu0
      %3106 = vmatprep.mubr.bf16.mxu0 0
      %3107 = vmatmul.mubr.bf16.gmra.mxu0 %v2961
      %v3108 = vpop.f32.mrf.mxu0
      %v3109 = vadd.f32 0.0, %v3108
      %v3110 = vpop.f32.mrf.mxu0
      %v3111 = vpop.f32.mrf.mxu0
      %v3112 = vadd.f32 0.0, %v3111
      %v3113 = vpop.f32.mrf.mxu0
      %3114 = vmatprep.mubr.bf16.mxu0 0
      %3115 = vmatmul.mubr.bf16.gmra.mxu0 %v2969
      %v3116 = vpop.f32.mrf.mxu0
      %v3117 = vadd.f32 0.0, %v3116
      %v3118 = vpop.f32.mrf.mxu0
      %v3119 = vpop.f32.mrf.mxu0
      %v3120 = vadd.f32 0.0, %v3119
      %v3121 = vpop.f32.mrf.mxu0
      %3122 = vmatprep.mubr.bf16.mxu0 0
      %3123 = vmatmul.mubr.bf16.gmra.mxu0 %v2977
      %v3124 = vpop.f32.mrf.mxu0
      %v3125 = vadd.f32 0.0, %v3124
      %v3126 = vpop.f32.mrf.mxu0
      %v3127 = vpop.f32.mrf.mxu0
      %v3128 = vadd.f32 0.0, %v3127
      %v3129 = vpop.f32.mrf.mxu0
      %3130 = vmatprep.mubr.bf16.mxu0 0
      %3131 = vmatmul.mubr.bf16.gmra.mxu0 %v2985
      %v3132 = vpop.f32.mrf.mxu0
      %v3133 = vadd.f32 0.0, %v3132
      %v3134 = vpop.f32.mrf.mxu0
      %v3135 = vpop.f32.mrf.mxu0
      %v3136 = vadd.f32 0.0, %v3135
      %v3137 = vpop.f32.mrf.mxu0
      %3138 = vmatprep.mubr.bf16.mxu0 0
      %3139 = vmatmul.mubr.bf16.gmra.mxu0 %v2993
      %v3140 = vpop.f32.mrf.mxu0
      %v3141 = vadd.f32 0.0, %v3140
      %v3142 = vpop.f32.mrf.mxu0
      %v3143 = vpop.f32.mrf.mxu0
      %v3144 = vadd.f32 0.0, %v3143
      %v3145 = vpop.f32.mrf.mxu0
      %3146 = vmatprep.mubr.bf16.mxu0 0
      %3147 = vmatmul.mubr.bf16.gmra.mxu0 %v3001
      %v3148 = vpop.f32.mrf.mxu0
      %v3149 = vadd.f32 0.0, %v3148
      %v3150 = vpop.f32.mrf.mxu0
      %v3151 = vpop.f32.mrf.mxu0
      %v3152 = vadd.f32 0.0, %v3151
      %v3153 = vpop.f32.mrf.mxu0
      %3154 = vdwg.mxu0
      %v3155 = vadd.f32 %v2841, %v3093
      %v3156 = vadd.f32 %v2842, %v3096
      %v3157 = vadd.f32 %v2843, %v3101
      %v3158 = vadd.f32 %v2844, %v3104
      %v3159 = vadd.f32 %v2845, %v3109
      %v3160 = vadd.f32 %v2846, %v3112
      %v3161 = vadd.f32 %v2847, %v3117
      %v3162 = vadd.f32 %v2848, %v3120
      %v3163 = vadd.f32 %v2849, %v3125
      %v3164 = vadd.f32 %v2850, %v3128
      %v3165 = vadd.f32 %v2851, %v3133
      %v3166 = vadd.f32 %v2852, %v3136
      %v3167 = vadd.f32 %v2853, %v3141
      %v3168 = vadd.f32 %v2854, %v3144
      %v3169 = vadd.f32 %v2855, %v3149
      %v3170 = vadd.f32 %v2856, %v3152
      %v3171 = vld [vmem:[#allocation2 + $0x10] sm:$0xe]
      %v3172 = vsel %vm1495, %v3171, 0
      %v3173 = vsel %vm1496, %v2858, 0
      %v3174 = vsel %vm1497, %v2859, 0
      %v3175 = vsel %vm1496, %v2860, 0
      %v3176 = vsel %vm1497, %v2861, 0
      %v3177 = vsel %vm1496, %v2862, 0
      %v3178 = vsel %vm1497, %v2863, 0
      %v3179 = vsel %vm1496, %v2864, 0
      %v3180 = vsel %vm1497, %v2865, 0
      %v3181 = vsel %vm1496, %v2866, 0
      %v3182 = vsel %vm1497, %v2867, 0
      %v3183 = vsel %vm1496, %v2868, 0
      %v3184 = vsel %vm1497, %v2869, 0
      %v3185 = vsel %vm1496, %v2870, 0
      %v3186 = vsel %vm1497, %v2871, 0
      %v3187 = vsel %vm1496, %v2872, 0
      %v3188 = vsel %vm1498, %v2873, 0
      %s3189 = scalar_lea.vmem %s4, 512
      %v3190 = vld [vmem:[%s3189] sm:$0xf]
      %v3191 = vld [vmem:[%s3189 + $0x4] sm:$0xf]
      %v3192 = vld [vmem:[%s3189 + $0x8] sm:$0xf]
      %v3193 = vld [vmem:[%s3189 + $0xc] sm:$0xf]
      %v3194 = vld [vmem:[%s3189 + $0x10] sm:$0xf]
      %v3195 = vld [vmem:[%s3189 + $0x14] sm:$0xf]
      %v3196 = vld [vmem:[%s3189 + $0x18] sm:$0xf]
      %v3197 = vld [vmem:[%s3189 + $0x1c] sm:$0xf]
      %v3198 = vld [vmem:[%s3189 + $0x20] sm:$0xf]
      %v3199 = vld [vmem:[%s3189 + $0x24] sm:$0xf]
      %v3200 = vld [vmem:[%s3189 + $0x28] sm:$0xf]
      %v3201 = vld [vmem:[%s3189 + $0x2c] sm:$0xf]
      %v3202 = vld [vmem:[%s3189 + $0x30] sm:$0xf]
      %v3203 = vld [vmem:[%s3189 + $0x34] sm:$0xf]
      %v3204 = vld [vmem:[%s3189 + $0x38] sm:$0xf]
      %v3205 = vld [vmem:[%s3189 + $0x3c] sm:$0xf]
      %v3223 = vunpack.c.l.b16 %v3172
      %v3224 = vunpack.c.l.b16 %v3173
      %v3225 = vunpack.c.l.b16 %v3174
      %v3226 = vunpack.c.l.b16 %v3175
      %v3227 = vunpack.c.l.b16 %v3176
      %v3228 = vunpack.c.l.b16 %v3177
      %v3229 = vunpack.c.l.b16 %v3178
      %v3230 = vunpack.c.l.b16 %v3179
      %v3231 = vunpack.c.l.b16 %v3180
      %v3232 = vunpack.c.l.b16 %v3181
      %v3233 = vunpack.c.l.b16 %v3182
      %v3234 = vunpack.c.l.b16 %v3183
      %v3235 = vunpack.c.l.b16 %v3184
      %v3236 = vunpack.c.l.b16 %v3185
      %v3237 = vunpack.c.l.b16 %v3186
      %v3238 = vunpack.c.l.b16 %v3187
      %v3239 = vunpack.c.l.b16 %v3188
      %v3240 = vpack.c.b16 %v3224, %v3223
      %v3241 = vpack.c.b16 %v3226, %v3225
      %v3242 = vpack.c.b16 %v3228, %v3227
      %v3243 = vpack.c.b16 %v3230, %v3229
      %v3244 = vpack.c.b16 %v3232, %v3231
      %v3245 = vpack.c.b16 %v3234, %v3233
      %v3246 = vpack.c.b16 %v3236, %v3235
      %v3247 = vpack.c.b16 %v3238, %v3237
      %v3248 = vpack.c.b16 %v3239, %v3239
      %v3249 = vrot.slane %v3240, 1
      %v3250 = vrot.slane %v3241, 1
      %v3251 = vsel %vm1576, %v3249, %v3250
      %v3252 = vrot.slane %v3242, 1
      %v3253 = vsel %vm1576, %v3250, %v3252
      %v3254 = vrot.slane %v3243, 1
      %v3255 = vsel %vm1576, %v3252, %v3254
      %v3256 = vrot.slane %v3244, 1
      %v3257 = vsel %vm1576, %v3254, %v3256
      %v3258 = vrot.slane %v3245, 1
      %v3259 = vsel %vm1576, %v3256, %v3258
      %v3260 = vrot.slane %v3246, 1
      %v3261 = vsel %vm1576, %v3258, %v3260
      %v3262 = vrot.slane %v3247, 1
      %v3263 = vsel %vm1576, %v3260, %v3262
      %v3264 = vrot.slane %v3248, 1
      %v3265 = vsel %vm1576, %v3262, %v3264
      %v3290 = vunpack.c.l.b16 %v3190
      %v3291 = vunpack.c.l.b16 %v3191
      %v3292 = vunpack.c.l.b16 %v3192
      %v3293 = vunpack.c.l.b16 %v3193
      %v3294 = vunpack.c.l.b16 %v3194
      %v3295 = vunpack.c.l.b16 %v3195
      %v3296 = vunpack.c.l.b16 %v3196
      %v3297 = vunpack.c.l.b16 %v3197
      %v3298 = vunpack.c.l.b16 %v3198
      %v3299 = vunpack.c.l.b16 %v3199
      %v3300 = vunpack.c.l.b16 %v3200
      %v3301 = vunpack.c.l.b16 %v3201
      %v3302 = vunpack.c.l.b16 %v3202
      %v3303 = vunpack.c.l.b16 %v3203
      %v3304 = vunpack.c.l.b16 %v3204
      %v3305 = vunpack.c.l.b16 %v3205
      %v3306 = vpack.c.b16 %v3291, %v3290
      %v3307 = vpack.c.b16 %v3293, %v3292
      %v3308 = vpack.c.b16 %v3295, %v3294
      %v3309 = vpack.c.b16 %v3297, %v3296
      %v3310 = vpack.c.b16 %v3299, %v3298
      %v3311 = vpack.c.b16 %v3301, %v3300
      %v3312 = vpack.c.b16 %v3303, %v3302
      %v3313 = vpack.c.b16 %v3305, %v3304
      %3322 = vmatprep.subr.bf16.mxu0 0
      %3323 = vmatpush1.bf16.msra.mxu0 %v3313
      %3324 = vmatprep.subr.bf16.mxu0 0
      %3325 = vmatpush1.bf16.msra.mxu0 %v3312
      %3326 = vmatprep.subr.bf16.mxu0 0
      %3327 = vmatpush1.bf16.msra.mxu0 %v3311
      %3328 = vmatprep.subr.bf16.mxu0 0
      %3329 = vmatpush1.bf16.msra.mxu0 %v3310
      %3330 = vmatprep.subr.bf16.mxu0 0
      %3331 = vmatpush1.bf16.msra.mxu0 %v3309
      %3332 = vmatprep.subr.bf16.mxu0 0
      %3333 = vmatpush1.bf16.msra.mxu0 %v3308
      %3334 = vmatprep.subr.bf16.mxu0 0
      %3335 = vmatpush1.bf16.msra.mxu0 %v3307
      %3336 = vmatprep.subr.bf16.mxu0 0
      %3337 = vmatpush1.bf16.msra.mxu0 %v3306
      %3338 = vmatprep.subr.bf16.mxu0 0
      %3339 = vmatpush2.bf16.msra.mxu0 0
      %3340 = vmatprep.subr.bf16.mxu0 0
      %3341 = vmatpush2.bf16.msra.mxu0 0
      %3342 = vmatprep.subr.bf16.mxu0 0
      %3343 = vmatpush2.bf16.msra.mxu0 0
      %3344 = vmatprep.subr.bf16.mxu0 0
      %3345 = vmatpush2.bf16.msra.mxu0 0
      %3346 = vmatprep.subr.bf16.mxu0 0
      %3347 = vmatpush2.bf16.msra.mxu0 0
      %3348 = vmatprep.subr.bf16.mxu0 0
      %3349 = vmatpush2.bf16.msra.mxu0 0
      %3350 = vmatprep.subr.bf16.mxu0 0
      %3351 = vmatpush2.bf16.msra.mxu0 0
      %3352 = vmatprep.subr.bf16.mxu0 0
      %3353 = vmatpush2.bf16.msra.mxu0 0
      %3354 = vmatprep.mubr.bf16.mxu0 0
      %3355 = vmatmul.mubr.bf16.gmra.mxu0 %v3251
      %v3356 = vpop.f32.mrf.mxu0
      %v3357 = vadd.f32 0.0, %v3356
      %v3358 = vpop.f32.mrf.mxu0
      %v3359 = vpop.f32.mrf.mxu0
      %v3360 = vadd.f32 0.0, %v3359
      %v3361 = vpop.f32.mrf.mxu0
      %3362 = vmatprep.mubr.bf16.mxu0 0
      %3363 = vmatmul.mubr.bf16.gmra.mxu0 %v3253
      %v3364 = vpop.f32.mrf.mxu0
      %v3365 = vadd.f32 0.0, %v3364
      %v3366 = vpop.f32.mrf.mxu0
      %v3367 = vpop.f32.mrf.mxu0
      %v3368 = vadd.f32 0.0, %v3367
      %v3369 = vpop.f32.mrf.mxu0
      %3370 = vmatprep.mubr.bf16.mxu0 0
      %3371 = vmatmul.mubr.bf16.gmra.mxu0 %v3255
      %v3372 = vpop.f32.mrf.mxu0
      %v3373 = vadd.f32 0.0, %v3372
      %v3374 = vpop.f32.mrf.mxu0
      %v3375 = vpop.f32.mrf.mxu0
      %v3376 = vadd.f32 0.0, %v3375
      %v3377 = vpop.f32.mrf.mxu0
      %3378 = vmatprep.mubr.bf16.mxu0 0
      %3379 = vmatmul.mubr.bf16.gmra.mxu0 %v3257
      %v3380 = vpop.f32.mrf.mxu0
      %v3381 = vadd.f32 0.0, %v3380
      %v3382 = vpop.f32.mrf.mxu0
      %v3383 = vpop.f32.mrf.mxu0
      %v3384 = vadd.f32 0.0, %v3383
      %v3385 = vpop.f32.mrf.mxu0
      %3386 = vmatprep.mubr.bf16.mxu0 0
      %3387 = vmatmul.mubr.bf16.gmra.mxu0 %v3259
      %v3388 = vpop.f32.mrf.mxu0
      %v3389 = vadd.f32 0.0, %v3388
      %v3390 = vpop.f32.mrf.mxu0
      %v3391 = vpop.f32.mrf.mxu0
      %v3392 = vadd.f32 0.0, %v3391
      %v3393 = vpop.f32.mrf.mxu0
      %3394 = vmatprep.mubr.bf16.mxu0 0
      %3395 = vmatmul.mubr.bf16.gmra.mxu0 %v3261
      %v3396 = vpop.f32.mrf.mxu0
      %v3397 = vadd.f32 0.0, %v3396
      %v3398 = vpop.f32.mrf.mxu0
      %v3399 = vpop.f32.mrf.mxu0
      %v3400 = vadd.f32 0.0, %v3399
      %v3401 = vpop.f32.mrf.mxu0
      %3402 = vmatprep.mubr.bf16.mxu0 0
      %3403 = vmatmul.mubr.bf16.gmra.mxu0 %v3263
      %v3404 = vpop.f32.mrf.mxu0
      %v3405 = vadd.f32 0.0, %v3404
      %v3406 = vpop.f32.mrf.mxu0
      %v3407 = vpop.f32.mrf.mxu0
      %v3408 = vadd.f32 0.0, %v3407
      %v3409 = vpop.f32.mrf.mxu0
      %3410 = vmatprep.mubr.bf16.mxu0 0
      %3411 = vmatmul.mubr.bf16.gmra.mxu0 %v3265
      %v3412 = vpop.f32.mrf.mxu0
      %v3413 = vadd.f32 0.0, %v3412
      %v3414 = vpop.f32.mrf.mxu0
      %v3415 = vpop.f32.mrf.mxu0
      %v3416 = vadd.f32 0.0, %v3415
      %v3417 = vpop.f32.mrf.mxu0
      %3418 = vdwg.mxu0
      %v3419 = vadd.f32 %v3155, %v3357
      %v3420 = vadd.f32 %v3156, %v3360
      %v3421 = vadd.f32 %v3157, %v3365
      %v3422 = vadd.f32 %v3158, %v3368
      %v3423 = vadd.f32 %v3159, %v3373
      %v3424 = vadd.f32 %v3160, %v3376
      %v3425 = vadd.f32 %v3161, %v3381
      %v3426 = vadd.f32 %v3162, %v3384
      %v3427 = vadd.f32 %v3163, %v3389
      %v3428 = vadd.f32 %v3164, %v3392
      %v3429 = vadd.f32 %v3165, %v3397
      %v3430 = vadd.f32 %v3166, %v3400
      %v3431 = vadd.f32 %v3167, %v3405
      %v3432 = vadd.f32 %v3168, %v3408
      %v3433 = vadd.f32 %v3169, %v3413
      %v3434 = vadd.f32 %v3170, %v3416
      %v3435 = vld [vmem:[%s5] sm:$0x1]
      %v3437 = vlaneseq
      %v3438 = vshrl.u32 %v3437, 7
      %v3439 = vsub.s32 0, %v3438
      %v3440 = vrot.slane %v3435, %v3439
      %v3442 = vmul.f32 %v3419, %v3440
      %v3443 = vmul.f32 %v3420, %v3440
      %v3444 = vmul.f32 %v3421, %v3440
      %v3445 = vmul.f32 %v3422, %v3440
      %v3446 = vmul.f32 %v3423, %v3440
      %v3447 = vmul.f32 %v3424, %v3440
      %v3448 = vmul.f32 %v3425, %v3440
      %v3449 = vmul.f32 %v3426, %v3440
      %v3450 = vmul.f32 %v3427, %v3440
      %v3451 = vmul.f32 %v3428, %v3440
      %v3452 = vmul.f32 %v3429, %v3440
      %v3453 = vmul.f32 %v3430, %v3440
      %v3454 = vmul.f32 %v3431, %v3440
      %v3455 = vmul.f32 %v3432, %v3440
      %v3456 = vmul.f32 %v3433, %v3440
      %v3457 = vmul.f32 %v3434, %v3440
      %v3458 = vld [vmem:[%s6] sm:$0x1]
      %v3460 = vlaneseq
      %v3461 = vshrl.u32 %v3460, 7
      %v3462 = vsub.s32 0, %v3461
      %v3463 = vrot.slane %v3458, %v3462
      %v3465 = vadd.f32 %v3442, %v3463
      %v3466 = vadd.f32 %v3443, %v3463
      %v3467 = vadd.f32 %v3444, %v3463
      %v3468 = vadd.f32 %v3445, %v3463
      %v3469 = vadd.f32 %v3446, %v3463
      %v3470 = vadd.f32 %v3447, %v3463
      %v3471 = vadd.f32 %v3448, %v3463
      %v3472 = vadd.f32 %v3449, %v3463
      %v3473 = vadd.f32 %v3450, %v3463
      %v3474 = vadd.f32 %v3451, %v3463
      %v3475 = vadd.f32 %v3452, %v3463
      %v3476 = vadd.f32 %v3453, %v3463
      %v3477 = vadd.f32 %v3454, %v3463
      %v3478 = vadd.f32 %v3455, %v3463
      %v3479 = vadd.f32 %v3456, %v3463
      %v3480 = vadd.f32 %v3457, %v3463
      %v3481 = vmax.f32 %v3465, 0.0
      %v3482 = vmax.f32 %v3466, 0.0
      %v3483 = vmax.f32 %v3467, 0.0
      %v3484 = vmax.f32 %v3468, 0.0
      %v3485 = vmax.f32 %v3469, 0.0
      %v3486 = vmax.f32 %v3470, 0.0
      %v3487 = vmax.f32 %v3471, 0.0
      %v3488 = vmax.f32 %v3472, 0.0
      %v3489 = vmax.f32 %v3473, 0.0
      %v3490 = vmax.f32 %v3474, 0.0
      %v3491 = vmax.f32 %v3475, 0.0
      %v3492 = vmax.f32 %v3476, 0.0
      %v3493 = vmax.f32 %v3477, 0.0
      %v3494 = vmax.f32 %v3478, 0.0
      %v3495 = vmax.f32 %v3479, 0.0
      %v3496 = vmax.f32 %v3480, 0.0
      %v3497 = vpack.c.bf16 %v3482, %v3481
      %v3498 = vpack.c.bf16 %v3484, %v3483
      %v3499 = vpack.c.bf16 %v3486, %v3485
      %v3500 = vpack.c.bf16 %v3488, %v3487
      %v3501 = vpack.c.bf16 %v3490, %v3489
      %v3502 = vpack.c.bf16 %v3492, %v3491
      %v3503 = vpack.c.bf16 %v3494, %v3493
      %v3504 = vpack.c.bf16 %v3496, %v3495
      %v3505 = vld [vmem:[%s7] sm:$0xf]
      %v3506 = vld [vmem:[%s7 + $0x4] sm:$0xf]
      %v3507 = vld [vmem:[%s7 + $0x8] sm:$0xf]
      %v3508 = vld [vmem:[%s7 + $0xc] sm:$0xf]
      %v3509 = vld [vmem:[%s7 + $0x10] sm:$0xf]
      %v3510 = vld [vmem:[%s7 + $0x14] sm:$0xf]
      %v3511 = vld [vmem:[%s7 + $0x18] sm:$0xf]
      %v3512 = vld [vmem:[%s7 + $0x1c] sm:$0xf]
      %v3513 = vld [vmem:[%s7 + $0x20] sm:$0xf]
      %v3514 = vld [vmem:[%s7 + $0x24] sm:$0xf]
      %v3515 = vld [vmem:[%s7 + $0x28] sm:$0xf]
      %v3516 = vld [vmem:[%s7 + $0x2c] sm:$0xf]
      %v3517 = vld [vmem:[%s7 + $0x30] sm:$0xf]
      %v3518 = vld [vmem:[%s7 + $0x34] sm:$0xf]
      %v3519 = vld [vmem:[%s7 + $0x38] sm:$0xf]
      %v3520 = vld [vmem:[%s7 + $0x3c] sm:$0xf]
      %v3537 = vunpack.c.l.b16 %v3505
      %v3538 = vunpack.c.l.b16 %v3506
      %v3539 = vunpack.c.l.b16 %v3507
      %v3540 = vunpack.c.l.b16 %v3508
      %v3541 = vunpack.c.l.b16 %v3509
      %v3542 = vunpack.c.l.b16 %v3510
      %v3543 = vunpack.c.l.b16 %v3511
      %v3544 = vunpack.c.l.b16 %v3512
      %v3545 = vunpack.c.l.b16 %v3513
      %v3546 = vunpack.c.l.b16 %v3514
      %v3547 = vunpack.c.l.b16 %v3515
      %v3548 = vunpack.c.l.b16 %v3516
      %v3549 = vunpack.c.l.b16 %v3517
      %v3550 = vunpack.c.l.b16 %v3518
      %v3551 = vunpack.c.l.b16 %v3519
      %v3552 = vunpack.c.l.b16 %v3520
      %v3553 = vpack.c.b16 %v3538, %v3537
      %v3554 = vpack.c.b16 %v3540, %v3539
      %v3555 = vpack.c.b16 %v3542, %v3541
      %v3556 = vpack.c.b16 %v3544, %v3543
      %v3557 = vpack.c.b16 %v3546, %v3545
      %v3558 = vpack.c.b16 %v3548, %v3547
      %v3559 = vpack.c.b16 %v3550, %v3549
      %v3560 = vpack.c.b16 %v3552, %v3551
      %3569 = vmatprep.subr.bf16.mxu0 0
      %3570 = vmatpush1.bf16.msra.mxu0 %v3560
      %3571 = vmatprep.subr.bf16.mxu0 0
      %3572 = vmatpush1.bf16.msra.mxu0 %v3559
      %3573 = vmatprep.subr.bf16.mxu0 0
      %3574 = vmatpush1.bf16.msra.mxu0 %v3558
      %3575 = vmatprep.subr.bf16.mxu0 0
      %3576 = vmatpush1.bf16.msra.mxu0 %v3557
      %3577 = vmatprep.subr.bf16.mxu0 0
      %3578 = vmatpush1.bf16.msra.mxu0 %v3556
      %3579 = vmatprep.subr.bf16.mxu0 0
      %3580 = vmatpush1.bf16.msra.mxu0 %v3555
      %3581 = vmatprep.subr.bf16.mxu0 0
      %3582 = vmatpush1.bf16.msra.mxu0 %v3554
      %3583 = vmatprep.subr.bf16.mxu0 0
      %3584 = vmatpush1.bf16.msra.mxu0 %v3553
      %3585 = vmatprep.subr.bf16.mxu0 0
      %3586 = vmatpush2.bf16.msra.mxu0 0
      %3587 = vmatprep.subr.bf16.mxu0 0
      %3588 = vmatpush2.bf16.msra.mxu0 0
      %3589 = vmatprep.subr.bf16.mxu0 0
      %3590 = vmatpush2.bf16.msra.mxu0 0
      %3591 = vmatprep.subr.bf16.mxu0 0
      %3592 = vmatpush2.bf16.msra.mxu0 0
      %3593 = vmatprep.subr.bf16.mxu0 0
      %3594 = vmatpush2.bf16.msra.mxu0 0
      %3595 = vmatprep.subr.bf16.mxu0 0
      %3596 = vmatpush2.bf16.msra.mxu0 0
      %3597 = vmatprep.subr.bf16.mxu0 0
      %3598 = vmatpush2.bf16.msra.mxu0 0
      %3599 = vmatprep.subr.bf16.mxu0 0
      %3600 = vmatpush2.bf16.msra.mxu0 0
      %3601 = vmatprep.mubr.bf16.mxu0 0
      %3602 = vmatmul.mubr.bf16.gmra.mxu0 %v3497
      %v3603 = vpop.f32.mrf.mxu0
      %v3604 = vadd.f32 0.0, %v3603
      %v3605 = vpop.f32.mrf.mxu0
      %v3606 = vpop.f32.mrf.mxu0
      %v3607 = vadd.f32 0.0, %v3606
      %v3608 = vpop.f32.mrf.mxu0
      %3609 = vmatprep.mubr.bf16.mxu0 0
      %3610 = vmatmul.mubr.bf16.gmra.mxu0 %v3498
      %v3611 = vpop.f32.mrf.mxu0
      %v3612 = vadd.f32 0.0, %v3611
      %v3613 = vpop.f32.mrf.mxu0
      %v3614 = vpop.f32.mrf.mxu0
      %v3615 = vadd.f32 0.0, %v3614
      %v3616 = vpop.f32.mrf.mxu0
      %3617 = vmatprep.mubr.bf16.mxu0 0
      %3618 = vmatmul.mubr.bf16.gmra.mxu0 %v3499
      %v3619 = vpop.f32.mrf.mxu0
      %v3620 = vadd.f32 0.0, %v3619
      %v3621 = vpop.f32.mrf.mxu0
      %v3622 = vpop.f32.mrf.mxu0
      %v3623 = vadd.f32 0.0, %v3622
      %v3624 = vpop.f32.mrf.mxu0
      %3625 = vmatprep.mubr.bf16.mxu0 0
      %3626 = vmatmul.mubr.bf16.gmra.mxu0 %v3500
      %v3627 = vpop.f32.mrf.mxu0
      %v3628 = vadd.f32 0.0, %v3627
      %v3629 = vpop.f32.mrf.mxu0
      %v3630 = vpop.f32.mrf.mxu0
      %v3631 = vadd.f32 0.0, %v3630
      %v3632 = vpop.f32.mrf.mxu0
      %3633 = vmatprep.mubr.bf16.mxu0 0
      %3634 = vmatmul.mubr.bf16.gmra.mxu0 %v3501
      %v3635 = vpop.f32.mrf.mxu0
      %v3636 = vadd.f32 0.0, %v3635
      %v3637 = vpop.f32.mrf.mxu0
      %v3638 = vpop.f32.mrf.mxu0
      %v3639 = vadd.f32 0.0, %v3638
      %v3640 = vpop.f32.mrf.mxu0
      %3641 = vmatprep.mubr.bf16.mxu0 0
      %3642 = vmatmul.mubr.bf16.gmra.mxu0 %v3502
      %v3643 = vpop.f32.mrf.mxu0
      %v3644 = vadd.f32 0.0, %v3643
      %v3645 = vpop.f32.mrf.mxu0
      %v3646 = vpop.f32.mrf.mxu0
      %v3647 = vadd.f32 0.0, %v3646
      %v3648 = vpop.f32.mrf.mxu0
      %3649 = vmatprep.mubr.bf16.mxu0 0
      %3650 = vmatmul.mubr.bf16.gmra.mxu0 %v3503
      %v3651 = vpop.f32.mrf.mxu0
      %v3652 = vadd.f32 0.0, %v3651
      %v3653 = vpop.f32.mrf.mxu0
      %v3654 = vpop.f32.mrf.mxu0
      %v3655 = vadd.f32 0.0, %v3654
      %v3656 = vpop.f32.mrf.mxu0
      %3657 = vmatprep.mubr.bf16.mxu0 0
      %3658 = vmatmul.mubr.bf16.gmra.mxu0 %v3504
      %v3659 = vpop.f32.mrf.mxu0
      %v3660 = vadd.f32 0.0, %v3659
      %v3661 = vpop.f32.mrf.mxu0
      %v3662 = vpop.f32.mrf.mxu0
      %v3663 = vadd.f32 0.0, %v3662
      %v3664 = vpop.f32.mrf.mxu0
      %3665 = vdwg.mxu0
      %v3666 = vld [vmem:[%s8] sm:$0x1]
      %v3668 = vlaneseq
      %v3669 = vshrl.u32 %v3668, 7
      %v3670 = vsub.s32 0, %v3669
      %v3671 = vrot.slane %v3666, %v3670
      %v3673 = vmul.f32 %v3604, %v3671
      %v3674 = vmul.f32 %v3607, %v3671
      %v3675 = vmul.f32 %v3612, %v3671
      %v3676 = vmul.f32 %v3615, %v3671
      %v3677 = vmul.f32 %v3620, %v3671
      %v3678 = vmul.f32 %v3623, %v3671
      %v3679 = vmul.f32 %v3628, %v3671
      %v3680 = vmul.f32 %v3631, %v3671
      %v3681 = vmul.f32 %v3636, %v3671
      %v3682 = vmul.f32 %v3639, %v3671
      %v3683 = vmul.f32 %v3644, %v3671
      %v3684 = vmul.f32 %v3647, %v3671
      %v3685 = vmul.f32 %v3652, %v3671
      %v3686 = vmul.f32 %v3655, %v3671
      %v3687 = vmul.f32 %v3660, %v3671
      %v3688 = vmul.f32 %v3663, %v3671
      %v3689 = vld [vmem:[%s9] sm:$0x1]
      %v3691 = vlaneseq
      %v3692 = vshrl.u32 %v3691, 7
      %v3693 = vsub.s32 0, %v3692
      %v3694 = vrot.slane %v3689, %v3693
      %v3696 = vadd.f32 %v3673, %v3694
      %v3697 = vadd.f32 %v3674, %v3694
      %v3698 = vadd.f32 %v3675, %v3694
      %v3699 = vadd.f32 %v3676, %v3694
      %v3700 = vadd.f32 %v3677, %v3694
      %v3701 = vadd.f32 %v3678, %v3694
      %v3702 = vadd.f32 %v3679, %v3694
      %v3703 = vadd.f32 %v3680, %v3694
      %v3704 = vadd.f32 %v3681, %v3694
      %v3705 = vadd.f32 %v3682, %v3694
      %v3706 = vadd.f32 %v3683, %v3694
      %v3707 = vadd.f32 %v3684, %v3694
      %v3708 = vadd.f32 %v3685, %v3694
      %v3709 = vadd.f32 %v3686, %v3694
      %v3710 = vadd.f32 %v3687, %v3694
      %v3711 = vadd.f32 %v3688, %v3694
      %v3712 = vld [vmem:[%s631] sm:$0xf]
      %v3713 = vld [vmem:[%s631 + $0x4] sm:$0xf]
      %v3714 = vld [vmem:[%s631 + $0x8] sm:$0xf]
      %v3715 = vld [vmem:[%s631 + $0xc] sm:$0xf]
      %v3716 = vld [vmem:[%s631 + $0x10] sm:$0xf]
      %v3717 = vld [vmem:[%s631 + $0x14] sm:$0xf]
      %v3718 = vld [vmem:[%s631 + $0x18] sm:$0xf]
      %v3719 = vld [vmem:[%s631 + $0x1c] sm:$0xf]
      %v3720 = vld [vmem:[%s631 + $0x20] sm:$0xf]
      %v3721 = vld [vmem:[%s631 + $0x24] sm:$0xf]
      %v3722 = vld [vmem:[%s631 + $0x28] sm:$0xf]
      %v3723 = vld [vmem:[%s631 + $0x2c] sm:$0xf]
      %v3724 = vld [vmem:[%s631 + $0x30] sm:$0xf]
      %v3725 = vld [vmem:[%s631 + $0x34] sm:$0xf]
      %v3726 = vld [vmem:[%s631 + $0x38] sm:$0xf]
      %v3727 = vld [vmem:[%s631 + $0x3c] sm:$0xf]
      %v3728 = vld [vmem:[%s10] sm:$0xf]
      %v3729 = vld [vmem:[%s10 + $0x4] sm:$0xf]
      %v3730 = vld [vmem:[%s10 + $0x8] sm:$0xf]
      %v3731 = vld [vmem:[%s10 + $0xc] sm:$0xf]
      %v3732 = vld [vmem:[%s10 + $0x10] sm:$0xf]
      %v3733 = vld [vmem:[%s10 + $0x14] sm:$0xf]
      %v3734 = vld [vmem:[%s10 + $0x18] sm:$0xf]
      %v3735 = vld [vmem:[%s10 + $0x1c] sm:$0xf]
      %v3736 = vld [vmem:[%s10 + $0x20] sm:$0xf]
      %v3737 = vld [vmem:[%s10 + $0x24] sm:$0xf]
      %v3738 = vld [vmem:[%s10 + $0x28] sm:$0xf]
      %v3739 = vld [vmem:[%s10 + $0x2c] sm:$0xf]
      %v3740 = vld [vmem:[%s10 + $0x30] sm:$0xf]
      %v3741 = vld [vmem:[%s10 + $0x34] sm:$0xf]
      %v3742 = vld [vmem:[%s10 + $0x38] sm:$0xf]
      %v3743 = vld [vmem:[%s10 + $0x3c] sm:$0xf]
      %v3760 = vunpack.c.l.b16 %v3712
      %v3761 = vunpack.c.l.b16 %v3713
      %v3762 = vunpack.c.l.b16 %v3714
      %v3763 = vunpack.c.l.b16 %v3715
      %v3764 = vunpack.c.l.b16 %v3716
      %v3765 = vunpack.c.l.b16 %v3717
      %v3766 = vunpack.c.l.b16 %v3718
      %v3767 = vunpack.c.l.b16 %v3719
      %v3768 = vunpack.c.l.b16 %v3720
      %v3769 = vunpack.c.l.b16 %v3721
      %v3770 = vunpack.c.l.b16 %v3722
      %v3771 = vunpack.c.l.b16 %v3723
      %v3772 = vunpack.c.l.b16 %v3724
      %v3773 = vunpack.c.l.b16 %v3725
      %v3774 = vunpack.c.l.b16 %v3726
      %v3775 = vunpack.c.l.b16 %v3727
      %v3776 = vpack.c.b16 %v3761, %v3760
      %v3777 = vpack.c.b16 %v3763, %v3762
      %v3778 = vpack.c.b16 %v3765, %v3764
      %v3779 = vpack.c.b16 %v3767, %v3766
      %v3780 = vpack.c.b16 %v3769, %v3768
      %v3781 = vpack.c.b16 %v3771, %v3770
      %v3782 = vpack.c.b16 %v3773, %v3772
      %v3783 = vpack.c.b16 %v3775, %v3774
      %v3808 = vunpack.c.l.b16 %v3728
      %v3809 = vunpack.c.l.b16 %v3729
      %v3810 = vunpack.c.l.b16 %v3730
      %v3811 = vunpack.c.l.b16 %v3731
      %v3812 = vunpack.c.l.b16 %v3732
      %v3813 = vunpack.c.l.b16 %v3733
      %v3814 = vunpack.c.l.b16 %v3734
      %v3815 = vunpack.c.l.b16 %v3735
      %v3816 = vunpack.c.l.b16 %v3736
      %v3817 = vunpack.c.l.b16 %v3737
      %v3818 = vunpack.c.l.b16 %v3738
      %v3819 = vunpack.c.l.b16 %v3739
      %v3820 = vunpack.c.l.b16 %v3740
      %v3821 = vunpack.c.l.b16 %v3741
      %v3822 = vunpack.c.l.b16 %v3742
      %v3823 = vunpack.c.l.b16 %v3743
      %v3824 = vpack.c.b16 %v3809, %v3808
      %v3825 = vpack.c.b16 %v3811, %v3810
      %v3826 = vpack.c.b16 %v3813, %v3812
      %v3827 = vpack.c.b16 %v3815, %v3814
      %v3828 = vpack.c.b16 %v3817, %v3816
      %v3829 = vpack.c.b16 %v3819, %v3818
      %v3830 = vpack.c.b16 %v3821, %v3820
      %v3831 = vpack.c.b16 %v3823, %v3822
      %3840 = vmatprep.subr.bf16.mxu0 0
      %3841 = vmatpush1.bf16.msra.mxu0 %v3831
      %3842 = vmatprep.subr.bf16.mxu0 0
      %3843 = vmatpush1.bf16.msra.mxu0 %v3830
      %3844 = vmatprep.subr.bf16.mxu0 0
      %3845 = vmatpush1.bf16.msra.mxu0 %v3829
      %3846 = vmatprep.subr.bf16.mxu0 0
      %3847 = vmatpush1.bf16.msra.mxu0 %v3828
      %3848 = vmatprep.subr.bf16.mxu0 0
      %3849 = vmatpush1.bf16.msra.mxu0 %v3827
      %3850 = vmatprep.subr.bf16.mxu0 0
      %3851 = vmatpush1.bf16.msra.mxu0 %v3826
      %3852 = vmatprep.subr.bf16.mxu0 0
      %3853 = vmatpush1.bf16.msra.mxu0 %v3825
      %3854 = vmatprep.subr.bf16.mxu0 0
      %3855 = vmatpush1.bf16.msra.mxu0 %v3824
      %3856 = vmatprep.subr.bf16.mxu0 0
      %3857 = vmatpush2.bf16.msra.mxu0 0
      %3858 = vmatprep.subr.bf16.mxu0 0
      %3859 = vmatpush2.bf16.msra.mxu0 0
      %3860 = vmatprep.subr.bf16.mxu0 0
      %3861 = vmatpush2.bf16.msra.mxu0 0
      %3862 = vmatprep.subr.bf16.mxu0 0
      %3863 = vmatpush2.bf16.msra.mxu0 0
      %3864 = vmatprep.subr.bf16.mxu0 0
      %3865 = vmatpush2.bf16.msra.mxu0 0
      %3866 = vmatprep.subr.bf16.mxu0 0
      %3867 = vmatpush2.bf16.msra.mxu0 0
      %3868 = vmatprep.subr.bf16.mxu0 0
      %3869 = vmatpush2.bf16.msra.mxu0 0
      %3870 = vmatprep.subr.bf16.mxu0 0
      %3871 = vmatpush2.bf16.msra.mxu0 0
      %3872 = vmatprep.mubr.bf16.mxu0 0
      %3873 = vmatmul.mubr.bf16.gmra.mxu0 %v3776
      %v3874 = vpop.f32.mrf.mxu0
      %v3875 = vadd.f32 0.0, %v3874
      %v3876 = vpop.f32.mrf.mxu0
      %v3877 = vpop.f32.mrf.mxu0
      %v3878 = vadd.f32 0.0, %v3877
      %v3879 = vpop.f32.mrf.mxu0
      %3880 = vmatprep.mubr.bf16.mxu0 0
      %3881 = vmatmul.mubr.bf16.gmra.mxu0 %v3777
      %v3882 = vpop.f32.mrf.mxu0
      %v3883 = vadd.f32 0.0, %v3882
      %v3884 = vpop.f32.mrf.mxu0
      %v3885 = vpop.f32.mrf.mxu0
      %v3886 = vadd.f32 0.0, %v3885
      %v3887 = vpop.f32.mrf.mxu0
      %3888 = vmatprep.mubr.bf16.mxu0 0
      %3889 = vmatmul.mubr.bf16.gmra.mxu0 %v3778
      %v3890 = vpop.f32.mrf.mxu0
      %v3891 = vadd.f32 0.0, %v3890
      %v3892 = vpop.f32.mrf.mxu0
      %v3893 = vpop.f32.mrf.mxu0
      %v3894 = vadd.f32 0.0, %v3893
      %v3895 = vpop.f32.mrf.mxu0
      %3896 = vmatprep.mubr.bf16.mxu0 0
      %3897 = vmatmul.mubr.bf16.gmra.mxu0 %v3779
      %v3898 = vpop.f32.mrf.mxu0
      %v3899 = vadd.f32 0.0, %v3898
      %v3900 = vpop.f32.mrf.mxu0
      %v3901 = vpop.f32.mrf.mxu0
      %v3902 = vadd.f32 0.0, %v3901
      %v3903 = vpop.f32.mrf.mxu0
      %3904 = vmatprep.mubr.bf16.mxu0 0
      %3905 = vmatmul.mubr.bf16.gmra.mxu0 %v3780
      %v3906 = vpop.f32.mrf.mxu0
      %v3907 = vadd.f32 0.0, %v3906
      %v3908 = vpop.f32.mrf.mxu0
      %v3909 = vpop.f32.mrf.mxu0
      %v3910 = vadd.f32 0.0, %v3909
      %v3911 = vpop.f32.mrf.mxu0
      %3912 = vmatprep.mubr.bf16.mxu0 0
      %3913 = vmatmul.mubr.bf16.gmra.mxu0 %v3781
      %v3914 = vpop.f32.mrf.mxu0
      %v3915 = vadd.f32 0.0, %v3914
      %v3916 = vpop.f32.mrf.mxu0
      %v3917 = vpop.f32.mrf.mxu0
      %v3918 = vadd.f32 0.0, %v3917
      %v3919 = vpop.f32.mrf.mxu0
      %3920 = vmatprep.mubr.bf16.mxu0 0
      %3921 = vmatmul.mubr.bf16.gmra.mxu0 %v3782
      %v3922 = vpop.f32.mrf.mxu0
      %v3923 = vadd.f32 0.0, %v3922
      %v3924 = vpop.f32.mrf.mxu0
      %v3925 = vpop.f32.mrf.mxu0
      %v3926 = vadd.f32 0.0, %v3925
      %v3927 = vpop.f32.mrf.mxu0
      %3928 = vmatprep.mubr.bf16.mxu0 0
      %3929 = vmatmul.mubr.bf16.gmra.mxu0 %v3783
      %v3930 = vpop.f32.mrf.mxu0
      %v3931 = vadd.f32 0.0, %v3930
      %v3932 = vpop.f32.mrf.mxu0
      %v3933 = vpop.f32.mrf.mxu0
      %v3934 = vadd.f32 0.0, %v3933
      %v3935 = vpop.f32.mrf.mxu0
      %3936 = vdwg.mxu0
      %v3937 = vld [vmem:[%s11] sm:$0x1]
      %v3939 = vlaneseq
      %v3940 = vshrl.u32 %v3939, 7
      %v3941 = vsub.s32 0, %v3940
      %v3942 = vrot.slane %v3937, %v3941
      %v3944 = vmul.f32 %v3875, %v3942
      %v3945 = vmul.f32 %v3878, %v3942
      %v3946 = vmul.f32 %v3883, %v3942
      %v3947 = vmul.f32 %v3886, %v3942
      %v3948 = vmul.f32 %v3891, %v3942
      %v3949 = vmul.f32 %v3894, %v3942
      %v3950 = vmul.f32 %v3899, %v3942
      %v3951 = vmul.f32 %v3902, %v3942
      %v3952 = vmul.f32 %v3907, %v3942
      %v3953 = vmul.f32 %v3910, %v3942
      %v3954 = vmul.f32 %v3915, %v3942
      %v3955 = vmul.f32 %v3918, %v3942
      %v3956 = vmul.f32 %v3923, %v3942
      %v3957 = vmul.f32 %v3926, %v3942
      %v3958 = vmul.f32 %v3931, %v3942
      %v3959 = vmul.f32 %v3934, %v3942
      %v3960 = vadd.f32 %v3696, %v3944
      %v3961 = vadd.f32 %v3697, %v3945
      %v3962 = vadd.f32 %v3698, %v3946
      %v3963 = vadd.f32 %v3699, %v3947
      %v3964 = vadd.f32 %v3700, %v3948
      %v3965 = vadd.f32 %v3701, %v3949
      %v3966 = vadd.f32 %v3702, %v3950
      %v3967 = vadd.f32 %v3703, %v3951
      %v3968 = vadd.f32 %v3704, %v3952
      %v3969 = vadd.f32 %v3705, %v3953
      %v3970 = vadd.f32 %v3706, %v3954
      %v3971 = vadd.f32 %v3707, %v3955
      %v3972 = vadd.f32 %v3708, %v3956
      %v3973 = vadd.f32 %v3709, %v3957
      %v3974 = vadd.f32 %v3710, %v3958
      %v3975 = vadd.f32 %v3711, %v3959
      %v3976 = vld [vmem:[%s12] sm:$0x1]
      %v3978 = vlaneseq
      %v3979 = vshrl.u32 %v3978, 7
      %v3980 = vsub.s32 0, %v3979
      %v3981 = vrot.slane %v3976, %v3980
      %v3983 = vadd.f32 %v3960, %v3981
      %v3984 = vadd.f32 %v3961, %v3981
      %v3985 = vadd.f32 %v3962, %v3981
      %v3986 = vadd.f32 %v3963, %v3981
      %v3987 = vadd.f32 %v3964, %v3981
      %v3988 = vadd.f32 %v3965, %v3981
      %v3989 = vadd.f32 %v3966, %v3981
      %v3990 = vadd.f32 %v3967, %v3981
      %v3991 = vadd.f32 %v3968, %v3981
      %v3992 = vadd.f32 %v3969, %v3981
      %v3993 = vadd.f32 %v3970, %v3981
      %v3994 = vadd.f32 %v3971, %v3981
      %v3995 = vadd.f32 %v3972, %v3981
      %v3996 = vadd.f32 %v3973, %v3981
      %v3997 = vadd.f32 %v3974, %v3981
      %v3998 = vadd.f32 %v3975, %v3981
      %v3999 = vmax.f32 %v3983, 0.0
      %v4000 = vmax.f32 %v3984, 0.0
      %v4001 = vmax.f32 %v3985, 0.0
      %v4002 = vmax.f32 %v3986, 0.0
      %v4003 = vmax.f32 %v3987, 0.0
      %v4004 = vmax.f32 %v3988, 0.0
      %v4005 = vmax.f32 %v3989, 0.0
      %v4006 = vmax.f32 %v3990, 0.0
      %v4007 = vmax.f32 %v3991, 0.0
      %v4008 = vmax.f32 %v3992, 0.0
      %v4009 = vmax.f32 %v3993, 0.0
      %v4010 = vmax.f32 %v3994, 0.0
      %v4011 = vmax.f32 %v3995, 0.0
      %v4012 = vmax.f32 %v3996, 0.0
      %v4013 = vmax.f32 %v3997, 0.0
      %v4014 = vmax.f32 %v3998, 0.0
      %v4015 = vpack.c.bf16 %v4000, %v3999
      %v4016 = vpack.c.bf16 %v4002, %v4001
      %v4017 = vpack.c.bf16 %v4004, %v4003
      %v4018 = vpack.c.bf16 %v4006, %v4005
      %v4019 = vpack.c.bf16 %v4008, %v4007
      %v4020 = vpack.c.bf16 %v4010, %v4009
      %v4021 = vpack.c.bf16 %v4012, %v4011
      %v4022 = vpack.c.bf16 %v4014, %v4013
      %v4031 = vunpack.c.l.b16 %v4015
      %v4032 = vunpack.c.h.b16 %v4015
      %v4033 = vunpack.c.l.b16 %v4016
      %v4034 = vunpack.c.h.b16 %v4016
      %v4035 = vunpack.c.l.b16 %v4017
      %v4036 = vunpack.c.h.b16 %v4017
      %v4037 = vunpack.c.l.b16 %v4018
      %v4038 = vunpack.c.h.b16 %v4018
      %v4039 = vunpack.c.l.b16 %v4019
      %v4040 = vunpack.c.h.b16 %v4019
      %v4041 = vunpack.c.l.b16 %v4020
      %v4042 = vunpack.c.h.b16 %v4020
      %v4043 = vunpack.c.l.b16 %v4021
      %v4044 = vunpack.c.h.b16 %v4021
      %v4045 = vunpack.c.l.b16 %v4022
      %v4046 = vunpack.c.h.b16 %v4022
      %v4047 = vpack.c.b16 %v4031, %v4031
      %v4048 = vpack.c.b16 %v4032, %v4032
      %v4049 = vpack.c.b16 %v4033, %v4033
      %v4050 = vpack.c.b16 %v4034, %v4034
      %v4051 = vpack.c.b16 %v4035, %v4035
      %v4052 = vpack.c.b16 %v4036, %v4036
      %v4053 = vpack.c.b16 %v4037, %v4037
      %v4054 = vpack.c.b16 %v4038, %v4038
      %v4055 = vpack.c.b16 %v4039, %v4039
      %v4056 = vpack.c.b16 %v4040, %v4040
      %v4057 = vpack.c.b16 %v4041, %v4041
      %v4058 = vpack.c.b16 %v4042, %v4042
      %v4059 = vpack.c.b16 %v4043, %v4043
      %v4060 = vpack.c.b16 %v4044, %v4044
      %v4061 = vpack.c.b16 %v4045, %v4045
      %v4062 = vpack.c.b16 %v4046, %v4046
      %4079 = vst [vmem:[%s642] sm:$0xf] %v4047
      %4080 = vst [vmem:[%s642 + $0x4] sm:$0xf] %v4048
      %4081 = vst [vmem:[%s642 + $0x8] sm:$0xf] %v4049
      %4082 = vst [vmem:[%s642 + $0xc] sm:$0xf] %v4050
      %4083 = vst [vmem:[%s642 + $0x10] sm:$0xf] %v4051
      %4084 = vst [vmem:[%s642 + $0x14] sm:$0xf] %v4052
      %4085 = vst [vmem:[%s642 + $0x18] sm:$0xf] %v4053
      %4086 = vst [vmem:[%s642 + $0x1c] sm:$0xf] %v4054
      %4087 = vst [vmem:[%s642 + $0x20] sm:$0xf] %v4055
      %4088 = vst [vmem:[%s642 + $0x24] sm:$0xf] %v4056
      %4089 = vst [vmem:[%s642 + $0x28] sm:$0xf] %v4057
      %4090 = vst [vmem:[%s642 + $0x2c] sm:$0xf] %v4058
      %4091 = vst [vmem:[%s642 + $0x30] sm:$0xf] %v4059
      %4092 = vst [vmem:[%s642 + $0x34] sm:$0xf] %v4060
      %4093 = vst [vmem:[%s642 + $0x38] sm:$0xf] %v4061
      %4094 = vst [vmem:[%s642 + $0x3c] sm:$0xf] %v4062
      %s4095 = smul.u32 8, %s29
      %p4096 = scmp.lt.s32.totalorder %s28, 1
      %s4097 = scalar_select %p4096, %s28, 1
      %p4098 = scmp.lt.s32.totalorder %s4095, 15
      %s4099 = scalar_select %p4098, %s4095, 15
      %s4100 = smul.addr %s4099, 2
      %s4101 = smul.addr %s4097, 32
      %s4102 = sadd.s32 %s4100, %s4101
      %s4103 = smul.addr %s4102, 4
      %s4104 = scalar_lea.vmem %s13, %s4103
      // Predicated region
      $region89: #{two_block_forward.5} parent=71 // pred_check
        %p4105 = pneg %p369
      $region90: #{two_block_forward.5} parent=71 // pred_check_branch
        %4107 = sbr.rel (%p4105) target = $region92
      $region91: #{two_block_forward.5} parent=71 // pred_region
        %s4108 = smul.u32 8, %s29
      $region92: #{two_block_forward.5} parent=71 // pred_fallthru
        _
    $region72: #{two_block_forward.5} parent=5 // pred_fallthru
      _
    %p4109 = scmp.le.s32.totalorder 2, %s19
    // Predicated region
    $region93: #{two_block_forward.5} parent=5 // pred_check
      %p4110 = pneg %p4109
    $region94: #{two_block_forward.5} parent=5 // pred_check_branch
      %4112 = sbr.rel (%p4110) target = $region96
    $region95: #{two_block_forward.5} parent=5 // pred_region
      %s4113 = ssub.s32 %s19, 2
      // Predicated region
      $region97: #{two_block_forward.5} parent=95 // pred_check
        %p4114 = pneg %p375
      $region98: #{two_block_forward.5} parent=95 // pred_check_branch
        %4116 = sbr.rel (%p4114) target = $region100
      $region99: #{two_block_forward.5} parent=95 // pred_region
        %s4117 = smul.u32 8, %s31
        %p4118 = scmp.lt.s32.totalorder %s30, 1
        %s4119 = scalar_select %p4118, %s30, 1
        %p4120 = scmp.lt.s32.totalorder %s4117, 15
        %s4121 = scalar_select %p4120, %s4117, 15
        %s4122 = smul.addr %s4121, 2
        %s4123 = smul.addr %s4119, 32
        %s4124 = sadd.s32 %s4122, %s4123
        %s4125 = smul.addr %s4124, 4
        %s4126 = scalar_lea.vmem %s13, %s4125
      $region100: #{two_block_forward.5} parent=95 // pred_fallthru
        _
    $region96: #{two_block_forward.5} parent=5 // pred_fallthru
      _
  $region6: #{two_block_forward.5} parent=0 // loop_footer
    %s23 = sadd.s32 1, %s19
  $region7: #{two_block_forward.5} parent=0 // loop_footer_branch
    %18 = sbr.rel target = $region3
  $region8: #{two_block_forward.5} parent=0 // loop_exit
    _

// kernel: two_block_forward.7
$region0: #{two_block_forward.7}
  #allocation0 [shape = 'u32[]', space=smem, size = 0x4, offset = 0x4, fixed_abs, tag = 'smem constant byte address 0x4 - core index']
  #allocation1 [shape = 'u32[144,128]{1,0:T(1,128)}', space=vmem, size = 0x12000, scoped, tag = 'internal scratch']
  #allocation2 [shape = 'bf16[168,128]{1,0:T(8,128)(2,1)}', space=vmem, size = 0xa800, scoped, tag = 'scratch operand']
  %s0 = inlined_call_operand.vmem [shape: bf16[2,16,16,128], index: 0, kind: input, shape index: {}, may-alias: {0,1,2}]
  %s1 = inlined_call_operand.vmem [shape: bf16[2,16,16,128], index: 1, kind: input, shape index: {}, may-alias: {0,1,2}]
  %s2 = inlined_call_operand.vmem [shape: bf16[2,16,16,128], index: 2, kind: input, shape index: {}, may-alias: {0,1,2}]
  %s3 = inlined_call_operand.vmem [shape: bf16[2,16,16,128], index: 3, kind: input, shape index: {}]
  %s4 = inlined_call_operand.vmem [shape: bf16[3,3,128,128], index: 4, kind: input, shape index: {}]
  %s5 = inlined_call_operand.vmem [shape: f32[1,128], index: 5, kind: input, shape index: {}]
  %s6 = inlined_call_operand.vmem [shape: f32[1,128], index: 6, kind: input, shape index: {}]
  %s7 = inlined_call_operand.vmem [shape: bf16[128,128], index: 7, kind: input, shape index: {}]
  %s8 = inlined_call_operand.vmem [shape: f32[1,128], index: 8, kind: input, shape index: {}]
  %s9 = inlined_call_operand.vmem [shape: f32[1,128], index: 9, kind: input, shape index: {}]
  %s10 = inlined_call_operand.vmem [shape: bf16[2,16,16,128], index: 10, kind: output, shape index: {}]
  %s11 = sld [smem:[#allocation0]]
  $region89: #{two_block_forward.7} parent=0
    _
  %s13 = ssub.s32 1, %s11
  %s14 = scalar_select 0, %s13, %s11
  loop: start=0, step=1, limit=6
  $region2: #{two_block_forward.7} parent=0 // loop_pre_header
    _
  $region3: #{two_block_forward.7} parent=0 // loop_header
    %s16 = sphi 0, %s20
    %p17 = scmp.ge.s32.totalorder %s16, 6
    %s23 = sphi 0, %s35
    %s24 = sphi 0, %s31
    %s25 = sphi 0, %s23
    %s26 = sphi 0, %s24
    %s27 = sphi 0, %s25
    %s28 = sphi 0, %s26
    %s40 = sphi 0, %s42
    %s43 = sphi 0, %s40
    %s44 = sphi 0, %s43
    %s60 = sphi 0, %s44
    %s74 = sphi 0, %s76
    %s77 = sphi 0, %s74
    %s78 = sphi 0, %s77
    %s94 = sphi 0, %s78
    %s108 = sphi 0, %s110
    %s111 = sphi 0, %s108
    %s112 = sphi 0, %s111
    %s128 = sphi 0, %s112
    %s136 = sphi 0, %s138
    %s139 = sphi 0, %s136
    %s140 = sphi 0, %s139
    %s156 = sphi 0, %s140
    %s160 = sphi 0, %s160
    %s162 = sphi 0, %s160
    %s163 = sphi 0, %s162
    %s177 = sphi 0, %s163
    %s181 = sphi 0, %s181
    %s183 = sphi 0, %s181
    %s184 = sphi 0, %s183
    %s198 = sphi 0, %s184
    %s202 = sphi 0, %s202
    %s204 = sphi 0, %s202
    %s205 = sphi 0, %s204
    %s219 = sphi 0, %s205
    %s223 = sphi 0, %s223
    %s225 = sphi 0, %s223
    %s226 = sphi 0, %s225
    %s240 = sphi 0, %s226
    %s244 = sphi 0, %s244
    %s246 = sphi 0, %s244
    %s247 = sphi 0, %s246
    %s261 = sphi 0, %s247
    %s265 = sphi 0, %s265
    %s267 = sphi 0, %s265
    %s268 = sphi 0, %s267
    %s282 = sphi 0, %s268
    %s290 = sphi 0, %s292
    %s293 = sphi 0, %s290
    %s294 = sphi 0, %s293
    %s310 = sphi 0, %s294
  $region4: #{two_block_forward.7} parent=0 // loop_header_branch
    %19 = sbr.rel (%p17) target = $region8
  $region5: #{two_block_forward.7} parent=0 // loop_body
    %s21 = ssub.s32 %s16, 1
    %s22 = ssub.s32 %s16, 2
    %s29 = sadd.s32 1, %s24
    %p30 = scmp.ge.s32.totalorder %s29, 2
    %s31 = scalar_select %p30, 0, %s29
    %s32 = sadd.s32 1, %s23
    %s33 = scalar_select %p30, %s32, %s23
    %p34 = scmp.ge.s32.totalorder %s33, 2
    %s35 = scalar_select %p34, 0, %s33
    %s36 = ssub.s32 %s23, %s35
    %s37 = ssub.s32 %s24, %s31
    %s38 = sor.u32 %s36, %s37
    %p39 = scmp.eq.s32.totalorder %s38, 0
    %s41 = sadd.s32 %s40, 1
    %s42 = scalar_select %p39, %s40, %s41
    %p45 = pneg %p39
    %p46 = scmp.eq.s32.totalorder %s16, 3
    %p47 = por %p45, %p46
    %p48 = scmp.ne.s32.totalorder %s40, %s43
    %p49 = scmp.eq.s32.totalorder %s16, 0
    %p50 = por %p48, %p49
    %p51 = scmp.ne.s32.totalorder %s40, %s43
    %p52 = scmp.eq.s32.totalorder %s21, 3
    %p53 = por %p51, %p52
    %p54 = scmp.ne.s32.totalorder %s43, %s44
    %p55 = scmp.eq.s32.totalorder %s21, 0
    %p56 = por %p54, %p55
    %p57 = scmp.ne.s32.totalorder %s43, %s44
    %p58 = scmp.eq.s32.totalorder %s22, 3
    %p59 = por %p57, %p58
    %p61 = scmp.ne.s32.totalorder %s44, %s60
    %p62 = scmp.eq.s32.totalorder %s22, 0
    %p63 = por %p61, %p62
    %s64 = ssub.s32 %s24, 1
    %p65 = scmp.gt.s32.totalorder %s64, 0
    %s66 = scalar_select %p65, %s64, 0
    %s67 = ssub.s32 %s31, 1
    %p68 = scmp.gt.s32.totalorder %s67, 0
    %s69 = scalar_select %p68, %s67, 0
    %s70 = ssub.s32 %s23, %s35
    %s71 = ssub.s32 %s66, %s69
    %s72 = sor.u32 %s70, %s71
    %p73 = scmp.eq.s32.totalorder %s72, 0
    %s75 = sadd.s32 %s74, 1
    %s76 = scalar_select %p73, %s74, %s75
    %p79 = pneg %p73
    %p80 = scmp.eq.s32.totalorder %s16, 3
    %p81 = por %p79, %p80
    %p82 = scmp.ne.s32.totalorder %s74, %s77
    %p83 = scmp.eq.s32.totalorder %s16, 0
    %p84 = por %p82, %p83
    %p85 = scmp.ne.s32.totalorder %s74, %s77
    %p86 = scmp.eq.s32.totalorder %s21, 3
    %p87 = por %p85, %p86
    %p88 = scmp.ne.s32.totalorder %s77, %s78
    %p89 = scmp.eq.s32.totalorder %s21, 0
    %p90 = por %p88, %p89
    %p91 = scmp.ne.s32.totalorder %s77, %s78
    %p92 = scmp.eq.s32.totalorder %s22, 3
    %p93 = por %p91, %p92
    %p95 = scmp.ne.s32.totalorder %s78, %s94
    %p96 = scmp.eq.s32.totalorder %s22, 0
    %p97 = por %p95, %p96
    %s98 = sadd.s32 %s24, 1
    %p99 = scmp.lt.s32.totalorder %s98, 1
    %s100 = scalar_select %p99, %s98, 1
    %s101 = sadd.s32 %s31, 1
    %p102 = scmp.lt.s32.totalorder %s101, 1
    %s103 = scalar_select %p102, %s101, 1
    %s104 = ssub.s32 %s23, %s35
    %s105 = ssub.s32 %s100, %s103
    %s106 = sor.u32 %s104, %s105
    %p107 = scmp.eq.s32.totalorder %s106, 0
    %s109 = sadd.s32 %s108, 1
    %s110 = scalar_select %p107, %s108, %s109
    %p113 = pneg %p107
    %p114 = scmp.eq.s32.totalorder %s16, 3
    %p115 = por %p113, %p114
    %p116 = scmp.ne.s32.totalorder %s108, %s111
    %p117 = scmp.eq.s32.totalorder %s16, 0
    %p118 = por %p116, %p117
    %p119 = scmp.ne.s32.totalorder %s108, %s111
    %p120 = scmp.eq.s32.totalorder %s21, 3
    %p121 = por %p119, %p120
    %p122 = scmp.ne.s32.totalorder %s111, %s112
    %p123 = scmp.eq.s32.totalorder %s21, 0
    %p124 = por %p122, %p123
    %p125 = scmp.ne.s32.totalorder %s111, %s112
    %p126 = scmp.eq.s32.totalorder %s22, 3
    %p127 = por %p125, %p126
    %p129 = scmp.ne.s32.totalorder %s112, %s128
    %p130 = scmp.eq.s32.totalorder %s22, 0
    %p131 = por %p129, %p130
    %s132 = ssub.s32 %s23, %s35
    %s133 = ssub.s32 %s24, %s31
    %s134 = sor.u32 %s132, %s133
    %p135 = scmp.eq.s32.totalorder %s134, 0
    %s137 = sadd.s32 %s136, 1
    %s138 = scalar_select %p135, %s136, %s137
    %p141 = pneg %p135
    %p142 = scmp.eq.s32.totalorder %s16, 3
    %p143 = por %p141, %p142
    %p144 = scmp.ne.s32.totalorder %s136, %s139
    %p145 = scmp.eq.s32.totalorder %s16, 0
    %p146 = por %p144, %p145
    %p147 = scmp.ne.s32.totalorder %s136, %s139
    %p148 = scmp.eq.s32.totalorder %s21, 3
    %p149 = por %p147, %p148
    %p150 = scmp.ne.s32.totalorder %s139, %s140
    %p151 = scmp.eq.s32.totalorder %s21, 0
    %p152 = por %p150, %p151
    %p153 = scmp.ne.s32.totalorder %s139, %s140
    %p154 = scmp.eq.s32.totalorder %s22, 3
    %p155 = por %p153, %p154
    %p157 = scmp.ne.s32.totalorder %s140, %s156
    %p158 = scmp.eq.s32.totalorder %s22, 0
    %p159 = por %p157, %p158
    %s161 = sadd.s32 %s160, 1
    %p164 = scmp.eq.s32.totalorder %s16, 3
    %p165 = scmp.ne.s32.totalorder %s160, %s162
    %p166 = scmp.eq.s32.totalorder %s16, 0
    %p167 = por %p165, %p166
    %p168 = scmp.ne.s32.totalorder %s160, %s162
    %p169 = scmp.eq.s32.totalorder %s21, 3
    %p170 = por %p168, %p169
    %p171 = scmp.ne.s32.totalorder %s162, %s163
    %p172 = scmp.eq.s32.totalorder %s21, 0
    %p173 = por %p171, %p172
    %p174 = scmp.ne.s32.totalorder %s162, %s163
    %p175 = scmp.eq.s32.totalorder %s22, 3
    %p176 = por %p174, %p175
    %p178 = scmp.ne.s32.totalorder %s163, %s177
    %p179 = scmp.eq.s32.totalorder %s22, 0
    %p180 = por %p178, %p179
    %s182 = sadd.s32 %s181, 1
    %p185 = scmp.eq.s32.totalorder %s16, 3
    %p186 = scmp.ne.s32.totalorder %s181, %s183
    %p187 = scmp.eq.s32.totalorder %s16, 0
    %p188 = por %p186, %p187
    %p189 = scmp.ne.s32.totalorder %s181, %s183
    %p190 = scmp.eq.s32.totalorder %s21, 3
    %p191 = por %p189, %p190
    %p192 = scmp.ne.s32.totalorder %s183, %s184
    %p193 = scmp.eq.s32.totalorder %s21, 0
    %p194 = por %p192, %p193
    %p195 = scmp.ne.s32.totalorder %s183, %s184
    %p196 = scmp.eq.s32.totalorder %s22, 3
    %p197 = por %p195, %p196
    %p199 = scmp.ne.s32.totalorder %s184, %s198
    %p200 = scmp.eq.s32.totalorder %s22, 0
    %p201 = por %p199, %p200
    %s203 = sadd.s32 %s202, 1
    %p206 = scmp.eq.s32.totalorder %s16, 3
    %p207 = scmp.ne.s32.totalorder %s202, %s204
    %p208 = scmp.eq.s32.totalorder %s16, 0
    %p209 = por %p207, %p208
    %p210 = scmp.ne.s32.totalorder %s202, %s204
    %p211 = scmp.eq.s32.totalorder %s21, 3
    %p212 = por %p210, %p211
    %p213 = scmp.ne.s32.totalorder %s204, %s205
    %p214 = scmp.eq.s32.totalorder %s21, 0
    %p215 = por %p213, %p214
    %p216 = scmp.ne.s32.totalorder %s204, %s205
    %p217 = scmp.eq.s32.totalorder %s22, 3
    %p218 = por %p216, %p217
    %p220 = scmp.ne.s32.totalorder %s205, %s219
    %p221 = scmp.eq.s32.totalorder %s22, 0
    %p222 = por %p220, %p221
    %s224 = sadd.s32 %s223, 1
    %p227 = scmp.eq.s32.totalorder %s16, 3
    %p228 = scmp.ne.s32.totalorder %s223, %s225
    %p229 = scmp.eq.s32.totalorder %s16, 0
    %p230 = por %p228, %p229
    %p231 = scmp.ne.s32.totalorder %s223, %s225
    %p232 = scmp.eq.s32.totalorder %s21, 3
    %p233 = por %p231, %p232
    %p234 = scmp.ne.s32.totalorder %s225, %s226
    %p235 = scmp.eq.s32.totalorder %s21, 0
    %p236 = por %p234, %p235
    %p237 = scmp.ne.s32.totalorder %s225, %s226
    %p238 = scmp.eq.s32.totalorder %s22, 3
    %p239 = por %p237, %p238
    %p241 = scmp.ne.s32.totalorder %s226, %s240
    %p242 = scmp.eq.s32.totalorder %s22, 0
    %p243 = por %p241, %p242
    %s245 = sadd.s32 %s244, 1
    %p248 = scmp.eq.s32.totalorder %s16, 3
    %p249 = scmp.ne.s32.totalorder %s244, %s246
    %p250 = scmp.eq.s32.totalorder %s16, 0
    %p251 = por %p249, %p250
    %p252 = scmp.ne.s32.totalorder %s244, %s246
    %p253 = scmp.eq.s32.totalorder %s21, 3
    %p254 = por %p252, %p253
    %p255 = scmp.ne.s32.totalorder %s246, %s247
    %p256 = scmp.eq.s32.totalorder %s21, 0
    %p257 = por %p255, %p256
    %p258 = scmp.ne.s32.totalorder %s246, %s247
    %p259 = scmp.eq.s32.totalorder %s22, 3
    %p260 = por %p258, %p259
    %p262 = scmp.ne.s32.totalorder %s247, %s261
    %p263 = scmp.eq.s32.totalorder %s22, 0
    %p264 = por %p262, %p263
    %s266 = sadd.s32 %s265, 1
    %p269 = scmp.eq.s32.totalorder %s16, 3
    %p270 = scmp.ne.s32.totalorder %s265, %s267
    %p271 = scmp.eq.s32.totalorder %s16, 0
    %p272 = por %p270, %p271
    %p273 = scmp.ne.s32.totalorder %s265, %s267
    %p274 = scmp.eq.s32.totalorder %s21, 3
    %p275 = por %p273, %p274
    %p276 = scmp.ne.s32.totalorder %s267, %s268
    %p277 = scmp.eq.s32.totalorder %s21, 0
    %p278 = por %p276, %p277
    %p279 = scmp.ne.s32.totalorder %s267, %s268
    %p280 = scmp.eq.s32.totalorder %s22, 3
    %p281 = por %p279, %p280
    %p283 = scmp.ne.s32.totalorder %s268, %s282
    %p284 = scmp.eq.s32.totalorder %s22, 0
    %p285 = por %p283, %p284
    %s286 = ssub.s32 %s23, %s35
    %s287 = ssub.s32 %s24, %s31
    %s288 = sor.u32 %s286, %s287
    %p289 = scmp.eq.s32.totalorder %s288, 0
    %s291 = sadd.s32 %s290, 1
    %s292 = scalar_select %p289, %s290, %s291
    %p295 = pneg %p289
    %p296 = scmp.eq.s32.totalorder %s16, 3
    %p297 = por %p295, %p296
    %p298 = scmp.ne.s32.totalorder %s290, %s293
    %p299 = scmp.eq.s32.totalorder %s16, 0
    %p300 = por %p298, %p299
    %p301 = scmp.ne.s32.totalorder %s290, %s293
    %p302 = scmp.eq.s32.totalorder %s21, 3
    %p303 = por %p301, %p302
    %p304 = scmp.ne.s32.totalorder %s293, %s294
    %p305 = scmp.eq.s32.totalorder %s21, 0
    %p306 = por %p304, %p305
    %p307 = scmp.ne.s32.totalorder %s293, %s294
    %p308 = scmp.eq.s32.totalorder %s22, 3
    %p309 = por %p307, %p308
    %p311 = scmp.ne.s32.totalorder %s294, %s310
    %p312 = scmp.eq.s32.totalorder %s22, 0
    %p313 = por %p311, %p312
    %p314 = scmp.le.s32.totalorder 1, %s16
    %p315 = scmp.lt.s32.totalorder %s16, 5
    %p316 = pnand %p314, %p315
    %p317 = pneg %p316
    // Predicated region
    $region9: #{two_block_forward.7} parent=5 // pred_check
      _
    $region10: #{two_block_forward.7} parent=5 // pred_check_branch
      %319 = sbr.rel (%p316) target = $region12
    $region11: #{two_block_forward.7} parent=5 // pred_region
      %s320 = ssub.s32 %s16, 1
      // Predicated region
      $region13: #{two_block_forward.7} parent=11 // pred_check
        %p321 = pneg %p173
      $region14: #{two_block_forward.7} parent=11 // pred_check_branch
        %323 = sbr.rel (%p321) target = $region16
      $region15: #{two_block_forward.7} parent=11 // pred_region
        _
      $region16: #{two_block_forward.7} parent=11 // pred_fallthru
        _
      // Predicated region
      $region17: #{two_block_forward.7} parent=11 // pred_check
        %p324 = pneg %p194
      $region18: #{two_block_forward.7} parent=11 // pred_check_branch
        %326 = sbr.rel (%p324) target = $region20
      $region19: #{two_block_forward.7} parent=11 // pred_region
        _
      $region20: #{two_block_forward.7} parent=11 // pred_fallthru
        _
      // Predicated region
      $region21: #{two_block_forward.7} parent=11 // pred_check
        %p327 = pneg %p215
      $region22: #{two_block_forward.7} parent=11 // pred_check_branch
        %329 = sbr.rel (%p327) target = $region24
      $region23: #{two_block_forward.7} parent=11 // pred_region
        _
      $region24: #{two_block_forward.7} parent=11 // pred_fallthru
        _
      // Predicated region
      $region25: #{two_block_forward.7} parent=11 // pred_check
        %p330 = pneg %p236
      $region26: #{two_block_forward.7} parent=11 // pred_check_branch
        %332 = sbr.rel (%p330) target = $region28
      $region27: #{two_block_forward.7} parent=11 // pred_region
        _
      $region28: #{two_block_forward.7} parent=11 // pred_fallthru
        _
      // Predicated region
      $region29: #{two_block_forward.7} parent=11 // pred_check
        %p333 = pneg %p257
      $region30: #{two_block_forward.7} parent=11 // pred_check_branch
        %335 = sbr.rel (%p333) target = $region32
      $region31: #{two_block_forward.7} parent=11 // pred_region
        _
      $region32: #{two_block_forward.7} parent=11 // pred_fallthru
        _
      // Predicated region
      $region33: #{two_block_forward.7} parent=11 // pred_check
        %p336 = pneg %p278
      $region34: #{two_block_forward.7} parent=11 // pred_check_branch
        %338 = sbr.rel (%p336) target = $region36
      $region35: #{two_block_forward.7} parent=11 // pred_region
        _
      $region36: #{two_block_forward.7} parent=11 // pred_fallthru
        _
    $region12: #{two_block_forward.7} parent=5 // pred_fallthru
      _
    %p339 = scmp.lt.s32.totalorder %s16, 4
    // Predicated region
    $region37: #{two_block_forward.7} parent=5 // pred_check
      %p340 = pneg %p339
    $region38: #{two_block_forward.7} parent=5 // pred_check_branch
      %342 = sbr.rel (%p340) target = $region40
    $region39: #{two_block_forward.7} parent=5 // pred_region
      // Predicated region
      $region41: #{two_block_forward.7} parent=39 // pred_check
        %p343 = pneg %p50
      $region42: #{two_block_forward.7} parent=39 // pred_check_branch
        %345 = sbr.rel (%p343) target = $region44
      $region43: #{two_block_forward.7} parent=39 // pred_region
        %s346 = smul.u32 8, %s24
        %p347 = scmp.lt.s32.totalorder %s23, 1
        %s348 = scalar_select %p347, %s23, 1
        %p349 = scmp.lt.s32.totalorder %s346, 15
        %s350 = scalar_select %p349, %s346, 15
        %s351 = smul.addr %s350, 2
        %s352 = smul.addr %s348, 32
        %s353 = sadd.s32 %s351, %s352
        %s354 = smul.addr %s353, 4
        %s355 = scalar_lea.vmem %s0, %s354
        %s356 = smul.u32 8, %s24
      $region44: #{two_block_forward.7} parent=39 // pred_fallthru
        _
      // Predicated region
      $region45: #{two_block_forward.7} parent=39 // pred_check
        %p357 = pneg %p84
      $region46: #{two_block_forward.7} parent=39 // pred_check_branch
        %359 = sbr.rel (%p357) target = $region48
      $region47: #{two_block_forward.7} parent=39 // pred_region
        %s360 = ssub.s32 %s24, 1
        %p361 = scmp.gt.s32.totalorder %s360, 0
        %s362 = scalar_select %p361, %s360, 0
        %s363 = smul.u32 8, %s362
        %p364 = scmp.lt.s32.totalorder %s23, 1
        %s365 = scalar_select %p364, %s23, 1
        %p366 = scmp.lt.s32.totalorder %s363, 15
        %s367 = scalar_select %p366, %s363, 15
        %s368 = smul.addr %s367, 2
        %s369 = smul.addr %s365, 32
        %s370 = sadd.s32 %s368, %s369
        %s371 = smul.addr %s370, 4
        %s372 = scalar_lea.vmem %s1, %s371
        %s373 = ssub.s32 %s24, 1
        %p374 = scmp.gt.s32.totalorder %s373, 0
        %s375 = scalar_select %p374, %s373, 0
        %s376 = smul.u32 8, %s375
      $region48: #{two_block_forward.7} parent=39 // pred_fallthru
        _
      // Predicated region
      $region49: #{two_block_forward.7} parent=39 // pred_check
        %p377 = pneg %p118
      $region50: #{two_block_forward.7} parent=39 // pred_check_branch
        %379 = sbr.rel (%p377) target = $region52
      $region51: #{two_block_forward.7} parent=39 // pred_region
        %s380 = sadd.s32 %s24, 1
        %p381 = scmp.lt.s32.totalorder %s380, 1
        %s382 = scalar_select %p381, %s380, 1
        %s383 = smul.u32 8, %s382
        %p384 = scmp.lt.s32.totalorder %s23, 1
        %s385 = scalar_select %p384, %s23, 1
        %p386 = scmp.lt.s32.totalorder %s383, 15
        %s387 = scalar_select %p386, %s383, 15
        %s388 = smul.addr %s387, 2
        %s389 = smul.addr %s385, 32
        %s390 = sadd.s32 %s388, %s389
        %s391 = smul.addr %s390, 4
        %s392 = scalar_lea.vmem %s2, %s391
        %s393 = sadd.s32 %s24, 1
        %p394 = scmp.lt.s32.totalorder %s393, 1
        %s395 = scalar_select %p394, %s393, 1
        %s396 = smul.u32 8, %s395
      $region52: #{two_block_forward.7} parent=39 // pred_fallthru
        _
      // Predicated region
      $region53: #{two_block_forward.7} parent=39 // pred_check
        %p397 = pneg %p146
      $region54: #{two_block_forward.7} parent=39 // pred_check_branch
        %399 = sbr.rel (%p397) target = $region56
      $region55: #{two_block_forward.7} parent=39 // pred_region
        %s400 = smul.u32 8, %s24
        %p401 = scmp.lt.s32.totalorder %s23, 1
        %s402 = scalar_select %p401, %s23, 1
        %p403 = scmp.lt.s32.totalorder %s400, 15
        %s404 = scalar_select %p403, %s400, 15
        %s405 = smul.addr %s404, 2
        %s406 = smul.addr %s402, 32
        %s407 = sadd.s32 %s405, %s406
        %s408 = smul.addr %s407, 4
        %s409 = scalar_lea.vmem %s3, %s408
        %s410 = smul.u32 8, %s24
      $region56: #{two_block_forward.7} parent=39 // pred_fallthru
        _
    $region40: #{two_block_forward.7} parent=5 // pred_fallthru
      _
    %p411 = scmp.le.s32.totalorder 1, %s16
    %p412 = scmp.lt.s32.totalorder %s16, 5
    %p413 = pnand %p411, %p412
    %p414 = pneg %p413
    // Predicated region
    $region57: #{two_block_forward.7} parent=5 // pred_check
      _
    $region58: #{two_block_forward.7} parent=5 // pred_check_branch
      %416 = sbr.rel (%p413) target = $region60
    $region59: #{two_block_forward.7} parent=5 // pred_region
      %s417 = ssub.s32 %s16, 1
      %s418 = smul.u32 8, %s26
      %p419 = scmp.lt.s32.totalorder %s25, 1
      %s420 = scalar_select %p419, %s25, 1
      %p421 = scmp.lt.s32.totalorder %s418, 15
      %s422 = scalar_select %p421, %s418, 15
      %s423 = smul.addr %s422, 2
      %s424 = smul.addr %s420, 32
      %s425 = sadd.s32 %s423, %s424
      %s426 = smul.addr %s425, 4
      %s427 = scalar_lea.vmem %s0, %s426
      %p428 = pneg %p56
      %p429 = pneg %p53
      %s430 = ssub.s32 %s26, 1
      %p431 = scmp.gt.s32.totalorder %s430, 0
      %s432 = scalar_select %p431, %s430, 0
      %s433 = smul.u32 8, %s432
      %p434 = scmp.lt.s32.totalorder %s25, 1
      %s435 = scalar_select %p434, %s25, 1
      %p436 = scmp.lt.s32.totalorder %s433, 15
      %s437 = scalar_select %p436, %s433, 15
      %s438 = smul.addr %s437, 2
      %s439 = smul.addr %s435, 32
      %s440 = sadd.s32 %s438, %s439
      %s441 = smul.addr %s440, 4
      %s442 = scalar_lea.vmem %s1, %s441
      %p443 = pneg %p90
      %p444 = pneg %p87
      %s445 = sadd.s32 %s26, 1
      %p446 = scmp.lt.s32.totalorder %s445, 1
      %s447 = scalar_select %p446, %s445, 1
      %s448 = smul.u32 8, %s447
      %p449 = scmp.lt.s32.totalorder %s25, 1
      %s450 = scalar_select %p449, %s25, 1
      %p451 = scmp.lt.s32.totalorder %s448, 15
      %s452 = scalar_select %p451, %s448, 15
      %s453 = smul.addr %s452, 2
      %s454 = smul.addr %s450, 32
      %s455 = sadd.s32 %s453, %s454
      %s456 = smul.addr %s455, 4
      %s457 = scalar_lea.vmem %s2, %s456
      %p458 = pneg %p124
      %p459 = pneg %p121
      %s460 = smul.u32 8, %s26
      %p461 = scmp.lt.s32.totalorder %s25, 1
      %s462 = scalar_select %p461, %s25, 1
      %p463 = scmp.lt.s32.totalorder %s460, 15
      %s464 = scalar_select %p463, %s460, 15
      %s465 = smul.addr %s464, 2
      %s466 = smul.addr %s462, 32
      %s467 = sadd.s32 %s465, %s466
      %s468 = smul.addr %s467, 4
      %s469 = scalar_lea.vmem %s3, %s468
      %p470 = pneg %p152
      %p471 = pneg %p149
      %p472 = pneg %p173
      %p473 = pneg %p170
      %p474 = pneg %p194
      %p475 = pneg %p191
      %p476 = pneg %p215
      %p477 = pneg %p212
      %p478 = pneg %p236
      %p479 = pneg %p233
      %p480 = pneg %p257
      %p481 = pneg %p254
      %p482 = pneg %p278
      %p483 = pneg %p275
      %p484 = pneg %p306
      %p485 = pneg %p303
      %s486 = smul.u32 8, %s26
      %p487 = scmp.lt.s32.totalorder %s25, 1
      %s488 = scalar_select %p487, %s25, 1
      %p489 = scmp.lt.s32.totalorder %s486, 15
      %s490 = scalar_select %p489, %s486, 15
      %s491 = smul.addr %s490, 2
      %s492 = smul.addr %s488, 32
      %s493 = sadd.s32 %s491, %s492
      %s494 = smul.addr %s493, 4
      %s495 = scalar_lea.vmem %s10, %s494
      %s496 = smul.u32 8, %s26
      %p497 = scmp.lt.s32.totalorder %s25, 1
      %s498 = scalar_select %p497, %s25, 1
      %p499 = scmp.lt.s32.totalorder %s496, 15
      %s500 = scalar_select %p499, %s496, 15
      %s501 = smul.addr %s500, 2
      %s502 = smul.addr %s498, 32
      %s503 = sadd.s32 %s501, %s502
      %s504 = smul.addr %s503, 4
      %s505 = scalar_lea.vmem %s0, %s504
      %s506 = smul.u32 8, %s26
      %s507 = ssub.s32 %s26, 1
      %p508 = scmp.gt.s32.totalorder %s507, 0
      %s509 = scalar_select %p508, %s507, 0
      %s510 = smul.u32 8, %s509
      %p511 = scmp.lt.s32.totalorder %s25, 1
      %s512 = scalar_select %p511, %s25, 1
      %p513 = scmp.lt.s32.totalorder %s510, 15
      %s514 = scalar_select %p513, %s510, 15
      %s515 = smul.addr %s514, 2
      %s516 = smul.addr %s512, 32
      %s517 = sadd.s32 %s515, %s516
      %s518 = smul.addr %s517, 4
      %s519 = scalar_lea.vmem %s1, %s518
      %s520 = ssub.s32 %s26, 1
      %p521 = scmp.gt.s32.totalorder %s520, 0
      %s522 = scalar_select %p521, %s520, 0
      %s523 = smul.u32 8, %s522
      %s524 = sadd.s32 %s26, 1
      %p525 = scmp.lt.s32.totalorder %s524, 1
      %s526 = scalar_select %p525, %s524, 1
      %s527 = smul.u32 8, %s526
      %p528 = scmp.lt.s32.totalorder %s25, 1
      %s529 = scalar_select %p528, %s25, 1
      %p530 = scmp.lt.s32.totalorder %s527, 15
      %s531 = scalar_select %p530, %s527, 15
      %s532 = smul.addr %s531, 2
      %s533 = smul.addr %s529, 32
      %s534 = sadd.s32 %s532, %s533
      %s535 = smul.addr %s534, 4
      %s536 = scalar_lea.vmem %s2, %s535
      %s537 = sadd.s32 %s26, 1
      %p538 = scmp.lt.s32.totalorder %s537, 1
      %s539 = scalar_select %p538, %s537, 1
      %s540 = smul.u32 8, %s539
      %s541 = smul.u32 8, %s26
      %p542 = scmp.lt.s32.totalorder %s25, 1
      %s543 = scalar_select %p542, %s25, 1
      %p544 = scmp.lt.s32.totalorder %s541, 15
      %s545 = scalar_select %p544, %s541, 15
      %s546 = smul.addr %s545, 2
      %s547 = smul.addr %s543, 32
      %s548 = sadd.s32 %s546, %s547
      %s549 = smul.addr %s548, 4
      %s550 = scalar_lea.vmem %s3, %s549
      %s551 = smul.u32 8, %s26
      %s552 = smul.u32 8, %s26
      %p553 = scmp.lt.s32.totalorder %s25, 1
      %s554 = scalar_select %p553, %s25, 1
      %p555 = scmp.lt.s32.totalorder %s552, 15
      %s556 = scalar_select %p555, %s552, 15
      %s557 = smul.addr %s556, 2
      %s558 = smul.addr %s554, 32
      %s559 = sadd.s32 %s557, %s558
      %s560 = smul.addr %s559, 4
      %s561 = scalar_lea.vmem %s10, %s560
      %s562 = smul.u32 8, %s26
      %v566 = vld [vmem:[%s505] sm:$0xf]
      %v567 = vld [vmem:[%s505 + $0x4] sm:$0xf]
      %v568 = vld [vmem:[%s505 + $0x8] sm:$0xf]
      %v569 = vld [vmem:[%s505 + $0xc] sm:$0xf]
      %v570 = vld [vmem:[%s505 + $0x10] sm:$0xf]
      %v571 = vld [vmem:[%s505 + $0x14] sm:$0xf]
      %v572 = vld [vmem:[%s505 + $0x18] sm:$0xf]
      %v573 = vld [vmem:[%s505 + $0x1c] sm:$0xf]
      %v574 = vld [vmem:[%s505 + $0x20] sm:$0xf]
      %v575 = vld [vmem:[%s505 + $0x24] sm:$0xf]
      %v576 = vld [vmem:[%s505 + $0x28] sm:$0xf]
      %v577 = vld [vmem:[%s505 + $0x2c] sm:$0xf]
      %v578 = vld [vmem:[%s505 + $0x30] sm:$0xf]
      %v579 = vld [vmem:[%s505 + $0x34] sm:$0xf]
      %v580 = vld [vmem:[%s505 + $0x38] sm:$0xf]
      %v581 = vld [vmem:[%s505 + $0x3c] sm:$0xf]
      %vm582 = vsmask.f32 256
      %vm583 = vsmask.f32 4368
      %vm584 = vmor %vm582, %vm583
      %v586 = vshrl.u32 %v566, 16
      %v588 = vrot.slane %v586, 7
      %v589 = vshll.u32 %v566, 16
      %v591 = vor.u32 %v588, %v589
      %v592 = vrot.slane %v588, 4
      %v594 = vshrl.u32 %v567, 16
      %v596 = vrot.slane %v594, 7
      %v597 = vshll.u32 %v567, 16
      %v599 = vor.u32 %v596, %v597
      %v600 = vsel %vm584, %v592, %v599
      %v601 = vrot.slane %v596, 4
      %v603 = vshrl.u32 %v568, 16
      %v605 = vrot.slane %v603, 7
      %v606 = vshll.u32 %v568, 16
      %v608 = vor.u32 %v605, %v606
      %v609 = vsel %vm584, %v601, %v608
      %v610 = vrot.slane %v605, 4
      %v612 = vshrl.u32 %v569, 16
      %v614 = vrot.slane %v612, 7
      %v615 = vshll.u32 %v569, 16
      %v617 = vor.u32 %v614, %v615
      %v618 = vsel %vm584, %v610, %v617
      %v619 = vrot.slane %v614, 4
      %v621 = vshrl.u32 %v570, 16
      %v623 = vrot.slane %v621, 7
      %v624 = vshll.u32 %v570, 16
      %v626 = vor.u32 %v623, %v624
      %v627 = vsel %vm584, %v619, %v626
      %v628 = vrot.slane %v623, 4
      %v630 = vshrl.u32 %v571, 16
      %v632 = vrot.slane %v630, 7
      %v633 = vshll.u32 %v571, 16
      %v635 = vor.u32 %v632, %v633
      %v636 = vsel %vm584, %v628, %v635
      %v637 = vrot.slane %v632, 4
      %v639 = vshrl.u32 %v572, 16
      %v641 = vrot.slane %v639, 7
      %v642 = vshll.u32 %v572, 16
      %v644 = vor.u32 %v641, %v642
      %v645 = vsel %vm584, %v637, %v644
      %v646 = vrot.slane %v641, 4
      %v648 = vshrl.u32 %v573, 16
      %v650 = vrot.slane %v648, 7
      %v651 = vshll.u32 %v573, 16
      %v653 = vor.u32 %v650, %v651
      %v654 = vsel %vm584, %v646, %v653
      %v655 = vrot.slane %v650, 4
      %v657 = vshrl.u32 %v574, 16
      %v659 = vrot.slane %v657, 7
      %v660 = vshll.u32 %v574, 16
      %v662 = vor.u32 %v659, %v660
      %v663 = vsel %vm584, %v655, %v662
      %v664 = vrot.slane %v659, 4
      %v666 = vshrl.u32 %v575, 16
      %v668 = vrot.slane %v666, 7
      %v669 = vshll.u32 %v575, 16
      %v671 = vor.u32 %v668, %v669
      %v672 = vsel %vm584, %v664, %v671
      %v673 = vrot.slane %v668, 4
      %v675 = vshrl.u32 %v576, 16
      %v677 = vrot.slane %v675, 7
      %v678 = vshll.u32 %v576, 16
      %v680 = vor.u32 %v677, %v678
      %v681 = vsel %vm584, %v673, %v680
      %v682 = vrot.slane %v677, 4
      %v684 = vshrl.u32 %v577, 16
      %v686 = vrot.slane %v684, 7
      %v687 = vshll.u32 %v577, 16
      %v689 = vor.u32 %v686, %v687
      %v690 = vsel %vm584, %v682, %v689
      %v691 = vrot.slane %v686, 4
      %v693 = vshrl.u32 %v578, 16
      %v695 = vrot.slane %v693, 7
      %v696 = vshll.u32 %v578, 16
      %v698 = vor.u32 %v695, %v696
      %v699 = vsel %vm584, %v691, %v698
      %v700 = vrot.slane %v695, 4
      %v702 = vshrl.u32 %v579, 16
      %v704 = vrot.slane %v702, 7
      %v705 = vshll.u32 %v579, 16
      %v707 = vor.u32 %v704, %v705
      %v708 = vsel %vm584, %v700, %v707
      %v709 = vrot.slane %v704, 4
      %v711 = vshrl.u32 %v580, 16
      %v713 = vrot.slane %v711, 7
      %v714 = vshll.u32 %v580, 16
      %v716 = vor.u32 %v713, %v714
      %v717 = vsel %vm584, %v709, %v716
      %v718 = vrot.slane %v713, 4
      %v720 = vshrl.u32 %v581, 16
      %v722 = vrot.slane %v720, 7
      %v723 = vshll.u32 %v581, 16
      %v725 = vor.u32 %v722, %v723
      %v726 = vsel %vm584, %v718, %v725
      %v727 = vrot.slane %v722, 4
      %vm745 = vcmask 1043456
      %vm746 = vsmask.f32 7938
      %vm747 = vmand %vm745, %vm746
      %v748 = vld [vmem:[#allocation2 + $0x8] sm:$0xf]
      %v749 = vsel %vm747, %v591, %v748
      %750 = vst [vmem:[#allocation2 + $0x8] sm:$0xf] %v749
      %751 = vst [vmem:[#allocation2 + $0xc] sm:$0xf] %v600
      %752 = vst [vmem:[#allocation2 + $0x10] sm:$0xf] %v609
      %753 = vst [vmem:[#allocation2 + $0x14] sm:$0xf] %v618
      %754 = vst [vmem:[#allocation2 + $0x18] sm:$0xf] %v627
      %755 = vst [vmem:[#allocation2 + $0x1c] sm:$0xf] %v636
      %756 = vst [vmem:[#allocation2 + $0x20] sm:$0xf] %v645
      %757 = vst [vmem:[#allocation2 + $0x24] sm:$0xf] %v654
      %758 = vst [vmem:[#allocation2 + $0x28] sm:$0xf] %v663
      %759 = vst [vmem:[#allocation2 + $0x2c] sm:$0xf] %v672
      %760 = vst [vmem:[#allocation2 + $0x30] sm:$0xf] %v681
      %761 = vst [vmem:[#allocation2 + $0x34] sm:$0xf] %v690
      %762 = vst [vmem:[#allocation2 + $0x38] sm:$0xf] %v699
      %763 = vst [vmem:[#allocation2 + $0x3c] sm:$0xf] %v708
      %764 = vst [vmem:[#allocation2 + $0x40] sm:$0xf] %v717
      %765 = vst [vmem:[#allocation2 + $0x44] sm:$0xf] %v726
      %vm766 = vcmask 1040384
      %vm767 = vmand %vm766, %vm582
      %v768 = vld [vmem:[#allocation2 + $0x48] sm:$0x1]
      %v769 = vsel %vm767, %v727, %v768
      %770 = vst [vmem:[#allocation2 + $0x48] sm:$0x1] %v769
      %p771 = scmp.gt.s32.totalorder %s26, 0
      // Predicated region
      $region61: #{two_block_forward.7} parent=59 // pred_check
        %p772 = pneg %p771
      $region62: #{two_block_forward.7} parent=59 // pred_check_branch
        %774 = sbr.rel (%p772) target = $region64
      $region63: #{two_block_forward.7} parent=59 // pred_region
        %s775 = scalar_lea.vmem %s519, 56
        %v776 = vld [vmem:[%s775] sm:$0xf]
        %v777 = vld [vmem:[%s775 + $0x4] sm:$0xf]
        %v779 = vshrl.u32 %v776, 16
        %v781 = vrot.slane %v779, 7
        %v782 = vshll.u32 %v776, 16
        %v784 = vor.u32 %v781, %v782
        %v785 = vrot.slane %v781, 4
        %v787 = vshrl.u32 %v777, 16
        %v789 = vrot.slane %v787, 7
        %v790 = vshll.u32 %v777, 16
        %v792 = vor.u32 %v789, %v790
        %v793 = vsel %vm584, %v785, %v792
        %v794 = vrot.slane %v789, 4
        %v798 = vld [vmem:[#allocation2] sm:$0xf]
        %v799 = vsel %vm747, %v784, %v798
        %800 = vst [vmem:[#allocation2] sm:$0xf] %v799
        %801 = vst [vmem:[#allocation2 + $0x4] sm:$0xf] %v793
        %v802 = vld [vmem:[#allocation2 + $0x8] sm:$0x1]
        %v803 = vsel %vm767, %v794, %v802
        %804 = vst [vmem:[#allocation2 + $0x8] sm:$0x1] %v803
      $region64: #{two_block_forward.7} parent=59 // pred_fallthru
        _
      %p805 = scmp.eq.s32.totalorder %s26, 0
      // Predicated region
      $region65: #{two_block_forward.7} parent=59 // pred_check
        %p806 = pneg %p805
      $region66: #{two_block_forward.7} parent=59 // pred_check_branch
        %808 = sbr.rel (%p806) target = $region68
      $region67: #{two_block_forward.7} parent=59 // pred_region
        %v809 = vld [vmem:[#allocation2] sm:$0xf]
        %v810 = vsel %vm747, 0, %v809
        %811 = vst [vmem:[#allocation2] sm:$0xf] %v810
        %812 = vst [vmem:[#allocation2 + $0x4] sm:$0xf] 0
        %v813 = vld [vmem:[#allocation2 + $0x8] sm:$0x1]
        %v814 = vsel %vm767, 0, %v813
        %815 = vst [vmem:[#allocation2 + $0x8] sm:$0x1] %v814
      $region68: #{two_block_forward.7} parent=59 // pred_fallthru
        _
      %p816 = scmp.lt.s32.totalorder %s26, 1
      // Predicated region
      $region69: #{two_block_forward.7} parent=59 // pred_check
        %p817 = pneg %p816
      $region70: #{two_block_forward.7} parent=59 // pred_check_branch
        %819 = sbr.rel (%p817) target = $region72
      $region71: #{two_block_forward.7} parent=59 // pred_region
        %v820 = vld [vmem:[%s536] sm:$0xf]
        %v821 = vld [vmem:[%s536 + $0x4] sm:$0xf]
        %v823 = vshrl.u32 %v820, 16
        %v825 = vrot.slane %v823, 7
        %v826 = vshll.u32 %v820, 16
        %v828 = vor.u32 %v825, %v826
        %v829 = vrot.slane %v825, 4
        %v831 = vshrl.u32 %v821, 16
        %v833 = vrot.slane %v831, 7
        %v834 = vshll.u32 %v821, 16
        %v836 = vor.u32 %v833, %v834
        %v837 = vsel %vm584, %v829, %v836
        %v838 = vrot.slane %v833, 4
        %v842 = vld [vmem:[#allocation2 + $0x48] sm:$0xf]
        %v843 = vsel %vm747, %v828, %v842
        %844 = vst [vmem:[#allocation2 + $0x48] sm:$0xf] %v843
        %845 = vst [vmem:[#allocation2 + $0x4c] sm:$0xf] %v837
        %v846 = vld [vmem:[#allocation2 + $0x50] sm:$0x1]
        %v847 = vsel %vm767, %v838, %v846
        %848 = vst [vmem:[#allocation2 + $0x50] sm:$0x1] %v847
      $region72: #{two_block_forward.7} parent=59 // pred_fallthru
        _
      %p849 = scmp.eq.s32.totalorder %s26, 1
      // Predicated region
      $region73: #{two_block_forward.7} parent=59 // pred_check
        %p850 = pneg %p849
      $region74: #{two_block_forward.7} parent=59 // pred_check_branch
        %852 = sbr.rel (%p850) target = $region76
      $region75: #{two_block_forward.7} parent=59 // pred_region
        %v853 = vld [vmem:[#allocation2 + $0x48] sm:$0xf]
        %v854 = vsel %vm747, 0, %v853
        %855 = vst [vmem:[#allocation2 + $0x48] sm:$0xf] %v854
        %856 = vst [vmem:[#allocation2 + $0x4c] sm:$0xf] 0
        %v857 = vld [vmem:[#allocation2 + $0x50] sm:$0x1]
        %v858 = vsel %vm767, 0, %v857
        %859 = vst [vmem:[#allocation2 + $0x50] sm:$0x1] %v858
      $region76: #{two_block_forward.7} parent=59 // pred_fallthru
        _
      %v860 = vlaneseq
      %v861 = vshrl.u32 %v860, 7
      %v862 = vadd.s32 %v861, 8
      %vm863 = vcmp.ge.s32.totalorder %v861, 1
      %vm864 = vcmp.ge.s32.totalorder %v862, 1
      %vm865 = vcmp.lt.s32.totalorder %v861, 15
      %vm866 = vcmp.lt.s32.totalorder %v862, 15
      %v867 = vld [vmem:[#allocation2] sm:$0xf]
      %v868 = vld [vmem:[#allocation2 + $0x4] sm:$0xf]
      %v869 = vld [vmem:[#allocation2 + $0x8] sm:$0xf]
      %v870 = vld [vmem:[#allocation2 + $0xc] sm:$0xf]
      %v871 = vld [vmem:[#allocation2 + $0x10] sm:$0xf]
      %v872 = vld [vmem:[#allocation2 + $0x14] sm:$0xf]
      %v873 = vld [vmem:[#allocation2 + $0x18] sm:$0xf]
      %v874 = vld [vmem:[#allocation2 + $0x1c] sm:$0xf]
      %v875 = vld [vmem:[#allocation2 + $0x20] sm:$0xf]
      %v876 = vld [vmem:[#allocation2 + $0x24] sm:$0xf]
      %v877 = vld [vmem:[#allocation2 + $0x28] sm:$0xf]
      %v878 = vld [vmem:[#allocation2 + $0x2c] sm:$0xf]
      %v879 = vld [vmem:[#allocation2 + $0x30] sm:$0xf]
      %v880 = vld [vmem:[#allocation2 + $0x34] sm:$0xf]
      %v881 = vld [vmem:[#allocation2 + $0x38] sm:$0xf]
      %v882 = vld [vmem:[#allocation2 + $0x3c] sm:$0xf]
      %v883 = vsel %vm863, 1, 0
      %v884 = vsel %vm864, 1, 0
      %vm885 = vcmp.eq.s32.totalorder %v883, 1
      %vm886 = vcmp.eq.s32.totalorder %v884, 1
      %vm887 = vmpackc.low %vm885, %vm885
      %vm888 = vmpackc.low %vm886, %vm886
      %v889 = vsel %vm887, %v867, 0
      %v890 = vsel %vm888, %v868, 0
      %v891 = vsel %vm887, %v869, 0
      %v892 = vsel %vm888, %v870, 0
      %v893 = vsel %vm887, %v871, 0
      %v894 = vsel %vm888, %v872, 0
      %v895 = vsel %vm887, %v873, 0
      %v896 = vsel %vm888, %v874, 0
      %v897 = vsel %vm887, %v875, 0
      %v898 = vsel %vm888, %v876, 0
      %v899 = vsel %vm887, %v877, 0
      %v900 = vsel %vm888, %v878, 0
      %v901 = vsel %vm887, %v879, 0
      %v902 = vsel %vm888, %v880, 0
      %v903 = vsel %vm887, %v881, 0
      %v904 = vsel %vm888, %v882, 0
      %v905 = vld [vmem:[%s4] sm:$0xf]
      %v906 = vld [vmem:[%s4 + $0x4] sm:$0xf]
      %v907 = vld [vmem:[%s4 + $0x8] sm:$0xf]
      %v908 = vld [vmem:[%s4 + $0xc] sm:$0xf]
      %v909 = vld [vmem:[%s4 + $0x10] sm:$0xf]
      %v910 = vld [vmem:[%s4 + $0x14] sm:$0xf]
      %v911 = vld [vmem:[%s4 + $0x18] sm:$0xf]
      %v912 = vld [vmem:[%s4 + $0x1c] sm:$0xf]
      %v913 = vld [vmem:[%s4 + $0x20] sm:$0xf]
      %v914 = vld [vmem:[%s4 + $0x24] sm:$0xf]
      %v915 = vld [vmem:[%s4 + $0x28] sm:$0xf]
      %v916 = vld [vmem:[%s4 + $0x2c] sm:$0xf]
      %v917 = vld [vmem:[%s4 + $0x30] sm:$0xf]
      %v918 = vld [vmem:[%s4 + $0x34] sm:$0xf]
      %v919 = vld [vmem:[%s4 + $0x38] sm:$0xf]
      %v920 = vld [vmem:[%s4 + $0x3c] sm:$0xf]
      %v921 = vld [vmem:[#allocation2 + $0x40] sm:$0x1]
      %s922 = scalar_lea.vmem %s4, 64
      %v923 = vld [vmem:[%s922] sm:$0xf]
      %v924 = vld [vmem:[%s922 + $0x4] sm:$0xf]
      %v925 = vld [vmem:[%s922 + $0x8] sm:$0xf]
      %v926 = vld [vmem:[%s922 + $0xc] sm:$0xf]
      %v927 = vld [vmem:[%s922 + $0x10] sm:$0xf]
      %v928 = vld [vmem:[%s922 + $0x14] sm:$0xf]
      %v929 = vld [vmem:[%s922 + $0x18] sm:$0xf]
      %v930 = vld [vmem:[%s922 + $0x1c] sm:$0xf]
      %v931 = vld [vmem:[%s922 + $0x20] sm:$0xf]
      %v932 = vld [vmem:[%s922 + $0x24] sm:$0xf]
      %v933 = vld [vmem:[%s922 + $0x28] sm:$0xf]
      %v934 = vld [vmem:[%s922 + $0x2c] sm:$0xf]
      %v935 = vld [vmem:[%s922 + $0x30] sm:$0xf]
      %v936 = vld [vmem:[%s922 + $0x34] sm:$0xf]
      %v937 = vld [vmem:[%s922 + $0x38] sm:$0xf]
      %v938 = vld [vmem:[%s922 + $0x3c] sm:$0xf]
      %v956 = vunpack.c.l.b16 %v867
      %v957 = vunpack.c.l.b16 %v868
      %v958 = vunpack.c.l.b16 %v869
      %v959 = vunpack.c.l.b16 %v870
      %v960 = vunpack.c.l.b16 %v871
      %v961 = vunpack.c.l.b16 %v872
      %v962 = vunpack.c.l.b16 %v873
      %v963 = vunpack.c.l.b16 %v874
      %v964 = vunpack.c.l.b16 %v875
      %v965 = vunpack.c.l.b16 %v876
      %v966 = vunpack.c.l.b16 %v877
      %v967 = vunpack.c.l.b16 %v878
      %v968 = vunpack.c.l.b16 %v879
      %v969 = vunpack.c.l.b16 %v880
      %v970 = vunpack.c.l.b16 %v881
      %v971 = vunpack.c.l.b16 %v882
      %v972 = vunpack.c.l.b16 %v921
      %v973 = vpack.c.b16 %v957, %v956
      %v974 = vpack.c.b16 %v959, %v958
      %v975 = vpack.c.b16 %v961, %v960
      %v976 = vpack.c.b16 %v963, %v962
      %v977 = vpack.c.b16 %v965, %v964
      %v978 = vpack.c.b16 %v967, %v966
      %v979 = vpack.c.b16 %v969, %v968
      %v980 = vpack.c.b16 %v971, %v970
      %v981 = vpack.c.b16 %v972, %v972
      %vm982 = vsmask.f32 7424
      %v984 = vshrl.u32 %v973, 16
      %v986 = vshll.u32 %v973, 16
      %v988 = vrot.slane %v986, 1
      %v989 = vor.u32 %v984, %v988
      %v991 = vshll.u32 %v974, 16
      %v993 = vrot.slane %v991, 1
      %v994 = vsel %vm982, %v989, %v993
      %v995 = vshrl.u32 %v974, 16
      %v997 = vor.u32 %v995, %v993
      %v999 = vshll.u32 %v975, 16
      %v1001 = vrot.slane %v999, 1
      %v1002 = vsel %vm982, %v997, %v1001
      %v1003 = vshrl.u32 %v975, 16
      %v1005 = vor.u32 %v1003, %v1001
      %v1007 = vshll.u32 %v976, 16
      %v1009 = vrot.slane %v1007, 1
      %v1010 = vsel %vm982, %v1005, %v1009
      %v1011 = vshrl.u32 %v976, 16
      %v1013 = vor.u32 %v1011, %v1009
      %v1015 = vshll.u32 %v977, 16
      %v1017 = vrot.slane %v1015, 1
      %v1018 = vsel %vm982, %v1013, %v1017
      %v1019 = vshrl.u32 %v977, 16
      %v1021 = vor.u32 %v1019, %v1017
      %v1023 = vshll.u32 %v978, 16
      %v1025 = vrot.slane %v1023, 1
      %v1026 = vsel %vm982, %v1021, %v1025
      %v1027 = vshrl.u32 %v978, 16
      %v1029 = vor.u32 %v1027, %v1025
      %v1031 = vshll.u32 %v979, 16
      %v1033 = vrot.slane %v1031, 1
      %v1034 = vsel %vm982, %v1029, %v1033
      %v1035 = vshrl.u32 %v979, 16
      %v1037 = vor.u32 %v1035, %v1033
      %v1039 = vshll.u32 %v980, 16
      %v1041 = vrot.slane %v1039, 1
      %v1042 = vsel %vm982, %v1037, %v1041
      %v1043 = vshrl.u32 %v980, 16
      %v1045 = vor.u32 %v1043, %v1041
      %v1047 = vshll.u32 %v981, 16
      %v1049 = vrot.slane %v1047, 1
      %v1050 = vsel %vm982, %v1045, %v1049
      %v1075 = vunpack.c.l.b16 %v923
      %v1076 = vunpack.c.l.b16 %v924
      %v1077 = vunpack.c.l.b16 %v925
      %v1078 = vunpack.c.l.b16 %v926
      %v1079 = vunpack.c.l.b16 %v927
      %v1080 = vunpack.c.l.b16 %v928
      %v1081 = vunpack.c.l.b16 %v929
      %v1082 = vunpack.c.l.b16 %v930
      %v1083 = vunpack.c.l.b16 %v931
      %v1084 = vunpack.c.l.b16 %v932
      %v1085 = vunpack.c.l.b16 %v933
      %v1086 = vunpack.c.l.b16 %v934
      %v1087 = vunpack.c.l.b16 %v935
      %v1088 = vunpack.c.l.b16 %v936
      %v1089 = vunpack.c.l.b16 %v937
      %v1090 = vunpack.c.l.b16 %v938
      %v1091 = vpack.c.b16 %v1076, %v1075
      %v1092 = vpack.c.b16 %v1078, %v1077
      %v1093 = vpack.c.b16 %v1080, %v1079
      %v1094 = vpack.c.b16 %v1082, %v1081
      %v1095 = vpack.c.b16 %v1084, %v1083
      %v1096 = vpack.c.b16 %v1086, %v1085
      %v1097 = vpack.c.b16 %v1088, %v1087
      %v1098 = vpack.c.b16 %v1090, %v1089
      %1107 = vmatprep.subr.bf16.mxu0 0
      %1108 = vmatpush1.bf16.msra.mxu0 %v1098
      %1109 = vmatprep.subr.bf16.mxu0 0
      %1110 = vmatpush1.bf16.msra.mxu0 %v1097
      %1111 = vmatprep.subr.bf16.mxu0 0
      %1112 = vmatpush1.bf16.msra.mxu0 %v1096
      %1113 = vmatprep.subr.bf16.mxu0 0
      %1114 = vmatpush1.bf16.msra.mxu0 %v1095
      %1115 = vmatprep.subr.bf16.mxu0 0
      %1116 = vmatpush1.bf16.msra.mxu0 %v1094
      %1117 = vmatprep.subr.bf16.mxu0 0
      %1118 = vmatpush1.bf16.msra.mxu0 %v1093
      %1119 = vmatprep.subr.bf16.mxu0 0
      %1120 = vmatpush1.bf16.msra.mxu0 %v1092
      %1121 = vmatprep.subr.bf16.mxu0 0
      %1122 = vmatpush1.bf16.msra.mxu0 %v1091
      %1123 = vmatprep.subr.bf16.mxu0 0
      %1124 = vmatpush2.bf16.msra.mxu0 0
      %1125 = vmatprep.subr.bf16.mxu0 0
      %1126 = vmatpush2.bf16.msra.mxu0 0
      %1127 = vmatprep.subr.bf16.mxu0 0
      %1128 = vmatpush2.bf16.msra.mxu0 0
      %1129 = vmatprep.subr.bf16.mxu0 0
      %1130 = vmatpush2.bf16.msra.mxu0 0
      %1131 = vmatprep.subr.bf16.mxu0 0
      %1132 = vmatpush2.bf16.msra.mxu0 0
      %1133 = vmatprep.subr.bf16.mxu0 0
      %1134 = vmatpush2.bf16.msra.mxu0 0
      %1135 = vmatprep.subr.bf16.mxu0 0
      %1136 = vmatpush2.bf16.msra.mxu0 0
      %1137 = vmatprep.subr.bf16.mxu0 0
      %1138 = vmatpush2.bf16.msra.mxu0 0
      %1139 = vmatprep.mubr.bf16.mxu0 0
      %1140 = vmatmul.mubr.bf16.gmra.mxu0 %v994
      %v1141 = vpop.f32.mrf.mxu0
      %v1142 = vadd.f32 0.0, %v1141
      %v1143 = vpop.f32.mrf.mxu0
      %v1144 = vpop.f32.mrf.mxu0
      %v1145 = vadd.f32 0.0, %v1144
      %v1146 = vpop.f32.mrf.mxu0
      %1147 = vmatprep.mubr.bf16.mxu0 0
      %1148 = vmatmul.mubr.bf16.gmra.mxu0 %v1002
      %v1149 = vpop.f32.mrf.mxu0
      %v1150 = vadd.f32 0.0, %v1149
      %v1151 = vpop.f32.mrf.mxu0
      %v1152 = vpop.f32.mrf.mxu0
      %v1153 = vadd.f32 0.0, %v1152
      %v1154 = vpop.f32.mrf.mxu0
      %1155 = vmatprep.mubr.bf16.mxu0 0
      %1156 = vmatmul.mubr.bf16.gmra.mxu0 %v1010
      %v1157 = vpop.f32.mrf.mxu0
      %v1158 = vadd.f32 0.0, %v1157
      %v1159 = vpop.f32.mrf.mxu0
      %v1160 = vpop.f32.mrf.mxu0
      %v1161 = vadd.f32 0.0, %v1160
      %v1162 = vpop.f32.mrf.mxu0
      %1163 = vmatprep.mubr.bf16.mxu0 0
      %1164 = vmatmul.mubr.bf16.gmra.mxu0 %v1018
      %v1165 = vpop.f32.mrf.mxu0
      %v1166 = vadd.f32 0.0, %v1165
      %v1167 = vpop.f32.mrf.mxu0
      %v1168 = vpop.f32.mrf.mxu0
      %v1169 = vadd.f32 0.0, %v1168
      %v1170 = vpop.f32.mrf.mxu0
      %1171 = vmatprep.mubr.bf16.mxu0 0
      %1172 = vmatmul.mubr.bf16.gmra.mxu0 %v1026
      %v1173 = vpop.f32.mrf.mxu0
      %v1174 = vadd.f32 0.0, %v1173
      %v1175 = vpop.f32.mrf.mxu0
      %v1176 = vpop.f32.mrf.mxu0
      %v1177 = vadd.f32 0.0, %v1176
      %v1178 = vpop.f32.mrf.mxu0
      %1179 = vmatprep.mubr.bf16.mxu0 0
      %1180 = vmatmul.mubr.bf16.gmra.mxu0 %v1034
      %v1181 = vpop.f32.mrf.mxu0
      %v1182 = vadd.f32 0.0, %v1181
      %v1183 = vpop.f32.mrf.mxu0
      %v1184 = vpop.f32.mrf.mxu0
      %v1185 = vadd.f32 0.0, %v1184
      %v1186 = vpop.f32.mrf.mxu0
      %1187 = vmatprep.mubr.bf16.mxu0 0
      %1188 = vmatmul.mubr.bf16.gmra.mxu0 %v1042
      %v1189 = vpop.f32.mrf.mxu0
      %v1190 = vadd.f32 0.0, %v1189
      %v1191 = vpop.f32.mrf.mxu0
      %v1192 = vpop.f32.mrf.mxu0
      %v1193 = vadd.f32 0.0, %v1192
      %v1194 = vpop.f32.mrf.mxu0
      %1195 = vmatprep.mubr.bf16.mxu0 0
      %1196 = vmatmul.mubr.bf16.gmra.mxu0 %v1050
      %v1197 = vpop.f32.mrf.mxu0
      %v1198 = vadd.f32 0.0, %v1197
      %v1199 = vpop.f32.mrf.mxu0
      %v1200 = vpop.f32.mrf.mxu0
      %v1201 = vadd.f32 0.0, %v1200
      %v1202 = vpop.f32.mrf.mxu0
      %1203 = vdwg.mxu0
      %v1220 = vunpack.c.l.b16 %v889
      %v1221 = vunpack.c.l.b16 %v890
      %v1222 = vunpack.c.l.b16 %v891
      %v1223 = vunpack.c.l.b16 %v892
      %v1224 = vunpack.c.l.b16 %v893
      %v1225 = vunpack.c.l.b16 %v894
      %v1226 = vunpack.c.l.b16 %v895
      %v1227 = vunpack.c.l.b16 %v896
      %v1228 = vunpack.c.l.b16 %v897
      %v1229 = vunpack.c.l.b16 %v898
      %v1230 = vunpack.c.l.b16 %v899
      %v1231 = vunpack.c.l.b16 %v900
      %v1232 = vunpack.c.l.b16 %v901
      %v1233 = vunpack.c.l.b16 %v902
      %v1234 = vunpack.c.l.b16 %v903
      %v1235 = vunpack.c.l.b16 %v904
      %v1236 = vpack.c.b16 %v1221, %v1220
      %v1237 = vpack.c.b16 %v1223, %v1222
      %v1238 = vpack.c.b16 %v1225, %v1224
      %v1239 = vpack.c.b16 %v1227, %v1226
      %v1240 = vpack.c.b16 %v1229, %v1228
      %v1241 = vpack.c.b16 %v1231, %v1230
      %v1242 = vpack.c.b16 %v1233, %v1232
      %v1243 = vpack.c.b16 %v1235, %v1234
      %v1268 = vunpack.c.l.b16 %v905
      %v1269 = vunpack.c.l.b16 %v906
      %v1270 = vunpack.c.l.b16 %v907
      %v1271 = vunpack.c.l.b16 %v908
      %v1272 = vunpack.c.l.b16 %v909
      %v1273 = vunpack.c.l.b16 %v910
      %v1274 = vunpack.c.l.b16 %v911
      %v1275 = vunpack.c.l.b16 %v912
      %v1276 = vunpack.c.l.b16 %v913
      %v1277 = vunpack.c.l.b16 %v914
      %v1278 = vunpack.c.l.b16 %v915
      %v1279 = vunpack.c.l.b16 %v916
      %v1280 = vunpack.c.l.b16 %v917
      %v1281 = vunpack.c.l.b16 %v918
      %v1282 = vunpack.c.l.b16 %v919
      %v1283 = vunpack.c.l.b16 %v920
      %v1284 = vpack.c.b16 %v1269, %v1268
      %v1285 = vpack.c.b16 %v1271, %v1270
      %v1286 = vpack.c.b16 %v1273, %v1272
      %v1287 = vpack.c.b16 %v1275, %v1274
      %v1288 = vpack.c.b16 %v1277, %v1276
      %v1289 = vpack.c.b16 %v1279, %v1278
      %v1290 = vpack.c.b16 %v1281, %v1280
      %v1291 = vpack.c.b16 %v1283, %v1282
      %1300 = vmatprep.subr.bf16.mxu0 0
      %1301 = vmatpush1.bf16.msra.mxu0 %v1291
      %1302 = vmatprep.subr.bf16.mxu0 0
      %1303 = vmatpush1.bf16.msra.mxu0 %v1290
      %1304 = vmatprep.subr.bf16.mxu0 0
      %1305 = vmatpush1.bf16.msra.mxu0 %v1289
      %1306 = vmatprep.subr.bf16.mxu0 0
      %1307 = vmatpush1.bf16.msra.mxu0 %v1288
      %1308 = vmatprep.subr.bf16.mxu0 0
      %1309 = vmatpush1.bf16.msra.mxu0 %v1287
      %1310 = vmatprep.subr.bf16.mxu0 0
      %1311 = vmatpush1.bf16.msra.mxu0 %v1286
      %1312 = vmatprep.subr.bf16.mxu0 0
      %1313 = vmatpush1.bf16.msra.mxu0 %v1285
      %1314 = vmatprep.subr.bf16.mxu0 0
      %1315 = vmatpush1.bf16.msra.mxu0 %v1284
      %1316 = vmatprep.subr.bf16.mxu0 0
      %1317 = vmatpush2.bf16.msra.mxu0 0
      %1318 = vmatprep.subr.bf16.mxu0 0
      %1319 = vmatpush2.bf16.msra.mxu0 0
      %1320 = vmatprep.subr.bf16.mxu0 0
      %1321 = vmatpush2.bf16.msra.mxu0 0
      %1322 = vmatprep.subr.bf16.mxu0 0
      %1323 = vmatpush2.bf16.msra.mxu0 0
      %1324 = vmatprep.subr.bf16.mxu0 0
      %1325 = vmatpush2.bf16.msra.mxu0 0
      %1326 = vmatprep.subr.bf16.mxu0 0
      %1327 = vmatpush2.bf16.msra.mxu0 0
      %1328 = vmatprep.subr.bf16.mxu0 0
      %1329 = vmatpush2.bf16.msra.mxu0 0
      %1330 = vmatprep.subr.bf16.mxu0 0
      %1331 = vmatpush2.bf16.msra.mxu0 0
      %1332 = vmatprep.mubr.bf16.mxu0 0
      %1333 = vmatmul.mubr.bf16.gmra.mxu0 %v1236
      %v1334 = vpop.f32.mrf.mxu0
      %v1335 = vadd.f32 %v1142, %v1334
      %v1336 = vpop.f32.mrf.mxu0
      %v1337 = vpop.f32.mrf.mxu0
      %v1338 = vadd.f32 %v1145, %v1337
      %v1339 = vpop.f32.mrf.mxu0
      %1340 = vmatprep.mubr.bf16.mxu0 0
      %1341 = vmatmul.mubr.bf16.gmra.mxu0 %v1237
      %v1342 = vpop.f32.mrf.mxu0
      %v1343 = vadd.f32 %v1150, %v1342
      %v1344 = vpop.f32.mrf.mxu0
      %v1345 = vpop.f32.mrf.mxu0
      %v1346 = vadd.f32 %v1153, %v1345
      %v1347 = vpop.f32.mrf.mxu0
      %1348 = vmatprep.mubr.bf16.mxu0 0
      %1349 = vmatmul.mubr.bf16.gmra.mxu0 %v1238
      %v1350 = vpop.f32.mrf.mxu0
      %v1351 = vadd.f32 %v1158, %v1350
      %v1352 = vpop.f32.mrf.mxu0
      %v1353 = vpop.f32.mrf.mxu0
      %v1354 = vadd.f32 %v1161, %v1353
      %v1355 = vpop.f32.mrf.mxu0
      %1356 = vmatprep.mubr.bf16.mxu0 0
      %1357 = vmatmul.mubr.bf16.gmra.mxu0 %v1239
      %v1358 = vpop.f32.mrf.mxu0
      %v1359 = vadd.f32 %v1166, %v1358
      %v1360 = vpop.f32.mrf.mxu0
      %v1361 = vpop.f32.mrf.mxu0
      %v1362 = vadd.f32 %v1169, %v1361
      %v1363 = vpop.f32.mrf.mxu0
      %1364 = vmatprep.mubr.bf16.mxu0 0
      %1365 = vmatmul.mubr.bf16.gmra.mxu0 %v1240
      %v1366 = vpop.f32.mrf.mxu0
      %v1367 = vadd.f32 %v1174, %v1366
      %v1368 = vpop.f32.mrf.mxu0
      %v1369 = vpop.f32.mrf.mxu0
      %v1370 = vadd.f32 %v1177, %v1369
      %v1371 = vpop.f32.mrf.mxu0
      %1372 = vmatprep.mubr.bf16.mxu0 0
      %1373 = vmatmul.mubr.bf16.gmra.mxu0 %v1241
      %v1374 = vpop.f32.mrf.mxu0
      %v1375 = vadd.f32 %v1182, %v1374
      %v1376 = vpop.f32.mrf.mxu0
      %v1377 = vpop.f32.mrf.mxu0
      %v1378 = vadd.f32 %v1185, %v1377
      %v1379 = vpop.f32.mrf.mxu0
      %1380 = vmatprep.mubr.bf16.mxu0 0
      %1381 = vmatmul.mubr.bf16.gmra.mxu0 %v1242
      %v1382 = vpop.f32.mrf.mxu0
      %v1383 = vadd.f32 %v1190, %v1382
      %v1384 = vpop.f32.mrf.mxu0
      %v1385 = vpop.f32.mrf.mxu0
      %v1386 = vadd.f32 %v1193, %v1385
      %v1387 = vpop.f32.mrf.mxu0
      %1388 = vmatprep.mubr.bf16.mxu0 0
      %1389 = vmatmul.mubr.bf16.gmra.mxu0 %v1243
      %v1390 = vpop.f32.mrf.mxu0
      %v1391 = vadd.f32 %v1198, %v1390
      %v1392 = vpop.f32.mrf.mxu0
      %v1393 = vpop.f32.mrf.mxu0
      %v1394 = vadd.f32 %v1201, %v1393
      %v1395 = vpop.f32.mrf.mxu0
      %1396 = vdwg.mxu0
      %v1397 = vld [vmem:[#allocation2] sm:$0xe]
      %v1398 = vsel %vm865, 1, 0
      %v1399 = vsel %vm866, 1, 0
      %vm1400 = vcmp.eq.s32.totalorder %v1398, 1
      %vm1401 = vcmp.eq.s32.totalorder %v1399, 1
      %vm1402 = vmpackc.low %vm1400, %vm1400
      %vm1403 = vmpackc.low %vm1401, %vm1401
      %v1404 = vsel %vm1402, 65537, 0
      %v1405 = vsel %vm1403, 65537, 0
      %vm1406 = vcmask 1044484
      %vm1407 = vmor %vm766, %vm1406
      %v1408 = vrot.slane %v1404, 7
      %v1409 = vrot.slane %v1408, 4
      %v1410 = vrot.slane %v1405, 7
      %v1411 = vsel %vm1407, %v1409, %v1410
      %v1412 = vrot.slane %v1410, 4
      %v1413 = vsel %vm1407, %v1412, %v1408
      %vm1414 = vcmp.ne.s16.totalorder %v1408, 0
      %vm1415 = vcmp.ne.s16.totalorder %v1411, 0
      %vm1416 = vcmp.ne.s16.totalorder %v1413, 0
      %vm1417 = vcmp.ne.s16.totalorder %v1412, 0
      %v1418 = vsel %vm1414, %v1397, 0
      %v1419 = vsel %vm1415, %v868, 0
      %v1420 = vsel %vm1416, %v869, 0
      %v1421 = vsel %vm1415, %v870, 0
      %v1422 = vsel %vm1416, %v871, 0
      %v1423 = vsel %vm1415, %v872, 0
      %v1424 = vsel %vm1416, %v873, 0
      %v1425 = vsel %vm1415, %v874, 0
      %v1426 = vsel %vm1416, %v875, 0
      %v1427 = vsel %vm1415, %v876, 0
      %v1428 = vsel %vm1416, %v877, 0
      %v1429 = vsel %vm1415, %v878, 0
      %v1430 = vsel %vm1416, %v879, 0
      %v1431 = vsel %vm1415, %v880, 0
      %v1432 = vsel %vm1416, %v881, 0
      %v1433 = vsel %vm1415, %v882, 0
      %v1434 = vsel %vm1417, %v921, 0
      %s1435 = scalar_lea.vmem %s4, 128
      %v1436 = vld [vmem:[%s1435] sm:$0xf]
      %v1437 = vld [vmem:[%s1435 + $0x4] sm:$0xf]
      %v1438 = vld [vmem:[%s1435 + $0x8] sm:$0xf]
      %v1439 = vld [vmem:[%s1435 + $0xc] sm:$0xf]
      %v1440 = vld [vmem:[%s1435 + $0x10] sm:$0xf]
      %v1441 = vld [vmem:[%s1435 + $0x14] sm:$0xf]
      %v1442 = vld [vmem:[%s1435 + $0x18] sm:$0xf]
      %v1443 = vld [vmem:[%s1435 + $0x1c] sm:$0xf]
      %v1444 = vld [vmem:[%s1435 + $0x20] sm:$0xf]
      %v1445 = vld [vmem:[%s1435 + $0x24] sm:$0xf]
      %v1446 = vld [vmem:[%s1435 + $0x28] sm:$0xf]
      %v1447 = vld [vmem:[%s1435 + $0x2c] sm:$0xf]
      %v1448 = vld [vmem:[%s1435 + $0x30] sm:$0xf]
      %v1449 = vld [vmem:[%s1435 + $0x34] sm:$0xf]
      %v1450 = vld [vmem:[%s1435 + $0x38] sm:$0xf]
      %v1451 = vld [vmem:[%s1435 + $0x3c] sm:$0xf]
      %v1469 = vunpack.c.l.b16 %v1418
      %v1470 = vunpack.c.l.b16 %v1419
      %v1471 = vunpack.c.l.b16 %v1420
      %v1472 = vunpack.c.l.b16 %v1421
      %v1473 = vunpack.c.l.b16 %v1422
      %v1474 = vunpack.c.l.b16 %v1423
      %v1475 = vunpack.c.l.b16 %v1424
      %v1476 = vunpack.c.l.b16 %v1425
      %v1477 = vunpack.c.l.b16 %v1426
      %v1478 = vunpack.c.l.b16 %v1427
      %v1479 = vunpack.c.l.b16 %v1428
      %v1480 = vunpack.c.l.b16 %v1429
      %v1481 = vunpack.c.l.b16 %v1430
      %v1482 = vunpack.c.l.b16 %v1431
      %v1483 = vunpack.c.l.b16 %v1432
      %v1484 = vunpack.c.l.b16 %v1433
      %v1485 = vunpack.c.l.b16 %v1434
      %v1486 = vpack.c.b16 %v1470, %v1469
      %v1487 = vpack.c.b16 %v1472, %v1471
      %v1488 = vpack.c.b16 %v1474, %v1473
      %v1489 = vpack.c.b16 %v1476, %v1475
      %v1490 = vpack.c.b16 %v1478, %v1477
      %v1491 = vpack.c.b16 %v1480, %v1479
      %v1492 = vpack.c.b16 %v1482, %v1481
      %v1493 = vpack.c.b16 %v1484, %v1483
      %v1494 = vpack.c.b16 %v1485, %v1485
      %vm1495 = vcmask 1046528
      %v1496 = vrot.slane %v1486, 1
      %v1497 = vrot.slane %v1487, 1
      %v1498 = vsel %vm1495, %v1496, %v1497
      %v1499 = vrot.slane %v1488, 1
      %v1500 = vsel %vm1495, %v1497, %v1499
      %v1501 = vrot.slane %v1489, 1
      %v1502 = vsel %vm1495, %v1499, %v1501
      %v1503 = vrot.slane %v1490, 1
      %v1504 = vsel %vm1495, %v1501, %v1503
      %v1505 = vrot.slane %v1491, 1
      %v1506 = vsel %vm1495, %v1503, %v1505
      %v1507 = vrot.slane %v1492, 1
      %v1508 = vsel %vm1495, %v1505, %v1507
      %v1509 = vrot.slane %v1493, 1
      %v1510 = vsel %vm1495, %v1507, %v1509
      %v1511 = vrot.slane %v1494, 1
      %v1512 = vsel %vm1495, %v1509, %v1511
      %v1537 = vunpack.c.l.b16 %v1436
      %v1538 = vunpack.c.l.b16 %v1437
      %v1539 = vunpack.c.l.b16 %v1438
      %v1540 = vunpack.c.l.b16 %v1439
      %v1541 = vunpack.c.l.b16 %v1440
      %v1542 = vunpack.c.l.b16 %v1441
      %v1543 = vunpack.c.l.b16 %v1442
      %v1544 = vunpack.c.l.b16 %v1443
      %v1545 = vunpack.c.l.b16 %v1444
      %v1546 = vunpack.c.l.b16 %v1445
      %v1547 = vunpack.c.l.b16 %v1446
      %v1548 = vunpack.c.l.b16 %v1447
      %v1549 = vunpack.c.l.b16 %v1448
      %v1550 = vunpack.c.l.b16 %v1449
      %v1551 = vunpack.c.l.b16 %v1450
      %v1552 = vunpack.c.l.b16 %v1451
      %v1553 = vpack.c.b16 %v1538, %v1537
      %v1554 = vpack.c.b16 %v1540, %v1539
      %v1555 = vpack.c.b16 %v1542, %v1541
      %v1556 = vpack.c.b16 %v1544, %v1543
      %v1557 = vpack.c.b16 %v1546, %v1545
      %v1558 = vpack.c.b16 %v1548, %v1547
      %v1559 = vpack.c.b16 %v1550, %v1549
      %v1560 = vpack.c.b16 %v1552, %v1551
      %1569 = vmatprep.subr.bf16.mxu0 0
      %1570 = vmatpush1.bf16.msra.mxu0 %v1560
      %1571 = vmatprep.subr.bf16.mxu0 0
      %1572 = vmatpush1.bf16.msra.mxu0 %v1559
      %1573 = vmatprep.subr.bf16.mxu0 0
      %1574 = vmatpush1.bf16.msra.mxu0 %v1558
      %1575 = vmatprep.subr.bf16.mxu0 0
      %1576 = vmatpush1.bf16.msra.mxu0 %v1557
      %1577 = vmatprep.subr.bf16.mxu0 0
      %1578 = vmatpush1.bf16.msra.mxu0 %v1556
      %1579 = vmatprep.subr.bf16.mxu0 0
      %1580 = vmatpush1.bf16.msra.mxu0 %v1555
      %1581 = vmatprep.subr.bf16.mxu0 0
      %1582 = vmatpush1.bf16.msra.mxu0 %v1554
      %1583 = vmatprep.subr.bf16.mxu0 0
      %1584 = vmatpush1.bf16.msra.mxu0 %v1553
      %1585 = vmatprep.subr.bf16.mxu0 0
      %1586 = vmatpush2.bf16.msra.mxu0 0
      %1587 = vmatprep.subr.bf16.mxu0 0
      %1588 = vmatpush2.bf16.msra.mxu0 0
      %1589 = vmatprep.subr.bf16.mxu0 0
      %1590 = vmatpush2.bf16.msra.mxu0 0
      %1591 = vmatprep.subr.bf16.mxu0 0
      %1592 = vmatpush2.bf16.msra.mxu0 0
      %1593 = vmatprep.subr.bf16.mxu0 0
      %1594 = vmatpush2.bf16.msra.mxu0 0
      %1595 = vmatprep.subr.bf16.mxu0 0
      %1596 = vmatpush2.bf16.msra.mxu0 0
      %1597 = vmatprep.subr.bf16.mxu0 0
      %1598 = vmatpush2.bf16.msra.mxu0 0
      %1599 = vmatprep.subr.bf16.mxu0 0
      %1600 = vmatpush2.bf16.msra.mxu0 0
      %1601 = vmatprep.mubr.bf16.mxu0 0
      %1602 = vmatmul.mubr.bf16.gmra.mxu0 %v1498
      %v1603 = vpop.f32.mrf.mxu0
      %v1604 = vadd.f32 0.0, %v1603
      %v1605 = vpop.f32.mrf.mxu0
      %v1606 = vpop.f32.mrf.mxu0
      %v1607 = vadd.f32 0.0, %v1606
      %v1608 = vpop.f32.mrf.mxu0
      %1609 = vmatprep.mubr.bf16.mxu0 0
      %1610 = vmatmul.mubr.bf16.gmra.mxu0 %v1500
      %v1611 = vpop.f32.mrf.mxu0
      %v1612 = vadd.f32 0.0, %v1611
      %v1613 = vpop.f32.mrf.mxu0
      %v1614 = vpop.f32.mrf.mxu0
      %v1615 = vadd.f32 0.0, %v1614
      %v1616 = vpop.f32.mrf.mxu0
      %1617 = vmatprep.mubr.bf16.mxu0 0
      %1618 = vmatmul.mubr.bf16.gmra.mxu0 %v1502
      %v1619 = vpop.f32.mrf.mxu0
      %v1620 = vadd.f32 0.0, %v1619
      %v1621 = vpop.f32.mrf.mxu0
      %v1622 = vpop.f32.mrf.mxu0
      %v1623 = vadd.f32 0.0, %v1622
      %v1624 = vpop.f32.mrf.mxu0
      %1625 = vmatprep.mubr.bf16.mxu0 0
      %1626 = vmatmul.mubr.bf16.gmra.mxu0 %v1504
      %v1627 = vpop.f32.mrf.mxu0
      %v1628 = vadd.f32 0.0, %v1627
      %v1629 = vpop.f32.mrf.mxu0
      %v1630 = vpop.f32.mrf.mxu0
      %v1631 = vadd.f32 0.0, %v1630
      %v1632 = vpop.f32.mrf.mxu0
      %1633 = vmatprep.mubr.bf16.mxu0 0
      %1634 = vmatmul.mubr.bf16.gmra.mxu0 %v1506
      %v1635 = vpop.f32.mrf.mxu0
      %v1636 = vadd.f32 0.0, %v1635
      %v1637 = vpop.f32.mrf.mxu0
      %v1638 = vpop.f32.mrf.mxu0
      %v1639 = vadd.f32 0.0, %v1638
      %v1640 = vpop.f32.mrf.mxu0
      %1641 = vmatprep.mubr.bf16.mxu0 0
      %1642 = vmatmul.mubr.bf16.gmra.mxu0 %v1508
      %v1643 = vpop.f32.mrf.mxu0
      %v1644 = vadd.f32 0.0, %v1643
      %v1645 = vpop.f32.mrf.mxu0
      %v1646 = vpop.f32.mrf.mxu0
      %v1647 = vadd.f32 0.0, %v1646
      %v1648 = vpop.f32.mrf.mxu0
      %1649 = vmatprep.mubr.bf16.mxu0 0
      %1650 = vmatmul.mubr.bf16.gmra.mxu0 %v1510
      %v1651 = vpop.f32.mrf.mxu0
      %v1652 = vadd.f32 0.0, %v1651
      %v1653 = vpop.f32.mrf.mxu0
      %v1654 = vpop.f32.mrf.mxu0
      %v1655 = vadd.f32 0.0, %v1654
      %v1656 = vpop.f32.mrf.mxu0
      %1657 = vmatprep.mubr.bf16.mxu0 0
      %1658 = vmatmul.mubr.bf16.gmra.mxu0 %v1512
      %v1659 = vpop.f32.mrf.mxu0
      %v1660 = vadd.f32 0.0, %v1659
      %v1661 = vpop.f32.mrf.mxu0
      %v1662 = vpop.f32.mrf.mxu0
      %v1663 = vadd.f32 0.0, %v1662
      %v1664 = vpop.f32.mrf.mxu0
      %1665 = vdwg.mxu0
      %v1666 = vadd.f32 %v1335, %v1604
      %v1667 = vadd.f32 %v1338, %v1607
      %v1668 = vadd.f32 %v1343, %v1612
      %v1669 = vadd.f32 %v1346, %v1615
      %v1670 = vadd.f32 %v1351, %v1620
      %v1671 = vadd.f32 %v1354, %v1623
      %v1672 = vadd.f32 %v1359, %v1628
      %v1673 = vadd.f32 %v1362, %v1631
      %v1674 = vadd.f32 %v1367, %v1636
      %v1675 = vadd.f32 %v1370, %v1639
      %v1676 = vadd.f32 %v1375, %v1644
      %v1677 = vadd.f32 %v1378, %v1647
      %v1678 = vadd.f32 %v1383, %v1652
      %v1679 = vadd.f32 %v1386, %v1655
      %v1680 = vadd.f32 %v1391, %v1660
      %v1681 = vadd.f32 %v1394, %v1663
      %v1682 = vld [vmem:[#allocation2 + $0x8] sm:$0xf]
      %v1683 = vld [vmem:[#allocation2 + $0xc] sm:$0xf]
      %v1684 = vld [vmem:[#allocation2 + $0x10] sm:$0xf]
      %v1685 = vld [vmem:[#allocation2 + $0x14] sm:$0xf]
      %v1686 = vld [vmem:[#allocation2 + $0x18] sm:$0xf]
      %v1687 = vld [vmem:[#allocation2 + $0x1c] sm:$0xf]
      %v1688 = vld [vmem:[#allocation2 + $0x20] sm:$0xf]
      %v1689 = vld [vmem:[#allocation2 + $0x24] sm:$0xf]
      %v1690 = vld [vmem:[#allocation2 + $0x28] sm:$0xf]
      %v1691 = vld [vmem:[#allocation2 + $0x2c] sm:$0xf]
      %v1692 = vld [vmem:[#allocation2 + $0x30] sm:$0xf]
      %v1693 = vld [vmem:[#allocation2 + $0x34] sm:$0xf]
      %v1694 = vld [vmem:[#allocation2 + $0x38] sm:$0xf]
      %v1695 = vld [vmem:[#allocation2 + $0x3c] sm:$0xf]
      %v1696 = vld [vmem:[#allocation2 + $0x40] sm:$0xf]
      %v1697 = vld [vmem:[#allocation2 + $0x44] sm:$0xf]
      %v1698 = vsel %vm887, %v1682, 0
      %v1699 = vsel %vm888, %v1683, 0
      %v1700 = vsel %vm887, %v1684, 0
      %v1701 = vsel %vm888, %v1685, 0
      %v1702 = vsel %vm887, %v1686, 0
      %v1703 = vsel %vm888, %v1687, 0
      %v1704 = vsel %vm887, %v1688, 0
      %v1705 = vsel %vm888, %v1689, 0
      %v1706 = vsel %vm887, %v1690, 0
      %v1707 = vsel %vm888, %v1691, 0
      %v1708 = vsel %vm887, %v1692, 0
      %v1709 = vsel %vm888, %v1693, 0
      %v1710 = vsel %vm887, %v1694, 0
      %v1711 = vsel %vm888, %v1695, 0
      %v1712 = vsel %vm887, %v1696, 0
      %v1713 = vsel %vm888, %v1697, 0
      %s1714 = scalar_lea.vmem %s4, 192
      %v1715 = vld [vmem:[%s1714] sm:$0xf]
      %v1716 = vld [vmem:[%s1714 + $0x4] sm:$0xf]
      %v1717 = vld [vmem:[%s1714 + $0x8] sm:$0xf]
      %v1718 = vld [vmem:[%s1714 + $0xc] sm:$0xf]
      %v1719 = vld [vmem:[%s1714 + $0x10] sm:$0xf]
      %v1720 = vld [vmem:[%s1714 + $0x14] sm:$0xf]
      %v1721 = vld [vmem:[%s1714 + $0x18] sm:$0xf]
      %v1722 = vld [vmem:[%s1714 + $0x1c] sm:$0xf]
      %v1723 = vld [vmem:[%s1714 + $0x20] sm:$0xf]
      %v1724 = vld [vmem:[%s1714 + $0x24] sm:$0xf]
      %v1725 = vld [vmem:[%s1714 + $0x28] sm:$0xf]
      %v1726 = vld [vmem:[%s1714 + $0x2c] sm:$0xf]
      %v1727 = vld [vmem:[%s1714 + $0x30] sm:$0xf]
      %v1728 = vld [vmem:[%s1714 + $0x34] sm:$0xf]
      %v1729 = vld [vmem:[%s1714 + $0x38] sm:$0xf]
      %v1730 = vld [vmem:[%s1714 + $0x3c] sm:$0xf]
      %v1747 = vunpack.c.l.b16 %v1698
      %v1748 = vunpack.c.l.b16 %v1699
      %v1749 = vunpack.c.l.b16 %v1700
      %v1750 = vunpack.c.l.b16 %v1701
      %v1751 = vunpack.c.l.b16 %v1702
      %v1752 = vunpack.c.l.b16 %v1703
      %v1753 = vunpack.c.l.b16 %v1704
      %v1754 = vunpack.c.l.b16 %v1705
      %v1755 = vunpack.c.l.b16 %v1706
      %v1756 = vunpack.c.l.b16 %v1707
      %v1757 = vunpack.c.l.b16 %v1708
      %v1758 = vunpack.c.l.b16 %v1709
      %v1759 = vunpack.c.l.b16 %v1710
      %v1760 = vunpack.c.l.b16 %v1711
      %v1761 = vunpack.c.l.b16 %v1712
      %v1762 = vunpack.c.l.b16 %v1713
      %v1763 = vpack.c.b16 %v1748, %v1747
      %v1764 = vpack.c.b16 %v1750, %v1749
      %v1765 = vpack.c.b16 %v1752, %v1751
      %v1766 = vpack.c.b16 %v1754, %v1753
      %v1767 = vpack.c.b16 %v1756, %v1755
      %v1768 = vpack.c.b16 %v1758, %v1757
      %v1769 = vpack.c.b16 %v1760, %v1759
      %v1770 = vpack.c.b16 %v1762, %v1761
      %v1795 = vunpack.c.l.b16 %v1715
      %v1796 = vunpack.c.l.b16 %v1716
      %v1797 = vunpack.c.l.b16 %v1717
      %v1798 = vunpack.c.l.b16 %v1718
      %v1799 = vunpack.c.l.b16 %v1719
      %v1800 = vunpack.c.l.b16 %v1720
      %v1801 = vunpack.c.l.b16 %v1721
      %v1802 = vunpack.c.l.b16 %v1722
      %v1803 = vunpack.c.l.b16 %v1723
      %v1804 = vunpack.c.l.b16 %v1724
      %v1805 = vunpack.c.l.b16 %v1725
      %v1806 = vunpack.c.l.b16 %v1726
      %v1807 = vunpack.c.l.b16 %v1727
      %v1808 = vunpack.c.l.b16 %v1728
      %v1809 = vunpack.c.l.b16 %v1729
      %v1810 = vunpack.c.l.b16 %v1730
      %v1811 = vpack.c.b16 %v1796, %v1795
      %v1812 = vpack.c.b16 %v1798, %v1797
      %v1813 = vpack.c.b16 %v1800, %v1799
      %v1814 = vpack.c.b16 %v1802, %v1801
      %v1815 = vpack.c.b16 %v1804, %v1803
      %v1816 = vpack.c.b16 %v1806, %v1805
      %v1817 = vpack.c.b16 %v1808, %v1807
      %v1818 = vpack.c.b16 %v1810, %v1809
      %1827 = vmatprep.subr.bf16.mxu0 0
      %1828 = vmatpush1.bf16.msra.mxu0 %v1818
      %1829 = vmatprep.subr.bf16.mxu0 0
      %1830 = vmatpush1.bf16.msra.mxu0 %v1817
      %1831 = vmatprep.subr.bf16.mxu0 0
      %1832 = vmatpush1.bf16.msra.mxu0 %v1816
      %1833 = vmatprep.subr.bf16.mxu0 0
      %1834 = vmatpush1.bf16.msra.mxu0 %v1815
      %1835 = vmatprep.subr.bf16.mxu0 0
      %1836 = vmatpush1.bf16.msra.mxu0 %v1814
      %1837 = vmatprep.subr.bf16.mxu0 0
      %1838 = vmatpush1.bf16.msra.mxu0 %v1813
      %1839 = vmatprep.subr.bf16.mxu0 0
      %1840 = vmatpush1.bf16.msra.mxu0 %v1812
      %1841 = vmatprep.subr.bf16.mxu0 0
      %1842 = vmatpush1.bf16.msra.mxu0 %v1811
      %1843 = vmatprep.subr.bf16.mxu0 0
      %1844 = vmatpush2.bf16.msra.mxu0 0
      %1845 = vmatprep.subr.bf16.mxu0 0
      %1846 = vmatpush2.bf16.msra.mxu0 0
      %1847 = vmatprep.subr.bf16.mxu0 0
      %1848 = vmatpush2.bf16.msra.mxu0 0
      %1849 = vmatprep.subr.bf16.mxu0 0
      %1850 = vmatpush2.bf16.msra.mxu0 0
      %1851 = vmatprep.subr.bf16.mxu0 0
      %1852 = vmatpush2.bf16.msra.mxu0 0
      %1853 = vmatprep.subr.bf16.mxu0 0
      %1854 = vmatpush2.bf16.msra.mxu0 0
      %1855 = vmatprep.subr.bf16.mxu0 0
      %1856 = vmatpush2.bf16.msra.mxu0 0
      %1857 = vmatprep.subr.bf16.mxu0 0
      %1858 = vmatpush2.bf16.msra.mxu0 0
      %1859 = vmatprep.mubr.bf16.mxu0 0
      %1860 = vmatmul.mubr.bf16.gmra.mxu0 %v1763
      %v1861 = vpop.f32.mrf.mxu0
      %v1862 = vadd.f32 0.0, %v1861
      %v1863 = vpop.f32.mrf.mxu0
      %v1864 = vpop.f32.mrf.mxu0
      %v1865 = vadd.f32 0.0, %v1864
      %v1866 = vpop.f32.mrf.mxu0
      %1867 = vmatprep.mubr.bf16.mxu0 0
      %1868 = vmatmul.mubr.bf16.gmra.mxu0 %v1764
      %v1869 = vpop.f32.mrf.mxu0
      %v1870 = vadd.f32 0.0, %v1869
      %v1871 = vpop.f32.mrf.mxu0
      %v1872 = vpop.f32.mrf.mxu0
      %v1873 = vadd.f32 0.0, %v1872
      %v1874 = vpop.f32.mrf.mxu0
      %1875 = vmatprep.mubr.bf16.mxu0 0
      %1876 = vmatmul.mubr.bf16.gmra.mxu0 %v1765
      %v1877 = vpop.f32.mrf.mxu0
      %v1878 = vadd.f32 0.0, %v1877
      %v1879 = vpop.f32.mrf.mxu0
      %v1880 = vpop.f32.mrf.mxu0
      %v1881 = vadd.f32 0.0, %v1880
      %v1882 = vpop.f32.mrf.mxu0
      %1883 = vmatprep.mubr.bf16.mxu0 0
      %1884 = vmatmul.mubr.bf16.gmra.mxu0 %v1766
      %v1885 = vpop.f32.mrf.mxu0
      %v1886 = vadd.f32 0.0, %v1885
      %v1887 = vpop.f32.mrf.mxu0
      %v1888 = vpop.f32.mrf.mxu0
      %v1889 = vadd.f32 0.0, %v1888
      %v1890 = vpop.f32.mrf.mxu0
      %1891 = vmatprep.mubr.bf16.mxu0 0
      %1892 = vmatmul.mubr.bf16.gmra.mxu0 %v1767
      %v1893 = vpop.f32.mrf.mxu0
      %v1894 = vadd.f32 0.0, %v1893
      %v1895 = vpop.f32.mrf.mxu0
      %v1896 = vpop.f32.mrf.mxu0
      %v1897 = vadd.f32 0.0, %v1896
      %v1898 = vpop.f32.mrf.mxu0
      %1899 = vmatprep.mubr.bf16.mxu0 0
      %1900 = vmatmul.mubr.bf16.gmra.mxu0 %v1768
      %v1901 = vpop.f32.mrf.mxu0
      %v1902 = vadd.f32 0.0, %v1901
      %v1903 = vpop.f32.mrf.mxu0
      %v1904 = vpop.f32.mrf.mxu0
      %v1905 = vadd.f32 0.0, %v1904
      %v1906 = vpop.f32.mrf.mxu0
      %1907 = vmatprep.mubr.bf16.mxu0 0
      %1908 = vmatmul.mubr.bf16.gmra.mxu0 %v1769
      %v1909 = vpop.f32.mrf.mxu0
      %v1910 = vadd.f32 0.0, %v1909
      %v1911 = vpop.f32.mrf.mxu0
      %v1912 = vpop.f32.mrf.mxu0
      %v1913 = vadd.f32 0.0, %v1912
      %v1914 = vpop.f32.mrf.mxu0
      %1915 = vmatprep.mubr.bf16.mxu0 0
      %1916 = vmatmul.mubr.bf16.gmra.mxu0 %v1770
      %v1917 = vpop.f32.mrf.mxu0
      %v1918 = vadd.f32 0.0, %v1917
      %v1919 = vpop.f32.mrf.mxu0
      %v1920 = vpop.f32.mrf.mxu0
      %v1921 = vadd.f32 0.0, %v1920
      %v1922 = vpop.f32.mrf.mxu0
      %1923 = vdwg.mxu0
      %v1924 = vadd.f32 %v1666, %v1862
      %v1925 = vadd.f32 %v1667, %v1865
      %v1926 = vadd.f32 %v1668, %v1870
      %v1927 = vadd.f32 %v1669, %v1873
      %v1928 = vadd.f32 %v1670, %v1878
      %v1929 = vadd.f32 %v1671, %v1881
      %v1930 = vadd.f32 %v1672, %v1886
      %v1931 = vadd.f32 %v1673, %v1889
      %v1932 = vadd.f32 %v1674, %v1894
      %v1933 = vadd.f32 %v1675, %v1897
      %v1934 = vadd.f32 %v1676, %v1902
      %v1935 = vadd.f32 %v1677, %v1905
      %v1936 = vadd.f32 %v1678, %v1910
      %v1937 = vadd.f32 %v1679, %v1913
      %v1938 = vadd.f32 %v1680, %v1918
      %v1939 = vadd.f32 %v1681, %v1921
      %v1940 = vld [vmem:[#allocation2 + $0x8] sm:$0xf]
      %v1941 = vld [vmem:[#allocation2 + $0xc] sm:$0xf]
      %v1942 = vld [vmem:[#allocation2 + $0x10] sm:$0xf]
      %v1943 = vld [vmem:[#allocation2 + $0x14] sm:$0xf]
      %v1944 = vld [vmem:[#allocation2 + $0x18] sm:$0xf]
      %v1945 = vld [vmem:[#allocation2 + $0x1c] sm:$0xf]
      %v1946 = vld [vmem:[#allocation2 + $0x20] sm:$0xf]
      %v1947 = vld [vmem:[#allocation2 + $0x24] sm:$0xf]
      %v1948 = vld [vmem:[#allocation2 + $0x28] sm:$0xf]
      %v1949 = vld [vmem:[#allocation2 + $0x2c] sm:$0xf]
      %v1950 = vld [vmem:[#allocation2 + $0x30] sm:$0xf]
      %v1951 = vld [vmem:[#allocation2 + $0x34] sm:$0xf]
      %v1952 = vld [vmem:[#allocation2 + $0x38] sm:$0xf]
      %v1953 = vld [vmem:[#allocation2 + $0x3c] sm:$0xf]
      %v1954 = vld [vmem:[#allocation2 + $0x40] sm:$0xf]
      %v1955 = vld [vmem:[#allocation2 + $0x44] sm:$0xf]
      %v1956 = vld [vmem:[#allocation2 + $0x48] sm:$0x1]
      %s1957 = scalar_lea.vmem %s4, 256
      %v1958 = vld [vmem:[%s1957] sm:$0xf]
      %v1959 = vld [vmem:[%s1957 + $0x4] sm:$0xf]
      %v1960 = vld [vmem:[%s1957 + $0x8] sm:$0xf]
      %v1961 = vld [vmem:[%s1957 + $0xc] sm:$0xf]
      %v1962 = vld [vmem:[%s1957 + $0x10] sm:$0xf]
      %v1963 = vld [vmem:[%s1957 + $0x14] sm:$0xf]
      %v1964 = vld [vmem:[%s1957 + $0x18] sm:$0xf]
      %v1965 = vld [vmem:[%s1957 + $0x1c] sm:$0xf]
      %v1966 = vld [vmem:[%s1957 + $0x20] sm:$0xf]
      %v1967 = vld [vmem:[%s1957 + $0x24] sm:$0xf]
      %v1968 = vld [vmem:[%s1957 + $0x28] sm:$0xf]
      %v1969 = vld [vmem:[%s1957 + $0x2c] sm:$0xf]
      %v1970 = vld [vmem:[%s1957 + $0x30] sm:$0xf]
      %v1971 = vld [vmem:[%s1957 + $0x34] sm:$0xf]
      %v1972 = vld [vmem:[%s1957 + $0x38] sm:$0xf]
      %v1973 = vld [vmem:[%s1957 + $0x3c] sm:$0xf]
      %v1991 = vunpack.c.l.b16 %v1940
      %v1992 = vunpack.c.l.b16 %v1941
      %v1993 = vunpack.c.l.b16 %v1942
      %v1994 = vunpack.c.l.b16 %v1943
      %v1995 = vunpack.c.l.b16 %v1944
      %v1996 = vunpack.c.l.b16 %v1945
      %v1997 = vunpack.c.l.b16 %v1946
      %v1998 = vunpack.c.l.b16 %v1947
      %v1999 = vunpack.c.l.b16 %v1948
      %v2000 = vunpack.c.l.b16 %v1949
      %v2001 = vunpack.c.l.b16 %v1950
      %v2002 = vunpack.c.l.b16 %v1951
      %v2003 = vunpack.c.l.b16 %v1952
      %v2004 = vunpack.c.l.b16 %v1953
      %v2005 = vunpack.c.l.b16 %v1954
      %v2006 = vunpack.c.l.b16 %v1955
      %v2007 = vunpack.c.l.b16 %v1956
      %v2008 = vpack.c.b16 %v1992, %v1991
      %v2009 = vpack.c.b16 %v1994, %v1993
      %v2010 = vpack.c.b16 %v1996, %v1995
      %v2011 = vpack.c.b16 %v1998, %v1997
      %v2012 = vpack.c.b16 %v2000, %v1999
      %v2013 = vpack.c.b16 %v2002, %v2001
      %v2014 = vpack.c.b16 %v2004, %v2003
      %v2015 = vpack.c.b16 %v2006, %v2005
      %v2016 = vpack.c.b16 %v2007, %v2007
      %v2018 = vshrl.u32 %v2008, 16
      %v2020 = vshll.u32 %v2008, 16
      %v2022 = vrot.slane %v2020, 1
      %v2023 = vor.u32 %v2018, %v2022
      %v2025 = vshll.u32 %v2009, 16
      %v2027 = vrot.slane %v2025, 1
      %v2028 = vsel %vm982, %v2023, %v2027
      %v2029 = vshrl.u32 %v2009, 16
      %v2031 = vor.u32 %v2029, %v2027
      %v2033 = vshll.u32 %v2010, 16
      %v2035 = vrot.slane %v2033, 1
      %v2036 = vsel %vm982, %v2031, %v2035
      %v2037 = vshrl.u32 %v2010, 16
      %v2039 = vor.u32 %v2037, %v2035
      %v2041 = vshll.u32 %v2011, 16
      %v2043 = vrot.slane %v2041, 1
      %v2044 = vsel %vm982, %v2039, %v2043
      %v2045 = vshrl.u32 %v2011, 16
      %v2047 = vor.u32 %v2045, %v2043
      %v2049 = vshll.u32 %v2012, 16
      %v2051 = vrot.slane %v2049, 1
      %v2052 = vsel %vm982, %v2047, %v2051
      %v2053 = vshrl.u32 %v2012, 16
      %v2055 = vor.u32 %v2053, %v2051
      %v2057 = vshll.u32 %v2013, 16
      %v2059 = vrot.slane %v2057, 1
      %v2060 = vsel %vm982, %v2055, %v2059
      %v2061 = vshrl.u32 %v2013, 16
      %v2063 = vor.u32 %v2061, %v2059
      %v2065 = vshll.u32 %v2014, 16
      %v2067 = vrot.slane %v2065, 1
      %v2068 = vsel %vm982, %v2063, %v2067
      %v2069 = vshrl.u32 %v2014, 16
      %v2071 = vor.u32 %v2069, %v2067
      %v2073 = vshll.u32 %v2015, 16
      %v2075 = vrot.slane %v2073, 1
      %v2076 = vsel %vm982, %v2071, %v2075
      %v2077 = vshrl.u32 %v2015, 16
      %v2079 = vor.u32 %v2077, %v2075
      %v2081 = vshll.u32 %v2016, 16
      %v2083 = vrot.slane %v2081, 1
      %v2084 = vsel %vm982, %v2079, %v2083
      %v2109 = vunpack.c.l.b16 %v1958
      %v2110 = vunpack.c.l.b16 %v1959
      %v2111 = vunpack.c.l.b16 %v1960
      %v2112 = vunpack.c.l.b16 %v1961
      %v2113 = vunpack.c.l.b16 %v1962
      %v2114 = vunpack.c.l.b16 %v1963
      %v2115 = vunpack.c.l.b16 %v1964
      %v2116 = vunpack.c.l.b16 %v1965
      %v2117 = vunpack.c.l.b16 %v1966
      %v2118 = vunpack.c.l.b16 %v1967
      %v2119 = vunpack.c.l.b16 %v1968
      %v2120 = vunpack.c.l.b16 %v1969
      %v2121 = vunpack.c.l.b16 %v1970
      %v2122 = vunpack.c.l.b16 %v1971
      %v2123 = vunpack.c.l.b16 %v1972
      %v2124 = vunpack.c.l.b16 %v1973
      %v2125 = vpack.c.b16 %v2110, %v2109
      %v2126 = vpack.c.b16 %v2112, %v2111
      %v2127 = vpack.c.b16 %v2114, %v2113
      %v2128 = vpack.c.b16 %v2116, %v2115
      %v2129 = vpack.c.b16 %v2118, %v2117
      %v2130 = vpack.c.b16 %v2120, %v2119
      %v2131 = vpack.c.b16 %v2122, %v2121
      %v2132 = vpack.c.b16 %v2124, %v2123
      %2141 = vmatprep.subr.bf16.mxu0 0
      %2142 = vmatpush1.bf16.msra.mxu0 %v2132
      %2143 = vmatprep.subr.bf16.mxu0 0
      %2144 = vmatpush1.bf16.msra.mxu0 %v2131
      %2145 = vmatprep.subr.bf16.mxu0 0
      %2146 = vmatpush1.bf16.msra.mxu0 %v2130
      %2147 = vmatprep.subr.bf16.mxu0 0
      %2148 = vmatpush1.bf16.msra.mxu0 %v2129
      %2149 = vmatprep.subr.bf16.mxu0 0
      %2150 = vmatpush1.bf16.msra.mxu0 %v2128
      %2151 = vmatprep.subr.bf16.mxu0 0
      %2152 = vmatpush1.bf16.msra.mxu0 %v2127
      %2153 = vmatprep.subr.bf16.mxu0 0
      %2154 = vmatpush1.bf16.msra.mxu0 %v2126
      %2155 = vmatprep.subr.bf16.mxu0 0
      %2156 = vmatpush1.bf16.msra.mxu0 %v2125
      %2157 = vmatprep.subr.bf16.mxu0 0
      %2158 = vmatpush2.bf16.msra.mxu0 0
      %2159 = vmatprep.subr.bf16.mxu0 0
      %2160 = vmatpush2.bf16.msra.mxu0 0
      %2161 = vmatprep.subr.bf16.mxu0 0
      %2162 = vmatpush2.bf16.msra.mxu0 0
      %2163 = vmatprep.subr.bf16.mxu0 0
      %2164 = vmatpush2.bf16.msra.mxu0 0
      %2165 = vmatprep.subr.bf16.mxu0 0
      %2166 = vmatpush2.bf16.msra.mxu0 0
      %2167 = vmatprep.subr.bf16.mxu0 0
      %2168 = vmatpush2.bf16.msra.mxu0 0
      %2169 = vmatprep.subr.bf16.mxu0 0
      %2170 = vmatpush2.bf16.msra.mxu0 0
      %2171 = vmatprep.subr.bf16.mxu0 0
      %2172 = vmatpush2.bf16.msra.mxu0 0
      %2173 = vmatprep.mubr.bf16.mxu0 0
      %2174 = vmatmul.mubr.bf16.gmra.mxu0 %v2028
      %v2175 = vpop.f32.mrf.mxu0
      %v2176 = vadd.f32 0.0, %v2175
      %v2177 = vpop.f32.mrf.mxu0
      %v2178 = vpop.f32.mrf.mxu0
      %v2179 = vadd.f32 0.0, %v2178
      %v2180 = vpop.f32.mrf.mxu0
      %2181 = vmatprep.mubr.bf16.mxu0 0
      %2182 = vmatmul.mubr.bf16.gmra.mxu0 %v2036
      %v2183 = vpop.f32.mrf.mxu0
      %v2184 = vadd.f32 0.0, %v2183
      %v2185 = vpop.f32.mrf.mxu0
      %v2186 = vpop.f32.mrf.mxu0
      %v2187 = vadd.f32 0.0, %v2186
      %v2188 = vpop.f32.mrf.mxu0
      %2189 = vmatprep.mubr.bf16.mxu0 0
      %2190 = vmatmul.mubr.bf16.gmra.mxu0 %v2044
      %v2191 = vpop.f32.mrf.mxu0
      %v2192 = vadd.f32 0.0, %v2191
      %v2193 = vpop.f32.mrf.mxu0
      %v2194 = vpop.f32.mrf.mxu0
      %v2195 = vadd.f32 0.0, %v2194
      %v2196 = vpop.f32.mrf.mxu0
      %2197 = vmatprep.mubr.bf16.mxu0 0
      %2198 = vmatmul.mubr.bf16.gmra.mxu0 %v2052
      %v2199 = vpop.f32.mrf.mxu0
      %v2200 = vadd.f32 0.0, %v2199
      %v2201 = vpop.f32.mrf.mxu0
      %v2202 = vpop.f32.mrf.mxu0
      %v2203 = vadd.f32 0.0, %v2202
      %v2204 = vpop.f32.mrf.mxu0
      %2205 = vmatprep.mubr.bf16.mxu0 0
      %2206 = vmatmul.mubr.bf16.gmra.mxu0 %v2060
      %v2207 = vpop.f32.mrf.mxu0
      %v2208 = vadd.f32 0.0, %v2207
      %v2209 = vpop.f32.mrf.mxu0
      %v2210 = vpop.f32.mrf.mxu0
      %v2211 = vadd.f32 0.0, %v2210
      %v2212 = vpop.f32.mrf.mxu0
      %2213 = vmatprep.mubr.bf16.mxu0 0
      %2214 = vmatmul.mubr.bf16.gmra.mxu0 %v2068
      %v2215 = vpop.f32.mrf.mxu0
      %v2216 = vadd.f32 0.0, %v2215
      %v2217 = vpop.f32.mrf.mxu0
      %v2218 = vpop.f32.mrf.mxu0
      %v2219 = vadd.f32 0.0, %v2218
      %v2220 = vpop.f32.mrf.mxu0
      %2221 = vmatprep.mubr.bf16.mxu0 0
      %2222 = vmatmul.mubr.bf16.gmra.mxu0 %v2076
      %v2223 = vpop.f32.mrf.mxu0
      %v2224 = vadd.f32 0.0, %v2223
      %v2225 = vpop.f32.mrf.mxu0
      %v2226 = vpop.f32.mrf.mxu0
      %v2227 = vadd.f32 0.0, %v2226
      %v2228 = vpop.f32.mrf.mxu0
      %2229 = vmatprep.mubr.bf16.mxu0 0
      %2230 = vmatmul.mubr.bf16.gmra.mxu0 %v2084
      %v2231 = vpop.f32.mrf.mxu0
      %v2232 = vadd.f32 0.0, %v2231
      %v2233 = vpop.f32.mrf.mxu0
      %v2234 = vpop.f32.mrf.mxu0
      %v2235 = vadd.f32 0.0, %v2234
      %v2236 = vpop.f32.mrf.mxu0
      %2237 = vdwg.mxu0
      %v2238 = vadd.f32 %v1924, %v2176
      %v2239 = vadd.f32 %v1925, %v2179
      %v2240 = vadd.f32 %v1926, %v2184
      %v2241 = vadd.f32 %v1927, %v2187
      %v2242 = vadd.f32 %v1928, %v2192
      %v2243 = vadd.f32 %v1929, %v2195
      %v2244 = vadd.f32 %v1930, %v2200
      %v2245 = vadd.f32 %v1931, %v2203
      %v2246 = vadd.f32 %v1932, %v2208
      %v2247 = vadd.f32 %v1933, %v2211
      %v2248 = vadd.f32 %v1934, %v2216
      %v2249 = vadd.f32 %v1935, %v2219
      %v2250 = vadd.f32 %v1936, %v2224
      %v2251 = vadd.f32 %v1937, %v2227
      %v2252 = vadd.f32 %v1938, %v2232
      %v2253 = vadd.f32 %v1939, %v2235
      %v2254 = vld [vmem:[#allocation2 + $0x8] sm:$0xe]
      %v2255 = vsel %vm1414, %v2254, 0
      %v2256 = vsel %vm1415, %v1941, 0
      %v2257 = vsel %vm1416, %v1942, 0
      %v2258 = vsel %vm1415, %v1943, 0
      %v2259 = vsel %vm1416, %v1944, 0
      %v2260 = vsel %vm1415, %v1945, 0
      %v2261 = vsel %vm1416, %v1946, 0
      %v2262 = vsel %vm1415, %v1947, 0
      %v2263 = vsel %vm1416, %v1948, 0
      %v2264 = vsel %vm1415, %v1949, 0
      %v2265 = vsel %vm1416, %v1950, 0
      %v2266 = vsel %vm1415, %v1951, 0
      %v2267 = vsel %vm1416, %v1952, 0
      %v2268 = vsel %vm1415, %v1953, 0
      %v2269 = vsel %vm1416, %v1954, 0
      %v2270 = vsel %vm1415, %v1955, 0
      %v2271 = vsel %vm1417, %v1956, 0
      %s2272 = scalar_lea.vmem %s4, 320
      %v2273 = vld [vmem:[%s2272] sm:$0xf]
      %v2274 = vld [vmem:[%s2272 + $0x4] sm:$0xf]
      %v2275 = vld [vmem:[%s2272 + $0x8] sm:$0xf]
      %v2276 = vld [vmem:[%s2272 + $0xc] sm:$0xf]
      %v2277 = vld [vmem:[%s2272 + $0x10] sm:$0xf]
      %v2278 = vld [vmem:[%s2272 + $0x14] sm:$0xf]
      %v2279 = vld [vmem:[%s2272 + $0x18] sm:$0xf]
      %v2280 = vld [vmem:[%s2272 + $0x1c] sm:$0xf]
      %v2281 = vld [vmem:[%s2272 + $0x20] sm:$0xf]
      %v2282 = vld [vmem:[%s2272 + $0x24] sm:$0xf]
      %v2283 = vld [vmem:[%s2272 + $0x28] sm:$0xf]
      %v2284 = vld [vmem:[%s2272 + $0x2c] sm:$0xf]
      %v2285 = vld [vmem:[%s2272 + $0x30] sm:$0xf]
      %v2286 = vld [vmem:[%s2272 + $0x34] sm:$0xf]
      %v2287 = vld [vmem:[%s2272 + $0x38] sm:$0xf]
      %v2288 = vld [vmem:[%s2272 + $0x3c] sm:$0xf]
      %v2306 = vunpack.c.l.b16 %v2255
      %v2307 = vunpack.c.l.b16 %v2256
      %v2308 = vunpack.c.l.b16 %v2257
      %v2309 = vunpack.c.l.b16 %v2258
      %v2310 = vunpack.c.l.b16 %v2259
      %v2311 = vunpack.c.l.b16 %v2260
      %v2312 = vunpack.c.l.b16 %v2261
      %v2313 = vunpack.c.l.b16 %v2262
      %v2314 = vunpack.c.l.b16 %v2263
      %v2315 = vunpack.c.l.b16 %v2264
      %v2316 = vunpack.c.l.b16 %v2265
      %v2317 = vunpack.c.l.b16 %v2266
      %v2318 = vunpack.c.l.b16 %v2267
      %v2319 = vunpack.c.l.b16 %v2268
      %v2320 = vunpack.c.l.b16 %v2269
      %v2321 = vunpack.c.l.b16 %v2270
      %v2322 = vunpack.c.l.b16 %v2271
      %v2323 = vpack.c.b16 %v2307, %v2306
      %v2324 = vpack.c.b16 %v2309, %v2308
      %v2325 = vpack.c.b16 %v2311, %v2310
      %v2326 = vpack.c.b16 %v2313, %v2312
      %v2327 = vpack.c.b16 %v2315, %v2314
      %v2328 = vpack.c.b16 %v2317, %v2316
      %v2329 = vpack.c.b16 %v2319, %v2318
      %v2330 = vpack.c.b16 %v2321, %v2320
      %v2331 = vpack.c.b16 %v2322, %v2322
      %v2332 = vrot.slane %v2323, 1
      %v2333 = vrot.slane %v2324, 1
      %v2334 = vsel %vm1495, %v2332, %v2333
      %v2335 = vrot.slane %v2325, 1
      %v2336 = vsel %vm1495, %v2333, %v2335
      %v2337 = vrot.slane %v2326, 1
      %v2338 = vsel %vm1495, %v2335, %v2337
      %v2339 = vrot.slane %v2327, 1
      %v2340 = vsel %vm1495, %v2337, %v2339
      %v2341 = vrot.slane %v2328, 1
      %v2342 = vsel %vm1495, %v2339, %v2341
      %v2343 = vrot.slane %v2329, 1
      %v2344 = vsel %vm1495, %v2341, %v2343
      %v2345 = vrot.slane %v2330, 1
      %v2346 = vsel %vm1495, %v2343, %v2345
      %v2347 = vrot.slane %v2331, 1
      %v2348 = vsel %vm1495, %v2345, %v2347
      %v2373 = vunpack.c.l.b16 %v2273
      %v2374 = vunpack.c.l.b16 %v2274
      %v2375 = vunpack.c.l.b16 %v2275
      %v2376 = vunpack.c.l.b16 %v2276
      %v2377 = vunpack.c.l.b16 %v2277
      %v2378 = vunpack.c.l.b16 %v2278
      %v2379 = vunpack.c.l.b16 %v2279
      %v2380 = vunpack.c.l.b16 %v2280
      %v2381 = vunpack.c.l.b16 %v2281
      %v2382 = vunpack.c.l.b16 %v2282
      %v2383 = vunpack.c.l.b16 %v2283
      %v2384 = vunpack.c.l.b16 %v2284
      %v2385 = vunpack.c.l.b16 %v2285
      %v2386 = vunpack.c.l.b16 %v2286
      %v2387 = vunpack.c.l.b16 %v2287
      %v2388 = vunpack.c.l.b16 %v2288
      %v2389 = vpack.c.b16 %v2374, %v2373
      %v2390 = vpack.c.b16 %v2376, %v2375
      %v2391 = vpack.c.b16 %v2378, %v2377
      %v2392 = vpack.c.b16 %v2380, %v2379
      %v2393 = vpack.c.b16 %v2382, %v2381
      %v2394 = vpack.c.b16 %v2384, %v2383
      %v2395 = vpack.c.b16 %v2386, %v2385
      %v2396 = vpack.c.b16 %v2388, %v2387
      %2405 = vmatprep.subr.bf16.mxu0 0
      %2406 = vmatpush1.bf16.msra.mxu0 %v2396
      %2407 = vmatprep.subr.bf16.mxu0 0
      %2408 = vmatpush1.bf16.msra.mxu0 %v2395
      %2409 = vmatprep.subr.bf16.mxu0 0
      %2410 = vmatpush1.bf16.msra.mxu0 %v2394
      %2411 = vmatprep.subr.bf16.mxu0 0
      %2412 = vmatpush1.bf16.msra.mxu0 %v2393
      %2413 = vmatprep.subr.bf16.mxu0 0
      %2414 = vmatpush1.bf16.msra.mxu0 %v2392
      %2415 = vmatprep.subr.bf16.mxu0 0
      %2416 = vmatpush1.bf16.msra.mxu0 %v2391
      %2417 = vmatprep.subr.bf16.mxu0 0
      %2418 = vmatpush1.bf16.msra.mxu0 %v2390
      %2419 = vmatprep.subr.bf16.mxu0 0
      %2420 = vmatpush1.bf16.msra.mxu0 %v2389
      %2421 = vmatprep.subr.bf16.mxu0 0
      %2422 = vmatpush2.bf16.msra.mxu0 0
      %2423 = vmatprep.subr.bf16.mxu0 0
      %2424 = vmatpush2.bf16.msra.mxu0 0
      %2425 = vmatprep.subr.bf16.mxu0 0
      %2426 = vmatpush2.bf16.msra.mxu0 0
      %2427 = vmatprep.subr.bf16.mxu0 0
      %2428 = vmatpush2.bf16.msra.mxu0 0
      %2429 = vmatprep.subr.bf16.mxu0 0
      %2430 = vmatpush2.bf16.msra.mxu0 0
      %2431 = vmatprep.subr.bf16.mxu0 0
      %2432 = vmatpush2.bf16.msra.mxu0 0
      %2433 = vmatprep.subr.bf16.mxu0 0
      %2434 = vmatpush2.bf16.msra.mxu0 0
      %2435 = vmatprep.subr.bf16.mxu0 0
      %2436 = vmatpush2.bf16.msra.mxu0 0
      %2437 = vmatprep.mubr.bf16.mxu0 0
      %2438 = vmatmul.mubr.bf16.gmra.mxu0 %v2334
      %v2439 = vpop.f32.mrf.mxu0
      %v2440 = vadd.f32 0.0, %v2439
      %v2441 = vpop.f32.mrf.mxu0
      %v2442 = vpop.f32.mrf.mxu0
      %v2443 = vadd.f32 0.0, %v2442
      %v2444 = vpop.f32.mrf.mxu0
      %2445 = vmatprep.mubr.bf16.mxu0 0
      %2446 = vmatmul.mubr.bf16.gmra.mxu0 %v2336
      %v2447 = vpop.f32.mrf.mxu0
      %v2448 = vadd.f32 0.0, %v2447
      %v2449 = vpop.f32.mrf.mxu0
      %v2450 = vpop.f32.mrf.mxu0
      %v2451 = vadd.f32 0.0, %v2450
      %v2452 = vpop.f32.mrf.mxu0
      %2453 = vmatprep.mubr.bf16.mxu0 0
      %2454 = vmatmul.mubr.bf16.gmra.mxu0 %v2338
      %v2455 = vpop.f32.mrf.mxu0
      %v2456 = vadd.f32 0.0, %v2455
      %v2457 = vpop.f32.mrf.mxu0
      %v2458 = vpop.f32.mrf.mxu0
      %v2459 = vadd.f32 0.0, %v2458
      %v2460 = vpop.f32.mrf.mxu0
      %2461 = vmatprep.mubr.bf16.mxu0 0
      %2462 = vmatmul.mubr.bf16.gmra.mxu0 %v2340
      %v2463 = vpop.f32.mrf.mxu0
      %v2464 = vadd.f32 0.0, %v2463
      %v2465 = vpop.f32.mrf.mxu0
      %v2466 = vpop.f32.mrf.mxu0
      %v2467 = vadd.f32 0.0, %v2466
      %v2468 = vpop.f32.mrf.mxu0
      %2469 = vmatprep.mubr.bf16.mxu0 0
      %2470 = vmatmul.mubr.bf16.gmra.mxu0 %v2342
      %v2471 = vpop.f32.mrf.mxu0
      %v2472 = vadd.f32 0.0, %v2471
      %v2473 = vpop.f32.mrf.mxu0
      %v2474 = vpop.f32.mrf.mxu0
      %v2475 = vadd.f32 0.0, %v2474
      %v2476 = vpop.f32.mrf.mxu0
      %2477 = vmatprep.mubr.bf16.mxu0 0
      %2478 = vmatmul.mubr.bf16.gmra.mxu0 %v2344
      %v2479 = vpop.f32.mrf.mxu0
      %v2480 = vadd.f32 0.0, %v2479
      %v2481 = vpop.f32.mrf.mxu0
      %v2482 = vpop.f32.mrf.mxu0
      %v2483 = vadd.f32 0.0, %v2482
      %v2484 = vpop.f32.mrf.mxu0
      %2485 = vmatprep.mubr.bf16.mxu0 0
      %2486 = vmatmul.mubr.bf16.gmra.mxu0 %v2346
      %v2487 = vpop.f32.mrf.mxu0
      %v2488 = vadd.f32 0.0, %v2487
      %v2489 = vpop.f32.mrf.mxu0
      %v2490 = vpop.f32.mrf.mxu0
      %v2491 = vadd.f32 0.0, %v2490
      %v2492 = vpop.f32.mrf.mxu0
      %2493 = vmatprep.mubr.bf16.mxu0 0
      %2494 = vmatmul.mubr.bf16.gmra.mxu0 %v2348
      %v2495 = vpop.f32.mrf.mxu0
      %v2496 = vadd.f32 0.0, %v2495
      %v2497 = vpop.f32.mrf.mxu0
      %v2498 = vpop.f32.mrf.mxu0
      %v2499 = vadd.f32 0.0, %v2498
      %v2500 = vpop.f32.mrf.mxu0
      %2501 = vdwg.mxu0
      %v2502 = vadd.f32 %v2238, %v2440
      %v2503 = vadd.f32 %v2239, %v2443
      %v2504 = vadd.f32 %v2240, %v2448
      %v2505 = vadd.f32 %v2241, %v2451
      %v2506 = vadd.f32 %v2242, %v2456
      %v2507 = vadd.f32 %v2243, %v2459
      %v2508 = vadd.f32 %v2244, %v2464
      %v2509 = vadd.f32 %v2245, %v2467
      %v2510 = vadd.f32 %v2246, %v2472
      %v2511 = vadd.f32 %v2247, %v2475
      %v2512 = vadd.f32 %v2248, %v2480
      %v2513 = vadd.f32 %v2249, %v2483
      %v2514 = vadd.f32 %v2250, %v2488
      %v2515 = vadd.f32 %v2251, %v2491
      %v2516 = vadd.f32 %v2252, %v2496
      %v2517 = vadd.f32 %v2253, %v2499
      %v2518 = vld [vmem:[#allocation2 + $0x10] sm:$0xf]
      %v2519 = vld [vmem:[#allocation2 + $0x14] sm:$0xf]
      %v2520 = vld [vmem:[#allocation2 + $0x18] sm:$0xf]
      %v2521 = vld [vmem:[#allocation2 + $0x1c] sm:$0xf]
      %v2522 = vld [vmem:[#allocation2 + $0x20] sm:$0xf]
      %v2523 = vld [vmem:[#allocation2 + $0x24] sm:$0xf]
      %v2524 = vld [vmem:[#allocation2 + $0x28] sm:$0xf]
      %v2525 = vld [vmem:[#allocation2 + $0x2c] sm:$0xf]
      %v2526 = vld [vmem:[#allocation2 + $0x30] sm:$0xf]
      %v2527 = vld [vmem:[#allocation2 + $0x34] sm:$0xf]
      %v2528 = vld [vmem:[#allocation2 + $0x38] sm:$0xf]
      %v2529 = vld [vmem:[#allocation2 + $0x3c] sm:$0xf]
      %v2530 = vld [vmem:[#allocation2 + $0x40] sm:$0xf]
      %v2531 = vld [vmem:[#allocation2 + $0x44] sm:$0xf]
      %v2532 = vld [vmem:[#allocation2 + $0x48] sm:$0xf]
      %v2533 = vld [vmem:[#allocation2 + $0x4c] sm:$0xf]
      %v2534 = vsel %vm887, %v2518, 0
      %v2535 = vsel %vm888, %v2519, 0
      %v2536 = vsel %vm887, %v2520, 0
      %v2537 = vsel %vm888, %v2521, 0
      %v2538 = vsel %vm887, %v2522, 0
      %v2539 = vsel %vm888, %v2523, 0
      %v2540 = vsel %vm887, %v2524, 0
      %v2541 = vsel %vm888, %v2525, 0
      %v2542 = vsel %vm887, %v2526, 0
      %v2543 = vsel %vm888, %v2527, 0
      %v2544 = vsel %vm887, %v2528, 0
      %v2545 = vsel %vm888, %v2529, 0
      %v2546 = vsel %vm887, %v2530, 0
      %v2547 = vsel %vm888, %v2531, 0
      %v2548 = vsel %vm887, %v2532, 0
      %v2549 = vsel %vm888, %v2533, 0
      %s2550 = scalar_lea.vmem %s4, 384
      %v2551 = vld [vmem:[%s2550] sm:$0xf]
      %v2552 = vld [vmem:[%s2550 + $0x4] sm:$0xf]
      %v2553 = vld [vmem:[%s2550 + $0x8] sm:$0xf]
      %v2554 = vld [vmem:[%s2550 + $0xc] sm:$0xf]
      %v2555 = vld [vmem:[%s2550 + $0x10] sm:$0xf]
      %v2556 = vld [vmem:[%s2550 + $0x14] sm:$0xf]
      %v2557 = vld [vmem:[%s2550 + $0x18] sm:$0xf]
      %v2558 = vld [vmem:[%s2550 + $0x1c] sm:$0xf]
      %v2559 = vld [vmem:[%s2550 + $0x20] sm:$0xf]
      %v2560 = vld [vmem:[%s2550 + $0x24] sm:$0xf]
      %v2561 = vld [vmem:[%s2550 + $0x28] sm:$0xf]
      %v2562 = vld [vmem:[%s2550 + $0x2c] sm:$0xf]
      %v2563 = vld [vmem:[%s2550 + $0x30] sm:$0xf]
      %v2564 = vld [vmem:[%s2550 + $0x34] sm:$0xf]
      %v2565 = vld [vmem:[%s2550 + $0x38] sm:$0xf]
      %v2566 = vld [vmem:[%s2550 + $0x3c] sm:$0xf]
      %v2583 = vunpack.c.l.b16 %v2534
      %v2584 = vunpack.c.l.b16 %v2535
      %v2585 = vunpack.c.l.b16 %v2536
      %v2586 = vunpack.c.l.b16 %v2537
      %v2587 = vunpack.c.l.b16 %v2538
      %v2588 = vunpack.c.l.b16 %v2539
      %v2589 = vunpack.c.l.b16 %v2540
      %v2590 = vunpack.c.l.b16 %v2541
      %v2591 = vunpack.c.l.b16 %v2542
      %v2592 = vunpack.c.l.b16 %v2543
      %v2593 = vunpack.c.l.b16 %v2544
      %v2594 = vunpack.c.l.b16 %v2545
      %v2595 = vunpack.c.l.b16 %v2546
      %v2596 = vunpack.c.l.b16 %v2547
      %v2597 = vunpack.c.l.b16 %v2548
      %v2598 = vunpack.c.l.b16 %v2549
      %v2599 = vpack.c.b16 %v2584, %v2583
      %v2600 = vpack.c.b16 %v2586, %v2585
      %v2601 = vpack.c.b16 %v2588, %v2587
      %v2602 = vpack.c.b16 %v2590, %v2589
      %v2603 = vpack.c.b16 %v2592, %v2591
      %v2604 = vpack.c.b16 %v2594, %v2593
      %v2605 = vpack.c.b16 %v2596, %v2595
      %v2606 = vpack.c.b16 %v2598, %v2597
      %v2631 = vunpack.c.l.b16 %v2551
      %v2632 = vunpack.c.l.b16 %v2552
      %v2633 = vunpack.c.l.b16 %v2553
      %v2634 = vunpack.c.l.b16 %v2554
      %v2635 = vunpack.c.l.b16 %v2555
      %v2636 = vunpack.c.l.b16 %v2556
      %v2637 = vunpack.c.l.b16 %v2557
      %v2638 = vunpack.c.l.b16 %v2558
      %v2639 = vunpack.c.l.b16 %v2559
      %v2640 = vunpack.c.l.b16 %v2560
      %v2641 = vunpack.c.l.b16 %v2561
      %v2642 = vunpack.c.l.b16 %v2562
      %v2643 = vunpack.c.l.b16 %v2563
      %v2644 = vunpack.c.l.b16 %v2564
      %v2645 = vunpack.c.l.b16 %v2565
      %v2646 = vunpack.c.l.b16 %v2566
      %v2647 = vpack.c.b16 %v2632, %v2631
      %v2648 = vpack.c.b16 %v2634, %v2633
      %v2649 = vpack.c.b16 %v2636, %v2635
      %v2650 = vpack.c.b16 %v2638, %v2637
      %v2651 = vpack.c.b16 %v2640, %v2639
      %v2652 = vpack.c.b16 %v2642, %v2641
      %v2653 = vpack.c.b16 %v2644, %v2643
      %v2654 = vpack.c.b16 %v2646, %v2645
      %2663 = vmatprep.subr.bf16.mxu0 0
      %2664 = vmatpush1.bf16.msra.mxu0 %v2654
      %2665 = vmatprep.subr.bf16.mxu0 0
      %2666 = vmatpush1.bf16.msra.mxu0 %v2653
      %2667 = vmatprep.subr.bf16.mxu0 0
      %2668 = vmatpush1.bf16.msra.mxu0 %v2652
      %2669 = vmatprep.subr.bf16.mxu0 0
      %2670 = vmatpush1.bf16.msra.mxu0 %v2651
      %2671 = vmatprep.subr.bf16.mxu0 0
      %2672 = vmatpush1.bf16.msra.mxu0 %v2650
      %2673 = vmatprep.subr.bf16.mxu0 0
      %2674 = vmatpush1.bf16.msra.mxu0 %v2649
      %2675 = vmatprep.subr.bf16.mxu0 0
      %2676 = vmatpush1.bf16.msra.mxu0 %v2648
      %2677 = vmatprep.subr.bf16.mxu0 0
      %2678 = vmatpush1.bf16.msra.mxu0 %v2647
      %2679 = vmatprep.subr.bf16.mxu0 0
      %2680 = vmatpush2.bf16.msra.mxu0 0
      %2681 = vmatprep.subr.bf16.mxu0 0
      %2682 = vmatpush2.bf16.msra.mxu0 0
      %2683 = vmatprep.subr.bf16.mxu0 0
      %2684 = vmatpush2.bf16.msra.mxu0 0
      %2685 = vmatprep.subr.bf16.mxu0 0
      %2686 = vmatpush2.bf16.msra.mxu0 0
      %2687 = vmatprep.subr.bf16.mxu0 0
      %2688 = vmatpush2.bf16.msra.mxu0 0
      %2689 = vmatprep.subr.bf16.mxu0 0
      %2690 = vmatpush2.bf16.msra.mxu0 0
      %2691 = vmatprep.subr.bf16.mxu0 0
      %2692 = vmatpush2.bf16.msra.mxu0 0
      %2693 = vmatprep.subr.bf16.mxu0 0
      %2694 = vmatpush2.bf16.msra.mxu0 0
      %2695 = vmatprep.mubr.bf16.mxu0 0
      %2696 = vmatmul.mubr.bf16.gmra.mxu0 %v2599
      %v2697 = vpop.f32.mrf.mxu0
      %v2698 = vadd.f32 0.0, %v2697
      %v2699 = vpop.f32.mrf.mxu0
      %v2700 = vpop.f32.mrf.mxu0
      %v2701 = vadd.f32 0.0, %v2700
      %v2702 = vpop.f32.mrf.mxu0
      %2703 = vmatprep.mubr.bf16.mxu0 0
      %2704 = vmatmul.mubr.bf16.gmra.mxu0 %v2600
      %v2705 = vpop.f32.mrf.mxu0
      %v2706 = vadd.f32 0.0, %v2705
      %v2707 = vpop.f32.mrf.mxu0
      %v2708 = vpop.f32.mrf.mxu0
      %v2709 = vadd.f32 0.0, %v2708
      %v2710 = vpop.f32.mrf.mxu0
      %2711 = vmatprep.mubr.bf16.mxu0 0
      %2712 = vmatmul.mubr.bf16.gmra.mxu0 %v2601
      %v2713 = vpop.f32.mrf.mxu0
      %v2714 = vadd.f32 0.0, %v2713
      %v2715 = vpop.f32.mrf.mxu0
      %v2716 = vpop.f32.mrf.mxu0
      %v2717 = vadd.f32 0.0, %v2716
      %v2718 = vpop.f32.mrf.mxu0
      %2719 = vmatprep.mubr.bf16.mxu0 0
      %2720 = vmatmul.mubr.bf16.gmra.mxu0 %v2602
      %v2721 = vpop.f32.mrf.mxu0
      %v2722 = vadd.f32 0.0, %v2721
      %v2723 = vpop.f32.mrf.mxu0
      %v2724 = vpop.f32.mrf.mxu0
      %v2725 = vadd.f32 0.0, %v2724
      %v2726 = vpop.f32.mrf.mxu0
      %2727 = vmatprep.mubr.bf16.mxu0 0
      %2728 = vmatmul.mubr.bf16.gmra.mxu0 %v2603
      %v2729 = vpop.f32.mrf.mxu0
      %v2730 = vadd.f32 0.0, %v2729
      %v2731 = vpop.f32.mrf.mxu0
      %v2732 = vpop.f32.mrf.mxu0
      %v2733 = vadd.f32 0.0, %v2732
      %v2734 = vpop.f32.mrf.mxu0
      %2735 = vmatprep.mubr.bf16.mxu0 0
      %2736 = vmatmul.mubr.bf16.gmra.mxu0 %v2604
      %v2737 = vpop.f32.mrf.mxu0
      %v2738 = vadd.f32 0.0, %v2737
      %v2739 = vpop.f32.mrf.mxu0
      %v2740 = vpop.f32.mrf.mxu0
      %v2741 = vadd.f32 0.0, %v2740
      %v2742 = vpop.f32.mrf.mxu0
      %2743 = vmatprep.mubr.bf16.mxu0 0
      %2744 = vmatmul.mubr.bf16.gmra.mxu0 %v2605
      %v2745 = vpop.f32.mrf.mxu0
      %v2746 = vadd.f32 0.0, %v2745
      %v2747 = vpop.f32.mrf.mxu0
      %v2748 = vpop.f32.mrf.mxu0
      %v2749 = vadd.f32 0.0, %v2748
      %v2750 = vpop.f32.mrf.mxu0
      %2751 = vmatprep.mubr.bf16.mxu0 0
      %2752 = vmatmul.mubr.bf16.gmra.mxu0 %v2606
      %v2753 = vpop.f32.mrf.mxu0
      %v2754 = vadd.f32 0.0, %v2753
      %v2755 = vpop.f32.mrf.mxu0
      %v2756 = vpop.f32.mrf.mxu0
      %v2757 = vadd.f32 0.0, %v2756
      %v2758 = vpop.f32.mrf.mxu0
      %2759 = vdwg.mxu0
      %v2760 = vadd.f32 %v2502, %v2698
      %v2761 = vadd.f32 %v2503, %v2701
      %v2762 = vadd.f32 %v2504, %v2706
      %v2763 = vadd.f32 %v2505, %v2709
      %v2764 = vadd.f32 %v2506, %v2714
      %v2765 = vadd.f32 %v2507, %v2717
      %v2766 = vadd.f32 %v2508, %v2722
      %v2767 = vadd.f32 %v2509, %v2725
      %v2768 = vadd.f32 %v2510, %v2730
      %v2769 = vadd.f32 %v2511, %v2733
      %v2770 = vadd.f32 %v2512, %v2738
      %v2771 = vadd.f32 %v2513, %v2741
      %v2772 = vadd.f32 %v2514, %v2746
      %v2773 = vadd.f32 %v2515, %v2749
      %v2774 = vadd.f32 %v2516, %v2754
      %v2775 = vadd.f32 %v2517, %v2757
      %v2776 = vld [vmem:[#allocation2 + $0x10] sm:$0xf]
      %v2777 = vld [vmem:[#allocation2 + $0x14] sm:$0xf]
      %v2778 = vld [vmem:[#allocation2 + $0x18] sm:$0xf]
      %v2779 = vld [vmem:[#allocation2 + $0x1c] sm:$0xf]
      %v2780 = vld [vmem:[#allocation2 + $0x20] sm:$0xf]
      %v2781 = vld [vmem:[#allocation2 + $0x24] sm:$0xf]
      %v2782 = vld [vmem:[#allocation2 + $0x28] sm:$0xf]
      %v2783 = vld [vmem:[#allocation2 + $0x2c] sm:$0xf]
      %v2784 = vld [vmem:[#allocation2 + $0x30] sm:$0xf]
      %v2785 = vld [vmem:[#allocation2 + $0x34] sm:$0xf]
      %v2786 = vld [vmem:[#allocation2 + $0x38] sm:$0xf]
      %v2787 = vld [vmem:[#allocation2 + $0x3c] sm:$0xf]
      %v2788 = vld [vmem:[#allocation2 + $0x40] sm:$0xf]
      %v2789 = vld [vmem:[#allocation2 + $0x44] sm:$0xf]
      %v2790 = vld [vmem:[#allocation2 + $0x48] sm:$0xf]
      %v2791 = vld [vmem:[#allocation2 + $0x4c] sm:$0xf]
      %v2792 = vld [vmem:[#allocation2 + $0x50] sm:$0x1]
      %s2793 = scalar_lea.vmem %s4, 448
      %v2794 = vld [vmem:[%s2793] sm:$0xf]
      %v2795 = vld [vmem:[%s2793 + $0x4] sm:$0xf]
      %v2796 = vld [vmem:[%s2793 + $0x8] sm:$0xf]
      %v2797 = vld [vmem:[%s2793 + $0xc] sm:$0xf]
      %v2798 = vld [vmem:[%s2793 + $0x10] sm:$0xf]
      %v2799 = vld [vmem:[%s2793 + $0x14] sm:$0xf]
      %v2800 = vld [vmem:[%s2793 + $0x18] sm:$0xf]
      %v2801 = vld [vmem:[%s2793 + $0x1c] sm:$0xf]
      %v2802 = vld [vmem:[%s2793 + $0x20] sm:$0xf]
      %v2803 = vld [vmem:[%s2793 + $0x24] sm:$0xf]
      %v2804 = vld [vmem:[%s2793 + $0x28] sm:$0xf]
      %v2805 = vld [vmem:[%s2793 + $0x2c] sm:$0xf]
      %v2806 = vld [vmem:[%s2793 + $0x30] sm:$0xf]
      %v2807 = vld [vmem:[%s2793 + $0x34] sm:$0xf]
      %v2808 = vld [vmem:[%s2793 + $0x38] sm:$0xf]
      %v2809 = vld [vmem:[%s2793 + $0x3c] sm:$0xf]
      %v2827 = vunpack.c.l.b16 %v2776
      %v2828 = vunpack.c.l.b16 %v2777
      %v2829 = vunpack.c.l.b16 %v2778
      %v2830 = vunpack.c.l.b16 %v2779
      %v2831 = vunpack.c.l.b16 %v2780
      %v2832 = vunpack.c.l.b16 %v2781
      %v2833 = vunpack.c.l.b16 %v2782
      %v2834 = vunpack.c.l.b16 %v2783
      %v2835 = vunpack.c.l.b16 %v2784
      %v2836 = vunpack.c.l.b16 %v2785
      %v2837 = vunpack.c.l.b16 %v2786
      %v2838 = vunpack.c.l.b16 %v2787
      %v2839 = vunpack.c.l.b16 %v2788
      %v2840 = vunpack.c.l.b16 %v2789
      %v2841 = vunpack.c.l.b16 %v2790
      %v2842 = vunpack.c.l.b16 %v2791
      %v2843 = vunpack.c.l.b16 %v2792
      %v2844 = vpack.c.b16 %v2828, %v2827
      %v2845 = vpack.c.b16 %v2830, %v2829
      %v2846 = vpack.c.b16 %v2832, %v2831
      %v2847 = vpack.c.b16 %v2834, %v2833
      %v2848 = vpack.c.b16 %v2836, %v2835
      %v2849 = vpack.c.b16 %v2838, %v2837
      %v2850 = vpack.c.b16 %v2840, %v2839
      %v2851 = vpack.c.b16 %v2842, %v2841
      %v2852 = vpack.c.b16 %v2843, %v2843
      %v2854 = vshrl.u32 %v2844, 16
      %v2856 = vshll.u32 %v2844, 16
      %v2858 = vrot.slane %v2856, 1
      %v2859 = vor.u32 %v2854, %v2858
      %v2861 = vshll.u32 %v2845, 16
      %v2863 = vrot.slane %v2861, 1
      %v2864 = vsel %vm982, %v2859, %v2863
      %v2865 = vshrl.u32 %v2845, 16
      %v2867 = vor.u32 %v2865, %v2863
      %v2869 = vshll.u32 %v2846, 16
      %v2871 = vrot.slane %v2869, 1
      %v2872 = vsel %vm982, %v2867, %v2871
      %v2873 = vshrl.u32 %v2846, 16
      %v2875 = vor.u32 %v2873, %v2871
      %v2877 = vshll.u32 %v2847, 16
      %v2879 = vrot.slane %v2877, 1
      %v2880 = vsel %vm982, %v2875, %v2879
      %v2881 = vshrl.u32 %v2847, 16
      %v2883 = vor.u32 %v2881, %v2879
      %v2885 = vshll.u32 %v2848, 16
      %v2887 = vrot.slane %v2885, 1
      %v2888 = vsel %vm982, %v2883, %v2887
      %v2889 = vshrl.u32 %v2848, 16
      %v2891 = vor.u32 %v2889, %v2887
      %v2893 = vshll.u32 %v2849, 16
      %v2895 = vrot.slane %v2893, 1
      %v2896 = vsel %vm982, %v2891, %v2895
      %v2897 = vshrl.u32 %v2849, 16
      %v2899 = vor.u32 %v2897, %v2895
      %v2901 = vshll.u32 %v2850, 16
      %v2903 = vrot.slane %v2901, 1
      %v2904 = vsel %vm982, %v2899, %v2903
      %v2905 = vshrl.u32 %v2850, 16
      %v2907 = vor.u32 %v2905, %v2903
      %v2909 = vshll.u32 %v2851, 16
      %v2911 = vrot.slane %v2909, 1
      %v2912 = vsel %vm982, %v2907, %v2911
      %v2913 = vshrl.u32 %v2851, 16
      %v2915 = vor.u32 %v2913, %v2911
      %v2917 = vshll.u32 %v2852, 16
      %v2919 = vrot.slane %v2917, 1
      %v2920 = vsel %vm982, %v2915, %v2919
      %v2945 = vunpack.c.l.b16 %v2794
      %v2946 = vunpack.c.l.b16 %v2795
      %v2947 = vunpack.c.l.b16 %v2796
      %v2948 = vunpack.c.l.b16 %v2797
      %v2949 = vunpack.c.l.b16 %v2798
      %v2950 = vunpack.c.l.b16 %v2799
      %v2951 = vunpack.c.l.b16 %v2800
      %v2952 = vunpack.c.l.b16 %v2801
      %v2953 = vunpack.c.l.b16 %v2802
      %v2954 = vunpack.c.l.b16 %v2803
      %v2955 = vunpack.c.l.b16 %v2804
      %v2956 = vunpack.c.l.b16 %v2805
      %v2957 = vunpack.c.l.b16 %v2806
      %v2958 = vunpack.c.l.b16 %v2807
      %v2959 = vunpack.c.l.b16 %v2808
      %v2960 = vunpack.c.l.b16 %v2809
      %v2961 = vpack.c.b16 %v2946, %v2945
      %v2962 = vpack.c.b16 %v2948, %v2947
      %v2963 = vpack.c.b16 %v2950, %v2949
      %v2964 = vpack.c.b16 %v2952, %v2951
      %v2965 = vpack.c.b16 %v2954, %v2953
      %v2966 = vpack.c.b16 %v2956, %v2955
      %v2967 = vpack.c.b16 %v2958, %v2957
      %v2968 = vpack.c.b16 %v2960, %v2959
      %2977 = vmatprep.subr.bf16.mxu0 0
      %2978 = vmatpush1.bf16.msra.mxu0 %v2968
      %2979 = vmatprep.subr.bf16.mxu0 0
      %2980 = vmatpush1.bf16.msra.mxu0 %v2967
      %2981 = vmatprep.subr.bf16.mxu0 0
      %2982 = vmatpush1.bf16.msra.mxu0 %v2966
      %2983 = vmatprep.subr.bf16.mxu0 0
      %2984 = vmatpush1.bf16.msra.mxu0 %v2965
      %2985 = vmatprep.subr.bf16.mxu0 0
      %2986 = vmatpush1.bf16.msra.mxu0 %v2964
      %2987 = vmatprep.subr.bf16.mxu0 0
      %2988 = vmatpush1.bf16.msra.mxu0 %v2963
      %2989 = vmatprep.subr.bf16.mxu0 0
      %2990 = vmatpush1.bf16.msra.mxu0 %v2962
      %2991 = vmatprep.subr.bf16.mxu0 0
      %2992 = vmatpush1.bf16.msra.mxu0 %v2961
      %2993 = vmatprep.subr.bf16.mxu0 0
      %2994 = vmatpush2.bf16.msra.mxu0 0
      %2995 = vmatprep.subr.bf16.mxu0 0
      %2996 = vmatpush2.bf16.msra.mxu0 0
      %2997 = vmatprep.subr.bf16.mxu0 0
      %2998 = vmatpush2.bf16.msra.mxu0 0
      %2999 = vmatprep.subr.bf16.mxu0 0
      %3000 = vmatpush2.bf16.msra.mxu0 0
      %3001 = vmatprep.subr.bf16.mxu0 0
      %3002 = vmatpush2.bf16.msra.mxu0 0
      %3003 = vmatprep.subr.bf16.mxu0 0
      %3004 = vmatpush2.bf16.msra.mxu0 0
      %3005 = vmatprep.subr.bf16.mxu0 0
      %3006 = vmatpush2.bf16.msra.mxu0 0
      %3007 = vmatprep.subr.bf16.mxu0 0
      %3008 = vmatpush2.bf16.msra.mxu0 0
      %3009 = vmatprep.mubr.bf16.mxu0 0
      %3010 = vmatmul.mubr.bf16.gmra.mxu0 %v2864
      %v3011 = vpop.f32.mrf.mxu0
      %v3012 = vadd.f32 0.0, %v3011
      %v3013 = vpop.f32.mrf.mxu0
      %v3014 = vpop.f32.mrf.mxu0
      %v3015 = vadd.f32 0.0, %v3014
      %v3016 = vpop.f32.mrf.mxu0
      %3017 = vmatprep.mubr.bf16.mxu0 0
      %3018 = vmatmul.mubr.bf16.gmra.mxu0 %v2872
      %v3019 = vpop.f32.mrf.mxu0
      %v3020 = vadd.f32 0.0, %v3019
      %v3021 = vpop.f32.mrf.mxu0
      %v3022 = vpop.f32.mrf.mxu0
      %v3023 = vadd.f32 0.0, %v3022
      %v3024 = vpop.f32.mrf.mxu0
      %3025 = vmatprep.mubr.bf16.mxu0 0
      %3026 = vmatmul.mubr.bf16.gmra.mxu0 %v2880
      %v3027 = vpop.f32.mrf.mxu0
      %v3028 = vadd.f32 0.0, %v3027
      %v3029 = vpop.f32.mrf.mxu0
      %v3030 = vpop.f32.mrf.mxu0
      %v3031 = vadd.f32 0.0, %v3030
      %v3032 = vpop.f32.mrf.mxu0
      %3033 = vmatprep.mubr.bf16.mxu0 0
      %3034 = vmatmul.mubr.bf16.gmra.mxu0 %v2888
      %v3035 = vpop.f32.mrf.mxu0
      %v3036 = vadd.f32 0.0, %v3035
      %v3037 = vpop.f32.mrf.mxu0
      %v3038 = vpop.f32.mrf.mxu0
      %v3039 = vadd.f32 0.0, %v3038
      %v3040 = vpop.f32.mrf.mxu0
      %3041 = vmatprep.mubr.bf16.mxu0 0
      %3042 = vmatmul.mubr.bf16.gmra.mxu0 %v2896
      %v3043 = vpop.f32.mrf.mxu0
      %v3044 = vadd.f32 0.0, %v3043
      %v3045 = vpop.f32.mrf.mxu0
      %v3046 = vpop.f32.mrf.mxu0
      %v3047 = vadd.f32 0.0, %v3046
      %v3048 = vpop.f32.mrf.mxu0
      %3049 = vmatprep.mubr.bf16.mxu0 0
      %3050 = vmatmul.mubr.bf16.gmra.mxu0 %v2904
      %v3051 = vpop.f32.mrf.mxu0
      %v3052 = vadd.f32 0.0, %v3051
      %v3053 = vpop.f32.mrf.mxu0
      %v3054 = vpop.f32.mrf.mxu0
      %v3055 = vadd.f32 0.0, %v3054
      %v3056 = vpop.f32.mrf.mxu0
      %3057 = vmatprep.mubr.bf16.mxu0 0
      %3058 = vmatmul.mubr.bf16.gmra.mxu0 %v2912
      %v3059 = vpop.f32.mrf.mxu0
      %v3060 = vadd.f32 0.0, %v3059
      %v3061 = vpop.f32.mrf.mxu0
      %v3062 = vpop.f32.mrf.mxu0
      %v3063 = vadd.f32 0.0, %v3062
      %v3064 = vpop.f32.mrf.mxu0
      %3065 = vmatprep.mubr.bf16.mxu0 0
      %3066 = vmatmul.mubr.bf16.gmra.mxu0 %v2920
      %v3067 = vpop.f32.mrf.mxu0
      %v3068 = vadd.f32 0.0, %v3067
      %v3069 = vpop.f32.mrf.mxu0
      %v3070 = vpop.f32.mrf.mxu0
      %v3071 = vadd.f32 0.0, %v3070
      %v3072 = vpop.f32.mrf.mxu0
      %3073 = vdwg.mxu0
      %v3074 = vadd.f32 %v2760, %v3012
      %v3075 = vadd.f32 %v2761, %v3015
      %v3076 = vadd.f32 %v2762, %v3020
      %v3077 = vadd.f32 %v2763, %v3023
      %v3078 = vadd.f32 %v2764, %v3028
      %v3079 = vadd.f32 %v2765, %v3031
      %v3080 = vadd.f32 %v2766, %v3036
      %v3081 = vadd.f32 %v2767, %v3039
      %v3082 = vadd.f32 %v2768, %v3044
      %v3083 = vadd.f32 %v2769, %v3047
      %v3084 = vadd.f32 %v2770, %v3052
      %v3085 = vadd.f32 %v2771, %v3055
      %v3086 = vadd.f32 %v2772, %v3060
      %v3087 = vadd.f32 %v2773, %v3063
      %v3088 = vadd.f32 %v2774, %v3068
      %v3089 = vadd.f32 %v2775, %v3071
      %v3090 = vld [vmem:[#allocation2 + $0x10] sm:$0xe]
      %v3091 = vsel %vm1414, %v3090, 0
      %v3092 = vsel %vm1415, %v2777, 0
      %v3093 = vsel %vm1416, %v2778, 0
      %v3094 = vsel %vm1415, %v2779, 0
      %v3095 = vsel %vm1416, %v2780, 0
      %v3096 = vsel %vm1415, %v2781, 0
      %v3097 = vsel %vm1416, %v2782, 0
      %v3098 = vsel %vm1415, %v2783, 0
      %v3099 = vsel %vm1416, %v2784, 0
      %v3100 = vsel %vm1415, %v2785, 0
      %v3101 = vsel %vm1416, %v2786, 0
      %v3102 = vsel %vm1415, %v2787, 0
      %v3103 = vsel %vm1416, %v2788, 0
      %v3104 = vsel %vm1415, %v2789, 0
      %v3105 = vsel %vm1416, %v2790, 0
      %v3106 = vsel %vm1415, %v2791, 0
      %v3107 = vsel %vm1417, %v2792, 0
      %s3108 = scalar_lea.vmem %s4, 512
      %v3109 = vld [vmem:[%s3108] sm:$0xf]
      %v3110 = vld [vmem:[%s3108 + $0x4] sm:$0xf]
      %v3111 = vld [vmem:[%s3108 + $0x8] sm:$0xf]
      %v3112 = vld [vmem:[%s3108 + $0xc] sm:$0xf]
      %v3113 = vld [vmem:[%s3108 + $0x10] sm:$0xf]
      %v3114 = vld [vmem:[%s3108 + $0x14] sm:$0xf]
      %v3115 = vld [vmem:[%s3108 + $0x18] sm:$0xf]
      %v3116 = vld [vmem:[%s3108 + $0x1c] sm:$0xf]
      %v3117 = vld [vmem:[%s3108 + $0x20] sm:$0xf]
      %v3118 = vld [vmem:[%s3108 + $0x24] sm:$0xf]
      %v3119 = vld [vmem:[%s3108 + $0x28] sm:$0xf]
      %v3120 = vld [vmem:[%s3108 + $0x2c] sm:$0xf]
      %v3121 = vld [vmem:[%s3108 + $0x30] sm:$0xf]
      %v3122 = vld [vmem:[%s3108 + $0x34] sm:$0xf]
      %v3123 = vld [vmem:[%s3108 + $0x38] sm:$0xf]
      %v3124 = vld [vmem:[%s3108 + $0x3c] sm:$0xf]
      %v3142 = vunpack.c.l.b16 %v3091
      %v3143 = vunpack.c.l.b16 %v3092
      %v3144 = vunpack.c.l.b16 %v3093
      %v3145 = vunpack.c.l.b16 %v3094
      %v3146 = vunpack.c.l.b16 %v3095
      %v3147 = vunpack.c.l.b16 %v3096
      %v3148 = vunpack.c.l.b16 %v3097
      %v3149 = vunpack.c.l.b16 %v3098
      %v3150 = vunpack.c.l.b16 %v3099
      %v3151 = vunpack.c.l.b16 %v3100
      %v3152 = vunpack.c.l.b16 %v3101
      %v3153 = vunpack.c.l.b16 %v3102
      %v3154 = vunpack.c.l.b16 %v3103
      %v3155 = vunpack.c.l.b16 %v3104
      %v3156 = vunpack.c.l.b16 %v3105
      %v3157 = vunpack.c.l.b16 %v3106
      %v3158 = vunpack.c.l.b16 %v3107
      %v3159 = vpack.c.b16 %v3143, %v3142
      %v3160 = vpack.c.b16 %v3145, %v3144
      %v3161 = vpack.c.b16 %v3147, %v3146
      %v3162 = vpack.c.b16 %v3149, %v3148
      %v3163 = vpack.c.b16 %v3151, %v3150
      %v3164 = vpack.c.b16 %v3153, %v3152
      %v3165 = vpack.c.b16 %v3155, %v3154
      %v3166 = vpack.c.b16 %v3157, %v3156
      %v3167 = vpack.c.b16 %v3158, %v3158
      %v3168 = vrot.slane %v3159, 1
      %v3169 = vrot.slane %v3160, 1
      %v3170 = vsel %vm1495, %v3168, %v3169
      %v3171 = vrot.slane %v3161, 1
      %v3172 = vsel %vm1495, %v3169, %v3171
      %v3173 = vrot.slane %v3162, 1
      %v3174 = vsel %vm1495, %v3171, %v3173
      %v3175 = vrot.slane %v3163, 1
      %v3176 = vsel %vm1495, %v3173, %v3175
      %v3177 = vrot.slane %v3164, 1
      %v3178 = vsel %vm1495, %v3175, %v3177
      %v3179 = vrot.slane %v3165, 1
      %v3180 = vsel %vm1495, %v3177, %v3179
      %v3181 = vrot.slane %v3166, 1
      %v3182 = vsel %vm1495, %v3179, %v3181
      %v3183 = vrot.slane %v3167, 1
      %v3184 = vsel %vm1495, %v3181, %v3183
      %v3209 = vunpack.c.l.b16 %v3109
      %v3210 = vunpack.c.l.b16 %v3110
      %v3211 = vunpack.c.l.b16 %v3111
      %v3212 = vunpack.c.l.b16 %v3112
      %v3213 = vunpack.c.l.b16 %v3113
      %v3214 = vunpack.c.l.b16 %v3114
      %v3215 = vunpack.c.l.b16 %v3115
      %v3216 = vunpack.c.l.b16 %v3116
      %v3217 = vunpack.c.l.b16 %v3117
      %v3218 = vunpack.c.l.b16 %v3118
      %v3219 = vunpack.c.l.b16 %v3119
      %v3220 = vunpack.c.l.b16 %v3120
      %v3221 = vunpack.c.l.b16 %v3121
      %v3222 = vunpack.c.l.b16 %v3122
      %v3223 = vunpack.c.l.b16 %v3123
      %v3224 = vunpack.c.l.b16 %v3124
      %v3225 = vpack.c.b16 %v3210, %v3209
      %v3226 = vpack.c.b16 %v3212, %v3211
      %v3227 = vpack.c.b16 %v3214, %v3213
      %v3228 = vpack.c.b16 %v3216, %v3215
      %v3229 = vpack.c.b16 %v3218, %v3217
      %v3230 = vpack.c.b16 %v3220, %v3219
      %v3231 = vpack.c.b16 %v3222, %v3221
      %v3232 = vpack.c.b16 %v3224, %v3223
      %3241 = vmatprep.subr.bf16.mxu0 0
      %3242 = vmatpush1.bf16.msra.mxu0 %v3232
      %3243 = vmatprep.subr.bf16.mxu0 0
      %3244 = vmatpush1.bf16.msra.mxu0 %v3231
      %3245 = vmatprep.subr.bf16.mxu0 0
      %3246 = vmatpush1.bf16.msra.mxu0 %v3230
      %3247 = vmatprep.subr.bf16.mxu0 0
      %3248 = vmatpush1.bf16.msra.mxu0 %v3229
      %3249 = vmatprep.subr.bf16.mxu0 0
      %3250 = vmatpush1.bf16.msra.mxu0 %v3228
      %3251 = vmatprep.subr.bf16.mxu0 0
      %3252 = vmatpush1.bf16.msra.mxu0 %v3227
      %3253 = vmatprep.subr.bf16.mxu0 0
      %3254 = vmatpush1.bf16.msra.mxu0 %v3226
      %3255 = vmatprep.subr.bf16.mxu0 0
      %3256 = vmatpush1.bf16.msra.mxu0 %v3225
      %3257 = vmatprep.subr.bf16.mxu0 0
      %3258 = vmatpush2.bf16.msra.mxu0 0
      %3259 = vmatprep.subr.bf16.mxu0 0
      %3260 = vmatpush2.bf16.msra.mxu0 0
      %3261 = vmatprep.subr.bf16.mxu0 0
      %3262 = vmatpush2.bf16.msra.mxu0 0
      %3263 = vmatprep.subr.bf16.mxu0 0
      %3264 = vmatpush2.bf16.msra.mxu0 0
      %3265 = vmatprep.subr.bf16.mxu0 0
      %3266 = vmatpush2.bf16.msra.mxu0 0
      %3267 = vmatprep.subr.bf16.mxu0 0
      %3268 = vmatpush2.bf16.msra.mxu0 0
      %3269 = vmatprep.subr.bf16.mxu0 0
      %3270 = vmatpush2.bf16.msra.mxu0 0
      %3271 = vmatprep.subr.bf16.mxu0 0
      %3272 = vmatpush2.bf16.msra.mxu0 0
      %3273 = vmatprep.mubr.bf16.mxu0 0
      %3274 = vmatmul.mubr.bf16.gmra.mxu0 %v3170
      %v3275 = vpop.f32.mrf.mxu0
      %v3276 = vadd.f32 0.0, %v3275
      %v3277 = vpop.f32.mrf.mxu0
      %v3278 = vpop.f32.mrf.mxu0
      %v3279 = vadd.f32 0.0, %v3278
      %v3280 = vpop.f32.mrf.mxu0
      %3281 = vmatprep.mubr.bf16.mxu0 0
      %3282 = vmatmul.mubr.bf16.gmra.mxu0 %v3172
      %v3283 = vpop.f32.mrf.mxu0
      %v3284 = vadd.f32 0.0, %v3283
      %v3285 = vpop.f32.mrf.mxu0
      %v3286 = vpop.f32.mrf.mxu0
      %v3287 = vadd.f32 0.0, %v3286
      %v3288 = vpop.f32.mrf.mxu0
      %3289 = vmatprep.mubr.bf16.mxu0 0
      %3290 = vmatmul.mubr.bf16.gmra.mxu0 %v3174
      %v3291 = vpop.f32.mrf.mxu0
      %v3292 = vadd.f32 0.0, %v3291
      %v3293 = vpop.f32.mrf.mxu0
      %v3294 = vpop.f32.mrf.mxu0
      %v3295 = vadd.f32 0.0, %v3294
      %v3296 = vpop.f32.mrf.mxu0
      %3297 = vmatprep.mubr.bf16.mxu0 0
      %3298 = vmatmul.mubr.bf16.gmra.mxu0 %v3176
      %v3299 = vpop.f32.mrf.mxu0
      %v3300 = vadd.f32 0.0, %v3299
      %v3301 = vpop.f32.mrf.mxu0
      %v3302 = vpop.f32.mrf.mxu0
      %v3303 = vadd.f32 0.0, %v3302
      %v3304 = vpop.f32.mrf.mxu0
      %3305 = vmatprep.mubr.bf16.mxu0 0
      %3306 = vmatmul.mubr.bf16.gmra.mxu0 %v3178
      %v3307 = vpop.f32.mrf.mxu0
      %v3308 = vadd.f32 0.0, %v3307
      %v3309 = vpop.f32.mrf.mxu0
      %v3310 = vpop.f32.mrf.mxu0
      %v3311 = vadd.f32 0.0, %v3310
      %v3312 = vpop.f32.mrf.mxu0
      %3313 = vmatprep.mubr.bf16.mxu0 0
      %3314 = vmatmul.mubr.bf16.gmra.mxu0 %v3180
      %v3315 = vpop.f32.mrf.mxu0
      %v3316 = vadd.f32 0.0, %v3315
      %v3317 = vpop.f32.mrf.mxu0
      %v3318 = vpop.f32.mrf.mxu0
      %v3319 = vadd.f32 0.0, %v3318
      %v3320 = vpop.f32.mrf.mxu0
      %3321 = vmatprep.mubr.bf16.mxu0 0
      %3322 = vmatmul.mubr.bf16.gmra.mxu0 %v3182
      %v3323 = vpop.f32.mrf.mxu0
      %v3324 = vadd.f32 0.0, %v3323
      %v3325 = vpop.f32.mrf.mxu0
      %v3326 = vpop.f32.mrf.mxu0
      %v3327 = vadd.f32 0.0, %v3326
      %v3328 = vpop.f32.mrf.mxu0
      %3329 = vmatprep.mubr.bf16.mxu0 0
      %3330 = vmatmul.mubr.bf16.gmra.mxu0 %v3184
      %v3331 = vpop.f32.mrf.mxu0
      %v3332 = vadd.f32 0.0, %v3331
      %v3333 = vpop.f32.mrf.mxu0
      %v3334 = vpop.f32.mrf.mxu0
      %v3335 = vadd.f32 0.0, %v3334
      %v3336 = vpop.f32.mrf.mxu0
      %3337 = vdwg.mxu0
      %v3338 = vadd.f32 %v3074, %v3276
      %v3339 = vadd.f32 %v3075, %v3279
      %v3340 = vadd.f32 %v3076, %v3284
      %v3341 = vadd.f32 %v3077, %v3287
      %v3342 = vadd.f32 %v3078, %v3292
      %v3343 = vadd.f32 %v3079, %v3295
      %v3344 = vadd.f32 %v3080, %v3300
      %v3345 = vadd.f32 %v3081, %v3303
      %v3346 = vadd.f32 %v3082, %v3308
      %v3347 = vadd.f32 %v3083, %v3311
      %v3348 = vadd.f32 %v3084, %v3316
      %v3349 = vadd.f32 %v3085, %v3319
      %v3350 = vadd.f32 %v3086, %v3324
      %v3351 = vadd.f32 %v3087, %v3327
      %v3352 = vadd.f32 %v3088, %v3332
      %v3353 = vadd.f32 %v3089, %v3335
      %v3354 = vld [vmem:[%s5] sm:$0x1]
      %v3356 = vlaneseq
      %v3357 = vshrl.u32 %v3356, 7
      %v3358 = vsub.s32 0, %v3357
      %v3359 = vrot.slane %v3354, %v3358
      %v3361 = vmul.f32 %v3338, %v3359
      %v3362 = vmul.f32 %v3339, %v3359
      %v3363 = vmul.f32 %v3340, %v3359
      %v3364 = vmul.f32 %v3341, %v3359
      %v3365 = vmul.f32 %v3342, %v3359
      %v3366 = vmul.f32 %v3343, %v3359
      %v3367 = vmul.f32 %v3344, %v3359
      %v3368 = vmul.f32 %v3345, %v3359
      %v3369 = vmul.f32 %v3346, %v3359
      %v3370 = vmul.f32 %v3347, %v3359
      %v3371 = vmul.f32 %v3348, %v3359
      %v3372 = vmul.f32 %v3349, %v3359
      %v3373 = vmul.f32 %v3350, %v3359
      %v3374 = vmul.f32 %v3351, %v3359
      %v3375 = vmul.f32 %v3352, %v3359
      %v3376 = vmul.f32 %v3353, %v3359
      %v3377 = vld [vmem:[%s6] sm:$0x1]
      %v3379 = vlaneseq
      %v3380 = vshrl.u32 %v3379, 7
      %v3381 = vsub.s32 0, %v3380
      %v3382 = vrot.slane %v3377, %v3381
      %v3384 = vadd.f32 %v3361, %v3382
      %v3385 = vadd.f32 %v3362, %v3382
      %v3386 = vadd.f32 %v3363, %v3382
      %v3387 = vadd.f32 %v3364, %v3382
      %v3388 = vadd.f32 %v3365, %v3382
      %v3389 = vadd.f32 %v3366, %v3382
      %v3390 = vadd.f32 %v3367, %v3382
      %v3391 = vadd.f32 %v3368, %v3382
      %v3392 = vadd.f32 %v3369, %v3382
      %v3393 = vadd.f32 %v3370, %v3382
      %v3394 = vadd.f32 %v3371, %v3382
      %v3395 = vadd.f32 %v3372, %v3382
      %v3396 = vadd.f32 %v3373, %v3382
      %v3397 = vadd.f32 %v3374, %v3382
      %v3398 = vadd.f32 %v3375, %v3382
      %v3399 = vadd.f32 %v3376, %v3382
      %v3400 = vmax.f32 %v3384, 0.0
      %v3401 = vmax.f32 %v3385, 0.0
      %v3402 = vmax.f32 %v3386, 0.0
      %v3403 = vmax.f32 %v3387, 0.0
      %v3404 = vmax.f32 %v3388, 0.0
      %v3405 = vmax.f32 %v3389, 0.0
      %v3406 = vmax.f32 %v3390, 0.0
      %v3407 = vmax.f32 %v3391, 0.0
      %v3408 = vmax.f32 %v3392, 0.0
      %v3409 = vmax.f32 %v3393, 0.0
      %v3410 = vmax.f32 %v3394, 0.0
      %v3411 = vmax.f32 %v3395, 0.0
      %v3412 = vmax.f32 %v3396, 0.0
      %v3413 = vmax.f32 %v3397, 0.0
      %v3414 = vmax.f32 %v3398, 0.0
      %v3415 = vmax.f32 %v3399, 0.0
      %v3416 = vpack.c.bf16 %v3401, %v3400
      %v3417 = vpack.c.bf16 %v3403, %v3402
      %v3418 = vpack.c.bf16 %v3405, %v3404
      %v3419 = vpack.c.bf16 %v3407, %v3406
      %v3420 = vpack.c.bf16 %v3409, %v3408
      %v3421 = vpack.c.bf16 %v3411, %v3410
      %v3422 = vpack.c.bf16 %v3413, %v3412
      %v3423 = vpack.c.bf16 %v3415, %v3414
      %v3424 = vld [vmem:[%s7] sm:$0xf]
      %v3425 = vld [vmem:[%s7 + $0x4] sm:$0xf]
      %v3426 = vld [vmem:[%s7 + $0x8] sm:$0xf]
      %v3427 = vld [vmem:[%s7 + $0xc] sm:$0xf]
      %v3428 = vld [vmem:[%s7 + $0x10] sm:$0xf]
      %v3429 = vld [vmem:[%s7 + $0x14] sm:$0xf]
      %v3430 = vld [vmem:[%s7 + $0x18] sm:$0xf]
      %v3431 = vld [vmem:[%s7 + $0x1c] sm:$0xf]
      %v3432 = vld [vmem:[%s7 + $0x20] sm:$0xf]
      %v3433 = vld [vmem:[%s7 + $0x24] sm:$0xf]
      %v3434 = vld [vmem:[%s7 + $0x28] sm:$0xf]
      %v3435 = vld [vmem:[%s7 + $0x2c] sm:$0xf]
      %v3436 = vld [vmem:[%s7 + $0x30] sm:$0xf]
      %v3437 = vld [vmem:[%s7 + $0x34] sm:$0xf]
      %v3438 = vld [vmem:[%s7 + $0x38] sm:$0xf]
      %v3439 = vld [vmem:[%s7 + $0x3c] sm:$0xf]
      %v3456 = vunpack.c.l.b16 %v3424
      %v3457 = vunpack.c.l.b16 %v3425
      %v3458 = vunpack.c.l.b16 %v3426
      %v3459 = vunpack.c.l.b16 %v3427
      %v3460 = vunpack.c.l.b16 %v3428
      %v3461 = vunpack.c.l.b16 %v3429
      %v3462 = vunpack.c.l.b16 %v3430
      %v3463 = vunpack.c.l.b16 %v3431
      %v3464 = vunpack.c.l.b16 %v3432
      %v3465 = vunpack.c.l.b16 %v3433
      %v3466 = vunpack.c.l.b16 %v3434
      %v3467 = vunpack.c.l.b16 %v3435
      %v3468 = vunpack.c.l.b16 %v3436
      %v3469 = vunpack.c.l.b16 %v3437
      %v3470 = vunpack.c.l.b16 %v3438
      %v3471 = vunpack.c.l.b16 %v3439
      %v3472 = vpack.c.b16 %v3457, %v3456
      %v3473 = vpack.c.b16 %v3459, %v3458
      %v3474 = vpack.c.b16 %v3461, %v3460
      %v3475 = vpack.c.b16 %v3463, %v3462
      %v3476 = vpack.c.b16 %v3465, %v3464
      %v3477 = vpack.c.b16 %v3467, %v3466
      %v3478 = vpack.c.b16 %v3469, %v3468
      %v3479 = vpack.c.b16 %v3471, %v3470
      %3488 = vmatprep.subr.bf16.mxu0 0
      %3489 = vmatpush1.bf16.msra.mxu0 %v3479
      %3490 = vmatprep.subr.bf16.mxu0 0
      %3491 = vmatpush1.bf16.msra.mxu0 %v3478
      %3492 = vmatprep.subr.bf16.mxu0 0
      %3493 = vmatpush1.bf16.msra.mxu0 %v3477
      %3494 = vmatprep.subr.bf16.mxu0 0
      %3495 = vmatpush1.bf16.msra.mxu0 %v3476
      %3496 = vmatprep.subr.bf16.mxu0 0
      %3497 = vmatpush1.bf16.msra.mxu0 %v3475
      %3498 = vmatprep.subr.bf16.mxu0 0
      %3499 = vmatpush1.bf16.msra.mxu0 %v3474
      %3500 = vmatprep.subr.bf16.mxu0 0
      %3501 = vmatpush1.bf16.msra.mxu0 %v3473
      %3502 = vmatprep.subr.bf16.mxu0 0
      %3503 = vmatpush1.bf16.msra.mxu0 %v3472
      %3504 = vmatprep.subr.bf16.mxu0 0
      %3505 = vmatpush2.bf16.msra.mxu0 0
      %3506 = vmatprep.subr.bf16.mxu0 0
      %3507 = vmatpush2.bf16.msra.mxu0 0
      %3508 = vmatprep.subr.bf16.mxu0 0
      %3509 = vmatpush2.bf16.msra.mxu0 0
      %3510 = vmatprep.subr.bf16.mxu0 0
      %3511 = vmatpush2.bf16.msra.mxu0 0
      %3512 = vmatprep.subr.bf16.mxu0 0
      %3513 = vmatpush2.bf16.msra.mxu0 0
      %3514 = vmatprep.subr.bf16.mxu0 0
      %3515 = vmatpush2.bf16.msra.mxu0 0
      %3516 = vmatprep.subr.bf16.mxu0 0
      %3517 = vmatpush2.bf16.msra.mxu0 0
      %3518 = vmatprep.subr.bf16.mxu0 0
      %3519 = vmatpush2.bf16.msra.mxu0 0
      %3520 = vmatprep.mubr.bf16.mxu0 0
      %3521 = vmatmul.mubr.bf16.gmra.mxu0 %v3416
      %v3522 = vpop.f32.mrf.mxu0
      %v3523 = vadd.f32 0.0, %v3522
      %v3524 = vpop.f32.mrf.mxu0
      %v3525 = vpop.f32.mrf.mxu0
      %v3526 = vadd.f32 0.0, %v3525
      %v3527 = vpop.f32.mrf.mxu0
      %3528 = vmatprep.mubr.bf16.mxu0 0
      %3529 = vmatmul.mubr.bf16.gmra.mxu0 %v3417
      %v3530 = vpop.f32.mrf.mxu0
      %v3531 = vadd.f32 0.0, %v3530
      %v3532 = vpop.f32.mrf.mxu0
      %v3533 = vpop.f32.mrf.mxu0
      %v3534 = vadd.f32 0.0, %v3533
      %v3535 = vpop.f32.mrf.mxu0
      %3536 = vmatprep.mubr.bf16.mxu0 0
      %3537 = vmatmul.mubr.bf16.gmra.mxu0 %v3418
      %v3538 = vpop.f32.mrf.mxu0
      %v3539 = vadd.f32 0.0, %v3538
      %v3540 = vpop.f32.mrf.mxu0
      %v3541 = vpop.f32.mrf.mxu0
      %v3542 = vadd.f32 0.0, %v3541
      %v3543 = vpop.f32.mrf.mxu0
      %3544 = vmatprep.mubr.bf16.mxu0 0
      %3545 = vmatmul.mubr.bf16.gmra.mxu0 %v3419
      %v3546 = vpop.f32.mrf.mxu0
      %v3547 = vadd.f32 0.0, %v3546
      %v3548 = vpop.f32.mrf.mxu0
      %v3549 = vpop.f32.mrf.mxu0
      %v3550 = vadd.f32 0.0, %v3549
      %v3551 = vpop.f32.mrf.mxu0
      %3552 = vmatprep.mubr.bf16.mxu0 0
      %3553 = vmatmul.mubr.bf16.gmra.mxu0 %v3420
      %v3554 = vpop.f32.mrf.mxu0
      %v3555 = vadd.f32 0.0, %v3554
      %v3556 = vpop.f32.mrf.mxu0
      %v3557 = vpop.f32.mrf.mxu0
      %v3558 = vadd.f32 0.0, %v3557
      %v3559 = vpop.f32.mrf.mxu0
      %3560 = vmatprep.mubr.bf16.mxu0 0
      %3561 = vmatmul.mubr.bf16.gmra.mxu0 %v3421
      %v3562 = vpop.f32.mrf.mxu0
      %v3563 = vadd.f32 0.0, %v3562
      %v3564 = vpop.f32.mrf.mxu0
      %v3565 = vpop.f32.mrf.mxu0
      %v3566 = vadd.f32 0.0, %v3565
      %v3567 = vpop.f32.mrf.mxu0
      %3568 = vmatprep.mubr.bf16.mxu0 0
      %3569 = vmatmul.mubr.bf16.gmra.mxu0 %v3422
      %v3570 = vpop.f32.mrf.mxu0
      %v3571 = vadd.f32 0.0, %v3570
      %v3572 = vpop.f32.mrf.mxu0
      %v3573 = vpop.f32.mrf.mxu0
      %v3574 = vadd.f32 0.0, %v3573
      %v3575 = vpop.f32.mrf.mxu0
      %3576 = vmatprep.mubr.bf16.mxu0 0
      %3577 = vmatmul.mubr.bf16.gmra.mxu0 %v3423
      %v3578 = vpop.f32.mrf.mxu0
      %v3579 = vadd.f32 0.0, %v3578
      %v3580 = vpop.f32.mrf.mxu0
      %v3581 = vpop.f32.mrf.mxu0
      %v3582 = vadd.f32 0.0, %v3581
      %v3583 = vpop.f32.mrf.mxu0
      %3584 = vdwg.mxu0
      %v3585 = vld [vmem:[%s8] sm:$0x1]
      %v3587 = vlaneseq
      %v3588 = vshrl.u32 %v3587, 7
      %v3589 = vsub.s32 0, %v3588
      %v3590 = vrot.slane %v3585, %v3589
      %v3592 = vmul.f32 %v3523, %v3590
      %v3593 = vmul.f32 %v3526, %v3590
      %v3594 = vmul.f32 %v3531, %v3590
      %v3595 = vmul.f32 %v3534, %v3590
      %v3596 = vmul.f32 %v3539, %v3590
      %v3597 = vmul.f32 %v3542, %v3590
      %v3598 = vmul.f32 %v3547, %v3590
      %v3599 = vmul.f32 %v3550, %v3590
      %v3600 = vmul.f32 %v3555, %v3590
      %v3601 = vmul.f32 %v3558, %v3590
      %v3602 = vmul.f32 %v3563, %v3590
      %v3603 = vmul.f32 %v3566, %v3590
      %v3604 = vmul.f32 %v3571, %v3590
      %v3605 = vmul.f32 %v3574, %v3590
      %v3606 = vmul.f32 %v3579, %v3590
      %v3607 = vmul.f32 %v3582, %v3590
      %v3608 = vld [vmem:[%s9] sm:$0x1]
      %v3610 = vlaneseq
      %v3611 = vshrl.u32 %v3610, 7
      %v3612 = vsub.s32 0, %v3611
      %v3613 = vrot.slane %v3608, %v3612
      %v3615 = vadd.f32 %v3592, %v3613
      %v3616 = vadd.f32 %v3593, %v3613
      %v3617 = vadd.f32 %v3594, %v3613
      %v3618 = vadd.f32 %v3595, %v3613
      %v3619 = vadd.f32 %v3596, %v3613
      %v3620 = vadd.f32 %v3597, %v3613
      %v3621 = vadd.f32 %v3598, %v3613
      %v3622 = vadd.f32 %v3599, %v3613
      %v3623 = vadd.f32 %v3600, %v3613
      %v3624 = vadd.f32 %v3601, %v3613
      %v3625 = vadd.f32 %v3602, %v3613
      %v3626 = vadd.f32 %v3603, %v3613
      %v3627 = vadd.f32 %v3604, %v3613
      %v3628 = vadd.f32 %v3605, %v3613
      %v3629 = vadd.f32 %v3606, %v3613
      %v3630 = vadd.f32 %v3607, %v3613
      %v3631 = vld [vmem:[%s550] sm:$0xf]
      %v3632 = vld [vmem:[%s550 + $0x4] sm:$0xf]
      %v3633 = vld [vmem:[%s550 + $0x8] sm:$0xf]
      %v3634 = vld [vmem:[%s550 + $0xc] sm:$0xf]
      %v3635 = vld [vmem:[%s550 + $0x10] sm:$0xf]
      %v3636 = vld [vmem:[%s550 + $0x14] sm:$0xf]
      %v3637 = vld [vmem:[%s550 + $0x18] sm:$0xf]
      %v3638 = vld [vmem:[%s550 + $0x1c] sm:$0xf]
      %v3639 = vld [vmem:[%s550 + $0x20] sm:$0xf]
      %v3640 = vld [vmem:[%s550 + $0x24] sm:$0xf]
      %v3641 = vld [vmem:[%s550 + $0x28] sm:$0xf]
      %v3642 = vld [vmem:[%s550 + $0x2c] sm:$0xf]
      %v3643 = vld [vmem:[%s550 + $0x30] sm:$0xf]
      %v3644 = vld [vmem:[%s550 + $0x34] sm:$0xf]
      %v3645 = vld [vmem:[%s550 + $0x38] sm:$0xf]
      %v3646 = vld [vmem:[%s550 + $0x3c] sm:$0xf]
      %v3647 = vunpack.c.l.bf16 %v3631
      %v3648 = vunpack.c.l.bf16 %v3632
      %v3649 = vunpack.c.l.bf16 %v3633
      %v3650 = vunpack.c.l.bf16 %v3634
      %v3651 = vunpack.c.l.bf16 %v3635
      %v3652 = vunpack.c.l.bf16 %v3636
      %v3653 = vunpack.c.l.bf16 %v3637
      %v3654 = vunpack.c.l.bf16 %v3638
      %v3655 = vunpack.c.l.bf16 %v3639
      %v3656 = vunpack.c.l.bf16 %v3640
      %v3657 = vunpack.c.l.bf16 %v3641
      %v3658 = vunpack.c.l.bf16 %v3642
      %v3659 = vunpack.c.l.bf16 %v3643
      %v3660 = vunpack.c.l.bf16 %v3644
      %v3661 = vunpack.c.l.bf16 %v3645
      %v3662 = vunpack.c.l.bf16 %v3646
      %v3663 = vadd.f32 %v3615, %v3647
      %v3664 = vadd.f32 %v3616, %v3648
      %v3665 = vadd.f32 %v3617, %v3649
      %v3666 = vadd.f32 %v3618, %v3650
      %v3667 = vadd.f32 %v3619, %v3651
      %v3668 = vadd.f32 %v3620, %v3652
      %v3669 = vadd.f32 %v3621, %v3653
      %v3670 = vadd.f32 %v3622, %v3654
      %v3671 = vadd.f32 %v3623, %v3655
      %v3672 = vadd.f32 %v3624, %v3656
      %v3673 = vadd.f32 %v3625, %v3657
      %v3674 = vadd.f32 %v3626, %v3658
      %v3675 = vadd.f32 %v3627, %v3659
      %v3676 = vadd.f32 %v3628, %v3660
      %v3677 = vadd.f32 %v3629, %v3661
      %v3678 = vadd.f32 %v3630, %v3662
      %v3679 = vmax.f32 %v3663, 0.0
      %v3680 = vmax.f32 %v3664, 0.0
      %v3681 = vmax.f32 %v3665, 0.0
      %v3682 = vmax.f32 %v3666, 0.0
      %v3683 = vmax.f32 %v3667, 0.0
      %v3684 = vmax.f32 %v3668, 0.0
      %v3685 = vmax.f32 %v3669, 0.0
      %v3686 = vmax.f32 %v3670, 0.0
      %v3687 = vmax.f32 %v3671, 0.0
      %v3688 = vmax.f32 %v3672, 0.0
      %v3689 = vmax.f32 %v3673, 0.0
      %v3690 = vmax.f32 %v3674, 0.0
      %v3691 = vmax.f32 %v3675, 0.0
      %v3692 = vmax.f32 %v3676, 0.0
      %v3693 = vmax.f32 %v3677, 0.0
      %v3694 = vmax.f32 %v3678, 0.0
      %v3695 = vpack.c.bf16 %v3680, %v3679
      %v3696 = vpack.c.bf16 %v3682, %v3681
      %v3697 = vpack.c.bf16 %v3684, %v3683
      %v3698 = vpack.c.bf16 %v3686, %v3685
      %v3699 = vpack.c.bf16 %v3688, %v3687
      %v3700 = vpack.c.bf16 %v3690, %v3689
      %v3701 = vpack.c.bf16 %v3692, %v3691
      %v3702 = vpack.c.bf16 %v3694, %v3693
      %v3711 = vunpack.c.l.b16 %v3695
      %v3712 = vunpack.c.h.b16 %v3695
      %v3713 = vunpack.c.l.b16 %v3696
      %v3714 = vunpack.c.h.b16 %v3696
      %v3715 = vunpack.c.l.b16 %v3697
      %v3716 = vunpack.c.h.b16 %v3697
      %v3717 = vunpack.c.l.b16 %v3698
      %v3718 = vunpack.c.h.b16 %v3698
      %v3719 = vunpack.c.l.b16 %v3699
      %v3720 = vunpack.c.h.b16 %v3699
      %v3721 = vunpack.c.l.b16 %v3700
      %v3722 = vunpack.c.h.b16 %v3700
      %v3723 = vunpack.c.l.b16 %v3701
      %v3724 = vunpack.c.h.b16 %v3701
      %v3725 = vunpack.c.l.b16 %v3702
      %v3726 = vunpack.c.h.b16 %v3702
      %v3727 = vpack.c.b16 %v3711, %v3711
      %v3728 = vpack.c.b16 %v3712, %v3712
      %v3729 = vpack.c.b16 %v3713, %v3713
      %v3730 = vpack.c.b16 %v3714, %v3714
      %v3731 = vpack.c.b16 %v3715, %v3715
      %v3732 = vpack.c.b16 %v3716, %v3716
      %v3733 = vpack.c.b16 %v3717, %v3717
      %v3734 = vpack.c.b16 %v3718, %v3718
      %v3735 = vpack.c.b16 %v3719, %v3719
      %v3736 = vpack.c.b16 %v3720, %v3720
      %v3737 = vpack.c.b16 %v3721, %v3721
      %v3738 = vpack.c.b16 %v3722, %v3722
      %v3739 = vpack.c.b16 %v3723, %v3723
      %v3740 = vpack.c.b16 %v3724, %v3724
      %v3741 = vpack.c.b16 %v3725, %v3725
      %v3742 = vpack.c.b16 %v3726, %v3726
      %3759 = vst [vmem:[%s561] sm:$0xf] %v3727
      %3760 = vst [vmem:[%s561 + $0x4] sm:$0xf] %v3728
      %3761 = vst [vmem:[%s561 + $0x8] sm:$0xf] %v3729
      %3762 = vst [vmem:[%s561 + $0xc] sm:$0xf] %v3730
      %3763 = vst [vmem:[%s561 + $0x10] sm:$0xf] %v3731
      %3764 = vst [vmem:[%s561 + $0x14] sm:$0xf] %v3732
      %3765 = vst [vmem:[%s561 + $0x18] sm:$0xf] %v3733
      %3766 = vst [vmem:[%s561 + $0x1c] sm:$0xf] %v3734
      %3767 = vst [vmem:[%s561 + $0x20] sm:$0xf] %v3735
      %3768 = vst [vmem:[%s561 + $0x24] sm:$0xf] %v3736
      %3769 = vst [vmem:[%s561 + $0x28] sm:$0xf] %v3737
      %3770 = vst [vmem:[%s561 + $0x2c] sm:$0xf] %v3738
      %3771 = vst [vmem:[%s561 + $0x30] sm:$0xf] %v3739
      %3772 = vst [vmem:[%s561 + $0x34] sm:$0xf] %v3740
      %3773 = vst [vmem:[%s561 + $0x38] sm:$0xf] %v3741
      %3774 = vst [vmem:[%s561 + $0x3c] sm:$0xf] %v3742
      %s3775 = smul.u32 8, %s26
      %p3776 = scmp.lt.s32.totalorder %s25, 1
      %s3777 = scalar_select %p3776, %s25, 1
      %p3778 = scmp.lt.s32.totalorder %s3775, 15
      %s3779 = scalar_select %p3778, %s3775, 15
      %s3780 = smul.addr %s3779, 2
      %s3781 = smul.addr %s3777, 32
      %s3782 = sadd.s32 %s3780, %s3781
      %s3783 = smul.addr %s3782, 4
      %s3784 = scalar_lea.vmem %s10, %s3783
      // Predicated region
      $region77: #{two_block_forward.7} parent=59 // pred_check
        %p3785 = pneg %p303
      $region78: #{two_block_forward.7} parent=59 // pred_check_branch
        %3787 = sbr.rel (%p3785) target = $region80
      $region79: #{two_block_forward.7} parent=59 // pred_region
        %s3788 = smul.u32 8, %s26
      $region80: #{two_block_forward.7} parent=59 // pred_fallthru
        _
    $region60: #{two_block_forward.7} parent=5 // pred_fallthru
      _
    %p3789 = scmp.le.s32.totalorder 2, %s16
    // Predicated region
    $region81: #{two_block_forward.7} parent=5 // pred_check
      %p3790 = pneg %p3789
    $region82: #{two_block_forward.7} parent=5 // pred_check_branch
      %3792 = sbr.rel (%p3790) target = $region84
    $region83: #{two_block_forward.7} parent=5 // pred_region
      %s3793 = ssub.s32 %s16, 2
      // Predicated region
      $region85: #{two_block_forward.7} parent=83 // pred_check
        %p3794 = pneg %p309
      $region86: #{two_block_forward.7} parent=83 // pred_check_branch
        %3796 = sbr.rel (%p3794) target = $region88
      $region87: #{two_block_forward.7} parent=83 // pred_region
        %s3797 = smul.u32 8, %s28
        %p3798 = scmp.lt.s32.totalorder %s27, 1
        %s3799 = scalar_select %p3798, %s27, 1
        %p3800 = scmp.lt.s32.totalorder %s3797, 15
        %s3801 = scalar_select %p3800, %s3797, 15
        %s3802 = smul.addr %s3801, 2
        %s3803 = smul.addr %s3799, 32
        %s3804 = sadd.s32 %s3802, %s3803
        %s3805 = smul.addr %s3804, 4
        %s3806 = scalar_lea.vmem %s10, %s3805
      $region88: #{two_block_forward.7} parent=83 // pred_fallthru
        _
    $region84: #{two_block_forward.7} parent=5 // pred_fallthru
      _
  $region6: #{two_block_forward.7} parent=0 // loop_footer
    %s20 = sadd.s32 1, %s16
  $region7: #{two_block_forward.7} parent=0 // loop_footer_branch
    %15 = sbr.rel target = $region3
  $region8: #{two_block_forward.7} parent=0 // loop_exit
    _

</llo_original>
